<compile_context>
chip_gen: v7x
topology: tpu7x:2x2x1
jax: 0.10.0
libtpu: 0.0.40
codegen_flags: <defaults>
</compile_context>

<pallas_src>
import functools
import math

import jax
import jax.numpy as jnp
from jax import lax
from jax.experimental import pallas as pl
from jax.experimental.pallas import tpu as pltpu


# ----------------------------------------------------------------------------
# Single fused Pallas kernel: whole transformer forward
# ----------------------------------------------------------------------------
def _forecast_kernel(*refs, D, H, NE, ND, use_sigmoid):
    Dh = D // H
    o_ref = refs[-1]
    it = iter(refs[:-1])
    nxt = lambda: next(it)[...]            # load the full (VMEM-resident) ref

    src = nxt(); pe_src = nxt(); pe_tgt = nxt()          # (B*S,F) (B*S,D) (B*W,D)
    w_in = nxt(); b_in = nxt()                           # (F,D) (1,D)
    bias_src = nxt(); bias_tgt = nxt(); bias_cross = nxt()  # block-diag additive masks
    enc_nw = nxt(); enc_nb = nxt(); dec_nw = nxt(); dec_nb = nxt()
    w_out = nxt(); b_out = nxt()                         # (1,D) (1,1)

    def layernorm(x, g, b, eps=1e-5):
        mu = jnp.mean(x, axis=-1, keepdims=True)
        xc = x - mu
        var = jnp.mean(xc * xc, axis=-1, keepdims=True)
        return xc * lax.rsqrt(var + eps) * g + b

    def attend(q_all, k_all, v_all, wo, bo, bias):
        # q_all: (Mq, D), k_all/v_all: (Mk, D); batches separated by `bias`.
        Mq = q_all.shape[0]
        acc = jnp.zeros((Mq, D), jnp.float32)
        for h in range(H):                               # static unroll, H=4
            sl = slice(h * Dh, (h + 1) * Dh)
            qh = q_all[:, sl]                            # (Mq, Dh) lane slice
            kh = k_all[:, sl]
            vh = v_all[:, sl]
            # q·k contracting last dims (no k.T materialization); scale is
            # already folded into the Q projection weights.
            s = lax.dot_general(qh, kh, (((1,), (1,)), ((), ())),
                                preferred_element_type=jnp.float32) + bias
            m = jnp.max(s, axis=-1, keepdims=True)
            p = jnp.exp(s - m)
            l = jnp.sum(p, axis=-1, keepdims=True)
            p = p * pl.reciprocal(l, approx=True)        # EUP slot
            oh = jnp.dot(p, vh, preferred_element_type=jnp.float32)   # (Mq, Dh)
            # accumulate through the output projection -> no head concat needed
            acc = acc + jnp.dot(oh, wo[sl, :], preferred_element_type=jnp.float32)
        return acc + bo

    def mha_self(x, wqkv, bqkv, wo, bo, bias):
        qkv = jnp.dot(x, wqkv, preferred_element_type=jnp.float32) + bqkv  # (M, 3D)
        return attend(qkv[:, :D], qkv[:, D:2 * D], qkv[:, 2 * D:], wo, bo, bias)

    def mha_cross(x, mem, wq, bq, wkv, bkv, wo, bo, bias):
        q_all = jnp.dot(x, wq, preferred_element_type=jnp.float32) + bq   # (Mq, D)
        kv = jnp.dot(mem, wkv, preferred_element_type=jnp.float32) + bkv  # (Mk, 2D)
        return attend(q_all, kv[:, :D], kv[:, D:], wo, bo, bias)

    def ffn(x, w1, b1, w2, b2):
        h = jnp.maximum(jnp.dot(x, w1, preferred_element_type=jnp.float32) + b1, 0.0)
        return jnp.dot(h, w2, preferred_element_type=jnp.float32) + b2

    # ---- source embedding + positional encoding -----------------------------
    x = jnp.dot(src, w_in, preferred_element_type=jnp.float32) + b_in + pe_src

    # ---- encoder stack -------------------------------------------------------
    for _ in range(NE):
        wqkv = nxt(); bqkv = nxt(); wo = nxt(); bo = nxt()
        w1 = nxt(); b1 = nxt(); w2 = nxt(); b2 = nxt()
        g1 = nxt(); be1 = nxt(); g2 = nxt(); be2 = nxt()
        a = mha_self(x, wqkv, bqkv, wo, bo, bias_src)
        x = layernorm(x + a, g1, be1)
        f = ffn(x, w1, b1, w2, b2)
        x = layernorm(x + f, g2, be2)
    mem = layernorm(x, enc_nw, enc_nb)           # final encoder norm (plain LN)

    # ---- decoder input: zeros @ W_in == 0  =>  bias + positional encoding ----
    y = pe_tgt + b_in

    # ---- decoder stack -------------------------------------------------------
    for _ in range(ND):
        wqkv = nxt(); bqkv = nxt(); wo = nxt(); bo = nxt()
        cwq = nxt(); cbq = nxt(); cwkv = nxt(); cbkv = nxt(); cwo = nxt(); cbo = nxt()
        w1 = nxt(); b1 = nxt(); w2 = nxt(); b2 = nxt()
        g1 = nxt(); be1 = nxt(); g2 = nxt(); be2 = nxt(); g3 = nxt(); be3 = nxt()
        sa = mha_self(y, wqkv, bqkv, wo, bo, bias_tgt)
        y = layernorm(y + sa, g1, be1)
        ca = mha_cross(y, mem, cwq, cbq, cwkv, cbkv, cwo, cbo, bias_cross)
        y = layernorm(y + ca, g2, be2)
        f = ffn(y, w1, b1, w2, b2)
        y = layernorm(y + f, g3, be3)
    y = layernorm(y, dec_nw, dec_nb)             # final decoder norm (plain LN)

    # ---- output projection (D -> 1) as a lane reduction ----------------------
    out = jnp.sum(y * w_out, axis=-1, keepdims=True) + b_out    # (B*W, 1)
    if use_sigmoid:
        out = jax.nn.sigmoid(out)
    o_ref[...] = out.astype(o_ref.dtype)


# ----------------------------------------------------------------------------
# Wrapper: parameter prep (fuse/transpose/scale) + single pallas_call
# ----------------------------------------------------------------------------
def positional_encoding(seq_len, d_model):
    position = jnp.arange(seq_len, dtype=jnp.float32)[:, None]
    div_term = jnp.exp(jnp.arange(0, d_model, 2, dtype=jnp.float32)
                       * (-math.log(10000.0) / d_model))
    pe = jnp.zeros((seq_len, d_model), jnp.float32)
    pe = pe.at[:, 0::2].set(jnp.sin(position * div_term))
    pe = pe.at[:, 1::2].set(jnp.cos(position * div_term))
    return pe


def _block_bias(mq, sq, mk, sk):
    """Additive attention bias: 0 within the same batch block, -1e30 across."""
    rb = jnp.arange(mq)[:, None] // sq
    cb = jnp.arange(mk)[None, :] // sk
    return jnp.where(rb == cb, 0.0, -1e30).astype(jnp.float32)


def forecast_net_transformer(src, params, *, nhead, output_window, use_sigmoid=False):
    """Forward pass equivalent to ForecastNetTransformer.forward (eval mode)."""
    B, S, F = src.shape
    D = params["input_linear_w"].shape[0]
    H = nhead
    assert D % H == 0
    W = output_window
    DFF = params["encoder_layers"][0]["linear1_w"].shape[0]
    NE = len(params["encoder_layers"])
    ND = len(params["decoder_layers"])
    scale = 1.0 / math.sqrt(D // H)

    f32 = lambda a: jnp.asarray(a, jnp.float32)
    row = lambda a, n: f32(a).reshape(1, n)

    def qkv_fused(p):
        wq, wk, wv = jnp.split(f32(p["in_proj_weight"]), 3, axis=0)   # torch (out,in)
        bq, bk, bv = jnp.split(f32(p["in_proj_bias"]), 3)
        wqkv = jnp.concatenate([wq.T * scale, wk.T, wv.T], axis=1)    # (D, 3D)
        bqkv = jnp.concatenate([bq * scale, bk, bv]).reshape(1, 3 * D)
        return wqkv, bqkv

    inputs = [
        f32(src).reshape(B * S, F),
        jnp.tile(positional_encoding(S, D), (B, 1)),      # (B*S, D)
        jnp.tile(positional_encoding(W, D), (B, 1)),      # (B*W, D)
        f32(params["input_linear_w"]).T,                  # (F, D)
        row(params["input_linear_b"], D),
        _block_bias(B * S, S, B * S, S),
        _block_bias(B * W, W, B * W, W),
        _block_bias(B * W, W, B * S, S),
        row(params["encoder_norm_w"], D), row(params["encoder_norm_b"], D),
        row(params["decoder_norm_w"], D), row(params["decoder_norm_b"], D),
        f32(params["output_linear_w"]).reshape(1, D),     # (1, D)
        f32(params["output_linear_b"]).reshape(1, 1),
    ]

    for p in params["encoder_layers"]:
        wqkv, bqkv = qkv_fused(p["self_attn"])
        inputs += [
            wqkv, bqkv,
            f32(p["self_attn"]["out_proj_weight"]).T, row(p["self_attn"]["out_proj_bias"], D),
            f32(p["linear1_w"]).T, row(p["linear1_b"], DFF),
            f32(p["linear2_w"]).T, row(p["linear2_b"], D),
            row(p["norm1_w"], D), row(p["norm1_b"], D),
            row(p["norm2_w"], D), row(p["norm2_b"], D),
        ]

    for p in params["decoder_layers"]:
        wqkv, bqkv = qkv_fused(p["self_attn"])
        cwq, cwk, cwv = jnp.split(f32(p["cross_attn"]["in_proj_weight"]), 3, axis=0)
        cbq, cbk, cbv = jnp.split(f32(p["cross_attn"]["in_proj_bias"]), 3)
        inputs += [
            wqkv, bqkv,
            f32(p["self_attn"]["out_proj_weight"]).T, row(p["self_attn"]["out_proj_bias"], D),
            cwq.T * scale, (cbq * scale).reshape(1, D),
            jnp.concatenate([cwk.T, cwv.T], axis=1),                  # (D, 2D)
            jnp.concatenate([cbk, cbv]).reshape(1, 2 * D),
            f32(p["cross_attn"]["out_proj_weight"]).T, row(p["cross_attn"]["out_proj_bias"], D),
            f32(p["linear1_w"]).T, row(p["linear1_b"], DFF),
            f32(p["linear2_w"]).T, row(p["linear2_b"], D),
            row(p["norm1_w"], D), row(p["norm1_b"], D),
            row(p["norm2_w"], D), row(p["norm2_b"], D),
            row(p["norm3_w"], D), row(p["norm3_b"], D),
        ]

    kern = functools.partial(_forecast_kernel, D=D, H=H, NE=NE, ND=ND,
                             use_sigmoid=use_sigmoid)
    vmem_spec = pl.BlockSpec(memory_space=pltpu.MemorySpace.VMEM)
    out = pl.pallas_call(
        kern,
        out_shape=jax.ShapeDtypeStruct((B * W, 1), jnp.float32),
        in_specs=[vmem_spec] * len(inputs),        # whole arrays VMEM-resident
        out_specs=vmem_spec,                       # single grid step, no tiling
    )(*inputs)
    return out.reshape(B, W, 1)


# ----------------------------------------------------------------------------
# Pure-JAX reference (mirrors the PyTorch module), for correctness checking
# ----------------------------------------------------------------------------
def _reference_forward(src, params, *, nhead, output_window, use_sigmoid=False):
    B, S, F = src.shape
    D = params["input_linear_w"].shape[0]
    H = nhead
    Dh = D // H
    W = output_window

    def linear(x, w, b):                 # torch layout: w (out, in)
        return x @ w.T + b

    def layernorm(x, g, b, eps=1e-5):
        mu = x.mean(-1, keepdims=True)
        var = ((x - mu) ** 2).mean(-1, keepdims=True)
        return (x - mu) / jnp.sqrt(var + eps) * g + b

    def mha(q, k, v, p):
        Bq, Sq, _ = q.shape
        Sk = k.shape[1]
        wq, wk, wv = jnp.split(p["in_proj_weight"], 3, axis=0)
        bq, bk, bv = jnp.split(p["in_proj_bias"], 3)
        qh = linear(q, wq, bq).reshape(Bq, Sq, H, Dh).transpose(0, 2, 1, 3)
        kh = linear(k, wk, bk).reshape(Bq, Sk, H, Dh).transpose(0, 2, 1, 3)
        vh = linear(v, wv, bv).reshape(Bq, Sk, H, Dh).transpose(0, 2, 1, 3)
        s = jnp.einsum("bhqd,bhkd->bhqk", qh, kh) / math.sqrt(Dh)
        a = jax.nn.softmax(s, axis=-1)
        o = jnp.einsum("bhqk,bhkd->bhqd", a, vh)
        o = o.transpose(0, 2, 1, 3).reshape(Bq, Sq, D)
        return linear(o, p["out_proj_weight"], p["out_proj_bias"])

    def ffn(x, p):
        h = jax.nn.relu(linear(x, p["linear1_w"], p["linear1_b"]))
        return linear(h, p["linear2_w"], p["linear2_b"])

    src_emb = linear(src, params["input_linear_w"], params["input_linear_b"])
    src_emb = src_emb + positional_encoding(S, D)[None]
    tgt = jnp.zeros((B, W, F), jnp.float32)
    tgt_emb = linear(tgt, params["input_linear_w"], params["input_linear_b"])
    tgt_emb = tgt_emb + positional_encoding(W, D)[None]

    x = src_emb
    for p in params["encoder_layers"]:
        a = mha(x, x, x, p["self_attn"])
        x = layernorm(x + a, p["norm1_w"], p["norm1_b"])
        f = ffn(x, p)
        x = layernorm(x + f, p["norm2_w"], p["norm2_b"])
    mem = layernorm(x, params["encoder_norm_w"], params["encoder_norm_b"])

    y = tgt_emb
    for p in params["decoder_layers"]:
        sa = mha(y, y, y, p["self_attn"])
        y = layernorm(y + sa, p["norm1_w"], p["norm1_b"])
        ca = mha(y, mem, mem, p["cross_attn"])
        y = layernorm(y + ca, p["norm2_w"], p["norm2_b"])
        f = ffn(y, p)
        y = layernorm(y + f, p["norm3_w"], p["norm3_b"])
    y = layernorm(y, params["decoder_norm_w"], params["decoder_norm_b"])

    out = linear(y, params["output_linear_w"], params["output_linear_b"])
    if use_sigmoid:
        out = jax.nn.sigmoid(out)
    return out


# ----------------------------------------------------------------------------
# Deterministic parameter initialization (shapes mirror the PyTorch module)
# ----------------------------------------------------------------------------
def init_params(key, num_features, d_model, nhead, n_enc, n_dec, dim_ff):
    keys = iter(jax.random.split(key, 512))

    def rnd(shape, scale=0.1):
        return scale * jax.random.normal(next(keys), shape, jnp.float32)

    def mha_params():
        return {
            "in_proj_weight": rnd((3 * d_model, d_model)),
            "in_proj_bias": rnd((3 * d_model,)),
            "out_proj_weight": rnd((d_model, d_model)),
            "out_proj_bias": rnd((d_model,)),
        }

    def enc_layer():
        return {
            "self_attn": mha_params(),
            "linear1_w": rnd((dim_ff, d_model)), "linear1_b": rnd((dim_ff,)),
            "linear2_w": rnd((d_model, dim_ff)), "linear2_b": rnd((d_model,)),
            "norm1_w": jnp.ones((d_model,), jnp.float32),
            "norm1_b": jnp.zeros((d_model,), jnp.float32),
            "norm2_w": jnp.ones((d_model,), jnp.float32),
            "norm2_b": jnp.zeros((d_model,), jnp.float32),
        }

    def dec_layer():
        p = {
            "self_attn": mha_params(),
            "cross_attn": mha_params(),
            "linear1_w": rnd((dim_ff, d_model)), "linear1_b": rnd((dim_ff,)),
            "linear2_w": rnd((d_model, dim_ff)), "linear2_b": rnd((d_model,)),
        }
        for i in (1, 2, 3):
            p[f"norm{i}_w"] = jnp.ones((d_model,), jnp.float32)
            p[f"norm{i}_b"] = jnp.zeros((d_model,), jnp.float32)
        return p

    return {
        "input_linear_w": rnd((d_model, num_features)),
        "input_linear_b": rnd((d_model,)),
        "encoder_layers": [enc_layer() for _ in range(n_enc)],
        "decoder_layers": [dec_layer() for _ in range(n_dec)],
        "encoder_norm_w": jnp.ones((d_model,), jnp.float32),
        "encoder_norm_b": jnp.zeros((d_model,), jnp.float32),
        "decoder_norm_w": jnp.ones((d_model,), jnp.float32),
        "decoder_norm_b": jnp.zeros((d_model,), jnp.float32),
        "output_linear_w": rnd((1, d_model)),
        "output_linear_b": rnd((1,)),
    }


# ----------------------------------------------------------------------------
if __name__ == "__main__":
    # num_features=4, d_model=32, nhead=4, 2 encoder layers, 2 decoder layers,
    # dim_feedforward=64, output_window=4, batch=2, src sequence length=8.
    B, S, F = 2, 8, 4
    D, H, NE, ND, DFF, OUT_W = 32, 4, 2, 2, 64, 4

    key = jax.random.PRNGKey(0)
    k_param, k_src = jax.random.split(key)
    params = init_params(k_param, F, D, H, NE, ND, DFF)
    src = jax.random.normal(k_src, (B, S, F), jnp.float32)

    fwd = jax.jit(functools.partial(forecast_net_transformer, nhead=H,
                                    output_window=OUT_W, use_sigmoid=False))
    out = jax.block_until_ready(fwd(src, params))

    assert out.shape == (B, OUT_W, 1), out.shape
    assert bool(jnp.all(jnp.isfinite(out)))

    ref = _reference_forward(src, params, nhead=H, output_window=OUT_W,
                             use_sigmoid=False)
    max_err = float(jnp.max(jnp.abs(out - ref)))
    assert max_err < 5e-3, f"max abs err vs reference: {max_err}"

    print("KERNEL_OK")
</pallas_src>

<mosaic_0001>
module attributes {stable_mosaic.version = 11 : i64} {
  func.func @_forecast_kernel(%arg0: memref<16x4xf32, #tpu.memory_space<vmem>>, %arg1: memref<16x32xf32, #tpu.memory_space<vmem>>, %arg2: memref<8x32xf32, #tpu.memory_space<vmem>>, %arg3: memref<4x32xf32, #tpu.memory_space<vmem>>, %arg4: memref<1x32xf32, #tpu.memory_space<vmem>>, %arg5: memref<16x16xf32, #tpu.memory_space<vmem>>, %arg6: memref<8x8xf32, #tpu.memory_space<vmem>>, %arg7: memref<8x16xf32, #tpu.memory_space<vmem>>, %arg8: memref<1x32xf32, #tpu.memory_space<vmem>>, %arg9: memref<1x32xf32, #tpu.memory_space<vmem>>, %arg10: memref<1x32xf32, #tpu.memory_space<vmem>>, %arg11: memref<1x32xf32, #tpu.memory_space<vmem>>, %arg12: memref<1x32xf32, #tpu.memory_space<vmem>>, %arg13: memref<1x1xf32, #tpu.memory_space<vmem>>, %arg14: memref<32x96xf32, #tpu.memory_space<vmem>>, %arg15: memref<1x96xf32, #tpu.memory_space<vmem>>, %arg16: memref<32x32xf32, #tpu.memory_space<vmem>>, %arg17: memref<1x32xf32, #tpu.memory_space<vmem>>, %arg18: memref<32x64xf32, #tpu.memory_space<vmem>>, %arg19: memref<1x64xf32, #tpu.memory_space<vmem>>, %arg20: memref<64x32xf32, #tpu.memory_space<vmem>>, %arg21: memref<1x32xf32, #tpu.memory_space<vmem>>, %arg22: memref<1x32xf32, #tpu.memory_space<vmem>>, %arg23: memref<1x32xf32, #tpu.memory_space<vmem>>, %arg24: memref<1x32xf32, #tpu.memory_space<vmem>>, %arg25: memref<1x32xf32, #tpu.memory_space<vmem>>, %arg26: memref<32x96xf32, #tpu.memory_space<vmem>>, %arg27: memref<1x96xf32, #tpu.memory_space<vmem>>, %arg28: memref<32x32xf32, #tpu.memory_space<vmem>>, %arg29: memref<1x32xf32, #tpu.memory_space<vmem>>, %arg30: memref<32x64xf32, #tpu.memory_space<vmem>>, %arg31: memref<1x64xf32, #tpu.memory_space<vmem>>, %arg32: memref<64x32xf32, #tpu.memory_space<vmem>>, %arg33: memref<1x32xf32, #tpu.memory_space<vmem>>, %arg34: memref<1x32xf32, #tpu.memory_space<vmem>>, %arg35: memref<1x32xf32, #tpu.memory_space<vmem>>, %arg36: memref<1x32xf32, #tpu.memory_space<vmem>>, %arg37: memref<1x32xf32, #tpu.memory_space<vmem>>, %arg38: memref<32x96xf32, #tpu.memory_space<vmem>>, %arg39: memref<1x96xf32, #tpu.memory_space<vmem>>, %arg40: memref<32x32xf32, #tpu.memory_space<vmem>>, %arg41: memref<1x32xf32, #tpu.memory_space<vmem>>, %arg42: memref<32x32xf32, #tpu.memory_space<vmem>>, %arg43: memref<1x32xf32, #tpu.memory_space<vmem>>, %arg44: memref<32x64xf32, #tpu.memory_space<vmem>>, %arg45: memref<1x64xf32, #tpu.memory_space<vmem>>, %arg46: memref<32x32xf32, #tpu.memory_space<vmem>>, %arg47: memref<1x32xf32, #tpu.memory_space<vmem>>, %arg48: memref<32x64xf32, #tpu.memory_space<vmem>>, %arg49: memref<1x64xf32, #tpu.memory_space<vmem>>, %arg50: memref<64x32xf32, #tpu.memory_space<vmem>>, %arg51: memref<1x32xf32, #tpu.memory_space<vmem>>, %arg52: memref<1x32xf32, #tpu.memory_space<vmem>>, %arg53: memref<1x32xf32, #tpu.memory_space<vmem>>, %arg54: memref<1x32xf32, #tpu.memory_space<vmem>>, %arg55: memref<1x32xf32, #tpu.memory_space<vmem>>, %arg56: memref<1x32xf32, #tpu.memory_space<vmem>>, %arg57: memref<1x32xf32, #tpu.memory_space<vmem>>, %arg58: memref<32x96xf32, #tpu.memory_space<vmem>>, %arg59: memref<1x96xf32, #tpu.memory_space<vmem>>, %arg60: memref<32x32xf32, #tpu.memory_space<vmem>>, %arg61: memref<1x32xf32, #tpu.memory_space<vmem>>, %arg62: memref<32x32xf32, #tpu.memory_space<vmem>>, %arg63: memref<1x32xf32, #tpu.memory_space<vmem>>, %arg64: memref<32x64xf32, #tpu.memory_space<vmem>>, %arg65: memref<1x64xf32, #tpu.memory_space<vmem>>, %arg66: memref<32x32xf32, #tpu.memory_space<vmem>>, %arg67: memref<1x32xf32, #tpu.memory_space<vmem>>, %arg68: memref<32x64xf32, #tpu.memory_space<vmem>>, %arg69: memref<1x64xf32, #tpu.memory_space<vmem>>, %arg70: memref<64x32xf32, #tpu.memory_space<vmem>>, %arg71: memref<1x32xf32, #tpu.memory_space<vmem>>, %arg72: memref<1x32xf32, #tpu.memory_space<vmem>>, %arg73: memref<1x32xf32, #tpu.memory_space<vmem>>, %arg74: memref<1x32xf32, #tpu.memory_space<vmem>>, %arg75: memref<1x32xf32, #tpu.memory_space<vmem>>, %arg76: memref<1x32xf32, #tpu.memory_space<vmem>>, %arg77: memref<1x32xf32, #tpu.memory_space<vmem>>, %arg78: memref<8x1xf32, #tpu.memory_space<vmem>>) attributes {dimension_semantics = [], scalar_prefetch = 0 : i64, scratch_operands = 0 : i64, tpu.core_type = #tpu.core_type<tc>} {
    %c0 = arith.constant 0 : index
    %c0_0 = arith.constant 0 : index
    %0 = vector.load %arg0[%c0, %c0_0] : memref<16x4xf32, #tpu.memory_space<vmem>>, vector<16x4xf32>
    %c0_1 = arith.constant 0 : index
    %c0_2 = arith.constant 0 : index
    %1 = vector.load %arg1[%c0_1, %c0_2] : memref<16x32xf32, #tpu.memory_space<vmem>>, vector<16x32xf32>
    %c0_3 = arith.constant 0 : index
    %c0_4 = arith.constant 0 : index
    %2 = vector.load %arg2[%c0_3, %c0_4] : memref<8x32xf32, #tpu.memory_space<vmem>>, vector<8x32xf32>
    %c0_5 = arith.constant 0 : index
    %c0_6 = arith.constant 0 : index
    %3 = vector.load %arg3[%c0_5, %c0_6] : memref<4x32xf32, #tpu.memory_space<vmem>>, vector<4x32xf32>
    %c0_7 = arith.constant 0 : index
    %c0_8 = arith.constant 0 : index
    %4 = vector.load %arg4[%c0_7, %c0_8] : memref<1x32xf32, #tpu.memory_space<vmem>>, vector<1x32xf32>
    %c0_9 = arith.constant 0 : index
    %c0_10 = arith.constant 0 : index
    %5 = vector.load %arg5[%c0_9, %c0_10] : memref<16x16xf32, #tpu.memory_space<vmem>>, vector<16x16xf32>
    %c0_11 = arith.constant 0 : index
    %c0_12 = arith.constant 0 : index
    %6 = vector.load %arg6[%c0_11, %c0_12] : memref<8x8xf32, #tpu.memory_space<vmem>>, vector<8x8xf32>
    %c0_13 = arith.constant 0 : index
    %c0_14 = arith.constant 0 : index
    %7 = vector.load %arg7[%c0_13, %c0_14] : memref<8x16xf32, #tpu.memory_space<vmem>>, vector<8x16xf32>
    %c0_15 = arith.constant 0 : index
    %c0_16 = arith.constant 0 : index
    %8 = vector.load %arg8[%c0_15, %c0_16] : memref<1x32xf32, #tpu.memory_space<vmem>>, vector<1x32xf32>
    %c0_17 = arith.constant 0 : index
    %c0_18 = arith.constant 0 : index
    %9 = vector.load %arg9[%c0_17, %c0_18] : memref<1x32xf32, #tpu.memory_space<vmem>>, vector<1x32xf32>
    %c0_19 = arith.constant 0 : index
    %c0_20 = arith.constant 0 : index
    %10 = vector.load %arg10[%c0_19, %c0_20] : memref<1x32xf32, #tpu.memory_space<vmem>>, vector<1x32xf32>
    %c0_21 = arith.constant 0 : index
    %c0_22 = arith.constant 0 : index
    %11 = vector.load %arg11[%c0_21, %c0_22] : memref<1x32xf32, #tpu.memory_space<vmem>>, vector<1x32xf32>
    %c0_23 = arith.constant 0 : index
    %c0_24 = arith.constant 0 : index
    %12 = vector.load %arg12[%c0_23, %c0_24] : memref<1x32xf32, #tpu.memory_space<vmem>>, vector<1x32xf32>
    %c0_25 = arith.constant 0 : index
    %c0_26 = arith.constant 0 : index
    %13 = vector.load %arg13[%c0_25, %c0_26] : memref<1x1xf32, #tpu.memory_space<vmem>>, vector<1x1xf32>
    %cst = arith.constant dense<0.000000e+00> : vector<16x32xf32>
    %14 = tpu.matmul %0, %3, %cst {dimension_numbers = #tpu.dot_dimension_numbers<[1], [0], [0], [1], [0, 0, 1, 1], [], []>} : vector<16x4xf32>, vector<4x32xf32>, vector<16x32xf32> -> vector<16x32xf32>
    %15 = vector.broadcast %4 : vector<1x32xf32> to vector<16x32xf32>
    %16 = arith.addf %14, %15 : vector<16x32xf32>
    %17 = arith.addf %16, %1 : vector<16x32xf32>
    %c0_27 = arith.constant 0 : index
    %c0_28 = arith.constant 0 : index
    %18 = vector.load %arg14[%c0_27, %c0_28] : memref<32x96xf32, #tpu.memory_space<vmem>>, vector<32x96xf32>
    %c0_29 = arith.constant 0 : index
    %c0_30 = arith.constant 0 : index
    %19 = vector.load %arg15[%c0_29, %c0_30] : memref<1x96xf32, #tpu.memory_space<vmem>>, vector<1x96xf32>
    %c0_31 = arith.constant 0 : index
    %c0_32 = arith.constant 0 : index
    %20 = vector.load %arg16[%c0_31, %c0_32] : memref<32x32xf32, #tpu.memory_space<vmem>>, vector<32x32xf32>
    %c0_33 = arith.constant 0 : index
    %c0_34 = arith.constant 0 : index
    %21 = vector.load %arg17[%c0_33, %c0_34] : memref<1x32xf32, #tpu.memory_space<vmem>>, vector<1x32xf32>
    %c0_35 = arith.constant 0 : index
    %c0_36 = arith.constant 0 : index
    %22 = vector.load %arg18[%c0_35, %c0_36] : memref<32x64xf32, #tpu.memory_space<vmem>>, vector<32x64xf32>
    %c0_37 = arith.constant 0 : index
    %c0_38 = arith.constant 0 : index
    %23 = vector.load %arg19[%c0_37, %c0_38] : memref<1x64xf32, #tpu.memory_space<vmem>>, vector<1x64xf32>
    %c0_39 = arith.constant 0 : index
    %c0_40 = arith.constant 0 : index
    %24 = vector.load %arg20[%c0_39, %c0_40] : memref<64x32xf32, #tpu.memory_space<vmem>>, vector<64x32xf32>
    %c0_41 = arith.constant 0 : index
    %c0_42 = arith.constant 0 : index
    %25 = vector.load %arg21[%c0_41, %c0_42] : memref<1x32xf32, #tpu.memory_space<vmem>>, vector<1x32xf32>
    %c0_43 = arith.constant 0 : index
    %c0_44 = arith.constant 0 : index
    %26 = vector.load %arg22[%c0_43, %c0_44] : memref<1x32xf32, #tpu.memory_space<vmem>>, vector<1x32xf32>
    %c0_45 = arith.constant 0 : index
    %c0_46 = arith.constant 0 : index
    %27 = vector.load %arg23[%c0_45, %c0_46] : memref<1x32xf32, #tpu.memory_space<vmem>>, vector<1x32xf32>
    %c0_47 = arith.constant 0 : index
    %c0_48 = arith.constant 0 : index
    %28 = vector.load %arg24[%c0_47, %c0_48] : memref<1x32xf32, #tpu.memory_space<vmem>>, vector<1x32xf32>
    %c0_49 = arith.constant 0 : index
    %c0_50 = arith.constant 0 : index
    %29 = vector.load %arg25[%c0_49, %c0_50] : memref<1x32xf32, #tpu.memory_space<vmem>>, vector<1x32xf32>
    %cst_51 = arith.constant dense<0.000000e+00> : vector<16x96xf32>
    %30 = tpu.matmul %17, %18, %cst_51 {dimension_numbers = #tpu.dot_dimension_numbers<[1], [0], [0], [1], [0, 0, 1, 1], [], []>} : vector<16x32xf32>, vector<32x96xf32>, vector<16x96xf32> -> vector<16x96xf32>
    %31 = vector.broadcast %19 : vector<1x96xf32> to vector<16x96xf32>
    %32 = arith.addf %30, %31 : vector<16x96xf32>
    %33 = vector.extract_strided_slice %32 {offsets = [0, 0], sizes = [16, 32], strides = [1, 1]} : vector<16x96xf32> to vector<16x32xf32>
    %34 = vector.extract_strided_slice %32 {offsets = [0, 32], sizes = [16, 32], strides = [1, 1]} : vector<16x96xf32> to vector<16x32xf32>
    %35 = vector.extract_strided_slice %32 {offsets = [0, 64], sizes = [16, 32], strides = [1, 1]} : vector<16x96xf32> to vector<16x32xf32>
    %cst_52 = arith.constant 0.000000e+00 : f32
    %36 = vector.broadcast %cst_52 : f32 to vector<16x32xf32>
    %37 = vector.extract_strided_slice %33 {offsets = [0, 0], sizes = [16, 8], strides = [1, 1]} : vector<16x32xf32> to vector<16x8xf32>
    %38 = vector.extract_strided_slice %34 {offsets = [0, 0], sizes = [16, 8], strides = [1, 1]} : vector<16x32xf32> to vector<16x8xf32>
    %39 = vector.extract_strided_slice %35 {offsets = [0, 0], sizes = [16, 8], strides = [1, 1]} : vector<16x32xf32> to vector<16x8xf32>
    %cst_53 = arith.constant dense<0.000000e+00> : vector<16x16xf32>
    %40 = tpu.matmul %37, %38, %cst_53 {dimension_numbers = #tpu.dot_dimension_numbers<[1], [1], [0], [0], [0, 0, 1, 0], [], []>} : vector<16x8xf32>, vector<16x8xf32>, vector<16x16xf32> -> vector<16x16xf32>
    %41 = arith.addf %40, %5 : vector<16x16xf32>
    %cst_54 = arith.constant dense<0xFF800000> : vector<16xf32>
    %42 = vector.multi_reduction <maximumf>, %41, %cst_54 [1] : vector<16x16xf32> to vector<16xf32>
    %43 = vector.shape_cast %42 : vector<16xf32> to vector<16x1xf32>
    %44 = vector.broadcast %43 : vector<16x1xf32> to vector<16x16xf32>
    %45 = arith.subf %41, %44 : vector<16x16xf32>
    %46 = math.exp %45 : vector<16x16xf32>
    %cst_55 = arith.constant dense<0.000000e+00> : vector<16xf32>
    %47 = vector.multi_reduction <add>, %46, %cst_55 [1] : vector<16x16xf32> to vector<16xf32>
    %48 = vector.shape_cast %47 : vector<16xf32> to vector<16x1xf32>
    %49 = tpu.reciprocal %48 {approx = true} : vector<16x1xf32> -> vector<16x1xf32>
    %50 = vector.broadcast %49 : vector<16x1xf32> to vector<16x16xf32>
    %51 = arith.mulf %46, %50 : vector<16x16xf32>
    %cst_56 = arith.constant dense<0.000000e+00> : vector<16x8xf32>
    %52 = tpu.matmul %51, %39, %cst_56 {dimension_numbers = #tpu.dot_dimension_numbers<[1], [0], [0], [1], [0, 0, 1, 1], [], []>} : vector<16x16xf32>, vector<16x8xf32>, vector<16x8xf32> -> vector<16x8xf32>
    %53 = vector.extract_strided_slice %20 {offsets = [0, 0], sizes = [8, 32], strides = [1, 1]} : vector<32x32xf32> to vector<8x32xf32>
    %cst_57 = arith.constant dense<0.000000e+00> : vector<16x32xf32>
    %54 = tpu.matmul %52, %53, %cst_57 {dimension_numbers = #tpu.dot_dimension_numbers<[1], [0], [0], [1], [0, 0, 1, 1], [], []>} : vector<16x8xf32>, vector<8x32xf32>, vector<16x32xf32> -> vector<16x32xf32>
    %55 = arith.addf %36, %54 : vector<16x32xf32>
    %56 = vector.extract_strided_slice %33 {offsets = [0, 8], sizes = [16, 8], strides = [1, 1]} : vector<16x32xf32> to vector<16x8xf32>
    %57 = vector.extract_strided_slice %34 {offsets = [0, 8], sizes = [16, 8], strides = [1, 1]} : vector<16x32xf32> to vector<16x8xf32>
    %58 = vector.extract_strided_slice %35 {offsets = [0, 8], sizes = [16, 8], strides = [1, 1]} : vector<16x32xf32> to vector<16x8xf32>
    %cst_58 = arith.constant dense<0.000000e+00> : vector<16x16xf32>
    %59 = tpu.matmul %56, %57, %cst_58 {dimension_numbers = #tpu.dot_dimension_numbers<[1], [1], [0], [0], [0, 0, 1, 0], [], []>} : vector<16x8xf32>, vector<16x8xf32>, vector<16x16xf32> -> vector<16x16xf32>
    %60 = arith.addf %59, %5 : vector<16x16xf32>
    %cst_59 = arith.constant dense<0xFF800000> : vector<16xf32>
    %61 = vector.multi_reduction <maximumf>, %60, %cst_59 [1] : vector<16x16xf32> to vector<16xf32>
    %62 = vector.shape_cast %61 : vector<16xf32> to vector<16x1xf32>
    %63 = vector.broadcast %62 : vector<16x1xf32> to vector<16x16xf32>
    %64 = arith.subf %60, %63 : vector<16x16xf32>
    %65 = math.exp %64 : vector<16x16xf32>
    %cst_60 = arith.constant dense<0.000000e+00> : vector<16xf32>
    %66 = vector.multi_reduction <add>, %65, %cst_60 [1] : vector<16x16xf32> to vector<16xf32>
    %67 = vector.shape_cast %66 : vector<16xf32> to vector<16x1xf32>
    %68 = tpu.reciprocal %67 {approx = true} : vector<16x1xf32> -> vector<16x1xf32>
    %69 = vector.broadcast %68 : vector<16x1xf32> to vector<16x16xf32>
    %70 = arith.mulf %65, %69 : vector<16x16xf32>
    %cst_61 = arith.constant dense<0.000000e+00> : vector<16x8xf32>
    %71 = tpu.matmul %70, %58, %cst_61 {dimension_numbers = #tpu.dot_dimension_numbers<[1], [0], [0], [1], [0, 0, 1, 1], [], []>} : vector<16x16xf32>, vector<16x8xf32>, vector<16x8xf32> -> vector<16x8xf32>
    %72 = vector.extract_strided_slice %20 {offsets = [8, 0], sizes = [8, 32], strides = [1, 1]} : vector<32x32xf32> to vector<8x32xf32>
    %cst_62 = arith.constant dense<0.000000e+00> : vector<16x32xf32>
    %73 = tpu.matmul %71, %72, %cst_62 {dimension_numbers = #tpu.dot_dimension_numbers<[1], [0], [0], [1], [0, 0, 1, 1], [], []>} : vector<16x8xf32>, vector<8x32xf32>, vector<16x32xf32> -> vector<16x32xf32>
    %74 = arith.addf %55, %73 : vector<16x32xf32>
    %75 = vector.extract_strided_slice %33 {offsets = [0, 16], sizes = [16, 8], strides = [1, 1]} : vector<16x32xf32> to vector<16x8xf32>
    %76 = vector.extract_strided_slice %34 {offsets = [0, 16], sizes = [16, 8], strides = [1, 1]} : vector<16x32xf32> to vector<16x8xf32>
    %77 = vector.extract_strided_slice %35 {offsets = [0, 16], sizes = [16, 8], strides = [1, 1]} : vector<16x32xf32> to vector<16x8xf32>
    %cst_63 = arith.constant dense<0.000000e+00> : vector<16x16xf32>
    %78 = tpu.matmul %75, %76, %cst_63 {dimension_numbers = #tpu.dot_dimension_numbers<[1], [1], [0], [0], [0, 0, 1, 0], [], []>} : vector<16x8xf32>, vector<16x8xf32>, vector<16x16xf32> -> vector<16x16xf32>
    %79 = arith.addf %78, %5 : vector<16x16xf32>
    %cst_64 = arith.constant dense<0xFF800000> : vector<16xf32>
    %80 = vector.multi_reduction <maximumf>, %79, %cst_64 [1] : vector<16x16xf32> to vector<16xf32>
    %81 = vector.shape_cast %80 : vector<16xf32> to vector<16x1xf32>
    %82 = vector.broadcast %81 : vector<16x1xf32> to vector<16x16xf32>
    %83 = arith.subf %79, %82 : vector<16x16xf32>
    %84 = math.exp %83 : vector<16x16xf32>
    %cst_65 = arith.constant dense<0.000000e+00> : vector<16xf32>
    %85 = vector.multi_reduction <add>, %84, %cst_65 [1] : vector<16x16xf32> to vector<16xf32>
    %86 = vector.shape_cast %85 : vector<16xf32> to vector<16x1xf32>
    %87 = tpu.reciprocal %86 {approx = true} : vector<16x1xf32> -> vector<16x1xf32>
    %88 = vector.broadcast %87 : vector<16x1xf32> to vector<16x16xf32>
    %89 = arith.mulf %84, %88 : vector<16x16xf32>
    %cst_66 = arith.constant dense<0.000000e+00> : vector<16x8xf32>
    %90 = tpu.matmul %89, %77, %cst_66 {dimension_numbers = #tpu.dot_dimension_numbers<[1], [0], [0], [1], [0, 0, 1, 1], [], []>} : vector<16x16xf32>, vector<16x8xf32>, vector<16x8xf32> -> vector<16x8xf32>
    %91 = vector.extract_strided_slice %20 {offsets = [16, 0], sizes = [8, 32], strides = [1, 1]} : vector<32x32xf32> to vector<8x32xf32>
    %cst_67 = arith.constant dense<0.000000e+00> : vector<16x32xf32>
    %92 = tpu.matmul %90, %91, %cst_67 {dimension_numbers = #tpu.dot_dimension_numbers<[1], [0], [0], [1], [0, 0, 1, 1], [], []>} : vector<16x8xf32>, vector<8x32xf32>, vector<16x32xf32> -> vector<16x32xf32>
    %93 = arith.addf %74, %92 : vector<16x32xf32>
    %94 = vector.extract_strided_slice %33 {offsets = [0, 24], sizes = [16, 8], strides = [1, 1]} : vector<16x32xf32> to vector<16x8xf32>
    %95 = vector.extract_strided_slice %34 {offsets = [0, 24], sizes = [16, 8], strides = [1, 1]} : vector<16x32xf32> to vector<16x8xf32>
    %96 = vector.extract_strided_slice %35 {offsets = [0, 24], sizes = [16, 8], strides = [1, 1]} : vector<16x32xf32> to vector<16x8xf32>
    %cst_68 = arith.constant dense<0.000000e+00> : vector<16x16xf32>
    %97 = tpu.matmul %94, %95, %cst_68 {dimension_numbers = #tpu.dot_dimension_numbers<[1], [1], [0], [0], [0, 0, 1, 0], [], []>} : vector<16x8xf32>, vector<16x8xf32>, vector<16x16xf32> -> vector<16x16xf32>
    %98 = arith.addf %97, %5 : vector<16x16xf32>
    %cst_69 = arith.constant dense<0xFF800000> : vector<16xf32>
    %99 = vector.multi_reduction <maximumf>, %98, %cst_69 [1] : vector<16x16xf32> to vector<16xf32>
    %100 = vector.shape_cast %99 : vector<16xf32> to vector<16x1xf32>
    %101 = vector.broadcast %100 : vector<16x1xf32> to vector<16x16xf32>
    %102 = arith.subf %98, %101 : vector<16x16xf32>
    %103 = math.exp %102 : vector<16x16xf32>
    %cst_70 = arith.constant dense<0.000000e+00> : vector<16xf32>
    %104 = vector.multi_reduction <add>, %103, %cst_70 [1] : vector<16x16xf32> to vector<16xf32>
    %105 = vector.shape_cast %104 : vector<16xf32> to vector<16x1xf32>
    %106 = tpu.reciprocal %105 {approx = true} : vector<16x1xf32> -> vector<16x1xf32>
    %107 = vector.broadcast %106 : vector<16x1xf32> to vector<16x16xf32>
    %108 = arith.mulf %103, %107 : vector<16x16xf32>
    %cst_71 = arith.constant dense<0.000000e+00> : vector<16x8xf32>
    %109 = tpu.matmul %108, %96, %cst_71 {dimension_numbers = #tpu.dot_dimension_numbers<[1], [0], [0], [1], [0, 0, 1, 1], [], []>} : vector<16x16xf32>, vector<16x8xf32>, vector<16x8xf32> -> vector<16x8xf32>
    %110 = vector.extract_strided_slice %20 {offsets = [24, 0], sizes = [8, 32], strides = [1, 1]} : vector<32x32xf32> to vector<8x32xf32>
    %cst_72 = arith.constant dense<0.000000e+00> : vector<16x32xf32>
    %111 = tpu.matmul %109, %110, %cst_72 {dimension_numbers = #tpu.dot_dimension_numbers<[1], [0], [0], [1], [0, 0, 1, 1], [], []>} : vector<16x8xf32>, vector<8x32xf32>, vector<16x32xf32> -> vector<16x32xf32>
    %112 = arith.addf %93, %111 : vector<16x32xf32>
    %113 = vector.broadcast %21 : vector<1x32xf32> to vector<16x32xf32>
    %114 = arith.addf %112, %113 : vector<16x32xf32>
    %115 = arith.addf %17, %114 : vector<16x32xf32>
    %cst_73 = arith.constant dense<0.000000e+00> : vector<16xf32>
    %116 = vector.multi_reduction <add>, %115, %cst_73 [1] : vector<16x32xf32> to vector<16xf32>
    %117 = vector.shape_cast %116 : vector<16xf32> to vector<16x1xf32>
    %cst_74 = arith.constant 3.200000e+01 : f32
    %118 = vector.broadcast %cst_74 : f32 to vector<16x1xf32>
    %119 = arith.divf %117, %118 : vector<16x1xf32>
    %120 = vector.broadcast %119 : vector<16x1xf32> to vector<16x32xf32>
    %121 = arith.subf %115, %120 : vector<16x32xf32>
    %122 = arith.mulf %121, %121 : vector<16x32xf32>
    %cst_75 = arith.constant dense<0.000000e+00> : vector<16xf32>
    %123 = vector.multi_reduction <add>, %122, %cst_75 [1] : vector<16x32xf32> to vector<16xf32>
    %124 = vector.shape_cast %123 : vector<16xf32> to vector<16x1xf32>
    %cst_76 = arith.constant 3.200000e+01 : f32
    %125 = vector.broadcast %cst_76 : f32 to vector<16x1xf32>
    %126 = arith.divf %124, %125 : vector<16x1xf32>
    %cst_77 = arith.constant 9.99999974E-6 : f32
    %127 = vector.broadcast %cst_77 : f32 to vector<16x1xf32>
    %128 = arith.addf %126, %127 : vector<16x1xf32>
    %129 = math.rsqrt %128 : vector<16x1xf32>
    %130 = vector.broadcast %129 : vector<16x1xf32> to vector<16x32xf32>
    %131 = arith.mulf %121, %130 : vector<16x32xf32>
    %132 = vector.broadcast %26 : vector<1x32xf32> to vector<16x32xf32>
    %133 = arith.mulf %131, %132 : vector<16x32xf32>
    %134 = vector.broadcast %27 : vector<1x32xf32> to vector<16x32xf32>
    %135 = arith.addf %133, %134 : vector<16x32xf32>
    %cst_78 = arith.constant dense<0.000000e+00> : vector<16x64xf32>
    %136 = tpu.matmul %135, %22, %cst_78 {dimension_numbers = #tpu.dot_dimension_numbers<[1], [0], [0], [1], [0, 0, 1, 1], [], []>} : vector<16x32xf32>, vector<32x64xf32>, vector<16x64xf32> -> vector<16x64xf32>
    %137 = vector.broadcast %23 : vector<1x64xf32> to vector<16x64xf32>
    %138 = arith.addf %136, %137 : vector<16x64xf32>
    %cst_79 = arith.constant 0.000000e+00 : f32
    %139 = vector.broadcast %cst_79 : f32 to vector<16x64xf32>
    %140 = arith.maximumf %138, %139 : vector<16x64xf32>
    %cst_80 = arith.constant dense<0.000000e+00> : vector<16x32xf32>
    %141 = tpu.matmul %140, %24, %cst_80 {dimension_numbers = #tpu.dot_dimension_numbers<[1], [0], [0], [1], [0, 0, 1, 1], [], []>} : vector<16x64xf32>, vector<64x32xf32>, vector<16x32xf32> -> vector<16x32xf32>
    %142 = vector.broadcast %25 : vector<1x32xf32> to vector<16x32xf32>
    %143 = arith.addf %141, %142 : vector<16x32xf32>
    %144 = arith.addf %135, %143 : vector<16x32xf32>
    %cst_81 = arith.constant dense<0.000000e+00> : vector<16xf32>
    %145 = vector.multi_reduction <add>, %144, %cst_81 [1] : vector<16x32xf32> to vector<16xf32>
    %146 = vector.shape_cast %145 : vector<16xf32> to vector<16x1xf32>
    %cst_82 = arith.constant 3.200000e+01 : f32
    %147 = vector.broadcast %cst_82 : f32 to vector<16x1xf32>
    %148 = arith.divf %146, %147 : vector<16x1xf32>
    %149 = vector.broadcast %148 : vector<16x1xf32> to vector<16x32xf32>
    %150 = arith.subf %144, %149 : vector<16x32xf32>
    %151 = arith.mulf %150, %150 : vector<16x32xf32>
    %cst_83 = arith.constant dense<0.000000e+00> : vector<16xf32>
    %152 = vector.multi_reduction <add>, %151, %cst_83 [1] : vector<16x32xf32> to vector<16xf32>
    %153 = vector.shape_cast %152 : vector<16xf32> to vector<16x1xf32>
    %cst_84 = arith.constant 3.200000e+01 : f32
    %154 = vector.broadcast %cst_84 : f32 to vector<16x1xf32>
    %155 = arith.divf %153, %154 : vector<16x1xf32>
    %cst_85 = arith.constant 9.99999974E-6 : f32
    %156 = vector.broadcast %cst_85 : f32 to vector<16x1xf32>
    %157 = arith.addf %155, %156 : vector<16x1xf32>
    %158 = math.rsqrt %157 : vector<16x1xf32>
    %159 = vector.broadcast %158 : vector<16x1xf32> to vector<16x32xf32>
    %160 = arith.mulf %150, %159 : vector<16x32xf32>
    %161 = vector.broadcast %28 : vector<1x32xf32> to vector<16x32xf32>
    %162 = arith.mulf %160, %161 : vector<16x32xf32>
    %163 = vector.broadcast %29 : vector<1x32xf32> to vector<16x32xf32>
    %164 = arith.addf %162, %163 : vector<16x32xf32>
    %c0_86 = arith.constant 0 : index
    %c0_87 = arith.constant 0 : index
    %165 = vector.load %arg26[%c0_86, %c0_87] : memref<32x96xf32, #tpu.memory_space<vmem>>, vector<32x96xf32>
    %c0_88 = arith.constant 0 : index
    %c0_89 = arith.constant 0 : index
    %166 = vector.load %arg27[%c0_88, %c0_89] : memref<1x96xf32, #tpu.memory_space<vmem>>, vector<1x96xf32>
    %c0_90 = arith.constant 0 : index
    %c0_91 = arith.constant 0 : index
    %167 = vector.load %arg28[%c0_90, %c0_91] : memref<32x32xf32, #tpu.memory_space<vmem>>, vector<32x32xf32>
    %c0_92 = arith.constant 0 : index
    %c0_93 = arith.constant 0 : index
    %168 = vector.load %arg29[%c0_92, %c0_93] : memref<1x32xf32, #tpu.memory_space<vmem>>, vector<1x32xf32>
    %c0_94 = arith.constant 0 : index
    %c0_95 = arith.constant 0 : index
    %169 = vector.load %arg30[%c0_94, %c0_95] : memref<32x64xf32, #tpu.memory_space<vmem>>, vector<32x64xf32>
    %c0_96 = arith.constant 0 : index
    %c0_97 = arith.constant 0 : index
    %170 = vector.load %arg31[%c0_96, %c0_97] : memref<1x64xf32, #tpu.memory_space<vmem>>, vector<1x64xf32>
    %c0_98 = arith.constant 0 : index
    %c0_99 = arith.constant 0 : index
    %171 = vector.load %arg32[%c0_98, %c0_99] : memref<64x32xf32, #tpu.memory_space<vmem>>, vector<64x32xf32>
    %c0_100 = arith.constant 0 : index
    %c0_101 = arith.constant 0 : index
    %172 = vector.load %arg33[%c0_100, %c0_101] : memref<1x32xf32, #tpu.memory_space<vmem>>, vector<1x32xf32>
    %c0_102 = arith.constant 0 : index
    %c0_103 = arith.constant 0 : index
    %173 = vector.load %arg34[%c0_102, %c0_103] : memref<1x32xf32, #tpu.memory_space<vmem>>, vector<1x32xf32>
    %c0_104 = arith.constant 0 : index
    %c0_105 = arith.constant 0 : index
    %174 = vector.load %arg35[%c0_104, %c0_105] : memref<1x32xf32, #tpu.memory_space<vmem>>, vector<1x32xf32>
    %c0_106 = arith.constant 0 : index
    %c0_107 = arith.constant 0 : index
    %175 = vector.load %arg36[%c0_106, %c0_107] : memref<1x32xf32, #tpu.memory_space<vmem>>, vector<1x32xf32>
    %c0_108 = arith.constant 0 : index
    %c0_109 = arith.constant 0 : index
    %176 = vector.load %arg37[%c0_108, %c0_109] : memref<1x32xf32, #tpu.memory_space<vmem>>, vector<1x32xf32>
    %cst_110 = arith.constant dense<0.000000e+00> : vector<16x96xf32>
    %177 = tpu.matmul %164, %165, %cst_110 {dimension_numbers = #tpu.dot_dimension_numbers<[1], [0], [0], [1], [0, 0, 1, 1], [], []>} : vector<16x32xf32>, vector<32x96xf32>, vector<16x96xf32> -> vector<16x96xf32>
    %178 = vector.broadcast %166 : vector<1x96xf32> to vector<16x96xf32>
    %179 = arith.addf %177, %178 : vector<16x96xf32>
    %180 = vector.extract_strided_slice %179 {offsets = [0, 0], sizes = [16, 32], strides = [1, 1]} : vector<16x96xf32> to vector<16x32xf32>
    %181 = vector.extract_strided_slice %179 {offsets = [0, 32], sizes = [16, 32], strides = [1, 1]} : vector<16x96xf32> to vector<16x32xf32>
    %182 = vector.extract_strided_slice %179 {offsets = [0, 64], sizes = [16, 32], strides = [1, 1]} : vector<16x96xf32> to vector<16x32xf32>
    %cst_111 = arith.constant 0.000000e+00 : f32
    %183 = vector.broadcast %cst_111 : f32 to vector<16x32xf32>
    %184 = vector.extract_strided_slice %180 {offsets = [0, 0], sizes = [16, 8], strides = [1, 1]} : vector<16x32xf32> to vector<16x8xf32>
    %185 = vector.extract_strided_slice %181 {offsets = [0, 0], sizes = [16, 8], strides = [1, 1]} : vector<16x32xf32> to vector<16x8xf32>
    %186 = vector.extract_strided_slice %182 {offsets = [0, 0], sizes = [16, 8], strides = [1, 1]} : vector<16x32xf32> to vector<16x8xf32>
    %cst_112 = arith.constant dense<0.000000e+00> : vector<16x16xf32>
    %187 = tpu.matmul %184, %185, %cst_112 {dimension_numbers = #tpu.dot_dimension_numbers<[1], [1], [0], [0], [0, 0, 1, 0], [], []>} : vector<16x8xf32>, vector<16x8xf32>, vector<16x16xf32> -> vector<16x16xf32>
    %188 = arith.addf %187, %5 : vector<16x16xf32>
    %cst_113 = arith.constant dense<0xFF800000> : vector<16xf32>
    %189 = vector.multi_reduction <maximumf>, %188, %cst_113 [1] : vector<16x16xf32> to vector<16xf32>
    %190 = vector.shape_cast %189 : vector<16xf32> to vector<16x1xf32>
    %191 = vector.broadcast %190 : vector<16x1xf32> to vector<16x16xf32>
    %192 = arith.subf %188, %191 : vector<16x16xf32>
    %193 = math.exp %192 : vector<16x16xf32>
    %cst_114 = arith.constant dense<0.000000e+00> : vector<16xf32>
    %194 = vector.multi_reduction <add>, %193, %cst_114 [1] : vector<16x16xf32> to vector<16xf32>
    %195 = vector.shape_cast %194 : vector<16xf32> to vector<16x1xf32>
    %196 = tpu.reciprocal %195 {approx = true} : vector<16x1xf32> -> vector<16x1xf32>
    %197 = vector.broadcast %196 : vector<16x1xf32> to vector<16x16xf32>
    %198 = arith.mulf %193, %197 : vector<16x16xf32>
    %cst_115 = arith.constant dense<0.000000e+00> : vector<16x8xf32>
    %199 = tpu.matmul %198, %186, %cst_115 {dimension_numbers = #tpu.dot_dimension_numbers<[1], [0], [0], [1], [0, 0, 1, 1], [], []>} : vector<16x16xf32>, vector<16x8xf32>, vector<16x8xf32> -> vector<16x8xf32>
    %200 = vector.extract_strided_slice %167 {offsets = [0, 0], sizes = [8, 32], strides = [1, 1]} : vector<32x32xf32> to vector<8x32xf32>
    %cst_116 = arith.constant dense<0.000000e+00> : vector<16x32xf32>
    %201 = tpu.matmul %199, %200, %cst_116 {dimension_numbers = #tpu.dot_dimension_numbers<[1], [0], [0], [1], [0, 0, 1, 1], [], []>} : vector<16x8xf32>, vector<8x32xf32>, vector<16x32xf32> -> vector<16x32xf32>
    %202 = arith.addf %183, %201 : vector<16x32xf32>
    %203 = vector.extract_strided_slice %180 {offsets = [0, 8], sizes = [16, 8], strides = [1, 1]} : vector<16x32xf32> to vector<16x8xf32>
    %204 = vector.extract_strided_slice %181 {offsets = [0, 8], sizes = [16, 8], strides = [1, 1]} : vector<16x32xf32> to vector<16x8xf32>
    %205 = vector.extract_strided_slice %182 {offsets = [0, 8], sizes = [16, 8], strides = [1, 1]} : vector<16x32xf32> to vector<16x8xf32>
    %cst_117 = arith.constant dense<0.000000e+00> : vector<16x16xf32>
    %206 = tpu.matmul %203, %204, %cst_117 {dimension_numbers = #tpu.dot_dimension_numbers<[1], [1], [0], [0], [0, 0, 1, 0], [], []>} : vector<16x8xf32>, vector<16x8xf32>, vector<16x16xf32> -> vector<16x16xf32>
    %207 = arith.addf %206, %5 : vector<16x16xf32>
    %cst_118 = arith.constant dense<0xFF800000> : vector<16xf32>
    %208 = vector.multi_reduction <maximumf>, %207, %cst_118 [1] : vector<16x16xf32> to vector<16xf32>
    %209 = vector.shape_cast %208 : vector<16xf32> to vector<16x1xf32>
    %210 = vector.broadcast %209 : vector<16x1xf32> to vector<16x16xf32>
    %211 = arith.subf %207, %210 : vector<16x16xf32>
    %212 = math.exp %211 : vector<16x16xf32>
    %cst_119 = arith.constant dense<0.000000e+00> : vector<16xf32>
    %213 = vector.multi_reduction <add>, %212, %cst_119 [1] : vector<16x16xf32> to vector<16xf32>
    %214 = vector.shape_cast %213 : vector<16xf32> to vector<16x1xf32>
    %215 = tpu.reciprocal %214 {approx = true} : vector<16x1xf32> -> vector<16x1xf32>
    %216 = vector.broadcast %215 : vector<16x1xf32> to vector<16x16xf32>
    %217 = arith.mulf %212, %216 : vector<16x16xf32>
    %cst_120 = arith.constant dense<0.000000e+00> : vector<16x8xf32>
    %218 = tpu.matmul %217, %205, %cst_120 {dimension_numbers = #tpu.dot_dimension_numbers<[1], [0], [0], [1], [0, 0, 1, 1], [], []>} : vector<16x16xf32>, vector<16x8xf32>, vector<16x8xf32> -> vector<16x8xf32>
    %219 = vector.extract_strided_slice %167 {offsets = [8, 0], sizes = [8, 32], strides = [1, 1]} : vector<32x32xf32> to vector<8x32xf32>
    %cst_121 = arith.constant dense<0.000000e+00> : vector<16x32xf32>
    %220 = tpu.matmul %218, %219, %cst_121 {dimension_numbers = #tpu.dot_dimension_numbers<[1], [0], [0], [1], [0, 0, 1, 1], [], []>} : vector<16x8xf32>, vector<8x32xf32>, vector<16x32xf32> -> vector<16x32xf32>
    %221 = arith.addf %202, %220 : vector<16x32xf32>
    %222 = vector.extract_strided_slice %180 {offsets = [0, 16], sizes = [16, 8], strides = [1, 1]} : vector<16x32xf32> to vector<16x8xf32>
    %223 = vector.extract_strided_slice %181 {offsets = [0, 16], sizes = [16, 8], strides = [1, 1]} : vector<16x32xf32> to vector<16x8xf32>
    %224 = vector.extract_strided_slice %182 {offsets = [0, 16], sizes = [16, 8], strides = [1, 1]} : vector<16x32xf32> to vector<16x8xf32>
    %cst_122 = arith.constant dense<0.000000e+00> : vector<16x16xf32>
    %225 = tpu.matmul %222, %223, %cst_122 {dimension_numbers = #tpu.dot_dimension_numbers<[1], [1], [0], [0], [0, 0, 1, 0], [], []>} : vector<16x8xf32>, vector<16x8xf32>, vector<16x16xf32> -> vector<16x16xf32>
    %226 = arith.addf %225, %5 : vector<16x16xf32>
    %cst_123 = arith.constant dense<0xFF800000> : vector<16xf32>
    %227 = vector.multi_reduction <maximumf>, %226, %cst_123 [1] : vector<16x16xf32> to vector<16xf32>
    %228 = vector.shape_cast %227 : vector<16xf32> to vector<16x1xf32>
    %229 = vector.broadcast %228 : vector<16x1xf32> to vector<16x16xf32>
    %230 = arith.subf %226, %229 : vector<16x16xf32>
    %231 = math.exp %230 : vector<16x16xf32>
    %cst_124 = arith.constant dense<0.000000e+00> : vector<16xf32>
    %232 = vector.multi_reduction <add>, %231, %cst_124 [1] : vector<16x16xf32> to vector<16xf32>
    %233 = vector.shape_cast %232 : vector<16xf32> to vector<16x1xf32>
    %234 = tpu.reciprocal %233 {approx = true} : vector<16x1xf32> -> vector<16x1xf32>
    %235 = vector.broadcast %234 : vector<16x1xf32> to vector<16x16xf32>
    %236 = arith.mulf %231, %235 : vector<16x16xf32>
    %cst_125 = arith.constant dense<0.000000e+00> : vector<16x8xf32>
    %237 = tpu.matmul %236, %224, %cst_125 {dimension_numbers = #tpu.dot_dimension_numbers<[1], [0], [0], [1], [0, 0, 1, 1], [], []>} : vector<16x16xf32>, vector<16x8xf32>, vector<16x8xf32> -> vector<16x8xf32>
    %238 = vector.extract_strided_slice %167 {offsets = [16, 0], sizes = [8, 32], strides = [1, 1]} : vector<32x32xf32> to vector<8x32xf32>
    %cst_126 = arith.constant dense<0.000000e+00> : vector<16x32xf32>
    %239 = tpu.matmul %237, %238, %cst_126 {dimension_numbers = #tpu.dot_dimension_numbers<[1], [0], [0], [1], [0, 0, 1, 1], [], []>} : vector<16x8xf32>, vector<8x32xf32>, vector<16x32xf32> -> vector<16x32xf32>
    %240 = arith.addf %221, %239 : vector<16x32xf32>
    %241 = vector.extract_strided_slice %180 {offsets = [0, 24], sizes = [16, 8], strides = [1, 1]} : vector<16x32xf32> to vector<16x8xf32>
    %242 = vector.extract_strided_slice %181 {offsets = [0, 24], sizes = [16, 8], strides = [1, 1]} : vector<16x32xf32> to vector<16x8xf32>
    %243 = vector.extract_strided_slice %182 {offsets = [0, 24], sizes = [16, 8], strides = [1, 1]} : vector<16x32xf32> to vector<16x8xf32>
    %cst_127 = arith.constant dense<0.000000e+00> : vector<16x16xf32>
    %244 = tpu.matmul %241, %242, %cst_127 {dimension_numbers = #tpu.dot_dimension_numbers<[1], [1], [0], [0], [0, 0, 1, 0], [], []>} : vector<16x8xf32>, vector<16x8xf32>, vector<16x16xf32> -> vector<16x16xf32>
    %245 = arith.addf %244, %5 : vector<16x16xf32>
    %cst_128 = arith.constant dense<0xFF800000> : vector<16xf32>
    %246 = vector.multi_reduction <maximumf>, %245, %cst_128 [1] : vector<16x16xf32> to vector<16xf32>
    %247 = vector.shape_cast %246 : vector<16xf32> to vector<16x1xf32>
    %248 = vector.broadcast %247 : vector<16x1xf32> to vector<16x16xf32>
    %249 = arith.subf %245, %248 : vector<16x16xf32>
    %250 = math.exp %249 : vector<16x16xf32>
    %cst_129 = arith.constant dense<0.000000e+00> : vector<16xf32>
    %251 = vector.multi_reduction <add>, %250, %cst_129 [1] : vector<16x16xf32> to vector<16xf32>
    %252 = vector.shape_cast %251 : vector<16xf32> to vector<16x1xf32>
    %253 = tpu.reciprocal %252 {approx = true} : vector<16x1xf32> -> vector<16x1xf32>
    %254 = vector.broadcast %253 : vector<16x1xf32> to vector<16x16xf32>
    %255 = arith.mulf %250, %254 : vector<16x16xf32>
    %cst_130 = arith.constant dense<0.000000e+00> : vector<16x8xf32>
    %256 = tpu.matmul %255, %243, %cst_130 {dimension_numbers = #tpu.dot_dimension_numbers<[1], [0], [0], [1], [0, 0, 1, 1], [], []>} : vector<16x16xf32>, vector<16x8xf32>, vector<16x8xf32> -> vector<16x8xf32>
    %257 = vector.extract_strided_slice %167 {offsets = [24, 0], sizes = [8, 32], strides = [1, 1]} : vector<32x32xf32> to vector<8x32xf32>
    %cst_131 = arith.constant dense<0.000000e+00> : vector<16x32xf32>
    %258 = tpu.matmul %256, %257, %cst_131 {dimension_numbers = #tpu.dot_dimension_numbers<[1], [0], [0], [1], [0, 0, 1, 1], [], []>} : vector<16x8xf32>, vector<8x32xf32>, vector<16x32xf32> -> vector<16x32xf32>
    %259 = arith.addf %240, %258 : vector<16x32xf32>
    %260 = vector.broadcast %168 : vector<1x32xf32> to vector<16x32xf32>
    %261 = arith.addf %259, %260 : vector<16x32xf32>
    %262 = arith.addf %164, %261 : vector<16x32xf32>
    %cst_132 = arith.constant dense<0.000000e+00> : vector<16xf32>
    %263 = vector.multi_reduction <add>, %262, %cst_132 [1] : vector<16x32xf32> to vector<16xf32>
    %264 = vector.shape_cast %263 : vector<16xf32> to vector<16x1xf32>
    %cst_133 = arith.constant 3.200000e+01 : f32
    %265 = vector.broadcast %cst_133 : f32 to vector<16x1xf32>
    %266 = arith.divf %264, %265 : vector<16x1xf32>
    %267 = vector.broadcast %266 : vector<16x1xf32> to vector<16x32xf32>
    %268 = arith.subf %262, %267 : vector<16x32xf32>
    %269 = arith.mulf %268, %268 : vector<16x32xf32>
    %cst_134 = arith.constant dense<0.000000e+00> : vector<16xf32>
    %270 = vector.multi_reduction <add>, %269, %cst_134 [1] : vector<16x32xf32> to vector<16xf32>
    %271 = vector.shape_cast %270 : vector<16xf32> to vector<16x1xf32>
    %cst_135 = arith.constant 3.200000e+01 : f32
    %272 = vector.broadcast %cst_135 : f32 to vector<16x1xf32>
    %273 = arith.divf %271, %272 : vector<16x1xf32>
    %cst_136 = arith.constant 9.99999974E-6 : f32
    %274 = vector.broadcast %cst_136 : f32 to vector<16x1xf32>
    %275 = arith.addf %273, %274 : vector<16x1xf32>
    %276 = math.rsqrt %275 : vector<16x1xf32>
    %277 = vector.broadcast %276 : vector<16x1xf32> to vector<16x32xf32>
    %278 = arith.mulf %268, %277 : vector<16x32xf32>
    %279 = vector.broadcast %173 : vector<1x32xf32> to vector<16x32xf32>
    %280 = arith.mulf %278, %279 : vector<16x32xf32>
    %281 = vector.broadcast %174 : vector<1x32xf32> to vector<16x32xf32>
    %282 = arith.addf %280, %281 : vector<16x32xf32>
    %cst_137 = arith.constant dense<0.000000e+00> : vector<16x64xf32>
    %283 = tpu.matmul %282, %169, %cst_137 {dimension_numbers = #tpu.dot_dimension_numbers<[1], [0], [0], [1], [0, 0, 1, 1], [], []>} : vector<16x32xf32>, vector<32x64xf32>, vector<16x64xf32> -> vector<16x64xf32>
    %284 = vector.broadcast %170 : vector<1x64xf32> to vector<16x64xf32>
    %285 = arith.addf %283, %284 : vector<16x64xf32>
    %cst_138 = arith.constant 0.000000e+00 : f32
    %286 = vector.broadcast %cst_138 : f32 to vector<16x64xf32>
    %287 = arith.maximumf %285, %286 : vector<16x64xf32>
    %cst_139 = arith.constant dense<0.000000e+00> : vector<16x32xf32>
    %288 = tpu.matmul %287, %171, %cst_139 {dimension_numbers = #tpu.dot_dimension_numbers<[1], [0], [0], [1], [0, 0, 1, 1], [], []>} : vector<16x64xf32>, vector<64x32xf32>, vector<16x32xf32> -> vector<16x32xf32>
    %289 = vector.broadcast %172 : vector<1x32xf32> to vector<16x32xf32>
    %290 = arith.addf %288, %289 : vector<16x32xf32>
    %291 = arith.addf %282, %290 : vector<16x32xf32>
    %cst_140 = arith.constant dense<0.000000e+00> : vector<16xf32>
    %292 = vector.multi_reduction <add>, %291, %cst_140 [1] : vector<16x32xf32> to vector<16xf32>
    %293 = vector.shape_cast %292 : vector<16xf32> to vector<16x1xf32>
    %cst_141 = arith.constant 3.200000e+01 : f32
    %294 = vector.broadcast %cst_141 : f32 to vector<16x1xf32>
    %295 = arith.divf %293, %294 : vector<16x1xf32>
    %296 = vector.broadcast %295 : vector<16x1xf32> to vector<16x32xf32>
    %297 = arith.subf %291, %296 : vector<16x32xf32>
    %298 = arith.mulf %297, %297 : vector<16x32xf32>
    %cst_142 = arith.constant dense<0.000000e+00> : vector<16xf32>
    %299 = vector.multi_reduction <add>, %298, %cst_142 [1] : vector<16x32xf32> to vector<16xf32>
    %300 = vector.shape_cast %299 : vector<16xf32> to vector<16x1xf32>
    %cst_143 = arith.constant 3.200000e+01 : f32
    %301 = vector.broadcast %cst_143 : f32 to vector<16x1xf32>
    %302 = arith.divf %300, %301 : vector<16x1xf32>
    %cst_144 = arith.constant 9.99999974E-6 : f32
    %303 = vector.broadcast %cst_144 : f32 to vector<16x1xf32>
    %304 = arith.addf %302, %303 : vector<16x1xf32>
    %305 = math.rsqrt %304 : vector<16x1xf32>
    %306 = vector.broadcast %305 : vector<16x1xf32> to vector<16x32xf32>
    %307 = arith.mulf %297, %306 : vector<16x32xf32>
    %308 = vector.broadcast %175 : vector<1x32xf32> to vector<16x32xf32>
    %309 = arith.mulf %307, %308 : vector<16x32xf32>
    %310 = vector.broadcast %176 : vector<1x32xf32> to vector<16x32xf32>
    %311 = arith.addf %309, %310 : vector<16x32xf32>
    %cst_145 = arith.constant dense<0.000000e+00> : vector<16xf32>
    %312 = vector.multi_reduction <add>, %311, %cst_145 [1] : vector<16x32xf32> to vector<16xf32>
    %313 = vector.shape_cast %312 : vector<16xf32> to vector<16x1xf32>
    %cst_146 = arith.constant 3.200000e+01 : f32
    %314 = vector.broadcast %cst_146 : f32 to vector<16x1xf32>
    %315 = arith.divf %313, %314 : vector<16x1xf32>
    %316 = vector.broadcast %315 : vector<16x1xf32> to vector<16x32xf32>
    %317 = arith.subf %311, %316 : vector<16x32xf32>
    %318 = arith.mulf %317, %317 : vector<16x32xf32>
    %cst_147 = arith.constant dense<0.000000e+00> : vector<16xf32>
    %319 = vector.multi_reduction <add>, %318, %cst_147 [1] : vector<16x32xf32> to vector<16xf32>
    %320 = vector.shape_cast %319 : vector<16xf32> to vector<16x1xf32>
    %cst_148 = arith.constant 3.200000e+01 : f32
    %321 = vector.broadcast %cst_148 : f32 to vector<16x1xf32>
    %322 = arith.divf %320, %321 : vector<16x1xf32>
    %cst_149 = arith.constant 9.99999974E-6 : f32
    %323 = vector.broadcast %cst_149 : f32 to vector<16x1xf32>
    %324 = arith.addf %322, %323 : vector<16x1xf32>
    %325 = math.rsqrt %324 : vector<16x1xf32>
    %326 = vector.broadcast %325 : vector<16x1xf32> to vector<16x32xf32>
    %327 = arith.mulf %317, %326 : vector<16x32xf32>
    %328 = vector.broadcast %8 : vector<1x32xf32> to vector<16x32xf32>
    %329 = arith.mulf %327, %328 : vector<16x32xf32>
    %330 = vector.broadcast %9 : vector<1x32xf32> to vector<16x32xf32>
    %331 = arith.addf %329, %330 : vector<16x32xf32>
    %332 = vector.broadcast %4 : vector<1x32xf32> to vector<8x32xf32>
    %333 = arith.addf %2, %332 : vector<8x32xf32>
    %c0_150 = arith.constant 0 : index
    %c0_151 = arith.constant 0 : index
    %334 = vector.load %arg38[%c0_150, %c0_151] : memref<32x96xf32, #tpu.memory_space<vmem>>, vector<32x96xf32>
    %c0_152 = arith.constant 0 : index
    %c0_153 = arith.constant 0 : index
    %335 = vector.load %arg39[%c0_152, %c0_153] : memref<1x96xf32, #tpu.memory_space<vmem>>, vector<1x96xf32>
    %c0_154 = arith.constant 0 : index
    %c0_155 = arith.constant 0 : index
    %336 = vector.load %arg40[%c0_154, %c0_155] : memref<32x32xf32, #tpu.memory_space<vmem>>, vector<32x32xf32>
    %c0_156 = arith.constant 0 : index
    %c0_157 = arith.constant 0 : index
    %337 = vector.load %arg41[%c0_156, %c0_157] : memref<1x32xf32, #tpu.memory_space<vmem>>, vector<1x32xf32>
    %c0_158 = arith.constant 0 : index
    %c0_159 = arith.constant 0 : index
    %338 = vector.load %arg42[%c0_158, %c0_159] : memref<32x32xf32, #tpu.memory_space<vmem>>, vector<32x32xf32>
    %c0_160 = arith.constant 0 : index
    %c0_161 = arith.constant 0 : index
    %339 = vector.load %arg43[%c0_160, %c0_161] : memref<1x32xf32, #tpu.memory_space<vmem>>, vector<1x32xf32>
    %c0_162 = arith.constant 0 : index
    %c0_163 = arith.constant 0 : index
    %340 = vector.load %arg44[%c0_162, %c0_163] : memref<32x64xf32, #tpu.memory_space<vmem>>, vector<32x64xf32>
    %c0_164 = arith.constant 0 : index
    %c0_165 = arith.constant 0 : index
    %341 = vector.load %arg45[%c0_164, %c0_165] : memref<1x64xf32, #tpu.memory_space<vmem>>, vector<1x64xf32>
    %c0_166 = arith.constant 0 : index
    %c0_167 = arith.constant 0 : index
    %342 = vector.load %arg46[%c0_166, %c0_167] : memref<32x32xf32, #tpu.memory_space<vmem>>, vector<32x32xf32>
    %c0_168 = arith.constant 0 : index
    %c0_169 = arith.constant 0 : index
    %343 = vector.load %arg47[%c0_168, %c0_169] : memref<1x32xf32, #tpu.memory_space<vmem>>, vector<1x32xf32>
    %c0_170 = arith.constant 0 : index
    %c0_171 = arith.constant 0 : index
    %344 = vector.load %arg48[%c0_170, %c0_171] : memref<32x64xf32, #tpu.memory_space<vmem>>, vector<32x64xf32>
    %c0_172 = arith.constant 0 : index
    %c0_173 = arith.constant 0 : index
    %345 = vector.load %arg49[%c0_172, %c0_173] : memref<1x64xf32, #tpu.memory_space<vmem>>, vector<1x64xf32>
    %c0_174 = arith.constant 0 : index
    %c0_175 = arith.constant 0 : index
    %346 = vector.load %arg50[%c0_174, %c0_175] : memref<64x32xf32, #tpu.memory_space<vmem>>, vector<64x32xf32>
    %c0_176 = arith.constant 0 : index
    %c0_177 = arith.constant 0 : index
    %347 = vector.load %arg51[%c0_176, %c0_177] : memref<1x32xf32, #tpu.memory_space<vmem>>, vector<1x32xf32>
    %c0_178 = arith.constant 0 : index
    %c0_179 = arith.constant 0 : index
    %348 = vector.load %arg52[%c0_178, %c0_179] : memref<1x32xf32, #tpu.memory_space<vmem>>, vector<1x32xf32>
    %c0_180 = arith.constant 0 : index
    %c0_181 = arith.constant 0 : index
    %349 = vector.load %arg53[%c0_180, %c0_181] : memref<1x32xf32, #tpu.memory_space<vmem>>, vector<1x32xf32>
    %c0_182 = arith.constant 0 : index
    %c0_183 = arith.constant 0 : index
    %350 = vector.load %arg54[%c0_182, %c0_183] : memref<1x32xf32, #tpu.memory_space<vmem>>, vector<1x32xf32>
    %c0_184 = arith.constant 0 : index
    %c0_185 = arith.constant 0 : index
    %351 = vector.load %arg55[%c0_184, %c0_185] : memref<1x32xf32, #tpu.memory_space<vmem>>, vector<1x32xf32>
    %c0_186 = arith.constant 0 : index
    %c0_187 = arith.constant 0 : index
    %352 = vector.load %arg56[%c0_186, %c0_187] : memref<1x32xf32, #tpu.memory_space<vmem>>, vector<1x32xf32>
    %c0_188 = arith.constant 0 : index
    %c0_189 = arith.constant 0 : index
    %353 = vector.load %arg57[%c0_188, %c0_189] : memref<1x32xf32, #tpu.memory_space<vmem>>, vector<1x32xf32>
    %cst_190 = arith.constant dense<0.000000e+00> : vector<8x96xf32>
    %354 = tpu.matmul %333, %334, %cst_190 {dimension_numbers = #tpu.dot_dimension_numbers<[1], [0], [0], [1], [0, 0, 1, 1], [], []>} : vector<8x32xf32>, vector<32x96xf32>, vector<8x96xf32> -> vector<8x96xf32>
    %355 = vector.broadcast %335 : vector<1x96xf32> to vector<8x96xf32>
    %356 = arith.addf %354, %355 : vector<8x96xf32>
    %357 = vector.extract_strided_slice %356 {offsets = [0, 0], sizes = [8, 32], strides = [1, 1]} : vector<8x96xf32> to vector<8x32xf32>
    %358 = vector.extract_strided_slice %356 {offsets = [0, 32], sizes = [8, 32], strides = [1, 1]} : vector<8x96xf32> to vector<8x32xf32>
    %359 = vector.extract_strided_slice %356 {offsets = [0, 64], sizes = [8, 32], strides = [1, 1]} : vector<8x96xf32> to vector<8x32xf32>
    %cst_191 = arith.constant 0.000000e+00 : f32
    %360 = vector.broadcast %cst_191 : f32 to vector<8x32xf32>
    %361 = vector.extract_strided_slice %357 {offsets = [0, 0], sizes = [8, 8], strides = [1, 1]} : vector<8x32xf32> to vector<8x8xf32>
    %362 = vector.extract_strided_slice %358 {offsets = [0, 0], sizes = [8, 8], strides = [1, 1]} : vector<8x32xf32> to vector<8x8xf32>
    %363 = vector.extract_strided_slice %359 {offsets = [0, 0], sizes = [8, 8], strides = [1, 1]} : vector<8x32xf32> to vector<8x8xf32>
    %cst_192 = arith.constant dense<0.000000e+00> : vector<8x8xf32>
    %364 = tpu.matmul %361, %362, %cst_192 {dimension_numbers = #tpu.dot_dimension_numbers<[1], [1], [0], [0], [0, 0, 1, 0], [], []>} : vector<8x8xf32>, vector<8x8xf32>, vector<8x8xf32> -> vector<8x8xf32>
    %365 = arith.addf %364, %6 : vector<8x8xf32>
    %cst_193 = arith.constant dense<0xFF800000> : vector<8xf32>
    %366 = vector.multi_reduction <maximumf>, %365, %cst_193 [1] : vector<8x8xf32> to vector<8xf32>
    %367 = vector.shape_cast %366 : vector<8xf32> to vector<8x1xf32>
    %368 = vector.broadcast %367 : vector<8x1xf32> to vector<8x8xf32>
    %369 = arith.subf %365, %368 : vector<8x8xf32>
    %370 = math.exp %369 : vector<8x8xf32>
    %cst_194 = arith.constant dense<0.000000e+00> : vector<8xf32>
    %371 = vector.multi_reduction <add>, %370, %cst_194 [1] : vector<8x8xf32> to vector<8xf32>
    %372 = vector.shape_cast %371 : vector<8xf32> to vector<8x1xf32>
    %373 = tpu.reciprocal %372 {approx = true} : vector<8x1xf32> -> vector<8x1xf32>
    %374 = vector.broadcast %373 : vector<8x1xf32> to vector<8x8xf32>
    %375 = arith.mulf %370, %374 : vector<8x8xf32>
    %cst_195 = arith.constant dense<0.000000e+00> : vector<8x8xf32>
    %376 = tpu.matmul %375, %363, %cst_195 {dimension_numbers = #tpu.dot_dimension_numbers<[1], [0], [0], [1], [0, 0, 1, 1], [], []>} : vector<8x8xf32>, vector<8x8xf32>, vector<8x8xf32> -> vector<8x8xf32>
    %377 = vector.extract_strided_slice %336 {offsets = [0, 0], sizes = [8, 32], strides = [1, 1]} : vector<32x32xf32> to vector<8x32xf32>
    %cst_196 = arith.constant dense<0.000000e+00> : vector<8x32xf32>
    %378 = tpu.matmul %376, %377, %cst_196 {dimension_numbers = #tpu.dot_dimension_numbers<[1], [0], [0], [1], [0, 0, 1, 1], [], []>} : vector<8x8xf32>, vector<8x32xf32>, vector<8x32xf32> -> vector<8x32xf32>
    %379 = arith.addf %360, %378 : vector<8x32xf32>
    %380 = vector.extract_strided_slice %357 {offsets = [0, 8], sizes = [8, 8], strides = [1, 1]} : vector<8x32xf32> to vector<8x8xf32>
    %381 = vector.extract_strided_slice %358 {offsets = [0, 8], sizes = [8, 8], strides = [1, 1]} : vector<8x32xf32> to vector<8x8xf32>
    %382 = vector.extract_strided_slice %359 {offsets = [0, 8], sizes = [8, 8], strides = [1, 1]} : vector<8x32xf32> to vector<8x8xf32>
    %cst_197 = arith.constant dense<0.000000e+00> : vector<8x8xf32>
    %383 = tpu.matmul %380, %381, %cst_197 {dimension_numbers = #tpu.dot_dimension_numbers<[1], [1], [0], [0], [0, 0, 1, 0], [], []>} : vector<8x8xf32>, vector<8x8xf32>, vector<8x8xf32> -> vector<8x8xf32>
    %384 = arith.addf %383, %6 : vector<8x8xf32>
    %cst_198 = arith.constant dense<0xFF800000> : vector<8xf32>
    %385 = vector.multi_reduction <maximumf>, %384, %cst_198 [1] : vector<8x8xf32> to vector<8xf32>
    %386 = vector.shape_cast %385 : vector<8xf32> to vector<8x1xf32>
    %387 = vector.broadcast %386 : vector<8x1xf32> to vector<8x8xf32>
    %388 = arith.subf %384, %387 : vector<8x8xf32>
    %389 = math.exp %388 : vector<8x8xf32>
    %cst_199 = arith.constant dense<0.000000e+00> : vector<8xf32>
    %390 = vector.multi_reduction <add>, %389, %cst_199 [1] : vector<8x8xf32> to vector<8xf32>
    %391 = vector.shape_cast %390 : vector<8xf32> to vector<8x1xf32>
    %392 = tpu.reciprocal %391 {approx = true} : vector<8x1xf32> -> vector<8x1xf32>
    %393 = vector.broadcast %392 : vector<8x1xf32> to vector<8x8xf32>
    %394 = arith.mulf %389, %393 : vector<8x8xf32>
    %cst_200 = arith.constant dense<0.000000e+00> : vector<8x8xf32>
    %395 = tpu.matmul %394, %382, %cst_200 {dimension_numbers = #tpu.dot_dimension_numbers<[1], [0], [0], [1], [0, 0, 1, 1], [], []>} : vector<8x8xf32>, vector<8x8xf32>, vector<8x8xf32> -> vector<8x8xf32>
    %396 = vector.extract_strided_slice %336 {offsets = [8, 0], sizes = [8, 32], strides = [1, 1]} : vector<32x32xf32> to vector<8x32xf32>
    %cst_201 = arith.constant dense<0.000000e+00> : vector<8x32xf32>
    %397 = tpu.matmul %395, %396, %cst_201 {dimension_numbers = #tpu.dot_dimension_numbers<[1], [0], [0], [1], [0, 0, 1, 1], [], []>} : vector<8x8xf32>, vector<8x32xf32>, vector<8x32xf32> -> vector<8x32xf32>
    %398 = arith.addf %379, %397 : vector<8x32xf32>
    %399 = vector.extract_strided_slice %357 {offsets = [0, 16], sizes = [8, 8], strides = [1, 1]} : vector<8x32xf32> to vector<8x8xf32>
    %400 = vector.extract_strided_slice %358 {offsets = [0, 16], sizes = [8, 8], strides = [1, 1]} : vector<8x32xf32> to vector<8x8xf32>
    %401 = vector.extract_strided_slice %359 {offsets = [0, 16], sizes = [8, 8], strides = [1, 1]} : vector<8x32xf32> to vector<8x8xf32>
    %cst_202 = arith.constant dense<0.000000e+00> : vector<8x8xf32>
    %402 = tpu.matmul %399, %400, %cst_202 {dimension_numbers = #tpu.dot_dimension_numbers<[1], [1], [0], [0], [0, 0, 1, 0], [], []>} : vector<8x8xf32>, vector<8x8xf32>, vector<8x8xf32> -> vector<8x8xf32>
    %403 = arith.addf %402, %6 : vector<8x8xf32>
    %cst_203 = arith.constant dense<0xFF800000> : vector<8xf32>
    %404 = vector.multi_reduction <maximumf>, %403, %cst_203 [1] : vector<8x8xf32> to vector<8xf32>
    %405 = vector.shape_cast %404 : vector<8xf32> to vector<8x1xf32>
    %406 = vector.broadcast %405 : vector<8x1xf32> to vector<8x8xf32>
    %407 = arith.subf %403, %406 : vector<8x8xf32>
    %408 = math.exp %407 : vector<8x8xf32>
    %cst_204 = arith.constant dense<0.000000e+00> : vector<8xf32>
    %409 = vector.multi_reduction <add>, %408, %cst_204 [1] : vector<8x8xf32> to vector<8xf32>
    %410 = vector.shape_cast %409 : vector<8xf32> to vector<8x1xf32>
    %411 = tpu.reciprocal %410 {approx = true} : vector<8x1xf32> -> vector<8x1xf32>
    %412 = vector.broadcast %411 : vector<8x1xf32> to vector<8x8xf32>
    %413 = arith.mulf %408, %412 : vector<8x8xf32>
    %cst_205 = arith.constant dense<0.000000e+00> : vector<8x8xf32>
    %414 = tpu.matmul %413, %401, %cst_205 {dimension_numbers = #tpu.dot_dimension_numbers<[1], [0], [0], [1], [0, 0, 1, 1], [], []>} : vector<8x8xf32>, vector<8x8xf32>, vector<8x8xf32> -> vector<8x8xf32>
    %415 = vector.extract_strided_slice %336 {offsets = [16, 0], sizes = [8, 32], strides = [1, 1]} : vector<32x32xf32> to vector<8x32xf32>
    %cst_206 = arith.constant dense<0.000000e+00> : vector<8x32xf32>
    %416 = tpu.matmul %414, %415, %cst_206 {dimension_numbers = #tpu.dot_dimension_numbers<[1], [0], [0], [1], [0, 0, 1, 1], [], []>} : vector<8x8xf32>, vector<8x32xf32>, vector<8x32xf32> -> vector<8x32xf32>
    %417 = arith.addf %398, %416 : vector<8x32xf32>
    %418 = vector.extract_strided_slice %357 {offsets = [0, 24], sizes = [8, 8], strides = [1, 1]} : vector<8x32xf32> to vector<8x8xf32>
    %419 = vector.extract_strided_slice %358 {offsets = [0, 24], sizes = [8, 8], strides = [1, 1]} : vector<8x32xf32> to vector<8x8xf32>
    %420 = vector.extract_strided_slice %359 {offsets = [0, 24], sizes = [8, 8], strides = [1, 1]} : vector<8x32xf32> to vector<8x8xf32>
    %cst_207 = arith.constant dense<0.000000e+00> : vector<8x8xf32>
    %421 = tpu.matmul %418, %419, %cst_207 {dimension_numbers = #tpu.dot_dimension_numbers<[1], [1], [0], [0], [0, 0, 1, 0], [], []>} : vector<8x8xf32>, vector<8x8xf32>, vector<8x8xf32> -> vector<8x8xf32>
    %422 = arith.addf %421, %6 : vector<8x8xf32>
    %cst_208 = arith.constant dense<0xFF800000> : vector<8xf32>
    %423 = vector.multi_reduction <maximumf>, %422, %cst_208 [1] : vector<8x8xf32> to vector<8xf32>
    %424 = vector.shape_cast %423 : vector<8xf32> to vector<8x1xf32>
    %425 = vector.broadcast %424 : vector<8x1xf32> to vector<8x8xf32>
    %426 = arith.subf %422, %425 : vector<8x8xf32>
    %427 = math.exp %426 : vector<8x8xf32>
    %cst_209 = arith.constant dense<0.000000e+00> : vector<8xf32>
    %428 = vector.multi_reduction <add>, %427, %cst_209 [1] : vector<8x8xf32> to vector<8xf32>
    %429 = vector.shape_cast %428 : vector<8xf32> to vector<8x1xf32>
    %430 = tpu.reciprocal %429 {approx = true} : vector<8x1xf32> -> vector<8x1xf32>
    %431 = vector.broadcast %430 : vector<8x1xf32> to vector<8x8xf32>
    %432 = arith.mulf %427, %431 : vector<8x8xf32>
    %cst_210 = arith.constant dense<0.000000e+00> : vector<8x8xf32>
    %433 = tpu.matmul %432, %420, %cst_210 {dimension_numbers = #tpu.dot_dimension_numbers<[1], [0], [0], [1], [0, 0, 1, 1], [], []>} : vector<8x8xf32>, vector<8x8xf32>, vector<8x8xf32> -> vector<8x8xf32>
    %434 = vector.extract_strided_slice %336 {offsets = [24, 0], sizes = [8, 32], strides = [1, 1]} : vector<32x32xf32> to vector<8x32xf32>
    %cst_211 = arith.constant dense<0.000000e+00> : vector<8x32xf32>
    %435 = tpu.matmul %433, %434, %cst_211 {dimension_numbers = #tpu.dot_dimension_numbers<[1], [0], [0], [1], [0, 0, 1, 1], [], []>} : vector<8x8xf32>, vector<8x32xf32>, vector<8x32xf32> -> vector<8x32xf32>
    %436 = arith.addf %417, %435 : vector<8x32xf32>
    %437 = vector.broadcast %337 : vector<1x32xf32> to vector<8x32xf32>
    %438 = arith.addf %436, %437 : vector<8x32xf32>
    %439 = arith.addf %333, %438 : vector<8x32xf32>
    %cst_212 = arith.constant dense<0.000000e+00> : vector<8xf32>
    %440 = vector.multi_reduction <add>, %439, %cst_212 [1] : vector<8x32xf32> to vector<8xf32>
    %441 = vector.shape_cast %440 : vector<8xf32> to vector<8x1xf32>
    %cst_213 = arith.constant 3.200000e+01 : f32
    %442 = vector.broadcast %cst_213 : f32 to vector<8x1xf32>
    %443 = arith.divf %441, %442 : vector<8x1xf32>
    %444 = vector.broadcast %443 : vector<8x1xf32> to vector<8x32xf32>
    %445 = arith.subf %439, %444 : vector<8x32xf32>
    %446 = arith.mulf %445, %445 : vector<8x32xf32>
    %cst_214 = arith.constant dense<0.000000e+00> : vector<8xf32>
    %447 = vector.multi_reduction <add>, %446, %cst_214 [1] : vector<8x32xf32> to vector<8xf32>
    %448 = vector.shape_cast %447 : vector<8xf32> to vector<8x1xf32>
    %cst_215 = arith.constant 3.200000e+01 : f32
    %449 = vector.broadcast %cst_215 : f32 to vector<8x1xf32>
    %450 = arith.divf %448, %449 : vector<8x1xf32>
    %cst_216 = arith.constant 9.99999974E-6 : f32
    %451 = vector.broadcast %cst_216 : f32 to vector<8x1xf32>
    %452 = arith.addf %450, %451 : vector<8x1xf32>
    %453 = math.rsqrt %452 : vector<8x1xf32>
    %454 = vector.broadcast %453 : vector<8x1xf32> to vector<8x32xf32>
    %455 = arith.mulf %445, %454 : vector<8x32xf32>
    %456 = vector.broadcast %348 : vector<1x32xf32> to vector<8x32xf32>
    %457 = arith.mulf %455, %456 : vector<8x32xf32>
    %458 = vector.broadcast %349 : vector<1x32xf32> to vector<8x32xf32>
    %459 = arith.addf %457, %458 : vector<8x32xf32>
    %cst_217 = arith.constant dense<0.000000e+00> : vector<8x32xf32>
    %460 = tpu.matmul %459, %338, %cst_217 {dimension_numbers = #tpu.dot_dimension_numbers<[1], [0], [0], [1], [0, 0, 1, 1], [], []>} : vector<8x32xf32>, vector<32x32xf32>, vector<8x32xf32> -> vector<8x32xf32>
    %461 = vector.broadcast %339 : vector<1x32xf32> to vector<8x32xf32>
    %462 = arith.addf %460, %461 : vector<8x32xf32>
    %cst_218 = arith.constant dense<0.000000e+00> : vector<16x64xf32>
    %463 = tpu.matmul %331, %340, %cst_218 {dimension_numbers = #tpu.dot_dimension_numbers<[1], [0], [0], [1], [0, 0, 1, 1], [], []>} : vector<16x32xf32>, vector<32x64xf32>, vector<16x64xf32> -> vector<16x64xf32>
    %464 = vector.broadcast %341 : vector<1x64xf32> to vector<16x64xf32>
    %465 = arith.addf %463, %464 : vector<16x64xf32>
    %466 = vector.extract_strided_slice %465 {offsets = [0, 0], sizes = [16, 32], strides = [1, 1]} : vector<16x64xf32> to vector<16x32xf32>
    %467 = vector.extract_strided_slice %465 {offsets = [0, 32], sizes = [16, 32], strides = [1, 1]} : vector<16x64xf32> to vector<16x32xf32>
    %cst_219 = arith.constant 0.000000e+00 : f32
    %468 = vector.broadcast %cst_219 : f32 to vector<8x32xf32>
    %469 = vector.extract_strided_slice %462 {offsets = [0, 0], sizes = [8, 8], strides = [1, 1]} : vector<8x32xf32> to vector<8x8xf32>
    %470 = vector.extract_strided_slice %466 {offsets = [0, 0], sizes = [16, 8], strides = [1, 1]} : vector<16x32xf32> to vector<16x8xf32>
    %471 = vector.extract_strided_slice %467 {offsets = [0, 0], sizes = [16, 8], strides = [1, 1]} : vector<16x32xf32> to vector<16x8xf32>
    %cst_220 = arith.constant dense<0.000000e+00> : vector<8x16xf32>
    %472 = tpu.matmul %469, %470, %cst_220 {dimension_numbers = #tpu.dot_dimension_numbers<[1], [1], [0], [0], [0, 0, 1, 0], [], []>} : vector<8x8xf32>, vector<16x8xf32>, vector<8x16xf32> -> vector<8x16xf32>
    %473 = arith.addf %472, %7 : vector<8x16xf32>
    %cst_221 = arith.constant dense<0xFF800000> : vector<8xf32>
    %474 = vector.multi_reduction <maximumf>, %473, %cst_221 [1] : vector<8x16xf32> to vector<8xf32>
    %475 = vector.shape_cast %474 : vector<8xf32> to vector<8x1xf32>
    %476 = vector.broadcast %475 : vector<8x1xf32> to vector<8x16xf32>
    %477 = arith.subf %473, %476 : vector<8x16xf32>
    %478 = math.exp %477 : vector<8x16xf32>
    %cst_222 = arith.constant dense<0.000000e+00> : vector<8xf32>
    %479 = vector.multi_reduction <add>, %478, %cst_222 [1] : vector<8x16xf32> to vector<8xf32>
    %480 = vector.shape_cast %479 : vector<8xf32> to vector<8x1xf32>
    %481 = tpu.reciprocal %480 {approx = true} : vector<8x1xf32> -> vector<8x1xf32>
    %482 = vector.broadcast %481 : vector<8x1xf32> to vector<8x16xf32>
    %483 = arith.mulf %478, %482 : vector<8x16xf32>
    %cst_223 = arith.constant dense<0.000000e+00> : vector<8x8xf32>
    %484 = tpu.matmul %483, %471, %cst_223 {dimension_numbers = #tpu.dot_dimension_numbers<[1], [0], [0], [1], [0, 0, 1, 1], [], []>} : vector<8x16xf32>, vector<16x8xf32>, vector<8x8xf32> -> vector<8x8xf32>
    %485 = vector.extract_strided_slice %342 {offsets = [0, 0], sizes = [8, 32], strides = [1, 1]} : vector<32x32xf32> to vector<8x32xf32>
    %cst_224 = arith.constant dense<0.000000e+00> : vector<8x32xf32>
    %486 = tpu.matmul %484, %485, %cst_224 {dimension_numbers = #tpu.dot_dimension_numbers<[1], [0], [0], [1], [0, 0, 1, 1], [], []>} : vector<8x8xf32>, vector<8x32xf32>, vector<8x32xf32> -> vector<8x32xf32>
    %487 = arith.addf %468, %486 : vector<8x32xf32>
    %488 = vector.extract_strided_slice %462 {offsets = [0, 8], sizes = [8, 8], strides = [1, 1]} : vector<8x32xf32> to vector<8x8xf32>
    %489 = vector.extract_strided_slice %466 {offsets = [0, 8], sizes = [16, 8], strides = [1, 1]} : vector<16x32xf32> to vector<16x8xf32>
    %490 = vector.extract_strided_slice %467 {offsets = [0, 8], sizes = [16, 8], strides = [1, 1]} : vector<16x32xf32> to vector<16x8xf32>
    %cst_225 = arith.constant dense<0.000000e+00> : vector<8x16xf32>
    %491 = tpu.matmul %488, %489, %cst_225 {dimension_numbers = #tpu.dot_dimension_numbers<[1], [1], [0], [0], [0, 0, 1, 0], [], []>} : vector<8x8xf32>, vector<16x8xf32>, vector<8x16xf32> -> vector<8x16xf32>
    %492 = arith.addf %491, %7 : vector<8x16xf32>
    %cst_226 = arith.constant dense<0xFF800000> : vector<8xf32>
    %493 = vector.multi_reduction <maximumf>, %492, %cst_226 [1] : vector<8x16xf32> to vector<8xf32>
    %494 = vector.shape_cast %493 : vector<8xf32> to vector<8x1xf32>
    %495 = vector.broadcast %494 : vector<8x1xf32> to vector<8x16xf32>
    %496 = arith.subf %492, %495 : vector<8x16xf32>
    %497 = math.exp %496 : vector<8x16xf32>
    %cst_227 = arith.constant dense<0.000000e+00> : vector<8xf32>
    %498 = vector.multi_reduction <add>, %497, %cst_227 [1] : vector<8x16xf32> to vector<8xf32>
    %499 = vector.shape_cast %498 : vector<8xf32> to vector<8x1xf32>
    %500 = tpu.reciprocal %499 {approx = true} : vector<8x1xf32> -> vector<8x1xf32>
    %501 = vector.broadcast %500 : vector<8x1xf32> to vector<8x16xf32>
    %502 = arith.mulf %497, %501 : vector<8x16xf32>
    %cst_228 = arith.constant dense<0.000000e+00> : vector<8x8xf32>
    %503 = tpu.matmul %502, %490, %cst_228 {dimension_numbers = #tpu.dot_dimension_numbers<[1], [0], [0], [1], [0, 0, 1, 1], [], []>} : vector<8x16xf32>, vector<16x8xf32>, vector<8x8xf32> -> vector<8x8xf32>
    %504 = vector.extract_strided_slice %342 {offsets = [8, 0], sizes = [8, 32], strides = [1, 1]} : vector<32x32xf32> to vector<8x32xf32>
    %cst_229 = arith.constant dense<0.000000e+00> : vector<8x32xf32>
    %505 = tpu.matmul %503, %504, %cst_229 {dimension_numbers = #tpu.dot_dimension_numbers<[1], [0], [0], [1], [0, 0, 1, 1], [], []>} : vector<8x8xf32>, vector<8x32xf32>, vector<8x32xf32> -> vector<8x32xf32>
    %506 = arith.addf %487, %505 : vector<8x32xf32>
    %507 = vector.extract_strided_slice %462 {offsets = [0, 16], sizes = [8, 8], strides = [1, 1]} : vector<8x32xf32> to vector<8x8xf32>
    %508 = vector.extract_strided_slice %466 {offsets = [0, 16], sizes = [16, 8], strides = [1, 1]} : vector<16x32xf32> to vector<16x8xf32>
    %509 = vector.extract_strided_slice %467 {offsets = [0, 16], sizes = [16, 8], strides = [1, 1]} : vector<16x32xf32> to vector<16x8xf32>
    %cst_230 = arith.constant dense<0.000000e+00> : vector<8x16xf32>
    %510 = tpu.matmul %507, %508, %cst_230 {dimension_numbers = #tpu.dot_dimension_numbers<[1], [1], [0], [0], [0, 0, 1, 0], [], []>} : vector<8x8xf32>, vector<16x8xf32>, vector<8x16xf32> -> vector<8x16xf32>
    %511 = arith.addf %510, %7 : vector<8x16xf32>
    %cst_231 = arith.constant dense<0xFF800000> : vector<8xf32>
    %512 = vector.multi_reduction <maximumf>, %511, %cst_231 [1] : vector<8x16xf32> to vector<8xf32>
    %513 = vector.shape_cast %512 : vector<8xf32> to vector<8x1xf32>
    %514 = vector.broadcast %513 : vector<8x1xf32> to vector<8x16xf32>
    %515 = arith.subf %511, %514 : vector<8x16xf32>
    %516 = math.exp %515 : vector<8x16xf32>
    %cst_232 = arith.constant dense<0.000000e+00> : vector<8xf32>
    %517 = vector.multi_reduction <add>, %516, %cst_232 [1] : vector<8x16xf32> to vector<8xf32>
    %518 = vector.shape_cast %517 : vector<8xf32> to vector<8x1xf32>
    %519 = tpu.reciprocal %518 {approx = true} : vector<8x1xf32> -> vector<8x1xf32>
    %520 = vector.broadcast %519 : vector<8x1xf32> to vector<8x16xf32>
    %521 = arith.mulf %516, %520 : vector<8x16xf32>
    %cst_233 = arith.constant dense<0.000000e+00> : vector<8x8xf32>
    %522 = tpu.matmul %521, %509, %cst_233 {dimension_numbers = #tpu.dot_dimension_numbers<[1], [0], [0], [1], [0, 0, 1, 1], [], []>} : vector<8x16xf32>, vector<16x8xf32>, vector<8x8xf32> -> vector<8x8xf32>
    %523 = vector.extract_strided_slice %342 {offsets = [16, 0], sizes = [8, 32], strides = [1, 1]} : vector<32x32xf32> to vector<8x32xf32>
    %cst_234 = arith.constant dense<0.000000e+00> : vector<8x32xf32>
    %524 = tpu.matmul %522, %523, %cst_234 {dimension_numbers = #tpu.dot_dimension_numbers<[1], [0], [0], [1], [0, 0, 1, 1], [], []>} : vector<8x8xf32>, vector<8x32xf32>, vector<8x32xf32> -> vector<8x32xf32>
    %525 = arith.addf %506, %524 : vector<8x32xf32>
    %526 = vector.extract_strided_slice %462 {offsets = [0, 24], sizes = [8, 8], strides = [1, 1]} : vector<8x32xf32> to vector<8x8xf32>
    %527 = vector.extract_strided_slice %466 {offsets = [0, 24], sizes = [16, 8], strides = [1, 1]} : vector<16x32xf32> to vector<16x8xf32>
    %528 = vector.extract_strided_slice %467 {offsets = [0, 24], sizes = [16, 8], strides = [1, 1]} : vector<16x32xf32> to vector<16x8xf32>
    %cst_235 = arith.constant dense<0.000000e+00> : vector<8x16xf32>
    %529 = tpu.matmul %526, %527, %cst_235 {dimension_numbers = #tpu.dot_dimension_numbers<[1], [1], [0], [0], [0, 0, 1, 0], [], []>} : vector<8x8xf32>, vector<16x8xf32>, vector<8x16xf32> -> vector<8x16xf32>
    %530 = arith.addf %529, %7 : vector<8x16xf32>
    %cst_236 = arith.constant dense<0xFF800000> : vector<8xf32>
    %531 = vector.multi_reduction <maximumf>, %530, %cst_236 [1] : vector<8x16xf32> to vector<8xf32>
    %532 = vector.shape_cast %531 : vector<8xf32> to vector<8x1xf32>
    %533 = vector.broadcast %532 : vector<8x1xf32> to vector<8x16xf32>
    %534 = arith.subf %530, %533 : vector<8x16xf32>
    %535 = math.exp %534 : vector<8x16xf32>
    %cst_237 = arith.constant dense<0.000000e+00> : vector<8xf32>
    %536 = vector.multi_reduction <add>, %535, %cst_237 [1] : vector<8x16xf32> to vector<8xf32>
    %537 = vector.shape_cast %536 : vector<8xf32> to vector<8x1xf32>
    %538 = tpu.reciprocal %537 {approx = true} : vector<8x1xf32> -> vector<8x1xf32>
    %539 = vector.broadcast %538 : vector<8x1xf32> to vector<8x16xf32>
    %540 = arith.mulf %535, %539 : vector<8x16xf32>
    %cst_238 = arith.constant dense<0.000000e+00> : vector<8x8xf32>
    %541 = tpu.matmul %540, %528, %cst_238 {dimension_numbers = #tpu.dot_dimension_numbers<[1], [0], [0], [1], [0, 0, 1, 1], [], []>} : vector<8x16xf32>, vector<16x8xf32>, vector<8x8xf32> -> vector<8x8xf32>
    %542 = vector.extract_strided_slice %342 {offsets = [24, 0], sizes = [8, 32], strides = [1, 1]} : vector<32x32xf32> to vector<8x32xf32>
    %cst_239 = arith.constant dense<0.000000e+00> : vector<8x32xf32>
    %543 = tpu.matmul %541, %542, %cst_239 {dimension_numbers = #tpu.dot_dimension_numbers<[1], [0], [0], [1], [0, 0, 1, 1], [], []>} : vector<8x8xf32>, vector<8x32xf32>, vector<8x32xf32> -> vector<8x32xf32>
    %544 = arith.addf %525, %543 : vector<8x32xf32>
    %545 = vector.broadcast %343 : vector<1x32xf32> to vector<8x32xf32>
    %546 = arith.addf %544, %545 : vector<8x32xf32>
    %547 = arith.addf %459, %546 : vector<8x32xf32>
    %cst_240 = arith.constant dense<0.000000e+00> : vector<8xf32>
    %548 = vector.multi_reduction <add>, %547, %cst_240 [1] : vector<8x32xf32> to vector<8xf32>
    %549 = vector.shape_cast %548 : vector<8xf32> to vector<8x1xf32>
    %cst_241 = arith.constant 3.200000e+01 : f32
    %550 = vector.broadcast %cst_241 : f32 to vector<8x1xf32>
    %551 = arith.divf %549, %550 : vector<8x1xf32>
    %552 = vector.broadcast %551 : vector<8x1xf32> to vector<8x32xf32>
    %553 = arith.subf %547, %552 : vector<8x32xf32>
    %554 = arith.mulf %553, %553 : vector<8x32xf32>
    %cst_242 = arith.constant dense<0.000000e+00> : vector<8xf32>
    %555 = vector.multi_reduction <add>, %554, %cst_242 [1] : vector<8x32xf32> to vector<8xf32>
    %556 = vector.shape_cast %555 : vector<8xf32> to vector<8x1xf32>
    %cst_243 = arith.constant 3.200000e+01 : f32
    %557 = vector.broadcast %cst_243 : f32 to vector<8x1xf32>
    %558 = arith.divf %556, %557 : vector<8x1xf32>
    %cst_244 = arith.constant 9.99999974E-6 : f32
    %559 = vector.broadcast %cst_244 : f32 to vector<8x1xf32>
    %560 = arith.addf %558, %559 : vector<8x1xf32>
    %561 = math.rsqrt %560 : vector<8x1xf32>
    %562 = vector.broadcast %561 : vector<8x1xf32> to vector<8x32xf32>
    %563 = arith.mulf %553, %562 : vector<8x32xf32>
    %564 = vector.broadcast %350 : vector<1x32xf32> to vector<8x32xf32>
    %565 = arith.mulf %563, %564 : vector<8x32xf32>
    %566 = vector.broadcast %351 : vector<1x32xf32> to vector<8x32xf32>
    %567 = arith.addf %565, %566 : vector<8x32xf32>
    %cst_245 = arith.constant dense<0.000000e+00> : vector<8x64xf32>
    %568 = tpu.matmul %567, %344, %cst_245 {dimension_numbers = #tpu.dot_dimension_numbers<[1], [0], [0], [1], [0, 0, 1, 1], [], []>} : vector<8x32xf32>, vector<32x64xf32>, vector<8x64xf32> -> vector<8x64xf32>
    %569 = vector.broadcast %345 : vector<1x64xf32> to vector<8x64xf32>
    %570 = arith.addf %568, %569 : vector<8x64xf32>
    %cst_246 = arith.constant 0.000000e+00 : f32
    %571 = vector.broadcast %cst_246 : f32 to vector<8x64xf32>
    %572 = arith.maximumf %570, %571 : vector<8x64xf32>
    %cst_247 = arith.constant dense<0.000000e+00> : vector<8x32xf32>
    %573 = tpu.matmul %572, %346, %cst_247 {dimension_numbers = #tpu.dot_dimension_numbers<[1], [0], [0], [1], [0, 0, 1, 1], [], []>} : vector<8x64xf32>, vector<64x32xf32>, vector<8x32xf32> -> vector<8x32xf32>
    %574 = vector.broadcast %347 : vector<1x32xf32> to vector<8x32xf32>
    %575 = arith.addf %573, %574 : vector<8x32xf32>
    %576 = arith.addf %567, %575 : vector<8x32xf32>
    %cst_248 = arith.constant dense<0.000000e+00> : vector<8xf32>
    %577 = vector.multi_reduction <add>, %576, %cst_248 [1] : vector<8x32xf32> to vector<8xf32>
    %578 = vector.shape_cast %577 : vector<8xf32> to vector<8x1xf32>
    %cst_249 = arith.constant 3.200000e+01 : f32
    %579 = vector.broadcast %cst_249 : f32 to vector<8x1xf32>
    %580 = arith.divf %578, %579 : vector<8x1xf32>
    %581 = vector.broadcast %580 : vector<8x1xf32> to vector<8x32xf32>
    %582 = arith.subf %576, %581 : vector<8x32xf32>
    %583 = arith.mulf %582, %582 : vector<8x32xf32>
    %cst_250 = arith.constant dense<0.000000e+00> : vector<8xf32>
    %584 = vector.multi_reduction <add>, %583, %cst_250 [1] : vector<8x32xf32> to vector<8xf32>
    %585 = vector.shape_cast %584 : vector<8xf32> to vector<8x1xf32>
    %cst_251 = arith.constant 3.200000e+01 : f32
    %586 = vector.broadcast %cst_251 : f32 to vector<8x1xf32>
    %587 = arith.divf %585, %586 : vector<8x1xf32>
    %cst_252 = arith.constant 9.99999974E-6 : f32
    %588 = vector.broadcast %cst_252 : f32 to vector<8x1xf32>
    %589 = arith.addf %587, %588 : vector<8x1xf32>
    %590 = math.rsqrt %589 : vector<8x1xf32>
    %591 = vector.broadcast %590 : vector<8x1xf32> to vector<8x32xf32>
    %592 = arith.mulf %582, %591 : vector<8x32xf32>
    %593 = vector.broadcast %352 : vector<1x32xf32> to vector<8x32xf32>
    %594 = arith.mulf %592, %593 : vector<8x32xf32>
    %595 = vector.broadcast %353 : vector<1x32xf32> to vector<8x32xf32>
    %596 = arith.addf %594, %595 : vector<8x32xf32>
    %c0_253 = arith.constant 0 : index
    %c0_254 = arith.constant 0 : index
    %597 = vector.load %arg58[%c0_253, %c0_254] : memref<32x96xf32, #tpu.memory_space<vmem>>, vector<32x96xf32>
    %c0_255 = arith.constant 0 : index
    %c0_256 = arith.constant 0 : index
    %598 = vector.load %arg59[%c0_255, %c0_256] : memref<1x96xf32, #tpu.memory_space<vmem>>, vector<1x96xf32>
    %c0_257 = arith.constant 0 : index
    %c0_258 = arith.constant 0 : index
    %599 = vector.load %arg60[%c0_257, %c0_258] : memref<32x32xf32, #tpu.memory_space<vmem>>, vector<32x32xf32>
    %c0_259 = arith.constant 0 : index
    %c0_260 = arith.constant 0 : index
    %600 = vector.load %arg61[%c0_259, %c0_260] : memref<1x32xf32, #tpu.memory_space<vmem>>, vector<1x32xf32>
    %c0_261 = arith.constant 0 : index
    %c0_262 = arith.constant 0 : index
    %601 = vector.load %arg62[%c0_261, %c0_262] : memref<32x32xf32, #tpu.memory_space<vmem>>, vector<32x32xf32>
    %c0_263 = arith.constant 0 : index
    %c0_264 = arith.constant 0 : index
    %602 = vector.load %arg63[%c0_263, %c0_264] : memref<1x32xf32, #tpu.memory_space<vmem>>, vector<1x32xf32>
    %c0_265 = arith.constant 0 : index
    %c0_266 = arith.constant 0 : index
    %603 = vector.load %arg64[%c0_265, %c0_266] : memref<32x64xf32, #tpu.memory_space<vmem>>, vector<32x64xf32>
    %c0_267 = arith.constant 0 : index
    %c0_268 = arith.constant 0 : index
    %604 = vector.load %arg65[%c0_267, %c0_268] : memref<1x64xf32, #tpu.memory_space<vmem>>, vector<1x64xf32>
    %c0_269 = arith.constant 0 : index
    %c0_270 = arith.constant 0 : index
    %605 = vector.load %arg66[%c0_269, %c0_270] : memref<32x32xf32, #tpu.memory_space<vmem>>, vector<32x32xf32>
    %c0_271 = arith.constant 0 : index
    %c0_272 = arith.constant 0 : index
    %606 = vector.load %arg67[%c0_271, %c0_272] : memref<1x32xf32, #tpu.memory_space<vmem>>, vector<1x32xf32>
    %c0_273 = arith.constant 0 : index
    %c0_274 = arith.constant 0 : index
    %607 = vector.load %arg68[%c0_273, %c0_274] : memref<32x64xf32, #tpu.memory_space<vmem>>, vector<32x64xf32>
    %c0_275 = arith.constant 0 : index
    %c0_276 = arith.constant 0 : index
    %608 = vector.load %arg69[%c0_275, %c0_276] : memref<1x64xf32, #tpu.memory_space<vmem>>, vector<1x64xf32>
    %c0_277 = arith.constant 0 : index
    %c0_278 = arith.constant 0 : index
    %609 = vector.load %arg70[%c0_277, %c0_278] : memref<64x32xf32, #tpu.memory_space<vmem>>, vector<64x32xf32>
    %c0_279 = arith.constant 0 : index
    %c0_280 = arith.constant 0 : index
    %610 = vector.load %arg71[%c0_279, %c0_280] : memref<1x32xf32, #tpu.memory_space<vmem>>, vector<1x32xf32>
    %c0_281 = arith.constant 0 : index
    %c0_282 = arith.constant 0 : index
    %611 = vector.load %arg72[%c0_281, %c0_282] : memref<1x32xf32, #tpu.memory_space<vmem>>, vector<1x32xf32>
    %c0_283 = arith.constant 0 : index
    %c0_284 = arith.constant 0 : index
    %612 = vector.load %arg73[%c0_283, %c0_284] : memref<1x32xf32, #tpu.memory_space<vmem>>, vector<1x32xf32>
    %c0_285 = arith.constant 0 : index
    %c0_286 = arith.constant 0 : index
    %613 = vector.load %arg74[%c0_285, %c0_286] : memref<1x32xf32, #tpu.memory_space<vmem>>, vector<1x32xf32>
    %c0_287 = arith.constant 0 : index
    %c0_288 = arith.constant 0 : index
    %614 = vector.load %arg75[%c0_287, %c0_288] : memref<1x32xf32, #tpu.memory_space<vmem>>, vector<1x32xf32>
    %c0_289 = arith.constant 0 : index
    %c0_290 = arith.constant 0 : index
    %615 = vector.load %arg76[%c0_289, %c0_290] : memref<1x32xf32, #tpu.memory_space<vmem>>, vector<1x32xf32>
    %c0_291 = arith.constant 0 : index
    %c0_292 = arith.constant 0 : index
    %616 = vector.load %arg77[%c0_291, %c0_292] : memref<1x32xf32, #tpu.memory_space<vmem>>, vector<1x32xf32>
    %cst_293 = arith.constant dense<0.000000e+00> : vector<8x96xf32>
    %617 = tpu.matmul %596, %597, %cst_293 {dimension_numbers = #tpu.dot_dimension_numbers<[1], [0], [0], [1], [0, 0, 1, 1], [], []>} : vector<8x32xf32>, vector<32x96xf32>, vector<8x96xf32> -> vector<8x96xf32>
    %618 = vector.broadcast %598 : vector<1x96xf32> to vector<8x96xf32>
    %619 = arith.addf %617, %618 : vector<8x96xf32>
    %620 = vector.extract_strided_slice %619 {offsets = [0, 0], sizes = [8, 32], strides = [1, 1]} : vector<8x96xf32> to vector<8x32xf32>
    %621 = vector.extract_strided_slice %619 {offsets = [0, 32], sizes = [8, 32], strides = [1, 1]} : vector<8x96xf32> to vector<8x32xf32>
    %622 = vector.extract_strided_slice %619 {offsets = [0, 64], sizes = [8, 32], strides = [1, 1]} : vector<8x96xf32> to vector<8x32xf32>
    %cst_294 = arith.constant 0.000000e+00 : f32
    %623 = vector.broadcast %cst_294 : f32 to vector<8x32xf32>
    %624 = vector.extract_strided_slice %620 {offsets = [0, 0], sizes = [8, 8], strides = [1, 1]} : vector<8x32xf32> to vector<8x8xf32>
    %625 = vector.extract_strided_slice %621 {offsets = [0, 0], sizes = [8, 8], strides = [1, 1]} : vector<8x32xf32> to vector<8x8xf32>
    %626 = vector.extract_strided_slice %622 {offsets = [0, 0], sizes = [8, 8], strides = [1, 1]} : vector<8x32xf32> to vector<8x8xf32>
    %cst_295 = arith.constant dense<0.000000e+00> : vector<8x8xf32>
    %627 = tpu.matmul %624, %625, %cst_295 {dimension_numbers = #tpu.dot_dimension_numbers<[1], [1], [0], [0], [0, 0, 1, 0], [], []>} : vector<8x8xf32>, vector<8x8xf32>, vector<8x8xf32> -> vector<8x8xf32>
    %628 = arith.addf %627, %6 : vector<8x8xf32>
    %cst_296 = arith.constant dense<0xFF800000> : vector<8xf32>
    %629 = vector.multi_reduction <maximumf>, %628, %cst_296 [1] : vector<8x8xf32> to vector<8xf32>
    %630 = vector.shape_cast %629 : vector<8xf32> to vector<8x1xf32>
    %631 = vector.broadcast %630 : vector<8x1xf32> to vector<8x8xf32>
    %632 = arith.subf %628, %631 : vector<8x8xf32>
    %633 = math.exp %632 : vector<8x8xf32>
    %cst_297 = arith.constant dense<0.000000e+00> : vector<8xf32>
    %634 = vector.multi_reduction <add>, %633, %cst_297 [1] : vector<8x8xf32> to vector<8xf32>
    %635 = vector.shape_cast %634 : vector<8xf32> to vector<8x1xf32>
    %636 = tpu.reciprocal %635 {approx = true} : vector<8x1xf32> -> vector<8x1xf32>
    %637 = vector.broadcast %636 : vector<8x1xf32> to vector<8x8xf32>
    %638 = arith.mulf %633, %637 : vector<8x8xf32>
    %cst_298 = arith.constant dense<0.000000e+00> : vector<8x8xf32>
    %639 = tpu.matmul %638, %626, %cst_298 {dimension_numbers = #tpu.dot_dimension_numbers<[1], [0], [0], [1], [0, 0, 1, 1], [], []>} : vector<8x8xf32>, vector<8x8xf32>, vector<8x8xf32> -> vector<8x8xf32>
    %640 = vector.extract_strided_slice %599 {offsets = [0, 0], sizes = [8, 32], strides = [1, 1]} : vector<32x32xf32> to vector<8x32xf32>
    %cst_299 = arith.constant dense<0.000000e+00> : vector<8x32xf32>
    %641 = tpu.matmul %639, %640, %cst_299 {dimension_numbers = #tpu.dot_dimension_numbers<[1], [0], [0], [1], [0, 0, 1, 1], [], []>} : vector<8x8xf32>, vector<8x32xf32>, vector<8x32xf32> -> vector<8x32xf32>
    %642 = arith.addf %623, %641 : vector<8x32xf32>
    %643 = vector.extract_strided_slice %620 {offsets = [0, 8], sizes = [8, 8], strides = [1, 1]} : vector<8x32xf32> to vector<8x8xf32>
    %644 = vector.extract_strided_slice %621 {offsets = [0, 8], sizes = [8, 8], strides = [1, 1]} : vector<8x32xf32> to vector<8x8xf32>
    %645 = vector.extract_strided_slice %622 {offsets = [0, 8], sizes = [8, 8], strides = [1, 1]} : vector<8x32xf32> to vector<8x8xf32>
    %cst_300 = arith.constant dense<0.000000e+00> : vector<8x8xf32>
    %646 = tpu.matmul %643, %644, %cst_300 {dimension_numbers = #tpu.dot_dimension_numbers<[1], [1], [0], [0], [0, 0, 1, 0], [], []>} : vector<8x8xf32>, vector<8x8xf32>, vector<8x8xf32> -> vector<8x8xf32>
    %647 = arith.addf %646, %6 : vector<8x8xf32>
    %cst_301 = arith.constant dense<0xFF800000> : vector<8xf32>
    %648 = vector.multi_reduction <maximumf>, %647, %cst_301 [1] : vector<8x8xf32> to vector<8xf32>
    %649 = vector.shape_cast %648 : vector<8xf32> to vector<8x1xf32>
    %650 = vector.broadcast %649 : vector<8x1xf32> to vector<8x8xf32>
    %651 = arith.subf %647, %650 : vector<8x8xf32>
    %652 = math.exp %651 : vector<8x8xf32>
    %cst_302 = arith.constant dense<0.000000e+00> : vector<8xf32>
    %653 = vector.multi_reduction <add>, %652, %cst_302 [1] : vector<8x8xf32> to vector<8xf32>
    %654 = vector.shape_cast %653 : vector<8xf32> to vector<8x1xf32>
    %655 = tpu.reciprocal %654 {approx = true} : vector<8x1xf32> -> vector<8x1xf32>
    %656 = vector.broadcast %655 : vector<8x1xf32> to vector<8x8xf32>
    %657 = arith.mulf %652, %656 : vector<8x8xf32>
    %cst_303 = arith.constant dense<0.000000e+00> : vector<8x8xf32>
    %658 = tpu.matmul %657, %645, %cst_303 {dimension_numbers = #tpu.dot_dimension_numbers<[1], [0], [0], [1], [0, 0, 1, 1], [], []>} : vector<8x8xf32>, vector<8x8xf32>, vector<8x8xf32> -> vector<8x8xf32>
    %659 = vector.extract_strided_slice %599 {offsets = [8, 0], sizes = [8, 32], strides = [1, 1]} : vector<32x32xf32> to vector<8x32xf32>
    %cst_304 = arith.constant dense<0.000000e+00> : vector<8x32xf32>
    %660 = tpu.matmul %658, %659, %cst_304 {dimension_numbers = #tpu.dot_dimension_numbers<[1], [0], [0], [1], [0, 0, 1, 1], [], []>} : vector<8x8xf32>, vector<8x32xf32>, vector<8x32xf32> -> vector<8x32xf32>
    %661 = arith.addf %642, %660 : vector<8x32xf32>
    %662 = vector.extract_strided_slice %620 {offsets = [0, 16], sizes = [8, 8], strides = [1, 1]} : vector<8x32xf32> to vector<8x8xf32>
    %663 = vector.extract_strided_slice %621 {offsets = [0, 16], sizes = [8, 8], strides = [1, 1]} : vector<8x32xf32> to vector<8x8xf32>
    %664 = vector.extract_strided_slice %622 {offsets = [0, 16], sizes = [8, 8], strides = [1, 1]} : vector<8x32xf32> to vector<8x8xf32>
    %cst_305 = arith.constant dense<0.000000e+00> : vector<8x8xf32>
    %665 = tpu.matmul %662, %663, %cst_305 {dimension_numbers = #tpu.dot_dimension_numbers<[1], [1], [0], [0], [0, 0, 1, 0], [], []>} : vector<8x8xf32>, vector<8x8xf32>, vector<8x8xf32> -> vector<8x8xf32>
    %666 = arith.addf %665, %6 : vector<8x8xf32>
    %cst_306 = arith.constant dense<0xFF800000> : vector<8xf32>
    %667 = vector.multi_reduction <maximumf>, %666, %cst_306 [1] : vector<8x8xf32> to vector<8xf32>
    %668 = vector.shape_cast %667 : vector<8xf32> to vector<8x1xf32>
    %669 = vector.broadcast %668 : vector<8x1xf32> to vector<8x8xf32>
    %670 = arith.subf %666, %669 : vector<8x8xf32>
    %671 = math.exp %670 : vector<8x8xf32>
    %cst_307 = arith.constant dense<0.000000e+00> : vector<8xf32>
    %672 = vector.multi_reduction <add>, %671, %cst_307 [1] : vector<8x8xf32> to vector<8xf32>
    %673 = vector.shape_cast %672 : vector<8xf32> to vector<8x1xf32>
    %674 = tpu.reciprocal %673 {approx = true} : vector<8x1xf32> -> vector<8x1xf32>
    %675 = vector.broadcast %674 : vector<8x1xf32> to vector<8x8xf32>
    %676 = arith.mulf %671, %675 : vector<8x8xf32>
    %cst_308 = arith.constant dense<0.000000e+00> : vector<8x8xf32>
    %677 = tpu.matmul %676, %664, %cst_308 {dimension_numbers = #tpu.dot_dimension_numbers<[1], [0], [0], [1], [0, 0, 1, 1], [], []>} : vector<8x8xf32>, vector<8x8xf32>, vector<8x8xf32> -> vector<8x8xf32>
    %678 = vector.extract_strided_slice %599 {offsets = [16, 0], sizes = [8, 32], strides = [1, 1]} : vector<32x32xf32> to vector<8x32xf32>
    %cst_309 = arith.constant dense<0.000000e+00> : vector<8x32xf32>
    %679 = tpu.matmul %677, %678, %cst_309 {dimension_numbers = #tpu.dot_dimension_numbers<[1], [0], [0], [1], [0, 0, 1, 1], [], []>} : vector<8x8xf32>, vector<8x32xf32>, vector<8x32xf32> -> vector<8x32xf32>
    %680 = arith.addf %661, %679 : vector<8x32xf32>
    %681 = vector.extract_strided_slice %620 {offsets = [0, 24], sizes = [8, 8], strides = [1, 1]} : vector<8x32xf32> to vector<8x8xf32>
    %682 = vector.extract_strided_slice %621 {offsets = [0, 24], sizes = [8, 8], strides = [1, 1]} : vector<8x32xf32> to vector<8x8xf32>
    %683 = vector.extract_strided_slice %622 {offsets = [0, 24], sizes = [8, 8], strides = [1, 1]} : vector<8x32xf32> to vector<8x8xf32>
    %cst_310 = arith.constant dense<0.000000e+00> : vector<8x8xf32>
    %684 = tpu.matmul %681, %682, %cst_310 {dimension_numbers = #tpu.dot_dimension_numbers<[1], [1], [0], [0], [0, 0, 1, 0], [], []>} : vector<8x8xf32>, vector<8x8xf32>, vector<8x8xf32> -> vector<8x8xf32>
    %685 = arith.addf %684, %6 : vector<8x8xf32>
    %cst_311 = arith.constant dense<0xFF800000> : vector<8xf32>
    %686 = vector.multi_reduction <maximumf>, %685, %cst_311 [1] : vector<8x8xf32> to vector<8xf32>
    %687 = vector.shape_cast %686 : vector<8xf32> to vector<8x1xf32>
    %688 = vector.broadcast %687 : vector<8x1xf32> to vector<8x8xf32>
    %689 = arith.subf %685, %688 : vector<8x8xf32>
    %690 = math.exp %689 : vector<8x8xf32>
    %cst_312 = arith.constant dense<0.000000e+00> : vector<8xf32>
    %691 = vector.multi_reduction <add>, %690, %cst_312 [1] : vector<8x8xf32> to vector<8xf32>
    %692 = vector.shape_cast %691 : vector<8xf32> to vector<8x1xf32>
    %693 = tpu.reciprocal %692 {approx = true} : vector<8x1xf32> -> vector<8x1xf32>
    %694 = vector.broadcast %693 : vector<8x1xf32> to vector<8x8xf32>
    %695 = arith.mulf %690, %694 : vector<8x8xf32>
    %cst_313 = arith.constant dense<0.000000e+00> : vector<8x8xf32>
    %696 = tpu.matmul %695, %683, %cst_313 {dimension_numbers = #tpu.dot_dimension_numbers<[1], [0], [0], [1], [0, 0, 1, 1], [], []>} : vector<8x8xf32>, vector<8x8xf32>, vector<8x8xf32> -> vector<8x8xf32>
    %697 = vector.extract_strided_slice %599 {offsets = [24, 0], sizes = [8, 32], strides = [1, 1]} : vector<32x32xf32> to vector<8x32xf32>
    %cst_314 = arith.constant dense<0.000000e+00> : vector<8x32xf32>
    %698 = tpu.matmul %696, %697, %cst_314 {dimension_numbers = #tpu.dot_dimension_numbers<[1], [0], [0], [1], [0, 0, 1, 1], [], []>} : vector<8x8xf32>, vector<8x32xf32>, vector<8x32xf32> -> vector<8x32xf32>
    %699 = arith.addf %680, %698 : vector<8x32xf32>
    %700 = vector.broadcast %600 : vector<1x32xf32> to vector<8x32xf32>
    %701 = arith.addf %699, %700 : vector<8x32xf32>
    %702 = arith.addf %596, %701 : vector<8x32xf32>
    %cst_315 = arith.constant dense<0.000000e+00> : vector<8xf32>
    %703 = vector.multi_reduction <add>, %702, %cst_315 [1] : vector<8x32xf32> to vector<8xf32>
    %704 = vector.shape_cast %703 : vector<8xf32> to vector<8x1xf32>
    %cst_316 = arith.constant 3.200000e+01 : f32
    %705 = vector.broadcast %cst_316 : f32 to vector<8x1xf32>
    %706 = arith.divf %704, %705 : vector<8x1xf32>
    %707 = vector.broadcast %706 : vector<8x1xf32> to vector<8x32xf32>
    %708 = arith.subf %702, %707 : vector<8x32xf32>
    %709 = arith.mulf %708, %708 : vector<8x32xf32>
    %cst_317 = arith.constant dense<0.000000e+00> : vector<8xf32>
    %710 = vector.multi_reduction <add>, %709, %cst_317 [1] : vector<8x32xf32> to vector<8xf32>
    %711 = vector.shape_cast %710 : vector<8xf32> to vector<8x1xf32>
    %cst_318 = arith.constant 3.200000e+01 : f32
    %712 = vector.broadcast %cst_318 : f32 to vector<8x1xf32>
    %713 = arith.divf %711, %712 : vector<8x1xf32>
    %cst_319 = arith.constant 9.99999974E-6 : f32
    %714 = vector.broadcast %cst_319 : f32 to vector<8x1xf32>
    %715 = arith.addf %713, %714 : vector<8x1xf32>
    %716 = math.rsqrt %715 : vector<8x1xf32>
    %717 = vector.broadcast %716 : vector<8x1xf32> to vector<8x32xf32>
    %718 = arith.mulf %708, %717 : vector<8x32xf32>
    %719 = vector.broadcast %611 : vector<1x32xf32> to vector<8x32xf32>
    %720 = arith.mulf %718, %719 : vector<8x32xf32>
    %721 = vector.broadcast %612 : vector<1x32xf32> to vector<8x32xf32>
    %722 = arith.addf %720, %721 : vector<8x32xf32>
    %cst_320 = arith.constant dense<0.000000e+00> : vector<8x32xf32>
    %723 = tpu.matmul %722, %601, %cst_320 {dimension_numbers = #tpu.dot_dimension_numbers<[1], [0], [0], [1], [0, 0, 1, 1], [], []>} : vector<8x32xf32>, vector<32x32xf32>, vector<8x32xf32> -> vector<8x32xf32>
    %724 = vector.broadcast %602 : vector<1x32xf32> to vector<8x32xf32>
    %725 = arith.addf %723, %724 : vector<8x32xf32>
    %cst_321 = arith.constant dense<0.000000e+00> : vector<16x64xf32>
    %726 = tpu.matmul %331, %603, %cst_321 {dimension_numbers = #tpu.dot_dimension_numbers<[1], [0], [0], [1], [0, 0, 1, 1], [], []>} : vector<16x32xf32>, vector<32x64xf32>, vector<16x64xf32> -> vector<16x64xf32>
    %727 = vector.broadcast %604 : vector<1x64xf32> to vector<16x64xf32>
    %728 = arith.addf %726, %727 : vector<16x64xf32>
    %729 = vector.extract_strided_slice %728 {offsets = [0, 0], sizes = [16, 32], strides = [1, 1]} : vector<16x64xf32> to vector<16x32xf32>
    %730 = vector.extract_strided_slice %728 {offsets = [0, 32], sizes = [16, 32], strides = [1, 1]} : vector<16x64xf32> to vector<16x32xf32>
    %cst_322 = arith.constant 0.000000e+00 : f32
    %731 = vector.broadcast %cst_322 : f32 to vector<8x32xf32>
    %732 = vector.extract_strided_slice %725 {offsets = [0, 0], sizes = [8, 8], strides = [1, 1]} : vector<8x32xf32> to vector<8x8xf32>
    %733 = vector.extract_strided_slice %729 {offsets = [0, 0], sizes = [16, 8], strides = [1, 1]} : vector<16x32xf32> to vector<16x8xf32>
    %734 = vector.extract_strided_slice %730 {offsets = [0, 0], sizes = [16, 8], strides = [1, 1]} : vector<16x32xf32> to vector<16x8xf32>
    %cst_323 = arith.constant dense<0.000000e+00> : vector<8x16xf32>
    %735 = tpu.matmul %732, %733, %cst_323 {dimension_numbers = #tpu.dot_dimension_numbers<[1], [1], [0], [0], [0, 0, 1, 0], [], []>} : vector<8x8xf32>, vector<16x8xf32>, vector<8x16xf32> -> vector<8x16xf32>
    %736 = arith.addf %735, %7 : vector<8x16xf32>
    %cst_324 = arith.constant dense<0xFF800000> : vector<8xf32>
    %737 = vector.multi_reduction <maximumf>, %736, %cst_324 [1] : vector<8x16xf32> to vector<8xf32>
    %738 = vector.shape_cast %737 : vector<8xf32> to vector<8x1xf32>
    %739 = vector.broadcast %738 : vector<8x1xf32> to vector<8x16xf32>
    %740 = arith.subf %736, %739 : vector<8x16xf32>
    %741 = math.exp %740 : vector<8x16xf32>
    %cst_325 = arith.constant dense<0.000000e+00> : vector<8xf32>
    %742 = vector.multi_reduction <add>, %741, %cst_325 [1] : vector<8x16xf32> to vector<8xf32>
    %743 = vector.shape_cast %742 : vector<8xf32> to vector<8x1xf32>
    %744 = tpu.reciprocal %743 {approx = true} : vector<8x1xf32> -> vector<8x1xf32>
    %745 = vector.broadcast %744 : vector<8x1xf32> to vector<8x16xf32>
    %746 = arith.mulf %741, %745 : vector<8x16xf32>
    %cst_326 = arith.constant dense<0.000000e+00> : vector<8x8xf32>
    %747 = tpu.matmul %746, %734, %cst_326 {dimension_numbers = #tpu.dot_dimension_numbers<[1], [0], [0], [1], [0, 0, 1, 1], [], []>} : vector<8x16xf32>, vector<16x8xf32>, vector<8x8xf32> -> vector<8x8xf32>
    %748 = vector.extract_strided_slice %605 {offsets = [0, 0], sizes = [8, 32], strides = [1, 1]} : vector<32x32xf32> to vector<8x32xf32>
    %cst_327 = arith.constant dense<0.000000e+00> : vector<8x32xf32>
    %749 = tpu.matmul %747, %748, %cst_327 {dimension_numbers = #tpu.dot_dimension_numbers<[1], [0], [0], [1], [0, 0, 1, 1], [], []>} : vector<8x8xf32>, vector<8x32xf32>, vector<8x32xf32> -> vector<8x32xf32>
    %750 = arith.addf %731, %749 : vector<8x32xf32>
    %751 = vector.extract_strided_slice %725 {offsets = [0, 8], sizes = [8, 8], strides = [1, 1]} : vector<8x32xf32> to vector<8x8xf32>
    %752 = vector.extract_strided_slice %729 {offsets = [0, 8], sizes = [16, 8], strides = [1, 1]} : vector<16x32xf32> to vector<16x8xf32>
    %753 = vector.extract_strided_slice %730 {offsets = [0, 8], sizes = [16, 8], strides = [1, 1]} : vector<16x32xf32> to vector<16x8xf32>
    %cst_328 = arith.constant dense<0.000000e+00> : vector<8x16xf32>
    %754 = tpu.matmul %751, %752, %cst_328 {dimension_numbers = #tpu.dot_dimension_numbers<[1], [1], [0], [0], [0, 0, 1, 0], [], []>} : vector<8x8xf32>, vector<16x8xf32>, vector<8x16xf32> -> vector<8x16xf32>
    %755 = arith.addf %754, %7 : vector<8x16xf32>
    %cst_329 = arith.constant dense<0xFF800000> : vector<8xf32>
    %756 = vector.multi_reduction <maximumf>, %755, %cst_329 [1] : vector<8x16xf32> to vector<8xf32>
    %757 = vector.shape_cast %756 : vector<8xf32> to vector<8x1xf32>
    %758 = vector.broadcast %757 : vector<8x1xf32> to vector<8x16xf32>
    %759 = arith.subf %755, %758 : vector<8x16xf32>
    %760 = math.exp %759 : vector<8x16xf32>
    %cst_330 = arith.constant dense<0.000000e+00> : vector<8xf32>
    %761 = vector.multi_reduction <add>, %760, %cst_330 [1] : vector<8x16xf32> to vector<8xf32>
    %762 = vector.shape_cast %761 : vector<8xf32> to vector<8x1xf32>
    %763 = tpu.reciprocal %762 {approx = true} : vector<8x1xf32> -> vector<8x1xf32>
    %764 = vector.broadcast %763 : vector<8x1xf32> to vector<8x16xf32>
    %765 = arith.mulf %760, %764 : vector<8x16xf32>
    %cst_331 = arith.constant dense<0.000000e+00> : vector<8x8xf32>
    %766 = tpu.matmul %765, %753, %cst_331 {dimension_numbers = #tpu.dot_dimension_numbers<[1], [0], [0], [1], [0, 0, 1, 1], [], []>} : vector<8x16xf32>, vector<16x8xf32>, vector<8x8xf32> -> vector<8x8xf32>
    %767 = vector.extract_strided_slice %605 {offsets = [8, 0], sizes = [8, 32], strides = [1, 1]} : vector<32x32xf32> to vector<8x32xf32>
    %cst_332 = arith.constant dense<0.000000e+00> : vector<8x32xf32>
    %768 = tpu.matmul %766, %767, %cst_332 {dimension_numbers = #tpu.dot_dimension_numbers<[1], [0], [0], [1], [0, 0, 1, 1], [], []>} : vector<8x8xf32>, vector<8x32xf32>, vector<8x32xf32> -> vector<8x32xf32>
    %769 = arith.addf %750, %768 : vector<8x32xf32>
    %770 = vector.extract_strided_slice %725 {offsets = [0, 16], sizes = [8, 8], strides = [1, 1]} : vector<8x32xf32> to vector<8x8xf32>
    %771 = vector.extract_strided_slice %729 {offsets = [0, 16], sizes = [16, 8], strides = [1, 1]} : vector<16x32xf32> to vector<16x8xf32>
    %772 = vector.extract_strided_slice %730 {offsets = [0, 16], sizes = [16, 8], strides = [1, 1]} : vector<16x32xf32> to vector<16x8xf32>
    %cst_333 = arith.constant dense<0.000000e+00> : vector<8x16xf32>
    %773 = tpu.matmul %770, %771, %cst_333 {dimension_numbers = #tpu.dot_dimension_numbers<[1], [1], [0], [0], [0, 0, 1, 0], [], []>} : vector<8x8xf32>, vector<16x8xf32>, vector<8x16xf32> -> vector<8x16xf32>
    %774 = arith.addf %773, %7 : vector<8x16xf32>
    %cst_334 = arith.constant dense<0xFF800000> : vector<8xf32>
    %775 = vector.multi_reduction <maximumf>, %774, %cst_334 [1] : vector<8x16xf32> to vector<8xf32>
    %776 = vector.shape_cast %775 : vector<8xf32> to vector<8x1xf32>
    %777 = vector.broadcast %776 : vector<8x1xf32> to vector<8x16xf32>
    %778 = arith.subf %774, %777 : vector<8x16xf32>
    %779 = math.exp %778 : vector<8x16xf32>
    %cst_335 = arith.constant dense<0.000000e+00> : vector<8xf32>
    %780 = vector.multi_reduction <add>, %779, %cst_335 [1] : vector<8x16xf32> to vector<8xf32>
    %781 = vector.shape_cast %780 : vector<8xf32> to vector<8x1xf32>
    %782 = tpu.reciprocal %781 {approx = true} : vector<8x1xf32> -> vector<8x1xf32>
    %783 = vector.broadcast %782 : vector<8x1xf32> to vector<8x16xf32>
    %784 = arith.mulf %779, %783 : vector<8x16xf32>
    %cst_336 = arith.constant dense<0.000000e+00> : vector<8x8xf32>
    %785 = tpu.matmul %784, %772, %cst_336 {dimension_numbers = #tpu.dot_dimension_numbers<[1], [0], [0], [1], [0, 0, 1, 1], [], []>} : vector<8x16xf32>, vector<16x8xf32>, vector<8x8xf32> -> vector<8x8xf32>
    %786 = vector.extract_strided_slice %605 {offsets = [16, 0], sizes = [8, 32], strides = [1, 1]} : vector<32x32xf32> to vector<8x32xf32>
    %cst_337 = arith.constant dense<0.000000e+00> : vector<8x32xf32>
    %787 = tpu.matmul %785, %786, %cst_337 {dimension_numbers = #tpu.dot_dimension_numbers<[1], [0], [0], [1], [0, 0, 1, 1], [], []>} : vector<8x8xf32>, vector<8x32xf32>, vector<8x32xf32> -> vector<8x32xf32>
    %788 = arith.addf %769, %787 : vector<8x32xf32>
    %789 = vector.extract_strided_slice %725 {offsets = [0, 24], sizes = [8, 8], strides = [1, 1]} : vector<8x32xf32> to vector<8x8xf32>
    %790 = vector.extract_strided_slice %729 {offsets = [0, 24], sizes = [16, 8], strides = [1, 1]} : vector<16x32xf32> to vector<16x8xf32>
    %791 = vector.extract_strided_slice %730 {offsets = [0, 24], sizes = [16, 8], strides = [1, 1]} : vector<16x32xf32> to vector<16x8xf32>
    %cst_338 = arith.constant dense<0.000000e+00> : vector<8x16xf32>
    %792 = tpu.matmul %789, %790, %cst_338 {dimension_numbers = #tpu.dot_dimension_numbers<[1], [1], [0], [0], [0, 0, 1, 0], [], []>} : vector<8x8xf32>, vector<16x8xf32>, vector<8x16xf32> -> vector<8x16xf32>
    %793 = arith.addf %792, %7 : vector<8x16xf32>
    %cst_339 = arith.constant dense<0xFF800000> : vector<8xf32>
    %794 = vector.multi_reduction <maximumf>, %793, %cst_339 [1] : vector<8x16xf32> to vector<8xf32>
    %795 = vector.shape_cast %794 : vector<8xf32> to vector<8x1xf32>
    %796 = vector.broadcast %795 : vector<8x1xf32> to vector<8x16xf32>
    %797 = arith.subf %793, %796 : vector<8x16xf32>
    %798 = math.exp %797 : vector<8x16xf32>
    %cst_340 = arith.constant dense<0.000000e+00> : vector<8xf32>
    %799 = vector.multi_reduction <add>, %798, %cst_340 [1] : vector<8x16xf32> to vector<8xf32>
    %800 = vector.shape_cast %799 : vector<8xf32> to vector<8x1xf32>
    %801 = tpu.reciprocal %800 {approx = true} : vector<8x1xf32> -> vector<8x1xf32>
    %802 = vector.broadcast %801 : vector<8x1xf32> to vector<8x16xf32>
    %803 = arith.mulf %798, %802 : vector<8x16xf32>
    %cst_341 = arith.constant dense<0.000000e+00> : vector<8x8xf32>
    %804 = tpu.matmul %803, %791, %cst_341 {dimension_numbers = #tpu.dot_dimension_numbers<[1], [0], [0], [1], [0, 0, 1, 1], [], []>} : vector<8x16xf32>, vector<16x8xf32>, vector<8x8xf32> -> vector<8x8xf32>
    %805 = vector.extract_strided_slice %605 {offsets = [24, 0], sizes = [8, 32], strides = [1, 1]} : vector<32x32xf32> to vector<8x32xf32>
    %cst_342 = arith.constant dense<0.000000e+00> : vector<8x32xf32>
    %806 = tpu.matmul %804, %805, %cst_342 {dimension_numbers = #tpu.dot_dimension_numbers<[1], [0], [0], [1], [0, 0, 1, 1], [], []>} : vector<8x8xf32>, vector<8x32xf32>, vector<8x32xf32> -> vector<8x32xf32>
    %807 = arith.addf %788, %806 : vector<8x32xf32>
    %808 = vector.broadcast %606 : vector<1x32xf32> to vector<8x32xf32>
    %809 = arith.addf %807, %808 : vector<8x32xf32>
    %810 = arith.addf %722, %809 : vector<8x32xf32>
    %cst_343 = arith.constant dense<0.000000e+00> : vector<8xf32>
    %811 = vector.multi_reduction <add>, %810, %cst_343 [1] : vector<8x32xf32> to vector<8xf32>
    %812 = vector.shape_cast %811 : vector<8xf32> to vector<8x1xf32>
    %cst_344 = arith.constant 3.200000e+01 : f32
    %813 = vector.broadcast %cst_344 : f32 to vector<8x1xf32>
    %814 = arith.divf %812, %813 : vector<8x1xf32>
    %815 = vector.broadcast %814 : vector<8x1xf32> to vector<8x32xf32>
    %816 = arith.subf %810, %815 : vector<8x32xf32>
    %817 = arith.mulf %816, %816 : vector<8x32xf32>
    %cst_345 = arith.constant dense<0.000000e+00> : vector<8xf32>
    %818 = vector.multi_reduction <add>, %817, %cst_345 [1] : vector<8x32xf32> to vector<8xf32>
    %819 = vector.shape_cast %818 : vector<8xf32> to vector<8x1xf32>
    %cst_346 = arith.constant 3.200000e+01 : f32
    %820 = vector.broadcast %cst_346 : f32 to vector<8x1xf32>
    %821 = arith.divf %819, %820 : vector<8x1xf32>
    %cst_347 = arith.constant 9.99999974E-6 : f32
    %822 = vector.broadcast %cst_347 : f32 to vector<8x1xf32>
    %823 = arith.addf %821, %822 : vector<8x1xf32>
    %824 = math.rsqrt %823 : vector<8x1xf32>
    %825 = vector.broadcast %824 : vector<8x1xf32> to vector<8x32xf32>
    %826 = arith.mulf %816, %825 : vector<8x32xf32>
    %827 = vector.broadcast %613 : vector<1x32xf32> to vector<8x32xf32>
    %828 = arith.mulf %826, %827 : vector<8x32xf32>
    %829 = vector.broadcast %614 : vector<1x32xf32> to vector<8x32xf32>
    %830 = arith.addf %828, %829 : vector<8x32xf32>
    %cst_348 = arith.constant dense<0.000000e+00> : vector<8x64xf32>
    %831 = tpu.matmul %830, %607, %cst_348 {dimension_numbers = #tpu.dot_dimension_numbers<[1], [0], [0], [1], [0, 0, 1, 1], [], []>} : vector<8x32xf32>, vector<32x64xf32>, vector<8x64xf32> -> vector<8x64xf32>
    %832 = vector.broadcast %608 : vector<1x64xf32> to vector<8x64xf32>
    %833 = arith.addf %831, %832 : vector<8x64xf32>
    %cst_349 = arith.constant 0.000000e+00 : f32
    %834 = vector.broadcast %cst_349 : f32 to vector<8x64xf32>
    %835 = arith.maximumf %833, %834 : vector<8x64xf32>
    %cst_350 = arith.constant dense<0.000000e+00> : vector<8x32xf32>
    %836 = tpu.matmul %835, %609, %cst_350 {dimension_numbers = #tpu.dot_dimension_numbers<[1], [0], [0], [1], [0, 0, 1, 1], [], []>} : vector<8x64xf32>, vector<64x32xf32>, vector<8x32xf32> -> vector<8x32xf32>
    %837 = vector.broadcast %610 : vector<1x32xf32> to vector<8x32xf32>
    %838 = arith.addf %836, %837 : vector<8x32xf32>
    %839 = arith.addf %830, %838 : vector<8x32xf32>
    %cst_351 = arith.constant dense<0.000000e+00> : vector<8xf32>
    %840 = vector.multi_reduction <add>, %839, %cst_351 [1] : vector<8x32xf32> to vector<8xf32>
    %841 = vector.shape_cast %840 : vector<8xf32> to vector<8x1xf32>
    %cst_352 = arith.constant 3.200000e+01 : f32
    %842 = vector.broadcast %cst_352 : f32 to vector<8x1xf32>
    %843 = arith.divf %841, %842 : vector<8x1xf32>
    %844 = vector.broadcast %843 : vector<8x1xf32> to vector<8x32xf32>
    %845 = arith.subf %839, %844 : vector<8x32xf32>
    %846 = arith.mulf %845, %845 : vector<8x32xf32>
    %cst_353 = arith.constant dense<0.000000e+00> : vector<8xf32>
    %847 = vector.multi_reduction <add>, %846, %cst_353 [1] : vector<8x32xf32> to vector<8xf32>
    %848 = vector.shape_cast %847 : vector<8xf32> to vector<8x1xf32>
    %cst_354 = arith.constant 3.200000e+01 : f32
    %849 = vector.broadcast %cst_354 : f32 to vector<8x1xf32>
    %850 = arith.divf %848, %849 : vector<8x1xf32>
    %cst_355 = arith.constant 9.99999974E-6 : f32
    %851 = vector.broadcast %cst_355 : f32 to vector<8x1xf32>
    %852 = arith.addf %850, %851 : vector<8x1xf32>
    %853 = math.rsqrt %852 : vector<8x1xf32>
    %854 = vector.broadcast %853 : vector<8x1xf32> to vector<8x32xf32>
    %855 = arith.mulf %845, %854 : vector<8x32xf32>
    %856 = vector.broadcast %615 : vector<1x32xf32> to vector<8x32xf32>
    %857 = arith.mulf %855, %856 : vector<8x32xf32>
    %858 = vector.broadcast %616 : vector<1x32xf32> to vector<8x32xf32>
    %859 = arith.addf %857, %858 : vector<8x32xf32>
    %cst_356 = arith.constant dense<0.000000e+00> : vector<8xf32>
    %860 = vector.multi_reduction <add>, %859, %cst_356 [1] : vector<8x32xf32> to vector<8xf32>
    %861 = vector.shape_cast %860 : vector<8xf32> to vector<8x1xf32>
    %cst_357 = arith.constant 3.200000e+01 : f32
    %862 = vector.broadcast %cst_357 : f32 to vector<8x1xf32>
    %863 = arith.divf %861, %862 : vector<8x1xf32>
    %864 = vector.broadcast %863 : vector<8x1xf32> to vector<8x32xf32>
    %865 = arith.subf %859, %864 : vector<8x32xf32>
    %866 = arith.mulf %865, %865 : vector<8x32xf32>
    %cst_358 = arith.constant dense<0.000000e+00> : vector<8xf32>
    %867 = vector.multi_reduction <add>, %866, %cst_358 [1] : vector<8x32xf32> to vector<8xf32>
    %868 = vector.shape_cast %867 : vector<8xf32> to vector<8x1xf32>
    %cst_359 = arith.constant 3.200000e+01 : f32
    %869 = vector.broadcast %cst_359 : f32 to vector<8x1xf32>
    %870 = arith.divf %868, %869 : vector<8x1xf32>
    %cst_360 = arith.constant 9.99999974E-6 : f32
    %871 = vector.broadcast %cst_360 : f32 to vector<8x1xf32>
    %872 = arith.addf %870, %871 : vector<8x1xf32>
    %873 = math.rsqrt %872 : vector<8x1xf32>
    %874 = vector.broadcast %873 : vector<8x1xf32> to vector<8x32xf32>
    %875 = arith.mulf %865, %874 : vector<8x32xf32>
    %876 = vector.broadcast %10 : vector<1x32xf32> to vector<8x32xf32>
    %877 = arith.mulf %875, %876 : vector<8x32xf32>
    %878 = vector.broadcast %11 : vector<1x32xf32> to vector<8x32xf32>
    %879 = arith.addf %877, %878 : vector<8x32xf32>
    %880 = vector.broadcast %12 : vector<1x32xf32> to vector<8x32xf32>
    %881 = arith.mulf %879, %880 : vector<8x32xf32>
    %cst_361 = arith.constant dense<0.000000e+00> : vector<8xf32>
    %882 = vector.multi_reduction <add>, %881, %cst_361 [1] : vector<8x32xf32> to vector<8xf32>
    %883 = vector.shape_cast %882 : vector<8xf32> to vector<8x1xf32>
    %884 = vector.broadcast %13 : vector<1x1xf32> to vector<8x1xf32>
    %885 = arith.addf %883, %884 : vector<8x1xf32>
    %c0_362 = arith.constant 0 : index
    %c0_363 = arith.constant 0 : index
    %886 = vector.load %arg78[%c0_362, %c0_363] : memref<8x1xf32, #tpu.memory_space<vmem>>, vector<8x1xf32>
    tpu.vector_store %arg78[%c0_362, %c0_363], %885 {strides = array<i32>} : memref<8x1xf32, #tpu.memory_space<vmem>>, vector<8x1xf32>,
    return
  }
}

</mosaic_0001>

<llo_original>
// kernel: forecast_net_transformer.1
$region0: #{forecast_net_transformer.1}
  #allocation0 [shape = 'u32[]', space=smem, size = 0x4, offset = 0x4, fixed_abs, tag = 'smem constant byte address 0x4 - core index']
  #allocation1 [shape = 'u32[144,128]{1,0:T(1,128)}', space=vmem, size = 0x12000, scoped, tag = 'internal scratch']
  #allocation2 [shape = 'f32[1,1]{1,0:T(1,128)S(1)}', space=vmem, size = 0x200, scoped, tag = 'scoped memory for forecast_net_transformer.1']
  %s0 = inlined_call_operand.smem [shape: u32[79], index: -1, kind: input, shape index: {}]
  %s1 = sld [smem:[%s0]]
  %s2 = scalar_lea.smem %s0, 1
  %s3 = sld [smem:[%s2]]
  %s4 = scalar_lea.smem %s0, 2
  %s5 = sld [smem:[%s4]]
  %s6 = scalar_lea.smem %s0, 3
  %s7 = sld [smem:[%s6]]
  %s8 = scalar_lea.smem %s0, 4
  %s9 = sld [smem:[%s8]]
  %s10 = scalar_lea.smem %s0, 5
  %s11 = sld [smem:[%s10]]
  %s12 = scalar_lea.smem %s0, 6
  %s13 = sld [smem:[%s12]]
  %s14 = scalar_lea.smem %s0, 7
  %s15 = sld [smem:[%s14]]
  %s16 = scalar_lea.smem %s0, 8
  %s17 = sld [smem:[%s16]]
  %s18 = scalar_lea.smem %s0, 9
  %s19 = sld [smem:[%s18]]
  %s20 = scalar_lea.smem %s0, 10
  %s21 = sld [smem:[%s20]]
  %s22 = scalar_lea.smem %s0, 11
  %s23 = sld [smem:[%s22]]
  %s24 = scalar_lea.smem %s0, 12
  %s25 = sld [smem:[%s24]]
  %s26 = scalar_lea.smem %s0, 13
  %s27 = sld [smem:[%s26]]
  %s28 = scalar_lea.smem %s0, 14
  %s29 = sld [smem:[%s28]]
  %s30 = scalar_lea.smem %s0, 15
  %s31 = sld [smem:[%s30]]
  %s32 = scalar_lea.smem %s0, 16
  %s33 = sld [smem:[%s32]]
  %s34 = scalar_lea.smem %s0, 17
  %s35 = sld [smem:[%s34]]
  %s36 = scalar_lea.smem %s0, 18
  %s37 = sld [smem:[%s36]]
  %s38 = scalar_lea.smem %s0, 19
  %s39 = sld [smem:[%s38]]
  %s40 = scalar_lea.smem %s0, 20
  %s41 = sld [smem:[%s40]]
  %s42 = scalar_lea.smem %s0, 21
  %s43 = sld [smem:[%s42]]
  %s44 = scalar_lea.smem %s0, 22
  %s45 = sld [smem:[%s44]]
  %s46 = scalar_lea.smem %s0, 23
  %s47 = sld [smem:[%s46]]
  %s48 = scalar_lea.smem %s0, 24
  %s49 = sld [smem:[%s48]]
  %s50 = scalar_lea.smem %s0, 25
  %s51 = sld [smem:[%s50]]
  %s52 = scalar_lea.smem %s0, 26
  %s53 = sld [smem:[%s52]]
  %s54 = scalar_lea.smem %s0, 27
  %s55 = sld [smem:[%s54]]
  %s56 = scalar_lea.smem %s0, 28
  %s57 = sld [smem:[%s56]]
  %s58 = scalar_lea.smem %s0, 29
  %s59 = sld [smem:[%s58]]
  %s60 = scalar_lea.smem %s0, 30
  %s61 = sld [smem:[%s60]]
  %s62 = scalar_lea.smem %s0, 31
  %s63 = sld [smem:[%s62]]
  %s64 = scalar_lea.smem %s0, 32
  %s65 = sld [smem:[%s64]]
  %s66 = scalar_lea.smem %s0, 33
  %s67 = sld [smem:[%s66]]
  %s68 = scalar_lea.smem %s0, 34
  %s69 = sld [smem:[%s68]]
  %s70 = scalar_lea.smem %s0, 35
  %s71 = sld [smem:[%s70]]
  %s72 = scalar_lea.smem %s0, 36
  %s73 = sld [smem:[%s72]]
  %s74 = scalar_lea.smem %s0, 37
  %s75 = sld [smem:[%s74]]
  %s76 = scalar_lea.smem %s0, 38
  %s77 = sld [smem:[%s76]]
  %s78 = scalar_lea.smem %s0, 39
  %s79 = sld [smem:[%s78]]
  %s80 = scalar_lea.smem %s0, 40
  %s81 = sld [smem:[%s80]]
  %s82 = scalar_lea.smem %s0, 41
  %s83 = sld [smem:[%s82]]
  %s84 = scalar_lea.smem %s0, 42
  %s85 = sld [smem:[%s84]]
  %s86 = scalar_lea.smem %s0, 43
  %s87 = sld [smem:[%s86]]
  %s88 = scalar_lea.smem %s0, 44
  %s89 = sld [smem:[%s88]]
  %s90 = scalar_lea.smem %s0, 45
  %s91 = sld [smem:[%s90]]
  %s92 = scalar_lea.smem %s0, 46
  %s93 = sld [smem:[%s92]]
  %s94 = scalar_lea.smem %s0, 47
  %s95 = sld [smem:[%s94]]
  %s96 = scalar_lea.smem %s0, 48
  %s97 = sld [smem:[%s96]]
  %s98 = scalar_lea.smem %s0, 49
  %s99 = sld [smem:[%s98]]
  %s100 = scalar_lea.smem %s0, 50
  %s101 = sld [smem:[%s100]]
  %s102 = scalar_lea.smem %s0, 51
  %s103 = sld [smem:[%s102]]
  %s104 = scalar_lea.smem %s0, 52
  %s105 = sld [smem:[%s104]]
  %s106 = scalar_lea.smem %s0, 53
  %s107 = sld [smem:[%s106]]
  %s108 = scalar_lea.smem %s0, 54
  %s109 = sld [smem:[%s108]]
  %s110 = scalar_lea.smem %s0, 55
  %s111 = sld [smem:[%s110]]
  %s112 = scalar_lea.smem %s0, 56
  %s113 = sld [smem:[%s112]]
  %s114 = scalar_lea.smem %s0, 57
  %s115 = sld [smem:[%s114]]
  %s116 = scalar_lea.smem %s0, 58
  %s117 = sld [smem:[%s116]]
  %s118 = scalar_lea.smem %s0, 59
  %s119 = sld [smem:[%s118]]
  %s120 = scalar_lea.smem %s0, 60
  %s121 = sld [smem:[%s120]]
  %s122 = scalar_lea.smem %s0, 61
  %s123 = sld [smem:[%s122]]
  %s124 = scalar_lea.smem %s0, 62
  %s125 = sld [smem:[%s124]]
  %s126 = scalar_lea.smem %s0, 63
  %s127 = sld [smem:[%s126]]
  %s128 = scalar_lea.smem %s0, 64
  %s129 = sld [smem:[%s128]]
  %s130 = scalar_lea.smem %s0, 65
  %s131 = sld [smem:[%s130]]
  %s132 = scalar_lea.smem %s0, 66
  %s133 = sld [smem:[%s132]]
  %s134 = scalar_lea.smem %s0, 67
  %s135 = sld [smem:[%s134]]
  %s136 = scalar_lea.smem %s0, 68
  %s137 = sld [smem:[%s136]]
  %s138 = scalar_lea.smem %s0, 69
  %s139 = sld [smem:[%s138]]
  %s140 = scalar_lea.smem %s0, 70
  %s141 = sld [smem:[%s140]]
  %s142 = scalar_lea.smem %s0, 71
  %s143 = sld [smem:[%s142]]
  %s144 = scalar_lea.smem %s0, 72
  %s145 = sld [smem:[%s144]]
  %s146 = scalar_lea.smem %s0, 73
  %s147 = sld [smem:[%s146]]
  %s148 = scalar_lea.smem %s0, 74
  %s149 = sld [smem:[%s148]]
  %s150 = scalar_lea.smem %s0, 75
  %s151 = sld [smem:[%s150]]
  %s152 = scalar_lea.smem %s0, 76
  %s153 = sld [smem:[%s152]]
  %s154 = scalar_lea.smem %s0, 77
  %s155 = sld [smem:[%s154]]
  %s156 = scalar_lea.smem %s0, 78
  %s157 = sld [smem:[%s156]]
  %s158 = sld [smem:[#allocation0]]
  $region342: #{forecast_net_transformer.1} parent=0
    _
  %s160 = ssub.s32 1, %s158
  %s161 = scalar_select 0, %s160, %s158
  %v162 = vstv %s27
  %163 = vst [vmem:[#allocation2] sm:$0x1] %v162
  $region1: #{forecast_net_transformer.1} parent=0
    #allocation3 [shape = 'u8[512]{0}', space=vmem, size = 0x400, scoped, tag = 'input window, operand 73, single buffered']
    #allocation4 [shape = 's32[1]{0}', space=sflag, size = 0x4, scoped, tag = 'scoped memory for forecast_net_transformer.1']
    #allocation5 [shape = 'u8[512]{0}', space=vmem, size = 0x400, scoped, tag = 'input window, operand 74, single buffered']
    #allocation6 [shape = 's32[1]{0}', space=sflag, size = 0x4, scoped, tag = 'scoped memory for forecast_net_transformer.1']
    #allocation7 [shape = 'u8[512]{0}', space=vmem, size = 0x400, scoped, tag = 'input window, operand 75, single buffered']
    #allocation8 [shape = 'u8[512]{0}', space=vmem, size = 0x400, scoped, tag = 'input window, operand 76, single buffered']
    #allocation9 [shape = 's32[1]{0}', space=sflag, size = 0x4, scoped, tag = 'scoped memory for forecast_net_transformer.1']
    #allocation10 [shape = 'u8[512]{0}', space=vmem, size = 0x400, scoped, tag = 'input window, operand 77, single buffered']
    %164 = vsyncpa [#allocation4], 0
    %165 = vsyncpa [#allocation6], 0
    %166 = vsyncpa [#allocation9], 0
    // Predicated region
    $region2: #{forecast_net_transformer.1} parent=1 // pred_check
      _
    $region3: #{forecast_net_transformer.1} parent=1 // pred_check_branch
      %168 = sbr.rel (0) target = $region5
    $region4: #{forecast_net_transformer.1} parent=1 // pred_region
      _
    $region5: #{forecast_net_transformer.1} parent=1 // pred_fallthru
      _
    // Predicated region
    $region6: #{forecast_net_transformer.1} parent=1 // pred_check
      _
    $region7: #{forecast_net_transformer.1} parent=1 // pred_check_branch
      %170 = sbr.rel (0) target = $region9
    $region8: #{forecast_net_transformer.1} parent=1 // pred_region
      _
    $region9: #{forecast_net_transformer.1} parent=1 // pred_fallthru
      _
    // Predicated region
    $region10: #{forecast_net_transformer.1} parent=1 // pred_check
      _
    $region11: #{forecast_net_transformer.1} parent=1 // pred_check_branch
      %172 = sbr.rel (0) target = $region13
    $region12: #{forecast_net_transformer.1} parent=1 // pred_region
      _
    $region13: #{forecast_net_transformer.1} parent=1 // pred_fallthru
      _
    // Predicated region
    $region14: #{forecast_net_transformer.1} parent=1 // pred_check
      _
    $region15: #{forecast_net_transformer.1} parent=1 // pred_check_branch
      %174 = sbr.rel (0) target = $region17
    $region16: #{forecast_net_transformer.1} parent=1 // pred_region
      _
    $region17: #{forecast_net_transformer.1} parent=1 // pred_fallthru
      _
    // Predicated region
    $region18: #{forecast_net_transformer.1} parent=1 // pred_check
      _
    $region19: #{forecast_net_transformer.1} parent=1 // pred_check_branch
      %176 = sbr.rel (0) target = $region21
    $region20: #{forecast_net_transformer.1} parent=1 // pred_region
      _
    $region21: #{forecast_net_transformer.1} parent=1 // pred_fallthru
      _
    // Predicated region
    $region22: #{forecast_net_transformer.1} parent=1 // pred_check
      _
    $region23: #{forecast_net_transformer.1} parent=1 // pred_check_branch
      %178 = sbr.rel (0) target = $region25
    $region24: #{forecast_net_transformer.1} parent=1 // pred_region
      _
    $region25: #{forecast_net_transformer.1} parent=1 // pred_fallthru
      _
    // Predicated region
    $region26: #{forecast_net_transformer.1} parent=1 // pred_check
      _
    $region27: #{forecast_net_transformer.1} parent=1 // pred_check_branch
      %180 = sbr.rel (0) target = $region29
    $region28: #{forecast_net_transformer.1} parent=1 // pred_region
      _
    $region29: #{forecast_net_transformer.1} parent=1 // pred_fallthru
      _
    // Predicated region
    $region30: #{forecast_net_transformer.1} parent=1 // pred_check
      _
    $region31: #{forecast_net_transformer.1} parent=1 // pred_check_branch
      %182 = sbr.rel (0) target = $region33
    $region32: #{forecast_net_transformer.1} parent=1 // pred_region
      _
    $region33: #{forecast_net_transformer.1} parent=1 // pred_fallthru
      _
    // Predicated region
    $region34: #{forecast_net_transformer.1} parent=1 // pred_check
      _
    $region35: #{forecast_net_transformer.1} parent=1 // pred_check_branch
      %184 = sbr.rel (0) target = $region37
    $region36: #{forecast_net_transformer.1} parent=1 // pred_region
      _
    $region37: #{forecast_net_transformer.1} parent=1 // pred_fallthru
      _
    // Predicated region
    $region38: #{forecast_net_transformer.1} parent=1 // pred_check
      _
    $region39: #{forecast_net_transformer.1} parent=1 // pred_check_branch
      %186 = sbr.rel (0) target = $region41
    $region40: #{forecast_net_transformer.1} parent=1 // pred_region
      _
    $region41: #{forecast_net_transformer.1} parent=1 // pred_fallthru
      _
    // Predicated region
    $region42: #{forecast_net_transformer.1} parent=1 // pred_check
      _
    $region43: #{forecast_net_transformer.1} parent=1 // pred_check_branch
      %188 = sbr.rel (0) target = $region45
    $region44: #{forecast_net_transformer.1} parent=1 // pred_region
      _
    $region45: #{forecast_net_transformer.1} parent=1 // pred_fallthru
      _
    // Predicated region
    $region46: #{forecast_net_transformer.1} parent=1 // pred_check
      _
    $region47: #{forecast_net_transformer.1} parent=1 // pred_check_branch
      %190 = sbr.rel (0) target = $region49
    $region48: #{forecast_net_transformer.1} parent=1 // pred_region
      _
    $region49: #{forecast_net_transformer.1} parent=1 // pred_fallthru
      _
    // Predicated region
    $region50: #{forecast_net_transformer.1} parent=1 // pred_check
      _
    $region51: #{forecast_net_transformer.1} parent=1 // pred_check_branch
      %192 = sbr.rel (0) target = $region53
    $region52: #{forecast_net_transformer.1} parent=1 // pred_region
      _
    $region53: #{forecast_net_transformer.1} parent=1 // pred_fallthru
      _
    // Predicated region
    $region54: #{forecast_net_transformer.1} parent=1 // pred_check
      _
    $region55: #{forecast_net_transformer.1} parent=1 // pred_check_branch
      %194 = sbr.rel (0) target = $region57
    $region56: #{forecast_net_transformer.1} parent=1 // pred_region
      _
    $region57: #{forecast_net_transformer.1} parent=1 // pred_fallthru
      _
    // Predicated region
    $region58: #{forecast_net_transformer.1} parent=1 // pred_check
      _
    $region59: #{forecast_net_transformer.1} parent=1 // pred_check_branch
      %196 = sbr.rel (0) target = $region61
    $region60: #{forecast_net_transformer.1} parent=1 // pred_region
      _
    $region61: #{forecast_net_transformer.1} parent=1 // pred_fallthru
      _
    // Predicated region
    $region62: #{forecast_net_transformer.1} parent=1 // pred_check
      _
    $region63: #{forecast_net_transformer.1} parent=1 // pred_check_branch
      %198 = sbr.rel (0) target = $region65
    $region64: #{forecast_net_transformer.1} parent=1 // pred_region
      _
    $region65: #{forecast_net_transformer.1} parent=1 // pred_fallthru
      _
    // Predicated region
    $region66: #{forecast_net_transformer.1} parent=1 // pred_check
      _
    $region67: #{forecast_net_transformer.1} parent=1 // pred_check_branch
      %200 = sbr.rel (0) target = $region69
    $region68: #{forecast_net_transformer.1} parent=1 // pred_region
      _
    $region69: #{forecast_net_transformer.1} parent=1 // pred_fallthru
      _
    // Predicated region
    $region70: #{forecast_net_transformer.1} parent=1 // pred_check
      _
    $region71: #{forecast_net_transformer.1} parent=1 // pred_check_branch
      %202 = sbr.rel (0) target = $region73
    $region72: #{forecast_net_transformer.1} parent=1 // pred_region
      _
    $region73: #{forecast_net_transformer.1} parent=1 // pred_fallthru
      _
    // Predicated region
    $region74: #{forecast_net_transformer.1} parent=1 // pred_check
      _
    $region75: #{forecast_net_transformer.1} parent=1 // pred_check_branch
      %204 = sbr.rel (0) target = $region77
    $region76: #{forecast_net_transformer.1} parent=1 // pred_region
      _
    $region77: #{forecast_net_transformer.1} parent=1 // pred_fallthru
      _
    // Predicated region
    $region78: #{forecast_net_transformer.1} parent=1 // pred_check
      _
    $region79: #{forecast_net_transformer.1} parent=1 // pred_check_branch
      %206 = sbr.rel (0) target = $region81
    $region80: #{forecast_net_transformer.1} parent=1 // pred_region
      _
    $region81: #{forecast_net_transformer.1} parent=1 // pred_fallthru
      _
    // Predicated region
    $region82: #{forecast_net_transformer.1} parent=1 // pred_check
      _
    $region83: #{forecast_net_transformer.1} parent=1 // pred_check_branch
      %208 = sbr.rel (0) target = $region85
    $region84: #{forecast_net_transformer.1} parent=1 // pred_region
      _
    $region85: #{forecast_net_transformer.1} parent=1 // pred_fallthru
      _
    // Predicated region
    $region86: #{forecast_net_transformer.1} parent=1 // pred_check
      _
    $region87: #{forecast_net_transformer.1} parent=1 // pred_check_branch
      %210 = sbr.rel (0) target = $region89
    $region88: #{forecast_net_transformer.1} parent=1 // pred_region
      _
    $region89: #{forecast_net_transformer.1} parent=1 // pred_fallthru
      _
    // Predicated region
    $region90: #{forecast_net_transformer.1} parent=1 // pred_check
      _
    $region91: #{forecast_net_transformer.1} parent=1 // pred_check_branch
      %212 = sbr.rel (0) target = $region93
    $region92: #{forecast_net_transformer.1} parent=1 // pred_region
      _
    $region93: #{forecast_net_transformer.1} parent=1 // pred_fallthru
      _
    // Predicated region
    $region94: #{forecast_net_transformer.1} parent=1 // pred_check
      _
    $region95: #{forecast_net_transformer.1} parent=1 // pred_check_branch
      %214 = sbr.rel (0) target = $region97
    $region96: #{forecast_net_transformer.1} parent=1 // pred_region
      _
    $region97: #{forecast_net_transformer.1} parent=1 // pred_fallthru
      _
    // Predicated region
    $region98: #{forecast_net_transformer.1} parent=1 // pred_check
      _
    $region99: #{forecast_net_transformer.1} parent=1 // pred_check_branch
      %216 = sbr.rel (0) target = $region101
    $region100: #{forecast_net_transformer.1} parent=1 // pred_region
      _
    $region101: #{forecast_net_transformer.1} parent=1 // pred_fallthru
      _
    // Predicated region
    $region102: #{forecast_net_transformer.1} parent=1 // pred_check
      _
    $region103: #{forecast_net_transformer.1} parent=1 // pred_check_branch
      %218 = sbr.rel (0) target = $region105
    $region104: #{forecast_net_transformer.1} parent=1 // pred_region
      _
    $region105: #{forecast_net_transformer.1} parent=1 // pred_fallthru
      _
    // Predicated region
    $region106: #{forecast_net_transformer.1} parent=1 // pred_check
      _
    $region107: #{forecast_net_transformer.1} parent=1 // pred_check_branch
      %220 = sbr.rel (0) target = $region109
    $region108: #{forecast_net_transformer.1} parent=1 // pred_region
      _
    $region109: #{forecast_net_transformer.1} parent=1 // pred_fallthru
      _
    // Predicated region
    $region110: #{forecast_net_transformer.1} parent=1 // pred_check
      _
    $region111: #{forecast_net_transformer.1} parent=1 // pred_check_branch
      %222 = sbr.rel (0) target = $region113
    $region112: #{forecast_net_transformer.1} parent=1 // pred_region
      _
    $region113: #{forecast_net_transformer.1} parent=1 // pred_fallthru
      _
    // Predicated region
    $region114: #{forecast_net_transformer.1} parent=1 // pred_check
      _
    $region115: #{forecast_net_transformer.1} parent=1 // pred_check_branch
      %224 = sbr.rel (0) target = $region117
    $region116: #{forecast_net_transformer.1} parent=1 // pred_region
      _
    $region117: #{forecast_net_transformer.1} parent=1 // pred_fallthru
      _
    // Predicated region
    $region118: #{forecast_net_transformer.1} parent=1 // pred_check
      _
    $region119: #{forecast_net_transformer.1} parent=1 // pred_check_branch
      %226 = sbr.rel (0) target = $region121
    $region120: #{forecast_net_transformer.1} parent=1 // pred_region
      _
    $region121: #{forecast_net_transformer.1} parent=1 // pred_fallthru
      _
    // Predicated region
    $region122: #{forecast_net_transformer.1} parent=1 // pred_check
      _
    $region123: #{forecast_net_transformer.1} parent=1 // pred_check_branch
      %228 = sbr.rel (0) target = $region125
    $region124: #{forecast_net_transformer.1} parent=1 // pred_region
      _
    $region125: #{forecast_net_transformer.1} parent=1 // pred_fallthru
      _
    // Predicated region
    $region126: #{forecast_net_transformer.1} parent=1 // pred_check
      _
    $region127: #{forecast_net_transformer.1} parent=1 // pred_check_branch
      %230 = sbr.rel (0) target = $region129
    $region128: #{forecast_net_transformer.1} parent=1 // pred_region
      _
    $region129: #{forecast_net_transformer.1} parent=1 // pred_fallthru
      _
    // Predicated region
    $region130: #{forecast_net_transformer.1} parent=1 // pred_check
      _
    $region131: #{forecast_net_transformer.1} parent=1 // pred_check_branch
      %232 = sbr.rel (0) target = $region133
    $region132: #{forecast_net_transformer.1} parent=1 // pred_region
      _
    $region133: #{forecast_net_transformer.1} parent=1 // pred_fallthru
      _
    // Predicated region
    $region134: #{forecast_net_transformer.1} parent=1 // pred_check
      _
    $region135: #{forecast_net_transformer.1} parent=1 // pred_check_branch
      %234 = sbr.rel (0) target = $region137
    $region136: #{forecast_net_transformer.1} parent=1 // pred_region
      _
    $region137: #{forecast_net_transformer.1} parent=1 // pred_fallthru
      _
    // Predicated region
    $region138: #{forecast_net_transformer.1} parent=1 // pred_check
      _
    $region139: #{forecast_net_transformer.1} parent=1 // pred_check_branch
      %236 = sbr.rel (0) target = $region141
    $region140: #{forecast_net_transformer.1} parent=1 // pred_region
      _
    $region141: #{forecast_net_transformer.1} parent=1 // pred_fallthru
      _
    // Predicated region
    $region142: #{forecast_net_transformer.1} parent=1 // pred_check
      _
    $region143: #{forecast_net_transformer.1} parent=1 // pred_check_branch
      %238 = sbr.rel (0) target = $region145
    $region144: #{forecast_net_transformer.1} parent=1 // pred_region
      _
    $region145: #{forecast_net_transformer.1} parent=1 // pred_fallthru
      _
    // Predicated region
    $region146: #{forecast_net_transformer.1} parent=1 // pred_check
      _
    $region147: #{forecast_net_transformer.1} parent=1 // pred_check_branch
      %240 = sbr.rel (0) target = $region149
    $region148: #{forecast_net_transformer.1} parent=1 // pred_region
      _
    $region149: #{forecast_net_transformer.1} parent=1 // pred_fallthru
      _
    // Predicated region
    $region150: #{forecast_net_transformer.1} parent=1 // pred_check
      _
    $region151: #{forecast_net_transformer.1} parent=1 // pred_check_branch
      %242 = sbr.rel (0) target = $region153
    $region152: #{forecast_net_transformer.1} parent=1 // pred_region
      _
    $region153: #{forecast_net_transformer.1} parent=1 // pred_fallthru
      _
    // Predicated region
    $region154: #{forecast_net_transformer.1} parent=1 // pred_check
      _
    $region155: #{forecast_net_transformer.1} parent=1 // pred_check_branch
      %244 = sbr.rel (0) target = $region157
    $region156: #{forecast_net_transformer.1} parent=1 // pred_region
      _
    $region157: #{forecast_net_transformer.1} parent=1 // pred_fallthru
      _
    // Predicated region
    $region158: #{forecast_net_transformer.1} parent=1 // pred_check
      _
    $region159: #{forecast_net_transformer.1} parent=1 // pred_check_branch
      %246 = sbr.rel (0) target = $region161
    $region160: #{forecast_net_transformer.1} parent=1 // pred_region
      _
    $region161: #{forecast_net_transformer.1} parent=1 // pred_fallthru
      _
    // Predicated region
    $region162: #{forecast_net_transformer.1} parent=1 // pred_check
      _
    $region163: #{forecast_net_transformer.1} parent=1 // pred_check_branch
      %248 = sbr.rel (0) target = $region165
    $region164: #{forecast_net_transformer.1} parent=1 // pred_region
      _
    $region165: #{forecast_net_transformer.1} parent=1 // pred_fallthru
      _
    // Predicated region
    $region166: #{forecast_net_transformer.1} parent=1 // pred_check
      _
    $region167: #{forecast_net_transformer.1} parent=1 // pred_check_branch
      %250 = sbr.rel (0) target = $region169
    $region168: #{forecast_net_transformer.1} parent=1 // pred_region
      _
    $region169: #{forecast_net_transformer.1} parent=1 // pred_fallthru
      _
    // Predicated region
    $region170: #{forecast_net_transformer.1} parent=1 // pred_check
      _
    $region171: #{forecast_net_transformer.1} parent=1 // pred_check_branch
      %252 = sbr.rel (0) target = $region173
    $region172: #{forecast_net_transformer.1} parent=1 // pred_region
      _
    $region173: #{forecast_net_transformer.1} parent=1 // pred_fallthru
      _
    // Predicated region
    $region174: #{forecast_net_transformer.1} parent=1 // pred_check
      _
    $region175: #{forecast_net_transformer.1} parent=1 // pred_check_branch
      %254 = sbr.rel (0) target = $region177
    $region176: #{forecast_net_transformer.1} parent=1 // pred_region
      _
    $region177: #{forecast_net_transformer.1} parent=1 // pred_fallthru
      _
    // Predicated region
    $region178: #{forecast_net_transformer.1} parent=1 // pred_check
      _
    $region179: #{forecast_net_transformer.1} parent=1 // pred_check_branch
      %256 = sbr.rel (0) target = $region181
    $region180: #{forecast_net_transformer.1} parent=1 // pred_region
      _
    $region181: #{forecast_net_transformer.1} parent=1 // pred_fallthru
      _
    // Predicated region
    $region182: #{forecast_net_transformer.1} parent=1 // pred_check
      _
    $region183: #{forecast_net_transformer.1} parent=1 // pred_check_branch
      %258 = sbr.rel (0) target = $region185
    $region184: #{forecast_net_transformer.1} parent=1 // pred_region
      _
    $region185: #{forecast_net_transformer.1} parent=1 // pred_fallthru
      _
    // Predicated region
    $region186: #{forecast_net_transformer.1} parent=1 // pred_check
      _
    $region187: #{forecast_net_transformer.1} parent=1 // pred_check_branch
      %260 = sbr.rel (0) target = $region189
    $region188: #{forecast_net_transformer.1} parent=1 // pred_region
      _
    $region189: #{forecast_net_transformer.1} parent=1 // pred_fallthru
      _
    // Predicated region
    $region190: #{forecast_net_transformer.1} parent=1 // pred_check
      _
    $region191: #{forecast_net_transformer.1} parent=1 // pred_check_branch
      %262 = sbr.rel (0) target = $region193
    $region192: #{forecast_net_transformer.1} parent=1 // pred_region
      _
    $region193: #{forecast_net_transformer.1} parent=1 // pred_fallthru
      _
    // Predicated region
    $region194: #{forecast_net_transformer.1} parent=1 // pred_check
      _
    $region195: #{forecast_net_transformer.1} parent=1 // pred_check_branch
      %264 = sbr.rel (0) target = $region197
    $region196: #{forecast_net_transformer.1} parent=1 // pred_region
      _
    $region197: #{forecast_net_transformer.1} parent=1 // pred_fallthru
      _
    // Predicated region
    $region198: #{forecast_net_transformer.1} parent=1 // pred_check
      _
    $region199: #{forecast_net_transformer.1} parent=1 // pred_check_branch
      %266 = sbr.rel (0) target = $region201
    $region200: #{forecast_net_transformer.1} parent=1 // pred_region
      _
    $region201: #{forecast_net_transformer.1} parent=1 // pred_fallthru
      _
    // Predicated region
    $region202: #{forecast_net_transformer.1} parent=1 // pred_check
      _
    $region203: #{forecast_net_transformer.1} parent=1 // pred_check_branch
      %268 = sbr.rel (0) target = $region205
    $region204: #{forecast_net_transformer.1} parent=1 // pred_region
      _
    $region205: #{forecast_net_transformer.1} parent=1 // pred_fallthru
      _
    // Predicated region
    $region206: #{forecast_net_transformer.1} parent=1 // pred_check
      _
    $region207: #{forecast_net_transformer.1} parent=1 // pred_check_branch
      %270 = sbr.rel (0) target = $region209
    $region208: #{forecast_net_transformer.1} parent=1 // pred_region
      _
    $region209: #{forecast_net_transformer.1} parent=1 // pred_fallthru
      _
    // Predicated region
    $region210: #{forecast_net_transformer.1} parent=1 // pred_check
      _
    $region211: #{forecast_net_transformer.1} parent=1 // pred_check_branch
      %272 = sbr.rel (0) target = $region213
    $region212: #{forecast_net_transformer.1} parent=1 // pred_region
      _
    $region213: #{forecast_net_transformer.1} parent=1 // pred_fallthru
      _
    // Predicated region
    $region214: #{forecast_net_transformer.1} parent=1 // pred_check
      _
    $region215: #{forecast_net_transformer.1} parent=1 // pred_check_branch
      %274 = sbr.rel (0) target = $region217
    $region216: #{forecast_net_transformer.1} parent=1 // pred_region
      _
    $region217: #{forecast_net_transformer.1} parent=1 // pred_fallthru
      _
    // Predicated region
    $region218: #{forecast_net_transformer.1} parent=1 // pred_check
      _
    $region219: #{forecast_net_transformer.1} parent=1 // pred_check_branch
      %276 = sbr.rel (0) target = $region221
    $region220: #{forecast_net_transformer.1} parent=1 // pred_region
      _
    $region221: #{forecast_net_transformer.1} parent=1 // pred_fallthru
      _
    // Predicated region
    $region222: #{forecast_net_transformer.1} parent=1 // pred_check
      _
    $region223: #{forecast_net_transformer.1} parent=1 // pred_check_branch
      %278 = sbr.rel (0) target = $region225
    $region224: #{forecast_net_transformer.1} parent=1 // pred_region
      _
    $region225: #{forecast_net_transformer.1} parent=1 // pred_fallthru
      _
    // Predicated region
    $region226: #{forecast_net_transformer.1} parent=1 // pred_check
      _
    $region227: #{forecast_net_transformer.1} parent=1 // pred_check_branch
      %280 = sbr.rel (0) target = $region229
    $region228: #{forecast_net_transformer.1} parent=1 // pred_region
      _
    $region229: #{forecast_net_transformer.1} parent=1 // pred_fallthru
      _
    // Predicated region
    $region230: #{forecast_net_transformer.1} parent=1 // pred_check
      _
    $region231: #{forecast_net_transformer.1} parent=1 // pred_check_branch
      %282 = sbr.rel (0) target = $region233
    $region232: #{forecast_net_transformer.1} parent=1 // pred_region
      _
    $region233: #{forecast_net_transformer.1} parent=1 // pred_fallthru
      _
    // Predicated region
    $region234: #{forecast_net_transformer.1} parent=1 // pred_check
      _
    $region235: #{forecast_net_transformer.1} parent=1 // pred_check_branch
      %284 = sbr.rel (0) target = $region237
    $region236: #{forecast_net_transformer.1} parent=1 // pred_region
      _
    $region237: #{forecast_net_transformer.1} parent=1 // pred_fallthru
      _
    // Predicated region
    $region238: #{forecast_net_transformer.1} parent=1 // pred_check
      _
    $region239: #{forecast_net_transformer.1} parent=1 // pred_check_branch
      %286 = sbr.rel (0) target = $region241
    $region240: #{forecast_net_transformer.1} parent=1 // pred_region
      _
    $region241: #{forecast_net_transformer.1} parent=1 // pred_fallthru
      _
    // Predicated region
    $region242: #{forecast_net_transformer.1} parent=1 // pred_check
      _
    $region243: #{forecast_net_transformer.1} parent=1 // pred_check_branch
      %288 = sbr.rel (0) target = $region245
    $region244: #{forecast_net_transformer.1} parent=1 // pred_region
      _
    $region245: #{forecast_net_transformer.1} parent=1 // pred_fallthru
      _
    // Predicated region
    $region246: #{forecast_net_transformer.1} parent=1 // pred_check
      _
    $region247: #{forecast_net_transformer.1} parent=1 // pred_check_branch
      %290 = sbr.rel (0) target = $region249
    $region248: #{forecast_net_transformer.1} parent=1 // pred_region
      _
    $region249: #{forecast_net_transformer.1} parent=1 // pred_fallthru
      _
    // Predicated region
    $region250: #{forecast_net_transformer.1} parent=1 // pred_check
      _
    $region251: #{forecast_net_transformer.1} parent=1 // pred_check_branch
      %292 = sbr.rel (0) target = $region253
    $region252: #{forecast_net_transformer.1} parent=1 // pred_region
      _
    $region253: #{forecast_net_transformer.1} parent=1 // pred_fallthru
      _
    // Predicated region
    $region254: #{forecast_net_transformer.1} parent=1 // pred_check
      _
    $region255: #{forecast_net_transformer.1} parent=1 // pred_check_branch
      %294 = sbr.rel (0) target = $region257
    $region256: #{forecast_net_transformer.1} parent=1 // pred_region
      _
    $region257: #{forecast_net_transformer.1} parent=1 // pred_fallthru
      _
    // Predicated region
    $region258: #{forecast_net_transformer.1} parent=1 // pred_check
      _
    $region259: #{forecast_net_transformer.1} parent=1 // pred_check_branch
      %296 = sbr.rel (0) target = $region261
    $region260: #{forecast_net_transformer.1} parent=1 // pred_region
      _
    $region261: #{forecast_net_transformer.1} parent=1 // pred_fallthru
      _
    // Predicated region
    $region262: #{forecast_net_transformer.1} parent=1 // pred_check
      _
    $region263: #{forecast_net_transformer.1} parent=1 // pred_check_branch
      %298 = sbr.rel (0) target = $region265
    $region264: #{forecast_net_transformer.1} parent=1 // pred_region
      _
    $region265: #{forecast_net_transformer.1} parent=1 // pred_fallthru
      _
    // Predicated region
    $region266: #{forecast_net_transformer.1} parent=1 // pred_check
      _
    $region267: #{forecast_net_transformer.1} parent=1 // pred_check_branch
      %300 = sbr.rel (0) target = $region269
    $region268: #{forecast_net_transformer.1} parent=1 // pred_region
      _
    $region269: #{forecast_net_transformer.1} parent=1 // pred_fallthru
      _
    // Predicated region
    $region270: #{forecast_net_transformer.1} parent=1 // pred_check
      _
    $region271: #{forecast_net_transformer.1} parent=1 // pred_check_branch
      %302 = sbr.rel (0) target = $region273
    $region272: #{forecast_net_transformer.1} parent=1 // pred_region
      _
    $region273: #{forecast_net_transformer.1} parent=1 // pred_fallthru
      _
    // Predicated region
    $region274: #{forecast_net_transformer.1} parent=1 // pred_check
      _
    $region275: #{forecast_net_transformer.1} parent=1 // pred_check_branch
      %304 = sbr.rel (0) target = $region277
    $region276: #{forecast_net_transformer.1} parent=1 // pred_region
      _
    $region277: #{forecast_net_transformer.1} parent=1 // pred_fallthru
      _
    // Predicated region
    $region278: #{forecast_net_transformer.1} parent=1 // pred_check
      _
    $region279: #{forecast_net_transformer.1} parent=1 // pred_check_branch
      %306 = sbr.rel (0) target = $region281
    $region280: #{forecast_net_transformer.1} parent=1 // pred_region
      _
    $region281: #{forecast_net_transformer.1} parent=1 // pred_fallthru
      _
    // Predicated region
    $region282: #{forecast_net_transformer.1} parent=1 // pred_check
      _
    $region283: #{forecast_net_transformer.1} parent=1 // pred_check_branch
      %308 = sbr.rel (0) target = $region285
    $region284: #{forecast_net_transformer.1} parent=1 // pred_region
      _
    $region285: #{forecast_net_transformer.1} parent=1 // pred_fallthru
      _
    // Predicated region
    $region286: #{forecast_net_transformer.1} parent=1 // pred_check
      _
    $region287: #{forecast_net_transformer.1} parent=1 // pred_check_branch
      %310 = sbr.rel (0) target = $region289
    $region288: #{forecast_net_transformer.1} parent=1 // pred_region
      _
    $region289: #{forecast_net_transformer.1} parent=1 // pred_fallthru
      _
    // Predicated region
    $region290: #{forecast_net_transformer.1} parent=1 // pred_check
      _
    $region291: #{forecast_net_transformer.1} parent=1 // pred_check_branch
      %312 = sbr.rel (0) target = $region293
    $region292: #{forecast_net_transformer.1} parent=1 // pred_region
      _
    $region293: #{forecast_net_transformer.1} parent=1 // pred_fallthru
      _
    // Predicated region
    $region294: #{forecast_net_transformer.1} parent=1 // pred_check
      _
    $region295: #{forecast_net_transformer.1} parent=1 // pred_check_branch
      %314 = sbr.rel (0) target = $region297
    $region296: #{forecast_net_transformer.1} parent=1 // pred_region
      %s316 = ssub.s32 16, 16
      %317 = vsyncadd [#allocation4], %s316
      %s319 = sshll.u32 [#allocation3], 4
      %s320 = int_to_ptr.vmem [resolvable:$true] %s319
      %322 = dma.hbm_to_vmem [thread:$0]  %s147, 16, %s320, [#allocation4]
    $region297: #{forecast_net_transformer.1} parent=1 // pred_fallthru
      _
    // Predicated region
    $region298: #{forecast_net_transformer.1} parent=1 // pred_check
      _
    $region299: #{forecast_net_transformer.1} parent=1 // pred_check_branch
      %324 = sbr.rel (0) target = $region301
    $region300: #{forecast_net_transformer.1} parent=1 // pred_region
      %s326 = ssub.s32 16, 16
      %327 = vsyncadd [#allocation6], %s326
      %s329 = sshll.u32 [#allocation5], 4
      %s330 = int_to_ptr.vmem [resolvable:$true] %s329
      %332 = dma.hbm_to_vmem [thread:$0]  %s149, 16, %s330, [#allocation6]
    $region301: #{forecast_net_transformer.1} parent=1 // pred_fallthru
      _
    // Predicated region
    $region302: #{forecast_net_transformer.1} parent=1 // pred_check
      _
    $region303: #{forecast_net_transformer.1} parent=1 // pred_check_branch
      %334 = sbr.rel (0) target = $region305
    $region304: #{forecast_net_transformer.1} parent=1 // pred_region
      %s336 = ssub.s32 16, 16
      %337 = vsyncadd [#allocation6], %s336
      %s339 = sshll.u32 [#allocation7], 4
      %s340 = int_to_ptr.vmem [resolvable:$true] %s339
      %342 = dma.hbm_to_vmem [thread:$0]  %s151, 16, %s340, [#allocation6]
    $region305: #{forecast_net_transformer.1} parent=1 // pred_fallthru
      _
    // Predicated region
    $region306: #{forecast_net_transformer.1} parent=1 // pred_check
      _
    $region307: #{forecast_net_transformer.1} parent=1 // pred_check_branch
      %344 = sbr.rel (0) target = $region309
    $region308: #{forecast_net_transformer.1} parent=1 // pred_region
      %s346 = ssub.s32 16, 16
      %347 = vsyncadd [#allocation9], %s346
      %s349 = sshll.u32 [#allocation8], 4
      %s350 = int_to_ptr.vmem [resolvable:$true] %s349
      %352 = dma.hbm_to_vmem [thread:$0]  %s153, 16, %s350, [#allocation9]
    $region309: #{forecast_net_transformer.1} parent=1 // pred_fallthru
      _
    // Predicated region
    $region310: #{forecast_net_transformer.1} parent=1 // pred_check
      _
    $region311: #{forecast_net_transformer.1} parent=1 // pred_check_branch
      %354 = sbr.rel (0) target = $region313
    $region312: #{forecast_net_transformer.1} parent=1 // pred_region
      %s356 = ssub.s32 16, 16
      %357 = vsyncadd [#allocation9], %s356
      %s359 = sshll.u32 [#allocation10], 4
      %s360 = int_to_ptr.vmem [resolvable:$true] %s359
      %362 = dma.hbm_to_vmem [thread:$0]  %s155, 16, %s360, [#allocation9]
    $region313: #{forecast_net_transformer.1} parent=1 // pred_fallthru
      _
    // Predicated region
    $region314: #{forecast_net_transformer.1} parent=1 // pred_check
      _
    $region315: #{forecast_net_transformer.1} parent=1 // pred_check_branch
      %364 = sbr.rel (0) target = $region317
    $region316: #{forecast_net_transformer.1} parent=1 // pred_region
      %365 = dma.done [#allocation4], 16
    $region317: #{forecast_net_transformer.1} parent=1 // pred_fallthru
      _
    // Predicated region
    $region318: #{forecast_net_transformer.1} parent=1 // pred_check
      _
    $region319: #{forecast_net_transformer.1} parent=1 // pred_check_branch
      %367 = sbr.rel (0) target = $region321
    $region320: #{forecast_net_transformer.1} parent=1 // pred_region
      %368 = dma.done [#allocation6], 16
    $region321: #{forecast_net_transformer.1} parent=1 // pred_fallthru
      _
    // Predicated region
    $region322: #{forecast_net_transformer.1} parent=1 // pred_check
      _
    $region323: #{forecast_net_transformer.1} parent=1 // pred_check_branch
      %370 = sbr.rel (0) target = $region325
    $region324: #{forecast_net_transformer.1} parent=1 // pred_region
      %371 = dma.done [#allocation6], 16
    $region325: #{forecast_net_transformer.1} parent=1 // pred_fallthru
      _
    // Predicated region
    $region326: #{forecast_net_transformer.1} parent=1 // pred_check
      _
    $region327: #{forecast_net_transformer.1} parent=1 // pred_check_branch
      %373 = sbr.rel (0) target = $region329
    $region328: #{forecast_net_transformer.1} parent=1 // pred_region
      %374 = dma.done [#allocation9], 16
    $region329: #{forecast_net_transformer.1} parent=1 // pred_fallthru
      _
    // Predicated region
    $region330: #{forecast_net_transformer.1} parent=1 // pred_check
      _
    $region331: #{forecast_net_transformer.1} parent=1 // pred_check_branch
      %376 = sbr.rel (0) target = $region333
    $region332: #{forecast_net_transformer.1} parent=1 // pred_region
      %377 = dma.done [#allocation9], 16
    $region333: #{forecast_net_transformer.1} parent=1 // pred_fallthru
      _
    %v378 = vld [vmem:[%s1] sm:$0xff]
    %v379 = vld [vmem:[%s1 + $0x8] sm:$0xff]
    %v380 = vld [vmem:[%s3] sm:$0xff]
    %v381 = vld [vmem:[%s3 + $0x8] sm:$0xff]
    %v382 = vld [vmem:[%s5] sm:$0xff]
    %v383 = vld [vmem:[%s7] sm:$0xf]
    %v384 = vld [vmem:[%s9] sm:$0x1]
    %v385 = vld [vmem:[%s11] sm:$0xff]
    %v386 = vld [vmem:[%s11 + $0x8] sm:$0xff]
    %v387 = vld [vmem:[%s13] sm:$0xff]
    %v388 = vld [vmem:[%s15] sm:$0xff]
    %v389 = vld [vmem:[%s17] sm:$0x1]
    %v390 = vld [vmem:[%s19] sm:$0x1]
    %v391 = vld [vmem:[%s21] sm:$0x1]
    %v392 = vld [vmem:[%s23] sm:$0x1]
    %v393 = vld [vmem:[%s25] sm:$0x1]
    %v394 = vld [vmem:[#allocation2] sm:$0x1]
    %v396 = vlaneseq
    %v397 = vshrl.u32 %v396, 7
    %v398 = vsub.s32 0, %v397
    %v399 = vrot.slane %v384, %v398
    %vm401 = vcmask 31744
    %v403 = vsel %vm401, %v378, 0
    %v406 = vsel %vm401, %v379, 0
    %vm408 = vcmask 1043456
    %v410 = vsel %vm408, %v383, 0
    %412 = vmatprep.subr.mxu0 0.0
    %413 = vmatpush1.msra.mxu0 %v410
    %414 = vmatprep.subr.mxu0 0.0
    %415 = vmatpush1.msra.mxu0 0.0
    %416 = vmatprep.subr.mxu0 0.0
    %417 = vmatpush1.msra.mxu0 0.0
    %418 = vmatprep.subr.mxu0 0.0
    %419 = vmatpush1.msra.mxu0 0.0
    %420 = vmatprep.subr.mxu0 0.0
    %421 = vmatpush1.msra.mxu0 0.0
    %422 = vmatprep.subr.mxu0 0.0
    %423 = vmatpush1.msra.mxu0 0.0
    %424 = vmatprep.subr.mxu0 0.0
    %425 = vmatpush1.msra.mxu0 0.0
    %426 = vmatprep.subr.mxu0 0.0
    %427 = vmatpush1.msra.mxu0 0.0
    %428 = vmatprep.subr.mxu0 0.0
    %429 = vmatpush1.msra.mxu0 0.0
    %430 = vmatprep.subr.mxu0 0.0
    %431 = vmatpush1.msra.mxu0 0.0
    %432 = vmatprep.subr.mxu0 0.0
    %433 = vmatpush1.msra.mxu0 0.0
    %434 = vmatprep.subr.mxu0 0.0
    %435 = vmatpush1.msra.mxu0 0.0
    %436 = vmatprep.subr.mxu0 0.0
    %437 = vmatpush1.msra.mxu0 0.0
    %438 = vmatprep.subr.mxu0 0.0
    %439 = vmatpush1.msra.mxu0 0.0
    %440 = vmatprep.subr.mxu0 0.0
    %441 = vmatpush1.msra.mxu0 0.0
    %442 = vmatprep.subr.mxu0 0.0
    %443 = vmatpush1.msra.mxu0 0.0
    %444 = vmatprep.subr.mxu0 0.0
    %445 = vmatpush1.msra.mxu0 0.0
    %446 = vmatprep.subr.mxu0 0.0
    %447 = vmatpush1.msra.mxu0 0.0
    %448 = vmatprep.subr.mxu0 0.0
    %449 = vmatpush1.msra.mxu0 0.0
    %450 = vmatprep.subr.mxu0 0.0
    %451 = vmatpush1.msra.mxu0 0.0
    %452 = vmatprep.subr.mxu0 0.0
    %453 = vmatpush1.msra.mxu0 0.0
    %454 = vmatprep.subr.mxu0 0.0
    %455 = vmatpush1.msra.mxu0 0.0
    %456 = vmatprep.subr.mxu0 0.0
    %457 = vmatpush1.msra.mxu0 0.0
    %458 = vmatprep.subr.mxu0 0.0
    %459 = vmatpush1.msra.mxu0 0.0
    %460 = vmatprep.subr.mxu0 0.0
    %461 = vmatpush1.msra.mxu0 0.0
    %462 = vmatprep.subr.mxu0 0.0
    %463 = vmatpush1.msra.mxu0 0.0
    %464 = vmatprep.subr.mxu0 0.0
    %465 = vmatpush1.msra.mxu0 0.0
    %466 = vmatprep.subr.mxu0 0.0
    %467 = vmatpush1.msra.mxu0 0.0
    %468 = vmatprep.subr.mxu0 0.0
    %469 = vmatpush1.msra.mxu0 0.0
    %470 = vmatprep.subr.mxu0 0.0
    %471 = vmatpush1.msra.mxu0 0.0
    %472 = vmatprep.subr.mxu0 0.0
    %473 = vmatpush1.msra.mxu0 0.0
    %474 = vmatprep.subr.mxu0 0.0
    %475 = vmatpush1.msra.mxu0 0.0
    %476 = vmatprep.mubr.f32.mxu0 0.0
    %477 = vmatmul.mubr.f32.gmra.mrb[0].mxu0 %v403
    %v478 = vpop.f32.mrb[0].mxu0
    %v479 = vadd.f32 %v399, %v478
    %v480 = vpop.f32.mrb[0].mxu0
    %481 = vmatprep.mubr.f32.mxu0 0.0
    %482 = vmatmul.mubr.f32.gmra.mrb[0].mxu0 %v406
    %v483 = vpop.f32.mrb[0].mxu0
    %v484 = vadd.f32 %v399, %v483
    %v485 = vpop.f32.mrb[0].mxu0
    %486 = vdwg.mxu0
    %v487 = vadd.f32 %v479, %v380
    %v488 = vadd.f32 %v484, %v381
    %v489 = vld [vmem:[%s29] sm:$0xff]
    %v490 = vld [vmem:[%s29 + $0x8] sm:$0xff]
    %v491 = vld [vmem:[%s29 + $0x10] sm:$0xff]
    %v492 = vld [vmem:[%s29 + $0x18] sm:$0xff]
    %v493 = vld [vmem:[%s31] sm:$0x1]
    %v494 = vld [vmem:[%s33] sm:$0xff]
    %v495 = vld [vmem:[%s33 + $0x8] sm:$0xff]
    %v496 = vld [vmem:[%s33 + $0x10] sm:$0xff]
    %v497 = vld [vmem:[%s33 + $0x18] sm:$0xff]
    %v498 = vld [vmem:[%s35] sm:$0x1]
    %v499 = vld [vmem:[%s37] sm:$0xff]
    %v500 = vld [vmem:[%s37 + $0x8] sm:$0xff]
    %v501 = vld [vmem:[%s37 + $0x10] sm:$0xff]
    %v502 = vld [vmem:[%s37 + $0x18] sm:$0xff]
    %v503 = vld [vmem:[%s39] sm:$0x1]
    %v504 = vld [vmem:[%s41] sm:$0xff]
    %v505 = vld [vmem:[%s41 + $0x8] sm:$0xff]
    %v506 = vld [vmem:[%s41 + $0x10] sm:$0xff]
    %v507 = vld [vmem:[%s41 + $0x18] sm:$0xff]
    %v508 = vld [vmem:[%s41 + $0x20] sm:$0xff]
    %v509 = vld [vmem:[%s41 + $0x28] sm:$0xff]
    %v510 = vld [vmem:[%s41 + $0x30] sm:$0xff]
    %v511 = vld [vmem:[%s41 + $0x38] sm:$0xff]
    %v512 = vld [vmem:[%s43] sm:$0x1]
    %v513 = vld [vmem:[%s45] sm:$0x1]
    %v514 = vld [vmem:[%s47] sm:$0x1]
    %v515 = vld [vmem:[%s49] sm:$0x1]
    %v516 = vld [vmem:[%s51] sm:$0x1]
    %v518 = vlaneseq
    %v519 = vshrl.u32 %v518, 7
    %v520 = vsub.s32 0, %v519
    %v521 = vrot.slane %v493, %v520
    %vm523 = vcmask 261120
    %v525 = vsel %vm523, %v487, 0
    %v528 = vsel %vm523, %v488, 0
    %530 = vmatprep.subr.mxu0 0.0
    %531 = vmatpush1.msra.mxu0 %v489
    %532 = vmatprep.subr.mxu0 0.0
    %533 = vmatpush1.msra.mxu0 %v490
    %534 = vmatprep.subr.mxu0 0.0
    %535 = vmatpush1.msra.mxu0 %v491
    %536 = vmatprep.subr.mxu0 0.0
    %537 = vmatpush1.msra.mxu0 %v492
    %538 = vmatprep.subr.mxu0 0.0
    %539 = vmatpush1.msra.mxu0 0.0
    %540 = vmatprep.subr.mxu0 0.0
    %541 = vmatpush1.msra.mxu0 0.0
    %542 = vmatprep.subr.mxu0 0.0
    %543 = vmatpush1.msra.mxu0 0.0
    %544 = vmatprep.subr.mxu0 0.0
    %545 = vmatpush1.msra.mxu0 0.0
    %546 = vmatprep.subr.mxu0 0.0
    %547 = vmatpush1.msra.mxu0 0.0
    %548 = vmatprep.subr.mxu0 0.0
    %549 = vmatpush1.msra.mxu0 0.0
    %550 = vmatprep.subr.mxu0 0.0
    %551 = vmatpush1.msra.mxu0 0.0
    %552 = vmatprep.subr.mxu0 0.0
    %553 = vmatpush1.msra.mxu0 0.0
    %554 = vmatprep.subr.mxu0 0.0
    %555 = vmatpush1.msra.mxu0 0.0
    %556 = vmatprep.subr.mxu0 0.0
    %557 = vmatpush1.msra.mxu0 0.0
    %558 = vmatprep.subr.mxu0 0.0
    %559 = vmatpush1.msra.mxu0 0.0
    %560 = vmatprep.subr.mxu0 0.0
    %561 = vmatpush1.msra.mxu0 0.0
    %562 = vmatprep.subr.mxu0 0.0
    %563 = vmatpush1.msra.mxu0 0.0
    %564 = vmatprep.subr.mxu0 0.0
    %565 = vmatpush1.msra.mxu0 0.0
    %566 = vmatprep.subr.mxu0 0.0
    %567 = vmatpush1.msra.mxu0 0.0
    %568 = vmatprep.subr.mxu0 0.0
    %569 = vmatpush1.msra.mxu0 0.0
    %570 = vmatprep.subr.mxu0 0.0
    %571 = vmatpush1.msra.mxu0 0.0
    %572 = vmatprep.subr.mxu0 0.0
    %573 = vmatpush1.msra.mxu0 0.0
    %574 = vmatprep.subr.mxu0 0.0
    %575 = vmatpush1.msra.mxu0 0.0
    %576 = vmatprep.subr.mxu0 0.0
    %577 = vmatpush1.msra.mxu0 0.0
    %578 = vmatprep.subr.mxu0 0.0
    %579 = vmatpush1.msra.mxu0 0.0
    %580 = vmatprep.subr.mxu0 0.0
    %581 = vmatpush1.msra.mxu0 0.0
    %582 = vmatprep.subr.mxu0 0.0
    %583 = vmatpush1.msra.mxu0 0.0
    %584 = vmatprep.subr.mxu0 0.0
    %585 = vmatpush1.msra.mxu0 0.0
    %586 = vmatprep.subr.mxu0 0.0
    %587 = vmatpush1.msra.mxu0 0.0
    %588 = vmatprep.subr.mxu0 0.0
    %589 = vmatpush1.msra.mxu0 0.0
    %590 = vmatprep.subr.mxu0 0.0
    %591 = vmatpush1.msra.mxu0 0.0
    %592 = vmatprep.subr.mxu0 0.0
    %593 = vmatpush1.msra.mxu0 0.0
    %594 = vmatprep.mubr.f32.mxu0 0.0
    %595 = vmatmul.mubr.f32.gmra.mrb[0].mxu0 %v525
    %v596 = vpop.f32.mrb[0].mxu0
    %v597 = vadd.f32 %v521, %v596
    %v598 = vpop.f32.mrb[0].mxu0
    %599 = vmatprep.mubr.f32.mxu0 0.0
    %600 = vmatmul.mubr.f32.gmra.mrb[0].mxu0 %v528
    %v601 = vpop.f32.mrb[0].mxu0
    %v602 = vadd.f32 %v521, %v601
    %v603 = vpop.f32.mrb[0].mxu0
    %604 = vdwg.mxu0
    %607 = vrot.lane.b32.xlu0 %v597, 96
    %v608 = vpop.permute.xlu0 %607
    %609 = vrot.lane.b32.xlu0 %v602, 96
    %v610 = vpop.permute.xlu0 %609
    %vm611 = vcmask 64512
    %v612 = vsel %vm611, %v597, 0
    %v614 = vsel %vm611, %v602, 0
    %v616 = vsel %vm611, %v608, 0
    %v618 = vsel %vm611, %v610, 0
    %620 = vmatprep.subr.mxu0 0.0
    %621 = vmatpush1.xpose.msra.mxu0 %v616
    %622 = vmatprep.subr.mxu0 0.0
    %623 = vmatpush1.xpose.msra.mxu0 %v618
    %624 = vmatprep.subr.mxu0 0.0
    %625 = vmatpush1.xpose.msra.mxu0 0.0
    %626 = vmatprep.subr.mxu0 0.0
    %627 = vmatpush1.xpose.msra.mxu0 0.0
    %628 = vmatprep.subr.mxu0 0.0
    %629 = vmatpush1.xpose.msra.mxu0 0.0
    %630 = vmatprep.subr.mxu0 0.0
    %631 = vmatpush1.xpose.msra.mxu0 0.0
    %632 = vmatprep.subr.mxu0 0.0
    %633 = vmatpush1.xpose.msra.mxu0 0.0
    %634 = vmatprep.subr.mxu0 0.0
    %635 = vmatpush1.xpose.msra.mxu0 0.0
    %636 = vmatprep.subr.mxu0 0.0
    %637 = vmatpush1.xpose.msra.mxu0 0.0
    %638 = vmatprep.subr.mxu0 0.0
    %639 = vmatpush1.xpose.msra.mxu0 0.0
    %640 = vmatprep.subr.mxu0 0.0
    %641 = vmatpush1.xpose.msra.mxu0 0.0
    %642 = vmatprep.subr.mxu0 0.0
    %643 = vmatpush1.xpose.msra.mxu0 0.0
    %644 = vmatprep.subr.mxu0 0.0
    %645 = vmatpush1.xpose.msra.mxu0 0.0
    %646 = vmatprep.subr.mxu0 0.0
    %647 = vmatpush1.xpose.msra.mxu0 0.0
    %648 = vmatprep.subr.mxu0 0.0
    %649 = vmatpush1.xpose.msra.mxu0 0.0
    %650 = vmatprep.subr.mxu0 0.0
    %651 = vmatpush1.xpose.msra.mxu0 0.0
    %652 = vmatprep.subr.mxu0 0.0
    %653 = vmatpush1.xpose.msra.mxu0 0.0
    %654 = vmatprep.subr.mxu0 0.0
    %655 = vmatpush1.xpose.msra.mxu0 0.0
    %656 = vmatprep.subr.mxu0 0.0
    %657 = vmatpush1.xpose.msra.mxu0 0.0
    %658 = vmatprep.subr.mxu0 0.0
    %659 = vmatpush1.xpose.msra.mxu0 0.0
    %660 = vmatprep.subr.mxu0 0.0
    %661 = vmatpush1.xpose.msra.mxu0 0.0
    %662 = vmatprep.subr.mxu0 0.0
    %663 = vmatpush1.xpose.msra.mxu0 0.0
    %664 = vmatprep.subr.mxu0 0.0
    %665 = vmatpush1.xpose.msra.mxu0 0.0
    %666 = vmatprep.subr.mxu0 0.0
    %667 = vmatpush1.xpose.msra.mxu0 0.0
    %668 = vmatprep.subr.mxu0 0.0
    %669 = vmatpush1.xpose.msra.mxu0 0.0
    %670 = vmatprep.subr.mxu0 0.0
    %671 = vmatpush1.xpose.msra.mxu0 0.0
    %672 = vmatprep.subr.mxu0 0.0
    %673 = vmatpush1.xpose.msra.mxu0 0.0
    %674 = vmatprep.subr.mxu0 0.0
    %675 = vmatpush1.xpose.msra.mxu0 0.0
    %676 = vmatprep.subr.mxu0 0.0
    %677 = vmatpush1.xpose.msra.mxu0 0.0
    %678 = vmatprep.subr.mxu0 0.0
    %679 = vmatpush1.xpose.msra.mxu0 0.0
    %680 = vmatprep.subr.mxu0 0.0
    %681 = vmatpush1.xpose.msra.mxu0 0.0
    %682 = vmatprep.subr.mxu0 0.0
    %683 = vmatpush1.xpose.msra.mxu0 0.0
    %684 = vmatprep.mubr.f32.mxu0 0.0
    %685 = vmatmul.mubr.f32.gmra.mrb[0].mxu0 %v612
    %v686 = vpop.f32.mrb[0].mxu0
    %v687 = vadd.f32 %v385, %v686
    %v688 = vpop.f32.mrb[0].mxu0
    %689 = vmatprep.mubr.f32.mxu0 0.0
    %690 = vmatmul.mubr.f32.gmra.mrb[0].mxu0 %v614
    %v691 = vpop.f32.mrb[0].mxu0
    %v692 = vadd.f32 %v386, %v691
    %v693 = vpop.f32.mrb[0].mxu0
    %694 = vdwg.mxu0
    %vm695 = vcmask 130048
    %v696 = vsel %vm695, %v687, -inf
    %697 = vmax.xlane.f32.xlu0 %v696
    %v698 = vpop.xlane.xlu0 %697
    %v699 = vsel %vm695, %v692, -inf
    %700 = vmax.xlane.f32.xlu0 %v699
    %v701 = vpop.xlane.xlu0 %700
    %v702 = vsub.f32 %v687, %v698
    %v703 = vsub.f32 %v692, %v701
    %v704 = vmul.f32 %v702, 1.442695
    %v705 = vpow.pop %v704
    %v706 = vmul.f32 %v703, 1.442695
    %v707 = vpow.pop %v706
    %v708 = vsel %vm695, %v705, 0.0
    %709 = vadd.xlane.f32.xlu0 %v708
    %v710 = vpop.xlane.xlu0 %709
    %v711 = vsel %vm695, %v707, 0.0
    %712 = vadd.xlane.f32.xlu0 %v711
    %v713 = vpop.xlane.xlu0 %712
    %v714 = vrcp.pop %v710
    %v715 = vrcp.pop %v713
    %v716 = vmul.f32 %v705, %v714
    %v717 = vmul.f32 %v707, %v715
    %718 = vrot.lane.b32.xlu0 %v597, 64
    %v719 = vpop.permute.xlu0 %718
    %720 = vrot.lane.b32.xlu0 %v602, 64
    %v721 = vpop.permute.xlu0 %720
    %v725 = vsel %vm695, %v716, 0
    %v728 = vsel %vm695, %v717, 0
    %730 = vmatprep.subr.mxu0 0.0
    %731 = vmatpush1.msra.mxu0 %v719
    %732 = vmatprep.subr.mxu0 0.0
    %733 = vmatpush1.msra.mxu0 %v721
    %734 = vmatprep.subr.mxu0 0.0
    %735 = vmatpush1.msra.mxu0 0.0
    %736 = vmatprep.subr.mxu0 0.0
    %737 = vmatpush1.msra.mxu0 0.0
    %738 = vmatprep.subr.mxu0 0.0
    %739 = vmatpush1.msra.mxu0 0.0
    %740 = vmatprep.subr.mxu0 0.0
    %741 = vmatpush1.msra.mxu0 0.0
    %742 = vmatprep.subr.mxu0 0.0
    %743 = vmatpush1.msra.mxu0 0.0
    %744 = vmatprep.subr.mxu0 0.0
    %745 = vmatpush1.msra.mxu0 0.0
    %746 = vmatprep.subr.mxu0 0.0
    %747 = vmatpush1.msra.mxu0 0.0
    %748 = vmatprep.subr.mxu0 0.0
    %749 = vmatpush1.msra.mxu0 0.0
    %750 = vmatprep.subr.mxu0 0.0
    %751 = vmatpush1.msra.mxu0 0.0
    %752 = vmatprep.subr.mxu0 0.0
    %753 = vmatpush1.msra.mxu0 0.0
    %754 = vmatprep.subr.mxu0 0.0
    %755 = vmatpush1.msra.mxu0 0.0
    %756 = vmatprep.subr.mxu0 0.0
    %757 = vmatpush1.msra.mxu0 0.0
    %758 = vmatprep.subr.mxu0 0.0
    %759 = vmatpush1.msra.mxu0 0.0
    %760 = vmatprep.subr.mxu0 0.0
    %761 = vmatpush1.msra.mxu0 0.0
    %762 = vmatprep.subr.mxu0 0.0
    %763 = vmatpush1.msra.mxu0 0.0
    %764 = vmatprep.subr.mxu0 0.0
    %765 = vmatpush1.msra.mxu0 0.0
    %766 = vmatprep.subr.mxu0 0.0
    %767 = vmatpush1.msra.mxu0 0.0
    %768 = vmatprep.subr.mxu0 0.0
    %769 = vmatpush1.msra.mxu0 0.0
    %770 = vmatprep.subr.mxu0 0.0
    %771 = vmatpush1.msra.mxu0 0.0
    %772 = vmatprep.subr.mxu0 0.0
    %773 = vmatpush1.msra.mxu0 0.0
    %774 = vmatprep.subr.mxu0 0.0
    %775 = vmatpush1.msra.mxu0 0.0
    %776 = vmatprep.subr.mxu0 0.0
    %777 = vmatpush1.msra.mxu0 0.0
    %778 = vmatprep.subr.mxu0 0.0
    %779 = vmatpush1.msra.mxu0 0.0
    %780 = vmatprep.subr.mxu0 0.0
    %781 = vmatpush1.msra.mxu0 0.0
    %782 = vmatprep.subr.mxu0 0.0
    %783 = vmatpush1.msra.mxu0 0.0
    %784 = vmatprep.subr.mxu0 0.0
    %785 = vmatpush1.msra.mxu0 0.0
    %786 = vmatprep.subr.mxu0 0.0
    %787 = vmatpush1.msra.mxu0 0.0
    %788 = vmatprep.subr.mxu0 0.0
    %789 = vmatpush1.msra.mxu0 0.0
    %790 = vmatprep.subr.mxu0 0.0
    %791 = vmatpush1.msra.mxu0 0.0
    %792 = vmatprep.subr.mxu0 0.0
    %793 = vmatpush1.msra.mxu0 0.0
    %794 = vmatprep.mubr.f32.mxu0 0.0
    %795 = vmatmul.mubr.f32.gmra.mrb[0].mxu0 %v725
    %v796 = vpop.f32.mrb[0].mxu0
    %v797 = vadd.f32 0.0, %v796
    %v798 = vpop.f32.mrb[0].mxu0
    %799 = vmatprep.mubr.f32.mxu0 0.0
    %800 = vmatmul.mubr.f32.gmra.mrb[0].mxu0 %v728
    %v801 = vpop.f32.mrb[0].mxu0
    %v802 = vadd.f32 0.0, %v801
    %v803 = vpop.f32.mrb[0].mxu0
    %804 = vdwg.mxu0
    %805 = vrot.lane.b32.xlu0 %v597, 120
    %v806 = vpop.permute.xlu0 %805
    %807 = vrot.lane.b32.xlu0 %v602, 120
    %v808 = vpop.permute.xlu0 %807
    %809 = vrot.lane.b32.xlu0 %v597, 88
    %v810 = vpop.permute.xlu0 %809
    %811 = vrot.lane.b32.xlu0 %v602, 88
    %v812 = vpop.permute.xlu0 %811
    %v813 = vsel %vm611, %v806, 0
    %v815 = vsel %vm611, %v808, 0
    %v817 = vsel %vm611, %v810, 0
    %v819 = vsel %vm611, %v812, 0
    %821 = vmatprep.subr.mxu0 0.0
    %822 = vmatpush1.xpose.msra.mxu0 %v817
    %823 = vmatprep.subr.mxu0 0.0
    %824 = vmatpush1.xpose.msra.mxu0 %v819
    %825 = vmatprep.subr.mxu0 0.0
    %826 = vmatpush1.xpose.msra.mxu0 0.0
    %827 = vmatprep.subr.mxu0 0.0
    %828 = vmatpush1.xpose.msra.mxu0 0.0
    %829 = vmatprep.subr.mxu0 0.0
    %830 = vmatpush1.xpose.msra.mxu0 0.0
    %831 = vmatprep.subr.mxu0 0.0
    %832 = vmatpush1.xpose.msra.mxu0 0.0
    %833 = vmatprep.subr.mxu0 0.0
    %834 = vmatpush1.xpose.msra.mxu0 0.0
    %835 = vmatprep.subr.mxu0 0.0
    %836 = vmatpush1.xpose.msra.mxu0 0.0
    %837 = vmatprep.subr.mxu0 0.0
    %838 = vmatpush1.xpose.msra.mxu0 0.0
    %839 = vmatprep.subr.mxu0 0.0
    %840 = vmatpush1.xpose.msra.mxu0 0.0
    %841 = vmatprep.subr.mxu0 0.0
    %842 = vmatpush1.xpose.msra.mxu0 0.0
    %843 = vmatprep.subr.mxu0 0.0
    %844 = vmatpush1.xpose.msra.mxu0 0.0
    %845 = vmatprep.subr.mxu0 0.0
    %846 = vmatpush1.xpose.msra.mxu0 0.0
    %847 = vmatprep.subr.mxu0 0.0
    %848 = vmatpush1.xpose.msra.mxu0 0.0
    %849 = vmatprep.subr.mxu0 0.0
    %850 = vmatpush1.xpose.msra.mxu0 0.0
    %851 = vmatprep.subr.mxu0 0.0
    %852 = vmatpush1.xpose.msra.mxu0 0.0
    %853 = vmatprep.subr.mxu0 0.0
    %854 = vmatpush1.xpose.msra.mxu0 0.0
    %855 = vmatprep.subr.mxu0 0.0
    %856 = vmatpush1.xpose.msra.mxu0 0.0
    %857 = vmatprep.subr.mxu0 0.0
    %858 = vmatpush1.xpose.msra.mxu0 0.0
    %859 = vmatprep.subr.mxu0 0.0
    %860 = vmatpush1.xpose.msra.mxu0 0.0
    %861 = vmatprep.subr.mxu0 0.0
    %862 = vmatpush1.xpose.msra.mxu0 0.0
    %863 = vmatprep.subr.mxu0 0.0
    %864 = vmatpush1.xpose.msra.mxu0 0.0
    %865 = vmatprep.subr.mxu0 0.0
    %866 = vmatpush1.xpose.msra.mxu0 0.0
    %867 = vmatprep.subr.mxu0 0.0
    %868 = vmatpush1.xpose.msra.mxu0 0.0
    %869 = vmatprep.subr.mxu0 0.0
    %870 = vmatpush1.xpose.msra.mxu0 0.0
    %871 = vmatprep.subr.mxu0 0.0
    %872 = vmatpush1.xpose.msra.mxu0 0.0
    %873 = vmatprep.subr.mxu0 0.0
    %874 = vmatpush1.xpose.msra.mxu0 0.0
    %875 = vmatprep.subr.mxu0 0.0
    %876 = vmatpush1.xpose.msra.mxu0 0.0
    %877 = vmatprep.subr.mxu0 0.0
    %878 = vmatpush1.xpose.msra.mxu0 0.0
    %879 = vmatprep.subr.mxu0 0.0
    %880 = vmatpush1.xpose.msra.mxu0 0.0
    %881 = vmatprep.subr.mxu0 0.0
    %882 = vmatpush1.xpose.msra.mxu0 0.0
    %883 = vmatprep.subr.mxu0 0.0
    %884 = vmatpush1.xpose.msra.mxu0 0.0
    %885 = vmatprep.mubr.f32.mxu0 0.0
    %886 = vmatmul.mubr.f32.gmra.mrb[0].mxu0 %v813
    %v887 = vpop.f32.mrb[0].mxu0
    %v888 = vadd.f32 %v385, %v887
    %v889 = vpop.f32.mrb[0].mxu0
    %890 = vmatprep.mubr.f32.mxu0 0.0
    %891 = vmatmul.mubr.f32.gmra.mrb[0].mxu0 %v815
    %v892 = vpop.f32.mrb[0].mxu0
    %v893 = vadd.f32 %v386, %v892
    %v894 = vpop.f32.mrb[0].mxu0
    %895 = vdwg.mxu0
    %v896 = vsel %vm695, %v888, -inf
    %897 = vmax.xlane.f32.xlu0 %v896
    %v898 = vpop.xlane.xlu0 %897
    %v899 = vsel %vm695, %v893, -inf
    %900 = vmax.xlane.f32.xlu0 %v899
    %v901 = vpop.xlane.xlu0 %900
    %v902 = vsub.f32 %v888, %v898
    %v903 = vsub.f32 %v893, %v901
    %v904 = vmul.f32 %v902, 1.442695
    %v905 = vpow.pop %v904
    %v906 = vmul.f32 %v903, 1.442695
    %v907 = vpow.pop %v906
    %v908 = vsel %vm695, %v905, 0.0
    %909 = vadd.xlane.f32.xlu0 %v908
    %v910 = vpop.xlane.xlu0 %909
    %v911 = vsel %vm695, %v907, 0.0
    %912 = vadd.xlane.f32.xlu0 %v911
    %v913 = vpop.xlane.xlu0 %912
    %v914 = vrcp.pop %v910
    %v915 = vrcp.pop %v913
    %v916 = vmul.f32 %v905, %v914
    %v917 = vmul.f32 %v907, %v915
    %918 = vrot.lane.b32.xlu0 %v597, 56
    %v919 = vpop.permute.xlu0 %918
    %920 = vrot.lane.b32.xlu0 %v602, 56
    %v921 = vpop.permute.xlu0 %920
    %v925 = vsel %vm695, %v916, 0
    %v928 = vsel %vm695, %v917, 0
    %930 = vmatprep.subr.mxu0 0.0
    %931 = vmatpush1.msra.mxu0 %v919
    %932 = vmatprep.subr.mxu0 0.0
    %933 = vmatpush1.msra.mxu0 %v921
    %934 = vmatprep.subr.mxu0 0.0
    %935 = vmatpush1.msra.mxu0 0.0
    %936 = vmatprep.subr.mxu0 0.0
    %937 = vmatpush1.msra.mxu0 0.0
    %938 = vmatprep.subr.mxu0 0.0
    %939 = vmatpush1.msra.mxu0 0.0
    %940 = vmatprep.subr.mxu0 0.0
    %941 = vmatpush1.msra.mxu0 0.0
    %942 = vmatprep.subr.mxu0 0.0
    %943 = vmatpush1.msra.mxu0 0.0
    %944 = vmatprep.subr.mxu0 0.0
    %945 = vmatpush1.msra.mxu0 0.0
    %946 = vmatprep.subr.mxu0 0.0
    %947 = vmatpush1.msra.mxu0 0.0
    %948 = vmatprep.subr.mxu0 0.0
    %949 = vmatpush1.msra.mxu0 0.0
    %950 = vmatprep.subr.mxu0 0.0
    %951 = vmatpush1.msra.mxu0 0.0
    %952 = vmatprep.subr.mxu0 0.0
    %953 = vmatpush1.msra.mxu0 0.0
    %954 = vmatprep.subr.mxu0 0.0
    %955 = vmatpush1.msra.mxu0 0.0
    %956 = vmatprep.subr.mxu0 0.0
    %957 = vmatpush1.msra.mxu0 0.0
    %958 = vmatprep.subr.mxu0 0.0
    %959 = vmatpush1.msra.mxu0 0.0
    %960 = vmatprep.subr.mxu0 0.0
    %961 = vmatpush1.msra.mxu0 0.0
    %962 = vmatprep.subr.mxu0 0.0
    %963 = vmatpush1.msra.mxu0 0.0
    %964 = vmatprep.subr.mxu0 0.0
    %965 = vmatpush1.msra.mxu0 0.0
    %966 = vmatprep.subr.mxu0 0.0
    %967 = vmatpush1.msra.mxu0 0.0
    %968 = vmatprep.subr.mxu0 0.0
    %969 = vmatpush1.msra.mxu0 0.0
    %970 = vmatprep.subr.mxu0 0.0
    %971 = vmatpush1.msra.mxu0 0.0
    %972 = vmatprep.subr.mxu0 0.0
    %973 = vmatpush1.msra.mxu0 0.0
    %974 = vmatprep.subr.mxu0 0.0
    %975 = vmatpush1.msra.mxu0 0.0
    %976 = vmatprep.subr.mxu0 0.0
    %977 = vmatpush1.msra.mxu0 0.0
    %978 = vmatprep.subr.mxu0 0.0
    %979 = vmatpush1.msra.mxu0 0.0
    %980 = vmatprep.subr.mxu0 0.0
    %981 = vmatpush1.msra.mxu0 0.0
    %982 = vmatprep.subr.mxu0 0.0
    %983 = vmatpush1.msra.mxu0 0.0
    %984 = vmatprep.subr.mxu0 0.0
    %985 = vmatpush1.msra.mxu0 0.0
    %986 = vmatprep.subr.mxu0 0.0
    %987 = vmatpush1.msra.mxu0 0.0
    %988 = vmatprep.subr.mxu0 0.0
    %989 = vmatpush1.msra.mxu0 0.0
    %990 = vmatprep.subr.mxu0 0.0
    %991 = vmatpush1.msra.mxu0 0.0
    %992 = vmatprep.subr.mxu0 0.0
    %993 = vmatpush1.msra.mxu0 0.0
    %994 = vmatprep.mubr.f32.mxu0 0.0
    %995 = vmatmul.mubr.f32.gmra.mrb[0].mxu0 %v925
    %v996 = vpop.f32.mrb[0].mxu0
    %v997 = vadd.f32 0.0, %v996
    %v998 = vpop.f32.mrb[0].mxu0
    %999 = vmatprep.mubr.f32.mxu0 0.0
    %1000 = vmatmul.mubr.f32.gmra.mrb[0].mxu0 %v928
    %v1001 = vpop.f32.mrb[0].mxu0
    %v1002 = vadd.f32 0.0, %v1001
    %v1003 = vpop.f32.mrb[0].mxu0
    %1004 = vdwg.mxu0
    %v1006 = vsel %vm611, %v997, 0
    %v1009 = vsel %vm611, %v1002, 0
    %1011 = vmatprep.subr.mxu0 0.0
    %1012 = vmatpush1.msra.mxu0 %v495
    %1013 = vmatprep.subr.mxu0 0.0
    %1014 = vmatpush1.msra.mxu0 0.0
    %1015 = vmatprep.subr.mxu0 0.0
    %1016 = vmatpush1.msra.mxu0 0.0
    %1017 = vmatprep.subr.mxu0 0.0
    %1018 = vmatpush1.msra.mxu0 0.0
    %1019 = vmatprep.subr.mxu0 0.0
    %1020 = vmatpush1.msra.mxu0 0.0
    %1021 = vmatprep.subr.mxu0 0.0
    %1022 = vmatpush1.msra.mxu0 0.0
    %1023 = vmatprep.subr.mxu0 0.0
    %1024 = vmatpush1.msra.mxu0 0.0
    %1025 = vmatprep.subr.mxu0 0.0
    %1026 = vmatpush1.msra.mxu0 0.0
    %1027 = vmatprep.subr.mxu0 0.0
    %1028 = vmatpush1.msra.mxu0 0.0
    %1029 = vmatprep.subr.mxu0 0.0
    %1030 = vmatpush1.msra.mxu0 0.0
    %1031 = vmatprep.subr.mxu0 0.0
    %1032 = vmatpush1.msra.mxu0 0.0
    %1033 = vmatprep.subr.mxu0 0.0
    %1034 = vmatpush1.msra.mxu0 0.0
    %1035 = vmatprep.subr.mxu0 0.0
    %1036 = vmatpush1.msra.mxu0 0.0
    %1037 = vmatprep.subr.mxu0 0.0
    %1038 = vmatpush1.msra.mxu0 0.0
    %1039 = vmatprep.subr.mxu0 0.0
    %1040 = vmatpush1.msra.mxu0 0.0
    %1041 = vmatprep.subr.mxu0 0.0
    %1042 = vmatpush1.msra.mxu0 0.0
    %1043 = vmatprep.subr.mxu0 0.0
    %1044 = vmatpush1.msra.mxu0 0.0
    %1045 = vmatprep.subr.mxu0 0.0
    %1046 = vmatpush1.msra.mxu0 0.0
    %1047 = vmatprep.subr.mxu0 0.0
    %1048 = vmatpush1.msra.mxu0 0.0
    %1049 = vmatprep.subr.mxu0 0.0
    %1050 = vmatpush1.msra.mxu0 0.0
    %1051 = vmatprep.subr.mxu0 0.0
    %1052 = vmatpush1.msra.mxu0 0.0
    %1053 = vmatprep.subr.mxu0 0.0
    %1054 = vmatpush1.msra.mxu0 0.0
    %1055 = vmatprep.subr.mxu0 0.0
    %1056 = vmatpush1.msra.mxu0 0.0
    %1057 = vmatprep.subr.mxu0 0.0
    %1058 = vmatpush1.msra.mxu0 0.0
    %1059 = vmatprep.subr.mxu0 0.0
    %1060 = vmatpush1.msra.mxu0 0.0
    %1061 = vmatprep.subr.mxu0 0.0
    %1062 = vmatpush1.msra.mxu0 0.0
    %1063 = vmatprep.subr.mxu0 0.0
    %1064 = vmatpush1.msra.mxu0 0.0
    %1065 = vmatprep.subr.mxu0 0.0
    %1066 = vmatpush1.msra.mxu0 0.0
    %1067 = vmatprep.subr.mxu0 0.0
    %1068 = vmatpush1.msra.mxu0 0.0
    %1069 = vmatprep.subr.mxu0 0.0
    %1070 = vmatpush1.msra.mxu0 0.0
    %1071 = vmatprep.subr.mxu0 0.0
    %1072 = vmatpush1.msra.mxu0 0.0
    %1073 = vmatprep.subr.mxu0 0.0
    %1074 = vmatpush1.msra.mxu0 0.0
    %1075 = vmatprep.mubr.f32.mxu0 0.0
    %1076 = vmatmul.mubr.f32.gmra.mrb[0].mxu0 %v1006
    %v1077 = vpop.f32.mrb[0].mxu0
    %v1078 = vadd.f32 0.0, %v1077
    %v1079 = vpop.f32.mrb[0].mxu0
    %1080 = vmatprep.mubr.f32.mxu0 0.0
    %1081 = vmatmul.mubr.f32.gmra.mrb[0].mxu0 %v1009
    %v1082 = vpop.f32.mrb[0].mxu0
    %v1083 = vadd.f32 0.0, %v1082
    %v1084 = vpop.f32.mrb[0].mxu0
    %1085 = vdwg.mxu0
    %v1087 = vsel %vm611, %v797, 0
    %v1090 = vsel %vm611, %v802, 0
    %1092 = vmatprep.subr.mxu0 0.0
    %1093 = vmatpush1.msra.mxu0 %v494
    %1094 = vmatprep.subr.mxu0 0.0
    %1095 = vmatpush1.msra.mxu0 0.0
    %1096 = vmatprep.subr.mxu0 0.0
    %1097 = vmatpush1.msra.mxu0 0.0
    %1098 = vmatprep.subr.mxu0 0.0
    %1099 = vmatpush1.msra.mxu0 0.0
    %1100 = vmatprep.subr.mxu0 0.0
    %1101 = vmatpush1.msra.mxu0 0.0
    %1102 = vmatprep.subr.mxu0 0.0
    %1103 = vmatpush1.msra.mxu0 0.0
    %1104 = vmatprep.subr.mxu0 0.0
    %1105 = vmatpush1.msra.mxu0 0.0
    %1106 = vmatprep.subr.mxu0 0.0
    %1107 = vmatpush1.msra.mxu0 0.0
    %1108 = vmatprep.subr.mxu0 0.0
    %1109 = vmatpush1.msra.mxu0 0.0
    %1110 = vmatprep.subr.mxu0 0.0
    %1111 = vmatpush1.msra.mxu0 0.0
    %1112 = vmatprep.subr.mxu0 0.0
    %1113 = vmatpush1.msra.mxu0 0.0
    %1114 = vmatprep.subr.mxu0 0.0
    %1115 = vmatpush1.msra.mxu0 0.0
    %1116 = vmatprep.subr.mxu0 0.0
    %1117 = vmatpush1.msra.mxu0 0.0
    %1118 = vmatprep.subr.mxu0 0.0
    %1119 = vmatpush1.msra.mxu0 0.0
    %1120 = vmatprep.subr.mxu0 0.0
    %1121 = vmatpush1.msra.mxu0 0.0
    %1122 = vmatprep.subr.mxu0 0.0
    %1123 = vmatpush1.msra.mxu0 0.0
    %1124 = vmatprep.subr.mxu0 0.0
    %1125 = vmatpush1.msra.mxu0 0.0
    %1126 = vmatprep.subr.mxu0 0.0
    %1127 = vmatpush1.msra.mxu0 0.0
    %1128 = vmatprep.subr.mxu0 0.0
    %1129 = vmatpush1.msra.mxu0 0.0
    %1130 = vmatprep.subr.mxu0 0.0
    %1131 = vmatpush1.msra.mxu0 0.0
    %1132 = vmatprep.subr.mxu0 0.0
    %1133 = vmatpush1.msra.mxu0 0.0
    %1134 = vmatprep.subr.mxu0 0.0
    %1135 = vmatpush1.msra.mxu0 0.0
    %1136 = vmatprep.subr.mxu0 0.0
    %1137 = vmatpush1.msra.mxu0 0.0
    %1138 = vmatprep.subr.mxu0 0.0
    %1139 = vmatpush1.msra.mxu0 0.0
    %1140 = vmatprep.subr.mxu0 0.0
    %1141 = vmatpush1.msra.mxu0 0.0
    %1142 = vmatprep.subr.mxu0 0.0
    %1143 = vmatpush1.msra.mxu0 0.0
    %1144 = vmatprep.subr.mxu0 0.0
    %1145 = vmatpush1.msra.mxu0 0.0
    %1146 = vmatprep.subr.mxu0 0.0
    %1147 = vmatpush1.msra.mxu0 0.0
    %1148 = vmatprep.subr.mxu0 0.0
    %1149 = vmatpush1.msra.mxu0 0.0
    %1150 = vmatprep.subr.mxu0 0.0
    %1151 = vmatpush1.msra.mxu0 0.0
    %1152 = vmatprep.subr.mxu0 0.0
    %1153 = vmatpush1.msra.mxu0 0.0
    %1154 = vmatprep.subr.mxu0 0.0
    %1155 = vmatpush1.msra.mxu0 0.0
    %1156 = vmatprep.mubr.f32.mxu0 0.0
    %1157 = vmatmul.mubr.f32.gmra.mrb[0].mxu0 %v1087
    %v1158 = vpop.f32.mrb[0].mxu0
    %v1159 = vadd.f32 %v1078, %v1158
    %v1160 = vpop.f32.mrb[0].mxu0
    %1161 = vmatprep.mubr.f32.mxu0 0.0
    %1162 = vmatmul.mubr.f32.gmra.mrb[0].mxu0 %v1090
    %v1163 = vpop.f32.mrb[0].mxu0
    %v1164 = vadd.f32 %v1083, %v1163
    %v1165 = vpop.f32.mrb[0].mxu0
    %1166 = vdwg.mxu0
    %1167 = vrot.lane.b32.xlu0 %v597, 112
    %v1168 = vpop.permute.xlu0 %1167
    %1169 = vrot.lane.b32.xlu0 %v602, 112
    %v1170 = vpop.permute.xlu0 %1169
    %1171 = vrot.lane.b32.xlu0 %v597, 80
    %v1172 = vpop.permute.xlu0 %1171
    %1173 = vrot.lane.b32.xlu0 %v602, 80
    %v1174 = vpop.permute.xlu0 %1173
    %v1175 = vsel %vm611, %v1168, 0
    %v1177 = vsel %vm611, %v1170, 0
    %v1179 = vsel %vm611, %v1172, 0
    %v1181 = vsel %vm611, %v1174, 0
    %1183 = vmatprep.subr.mxu0 0.0
    %1184 = vmatpush1.xpose.msra.mxu0 %v1179
    %1185 = vmatprep.subr.mxu0 0.0
    %1186 = vmatpush1.xpose.msra.mxu0 %v1181
    %1187 = vmatprep.subr.mxu0 0.0
    %1188 = vmatpush1.xpose.msra.mxu0 0.0
    %1189 = vmatprep.subr.mxu0 0.0
    %1190 = vmatpush1.xpose.msra.mxu0 0.0
    %1191 = vmatprep.subr.mxu0 0.0
    %1192 = vmatpush1.xpose.msra.mxu0 0.0
    %1193 = vmatprep.subr.mxu0 0.0
    %1194 = vmatpush1.xpose.msra.mxu0 0.0
    %1195 = vmatprep.subr.mxu0 0.0
    %1196 = vmatpush1.xpose.msra.mxu0 0.0
    %1197 = vmatprep.subr.mxu0 0.0
    %1198 = vmatpush1.xpose.msra.mxu0 0.0
    %1199 = vmatprep.subr.mxu0 0.0
    %1200 = vmatpush1.xpose.msra.mxu0 0.0
    %1201 = vmatprep.subr.mxu0 0.0
    %1202 = vmatpush1.xpose.msra.mxu0 0.0
    %1203 = vmatprep.subr.mxu0 0.0
    %1204 = vmatpush1.xpose.msra.mxu0 0.0
    %1205 = vmatprep.subr.mxu0 0.0
    %1206 = vmatpush1.xpose.msra.mxu0 0.0
    %1207 = vmatprep.subr.mxu0 0.0
    %1208 = vmatpush1.xpose.msra.mxu0 0.0
    %1209 = vmatprep.subr.mxu0 0.0
    %1210 = vmatpush1.xpose.msra.mxu0 0.0
    %1211 = vmatprep.subr.mxu0 0.0
    %1212 = vmatpush1.xpose.msra.mxu0 0.0
    %1213 = vmatprep.subr.mxu0 0.0
    %1214 = vmatpush1.xpose.msra.mxu0 0.0
    %1215 = vmatprep.subr.mxu0 0.0
    %1216 = vmatpush1.xpose.msra.mxu0 0.0
    %1217 = vmatprep.subr.mxu0 0.0
    %1218 = vmatpush1.xpose.msra.mxu0 0.0
    %1219 = vmatprep.subr.mxu0 0.0
    %1220 = vmatpush1.xpose.msra.mxu0 0.0
    %1221 = vmatprep.subr.mxu0 0.0
    %1222 = vmatpush1.xpose.msra.mxu0 0.0
    %1223 = vmatprep.subr.mxu0 0.0
    %1224 = vmatpush1.xpose.msra.mxu0 0.0
    %1225 = vmatprep.subr.mxu0 0.0
    %1226 = vmatpush1.xpose.msra.mxu0 0.0
    %1227 = vmatprep.subr.mxu0 0.0
    %1228 = vmatpush1.xpose.msra.mxu0 0.0
    %1229 = vmatprep.subr.mxu0 0.0
    %1230 = vmatpush1.xpose.msra.mxu0 0.0
    %1231 = vmatprep.subr.mxu0 0.0
    %1232 = vmatpush1.xpose.msra.mxu0 0.0
    %1233 = vmatprep.subr.mxu0 0.0
    %1234 = vmatpush1.xpose.msra.mxu0 0.0
    %1235 = vmatprep.subr.mxu0 0.0
    %1236 = vmatpush1.xpose.msra.mxu0 0.0
    %1237 = vmatprep.subr.mxu0 0.0
    %1238 = vmatpush1.xpose.msra.mxu0 0.0
    %1239 = vmatprep.subr.mxu0 0.0
    %1240 = vmatpush1.xpose.msra.mxu0 0.0
    %1241 = vmatprep.subr.mxu0 0.0
    %1242 = vmatpush1.xpose.msra.mxu0 0.0
    %1243 = vmatprep.subr.mxu0 0.0
    %1244 = vmatpush1.xpose.msra.mxu0 0.0
    %1245 = vmatprep.subr.mxu0 0.0
    %1246 = vmatpush1.xpose.msra.mxu0 0.0
    %1247 = vmatprep.mubr.f32.mxu0 0.0
    %1248 = vmatmul.mubr.f32.gmra.mrb[0].mxu0 %v1175
    %v1249 = vpop.f32.mrb[0].mxu0
    %v1250 = vadd.f32 %v385, %v1249
    %v1251 = vpop.f32.mrb[0].mxu0
    %1252 = vmatprep.mubr.f32.mxu0 0.0
    %1253 = vmatmul.mubr.f32.gmra.mrb[0].mxu0 %v1177
    %v1254 = vpop.f32.mrb[0].mxu0
    %v1255 = vadd.f32 %v386, %v1254
    %v1256 = vpop.f32.mrb[0].mxu0
    %1257 = vdwg.mxu0
    %v1258 = vsel %vm695, %v1250, -inf
    %1259 = vmax.xlane.f32.xlu0 %v1258
    %v1260 = vpop.xlane.xlu0 %1259
    %v1261 = vsel %vm695, %v1255, -inf
    %1262 = vmax.xlane.f32.xlu0 %v1261
    %v1263 = vpop.xlane.xlu0 %1262
    %v1264 = vsub.f32 %v1250, %v1260
    %v1265 = vsub.f32 %v1255, %v1263
    %v1266 = vmul.f32 %v1264, 1.442695
    %v1267 = vpow.pop %v1266
    %v1268 = vmul.f32 %v1265, 1.442695
    %v1269 = vpow.pop %v1268
    %v1270 = vsel %vm695, %v1267, 0.0
    %1271 = vadd.xlane.f32.xlu0 %v1270
    %v1272 = vpop.xlane.xlu0 %1271
    %v1273 = vsel %vm695, %v1269, 0.0
    %1274 = vadd.xlane.f32.xlu0 %v1273
    %v1275 = vpop.xlane.xlu0 %1274
    %v1276 = vrcp.pop %v1272
    %v1277 = vrcp.pop %v1275
    %v1278 = vmul.f32 %v1267, %v1276
    %v1279 = vmul.f32 %v1269, %v1277
    %1280 = vrot.lane.b32.xlu0 %v597, 48
    %v1281 = vpop.permute.xlu0 %1280
    %1282 = vrot.lane.b32.xlu0 %v602, 48
    %v1283 = vpop.permute.xlu0 %1282
    %v1287 = vsel %vm695, %v1278, 0
    %v1290 = vsel %vm695, %v1279, 0
    %1292 = vmatprep.subr.mxu0 0.0
    %1293 = vmatpush1.msra.mxu0 %v1281
    %1294 = vmatprep.subr.mxu0 0.0
    %1295 = vmatpush1.msra.mxu0 %v1283
    %1296 = vmatprep.subr.mxu0 0.0
    %1297 = vmatpush1.msra.mxu0 0.0
    %1298 = vmatprep.subr.mxu0 0.0
    %1299 = vmatpush1.msra.mxu0 0.0
    %1300 = vmatprep.subr.mxu0 0.0
    %1301 = vmatpush1.msra.mxu0 0.0
    %1302 = vmatprep.subr.mxu0 0.0
    %1303 = vmatpush1.msra.mxu0 0.0
    %1304 = vmatprep.subr.mxu0 0.0
    %1305 = vmatpush1.msra.mxu0 0.0
    %1306 = vmatprep.subr.mxu0 0.0
    %1307 = vmatpush1.msra.mxu0 0.0
    %1308 = vmatprep.subr.mxu0 0.0
    %1309 = vmatpush1.msra.mxu0 0.0
    %1310 = vmatprep.subr.mxu0 0.0
    %1311 = vmatpush1.msra.mxu0 0.0
    %1312 = vmatprep.subr.mxu0 0.0
    %1313 = vmatpush1.msra.mxu0 0.0
    %1314 = vmatprep.subr.mxu0 0.0
    %1315 = vmatpush1.msra.mxu0 0.0
    %1316 = vmatprep.subr.mxu0 0.0
    %1317 = vmatpush1.msra.mxu0 0.0
    %1318 = vmatprep.subr.mxu0 0.0
    %1319 = vmatpush1.msra.mxu0 0.0
    %1320 = vmatprep.subr.mxu0 0.0
    %1321 = vmatpush1.msra.mxu0 0.0
    %1322 = vmatprep.subr.mxu0 0.0
    %1323 = vmatpush1.msra.mxu0 0.0
    %1324 = vmatprep.subr.mxu0 0.0
    %1325 = vmatpush1.msra.mxu0 0.0
    %1326 = vmatprep.subr.mxu0 0.0
    %1327 = vmatpush1.msra.mxu0 0.0
    %1328 = vmatprep.subr.mxu0 0.0
    %1329 = vmatpush1.msra.mxu0 0.0
    %1330 = vmatprep.subr.mxu0 0.0
    %1331 = vmatpush1.msra.mxu0 0.0
    %1332 = vmatprep.subr.mxu0 0.0
    %1333 = vmatpush1.msra.mxu0 0.0
    %1334 = vmatprep.subr.mxu0 0.0
    %1335 = vmatpush1.msra.mxu0 0.0
    %1336 = vmatprep.subr.mxu0 0.0
    %1337 = vmatpush1.msra.mxu0 0.0
    %1338 = vmatprep.subr.mxu0 0.0
    %1339 = vmatpush1.msra.mxu0 0.0
    %1340 = vmatprep.subr.mxu0 0.0
    %1341 = vmatpush1.msra.mxu0 0.0
    %1342 = vmatprep.subr.mxu0 0.0
    %1343 = vmatpush1.msra.mxu0 0.0
    %1344 = vmatprep.subr.mxu0 0.0
    %1345 = vmatpush1.msra.mxu0 0.0
    %1346 = vmatprep.subr.mxu0 0.0
    %1347 = vmatpush1.msra.mxu0 0.0
    %1348 = vmatprep.subr.mxu0 0.0
    %1349 = vmatpush1.msra.mxu0 0.0
    %1350 = vmatprep.subr.mxu0 0.0
    %1351 = vmatpush1.msra.mxu0 0.0
    %1352 = vmatprep.subr.mxu0 0.0
    %1353 = vmatpush1.msra.mxu0 0.0
    %1354 = vmatprep.subr.mxu0 0.0
    %1355 = vmatpush1.msra.mxu0 0.0
    %1356 = vmatprep.mubr.f32.mxu0 0.0
    %1357 = vmatmul.mubr.f32.gmra.mrb[0].mxu0 %v1287
    %v1358 = vpop.f32.mrb[0].mxu0
    %v1359 = vadd.f32 0.0, %v1358
    %v1360 = vpop.f32.mrb[0].mxu0
    %1361 = vmatprep.mubr.f32.mxu0 0.0
    %1362 = vmatmul.mubr.f32.gmra.mrb[0].mxu0 %v1290
    %v1363 = vpop.f32.mrb[0].mxu0
    %v1364 = vadd.f32 0.0, %v1363
    %v1365 = vpop.f32.mrb[0].mxu0
    %1366 = vdwg.mxu0
    %v1368 = vsel %vm611, %v1359, 0
    %v1371 = vsel %vm611, %v1364, 0
    %1373 = vmatprep.subr.mxu0 0.0
    %1374 = vmatpush1.msra.mxu0 %v496
    %1375 = vmatprep.subr.mxu0 0.0
    %1376 = vmatpush1.msra.mxu0 0.0
    %1377 = vmatprep.subr.mxu0 0.0
    %1378 = vmatpush1.msra.mxu0 0.0
    %1379 = vmatprep.subr.mxu0 0.0
    %1380 = vmatpush1.msra.mxu0 0.0
    %1381 = vmatprep.subr.mxu0 0.0
    %1382 = vmatpush1.msra.mxu0 0.0
    %1383 = vmatprep.subr.mxu0 0.0
    %1384 = vmatpush1.msra.mxu0 0.0
    %1385 = vmatprep.subr.mxu0 0.0
    %1386 = vmatpush1.msra.mxu0 0.0
    %1387 = vmatprep.subr.mxu0 0.0
    %1388 = vmatpush1.msra.mxu0 0.0
    %1389 = vmatprep.subr.mxu0 0.0
    %1390 = vmatpush1.msra.mxu0 0.0
    %1391 = vmatprep.subr.mxu0 0.0
    %1392 = vmatpush1.msra.mxu0 0.0
    %1393 = vmatprep.subr.mxu0 0.0
    %1394 = vmatpush1.msra.mxu0 0.0
    %1395 = vmatprep.subr.mxu0 0.0
    %1396 = vmatpush1.msra.mxu0 0.0
    %1397 = vmatprep.subr.mxu0 0.0
    %1398 = vmatpush1.msra.mxu0 0.0
    %1399 = vmatprep.subr.mxu0 0.0
    %1400 = vmatpush1.msra.mxu0 0.0
    %1401 = vmatprep.subr.mxu0 0.0
    %1402 = vmatpush1.msra.mxu0 0.0
    %1403 = vmatprep.subr.mxu0 0.0
    %1404 = vmatpush1.msra.mxu0 0.0
    %1405 = vmatprep.subr.mxu0 0.0
    %1406 = vmatpush1.msra.mxu0 0.0
    %1407 = vmatprep.subr.mxu0 0.0
    %1408 = vmatpush1.msra.mxu0 0.0
    %1409 = vmatprep.subr.mxu0 0.0
    %1410 = vmatpush1.msra.mxu0 0.0
    %1411 = vmatprep.subr.mxu0 0.0
    %1412 = vmatpush1.msra.mxu0 0.0
    %1413 = vmatprep.subr.mxu0 0.0
    %1414 = vmatpush1.msra.mxu0 0.0
    %1415 = vmatprep.subr.mxu0 0.0
    %1416 = vmatpush1.msra.mxu0 0.0
    %1417 = vmatprep.subr.mxu0 0.0
    %1418 = vmatpush1.msra.mxu0 0.0
    %1419 = vmatprep.subr.mxu0 0.0
    %1420 = vmatpush1.msra.mxu0 0.0
    %1421 = vmatprep.subr.mxu0 0.0
    %1422 = vmatpush1.msra.mxu0 0.0
    %1423 = vmatprep.subr.mxu0 0.0
    %1424 = vmatpush1.msra.mxu0 0.0
    %1425 = vmatprep.subr.mxu0 0.0
    %1426 = vmatpush1.msra.mxu0 0.0
    %1427 = vmatprep.subr.mxu0 0.0
    %1428 = vmatpush1.msra.mxu0 0.0
    %1429 = vmatprep.subr.mxu0 0.0
    %1430 = vmatpush1.msra.mxu0 0.0
    %1431 = vmatprep.subr.mxu0 0.0
    %1432 = vmatpush1.msra.mxu0 0.0
    %1433 = vmatprep.subr.mxu0 0.0
    %1434 = vmatpush1.msra.mxu0 0.0
    %1435 = vmatprep.subr.mxu0 0.0
    %1436 = vmatpush1.msra.mxu0 0.0
    %1437 = vmatprep.mubr.f32.mxu0 0.0
    %1438 = vmatmul.mubr.f32.gmra.mrb[0].mxu0 %v1368
    %v1439 = vpop.f32.mrb[0].mxu0
    %v1440 = vadd.f32 0.0, %v1439
    %v1441 = vpop.f32.mrb[0].mxu0
    %1442 = vmatprep.mubr.f32.mxu0 0.0
    %1443 = vmatmul.mubr.f32.gmra.mrb[0].mxu0 %v1371
    %v1444 = vpop.f32.mrb[0].mxu0
    %v1445 = vadd.f32 0.0, %v1444
    %v1446 = vpop.f32.mrb[0].mxu0
    %1447 = vdwg.mxu0
    %v1448 = vadd.f32 %v1159, %v1440
    %v1449 = vadd.f32 %v1164, %v1445
    %1450 = vrot.lane.b32.xlu0 %v597, 104
    %v1451 = vpop.permute.xlu0 %1450
    %1452 = vrot.lane.b32.xlu0 %v602, 104
    %v1453 = vpop.permute.xlu0 %1452
    %1454 = vrot.lane.b32.xlu0 %v597, 72
    %v1455 = vpop.permute.xlu0 %1454
    %1456 = vrot.lane.b32.xlu0 %v602, 72
    %v1457 = vpop.permute.xlu0 %1456
    %v1458 = vsel %vm611, %v1451, 0
    %v1460 = vsel %vm611, %v1453, 0
    %v1462 = vsel %vm611, %v1455, 0
    %v1464 = vsel %vm611, %v1457, 0
    %1466 = vmatprep.subr.mxu0 0.0
    %1467 = vmatpush1.xpose.msra.mxu0 %v1462
    %1468 = vmatprep.subr.mxu0 0.0
    %1469 = vmatpush1.xpose.msra.mxu0 %v1464
    %1470 = vmatprep.subr.mxu0 0.0
    %1471 = vmatpush1.xpose.msra.mxu0 0.0
    %1472 = vmatprep.subr.mxu0 0.0
    %1473 = vmatpush1.xpose.msra.mxu0 0.0
    %1474 = vmatprep.subr.mxu0 0.0
    %1475 = vmatpush1.xpose.msra.mxu0 0.0
    %1476 = vmatprep.subr.mxu0 0.0
    %1477 = vmatpush1.xpose.msra.mxu0 0.0
    %1478 = vmatprep.subr.mxu0 0.0
    %1479 = vmatpush1.xpose.msra.mxu0 0.0
    %1480 = vmatprep.subr.mxu0 0.0
    %1481 = vmatpush1.xpose.msra.mxu0 0.0
    %1482 = vmatprep.subr.mxu0 0.0
    %1483 = vmatpush1.xpose.msra.mxu0 0.0
    %1484 = vmatprep.subr.mxu0 0.0
    %1485 = vmatpush1.xpose.msra.mxu0 0.0
    %1486 = vmatprep.subr.mxu0 0.0
    %1487 = vmatpush1.xpose.msra.mxu0 0.0
    %1488 = vmatprep.subr.mxu0 0.0
    %1489 = vmatpush1.xpose.msra.mxu0 0.0
    %1490 = vmatprep.subr.mxu0 0.0
    %1491 = vmatpush1.xpose.msra.mxu0 0.0
    %1492 = vmatprep.subr.mxu0 0.0
    %1493 = vmatpush1.xpose.msra.mxu0 0.0
    %1494 = vmatprep.subr.mxu0 0.0
    %1495 = vmatpush1.xpose.msra.mxu0 0.0
    %1496 = vmatprep.subr.mxu0 0.0
    %1497 = vmatpush1.xpose.msra.mxu0 0.0
    %1498 = vmatprep.subr.mxu0 0.0
    %1499 = vmatpush1.xpose.msra.mxu0 0.0
    %1500 = vmatprep.subr.mxu0 0.0
    %1501 = vmatpush1.xpose.msra.mxu0 0.0
    %1502 = vmatprep.subr.mxu0 0.0
    %1503 = vmatpush1.xpose.msra.mxu0 0.0
    %1504 = vmatprep.subr.mxu0 0.0
    %1505 = vmatpush1.xpose.msra.mxu0 0.0
    %1506 = vmatprep.subr.mxu0 0.0
    %1507 = vmatpush1.xpose.msra.mxu0 0.0
    %1508 = vmatprep.subr.mxu0 0.0
    %1509 = vmatpush1.xpose.msra.mxu0 0.0
    %1510 = vmatprep.subr.mxu0 0.0
    %1511 = vmatpush1.xpose.msra.mxu0 0.0
    %1512 = vmatprep.subr.mxu0 0.0
    %1513 = vmatpush1.xpose.msra.mxu0 0.0
    %1514 = vmatprep.subr.mxu0 0.0
    %1515 = vmatpush1.xpose.msra.mxu0 0.0
    %1516 = vmatprep.subr.mxu0 0.0
    %1517 = vmatpush1.xpose.msra.mxu0 0.0
    %1518 = vmatprep.subr.mxu0 0.0
    %1519 = vmatpush1.xpose.msra.mxu0 0.0
    %1520 = vmatprep.subr.mxu0 0.0
    %1521 = vmatpush1.xpose.msra.mxu0 0.0
    %1522 = vmatprep.subr.mxu0 0.0
    %1523 = vmatpush1.xpose.msra.mxu0 0.0
    %1524 = vmatprep.subr.mxu0 0.0
    %1525 = vmatpush1.xpose.msra.mxu0 0.0
    %1526 = vmatprep.subr.mxu0 0.0
    %1527 = vmatpush1.xpose.msra.mxu0 0.0
    %1528 = vmatprep.subr.mxu0 0.0
    %1529 = vmatpush1.xpose.msra.mxu0 0.0
    %1530 = vmatprep.mubr.f32.mxu0 0.0
    %1531 = vmatmul.mubr.f32.gmra.mrb[0].mxu0 %v1458
    %v1532 = vpop.f32.mrb[0].mxu0
    %v1533 = vadd.f32 %v385, %v1532
    %v1534 = vpop.f32.mrb[0].mxu0
    %1535 = vmatprep.mubr.f32.mxu0 0.0
    %1536 = vmatmul.mubr.f32.gmra.mrb[0].mxu0 %v1460
    %v1537 = vpop.f32.mrb[0].mxu0
    %v1538 = vadd.f32 %v386, %v1537
    %v1539 = vpop.f32.mrb[0].mxu0
    %1540 = vdwg.mxu0
    %v1541 = vsel %vm695, %v1533, -inf
    %1542 = vmax.xlane.f32.xlu0 %v1541
    %v1543 = vpop.xlane.xlu0 %1542
    %v1544 = vsel %vm695, %v1538, -inf
    %1545 = vmax.xlane.f32.xlu0 %v1544
    %v1546 = vpop.xlane.xlu0 %1545
    %v1547 = vsub.f32 %v1533, %v1543
    %v1548 = vsub.f32 %v1538, %v1546
    %v1549 = vmul.f32 %v1547, 1.442695
    %v1550 = vpow.pop %v1549
    %v1551 = vmul.f32 %v1548, 1.442695
    %v1552 = vpow.pop %v1551
    %v1553 = vsel %vm695, %v1550, 0.0
    %1554 = vadd.xlane.f32.xlu0 %v1553
    %v1555 = vpop.xlane.xlu0 %1554
    %v1556 = vsel %vm695, %v1552, 0.0
    %1557 = vadd.xlane.f32.xlu0 %v1556
    %v1558 = vpop.xlane.xlu0 %1557
    %v1559 = vrcp.pop %v1555
    %v1560 = vrcp.pop %v1558
    %v1561 = vmul.f32 %v1550, %v1559
    %v1562 = vmul.f32 %v1552, %v1560
    %1563 = vrot.lane.b32.xlu0 %v597, 40
    %v1564 = vpop.permute.xlu0 %1563
    %1565 = vrot.lane.b32.xlu0 %v602, 40
    %v1566 = vpop.permute.xlu0 %1565
    %v1570 = vsel %vm695, %v1561, 0
    %v1573 = vsel %vm695, %v1562, 0
    %1575 = vmatprep.subr.mxu0 0.0
    %1576 = vmatpush1.msra.mxu0 %v1564
    %1577 = vmatprep.subr.mxu0 0.0
    %1578 = vmatpush1.msra.mxu0 %v1566
    %1579 = vmatprep.subr.mxu0 0.0
    %1580 = vmatpush1.msra.mxu0 0.0
    %1581 = vmatprep.subr.mxu0 0.0
    %1582 = vmatpush1.msra.mxu0 0.0
    %1583 = vmatprep.subr.mxu0 0.0
    %1584 = vmatpush1.msra.mxu0 0.0
    %1585 = vmatprep.subr.mxu0 0.0
    %1586 = vmatpush1.msra.mxu0 0.0
    %1587 = vmatprep.subr.mxu0 0.0
    %1588 = vmatpush1.msra.mxu0 0.0
    %1589 = vmatprep.subr.mxu0 0.0
    %1590 = vmatpush1.msra.mxu0 0.0
    %1591 = vmatprep.subr.mxu0 0.0
    %1592 = vmatpush1.msra.mxu0 0.0
    %1593 = vmatprep.subr.mxu0 0.0
    %1594 = vmatpush1.msra.mxu0 0.0
    %1595 = vmatprep.subr.mxu0 0.0
    %1596 = vmatpush1.msra.mxu0 0.0
    %1597 = vmatprep.subr.mxu0 0.0
    %1598 = vmatpush1.msra.mxu0 0.0
    %1599 = vmatprep.subr.mxu0 0.0
    %1600 = vmatpush1.msra.mxu0 0.0
    %1601 = vmatprep.subr.mxu0 0.0
    %1602 = vmatpush1.msra.mxu0 0.0
    %1603 = vmatprep.subr.mxu0 0.0
    %1604 = vmatpush1.msra.mxu0 0.0
    %1605 = vmatprep.subr.mxu0 0.0
    %1606 = vmatpush1.msra.mxu0 0.0
    %1607 = vmatprep.subr.mxu0 0.0
    %1608 = vmatpush1.msra.mxu0 0.0
    %1609 = vmatprep.subr.mxu0 0.0
    %1610 = vmatpush1.msra.mxu0 0.0
    %1611 = vmatprep.subr.mxu0 0.0
    %1612 = vmatpush1.msra.mxu0 0.0
    %1613 = vmatprep.subr.mxu0 0.0
    %1614 = vmatpush1.msra.mxu0 0.0
    %1615 = vmatprep.subr.mxu0 0.0
    %1616 = vmatpush1.msra.mxu0 0.0
    %1617 = vmatprep.subr.mxu0 0.0
    %1618 = vmatpush1.msra.mxu0 0.0
    %1619 = vmatprep.subr.mxu0 0.0
    %1620 = vmatpush1.msra.mxu0 0.0
    %1621 = vmatprep.subr.mxu0 0.0
    %1622 = vmatpush1.msra.mxu0 0.0
    %1623 = vmatprep.subr.mxu0 0.0
    %1624 = vmatpush1.msra.mxu0 0.0
    %1625 = vmatprep.subr.mxu0 0.0
    %1626 = vmatpush1.msra.mxu0 0.0
    %1627 = vmatprep.subr.mxu0 0.0
    %1628 = vmatpush1.msra.mxu0 0.0
    %1629 = vmatprep.subr.mxu0 0.0
    %1630 = vmatpush1.msra.mxu0 0.0
    %1631 = vmatprep.subr.mxu0 0.0
    %1632 = vmatpush1.msra.mxu0 0.0
    %1633 = vmatprep.subr.mxu0 0.0
    %1634 = vmatpush1.msra.mxu0 0.0
    %1635 = vmatprep.subr.mxu0 0.0
    %1636 = vmatpush1.msra.mxu0 0.0
    %1637 = vmatprep.subr.mxu0 0.0
    %1638 = vmatpush1.msra.mxu0 0.0
    %1639 = vmatprep.mubr.f32.mxu0 0.0
    %1640 = vmatmul.mubr.f32.gmra.mrb[0].mxu0 %v1570
    %v1641 = vpop.f32.mrb[0].mxu0
    %v1642 = vadd.f32 0.0, %v1641
    %v1643 = vpop.f32.mrb[0].mxu0
    %1644 = vmatprep.mubr.f32.mxu0 0.0
    %1645 = vmatmul.mubr.f32.gmra.mrb[0].mxu0 %v1573
    %v1646 = vpop.f32.mrb[0].mxu0
    %v1647 = vadd.f32 0.0, %v1646
    %v1648 = vpop.f32.mrb[0].mxu0
    %1649 = vdwg.mxu0
    %v1651 = vsel %vm611, %v1642, 0
    %v1654 = vsel %vm611, %v1647, 0
    %1656 = vmatprep.subr.mxu0 0.0
    %1657 = vmatpush1.msra.mxu0 %v497
    %1658 = vmatprep.subr.mxu0 0.0
    %1659 = vmatpush1.msra.mxu0 0.0
    %1660 = vmatprep.subr.mxu0 0.0
    %1661 = vmatpush1.msra.mxu0 0.0
    %1662 = vmatprep.subr.mxu0 0.0
    %1663 = vmatpush1.msra.mxu0 0.0
    %1664 = vmatprep.subr.mxu0 0.0
    %1665 = vmatpush1.msra.mxu0 0.0
    %1666 = vmatprep.subr.mxu0 0.0
    %1667 = vmatpush1.msra.mxu0 0.0
    %1668 = vmatprep.subr.mxu0 0.0
    %1669 = vmatpush1.msra.mxu0 0.0
    %1670 = vmatprep.subr.mxu0 0.0
    %1671 = vmatpush1.msra.mxu0 0.0
    %1672 = vmatprep.subr.mxu0 0.0
    %1673 = vmatpush1.msra.mxu0 0.0
    %1674 = vmatprep.subr.mxu0 0.0
    %1675 = vmatpush1.msra.mxu0 0.0
    %1676 = vmatprep.subr.mxu0 0.0
    %1677 = vmatpush1.msra.mxu0 0.0
    %1678 = vmatprep.subr.mxu0 0.0
    %1679 = vmatpush1.msra.mxu0 0.0
    %1680 = vmatprep.subr.mxu0 0.0
    %1681 = vmatpush1.msra.mxu0 0.0
    %1682 = vmatprep.subr.mxu0 0.0
    %1683 = vmatpush1.msra.mxu0 0.0
    %1684 = vmatprep.subr.mxu0 0.0
    %1685 = vmatpush1.msra.mxu0 0.0
    %1686 = vmatprep.subr.mxu0 0.0
    %1687 = vmatpush1.msra.mxu0 0.0
    %1688 = vmatprep.subr.mxu0 0.0
    %1689 = vmatpush1.msra.mxu0 0.0
    %1690 = vmatprep.subr.mxu0 0.0
    %1691 = vmatpush1.msra.mxu0 0.0
    %1692 = vmatprep.subr.mxu0 0.0
    %1693 = vmatpush1.msra.mxu0 0.0
    %1694 = vmatprep.subr.mxu0 0.0
    %1695 = vmatpush1.msra.mxu0 0.0
    %1696 = vmatprep.subr.mxu0 0.0
    %1697 = vmatpush1.msra.mxu0 0.0
    %1698 = vmatprep.subr.mxu0 0.0
    %1699 = vmatpush1.msra.mxu0 0.0
    %1700 = vmatprep.subr.mxu0 0.0
    %1701 = vmatpush1.msra.mxu0 0.0
    %1702 = vmatprep.subr.mxu0 0.0
    %1703 = vmatpush1.msra.mxu0 0.0
    %1704 = vmatprep.subr.mxu0 0.0
    %1705 = vmatpush1.msra.mxu0 0.0
    %1706 = vmatprep.subr.mxu0 0.0
    %1707 = vmatpush1.msra.mxu0 0.0
    %1708 = vmatprep.subr.mxu0 0.0
    %1709 = vmatpush1.msra.mxu0 0.0
    %1710 = vmatprep.subr.mxu0 0.0
    %1711 = vmatpush1.msra.mxu0 0.0
    %1712 = vmatprep.subr.mxu0 0.0
    %1713 = vmatpush1.msra.mxu0 0.0
    %1714 = vmatprep.subr.mxu0 0.0
    %1715 = vmatpush1.msra.mxu0 0.0
    %1716 = vmatprep.subr.mxu0 0.0
    %1717 = vmatpush1.msra.mxu0 0.0
    %1718 = vmatprep.subr.mxu0 0.0
    %1719 = vmatpush1.msra.mxu0 0.0
    %1720 = vmatprep.mubr.f32.mxu0 0.0
    %1721 = vmatmul.mubr.f32.gmra.mrb[0].mxu0 %v1651
    %v1722 = vpop.f32.mrb[0].mxu0
    %v1723 = vadd.f32 0.0, %v1722
    %v1724 = vpop.f32.mrb[0].mxu0
    %1725 = vmatprep.mubr.f32.mxu0 0.0
    %1726 = vmatmul.mubr.f32.gmra.mrb[0].mxu0 %v1654
    %v1727 = vpop.f32.mrb[0].mxu0
    %v1728 = vadd.f32 0.0, %v1727
    %v1729 = vpop.f32.mrb[0].mxu0
    %1730 = vdwg.mxu0
    %v1731 = vadd.f32 %v1448, %v1723
    %v1732 = vadd.f32 %v1449, %v1728
    %v1734 = vlaneseq
    %v1735 = vshrl.u32 %v1734, 7
    %v1736 = vsub.s32 0, %v1735
    %v1737 = vrot.slane %v498, %v1736
    %v1739 = vadd.f32 %v1731, %v1737
    %v1740 = vadd.f32 %v1732, %v1737
    %v1741 = vadd.f32 %v487, %v1739
    %v1742 = vadd.f32 %v488, %v1740
    %v1743 = vsel %vm523, %v1741, 0.0
    %1744 = vadd.xlane.f32.xlu0 %v1743
    %v1745 = vpop.xlane.xlu0 %1744
    %v1746 = vsel %vm523, %v1742, 0.0
    %1747 = vadd.xlane.f32.xlu0 %v1746
    %v1748 = vpop.xlane.xlu0 %1747
    %v1749 = vrcp.pop 32.0
    %v1750 = vmul.f32 %v1745, %v1749
    %v1751 = vmul.f32 %v1748, %v1749
    %v1752 = vsub.f32 %v1741, %v1750
    %v1753 = vsub.f32 %v1742, %v1751
    %v1754 = vmul.f32 %v1752, %v1752
    %v1755 = vmul.f32 %v1753, %v1753
    %v1756 = vsel %vm523, %v1754, 0.0
    %1757 = vadd.xlane.f32.xlu0 %v1756
    %v1758 = vpop.xlane.xlu0 %1757
    %v1759 = vsel %vm523, %v1755, 0.0
    %1760 = vadd.xlane.f32.xlu0 %v1759
    %v1761 = vpop.xlane.xlu0 %1760
    %v1762 = vmul.f32 %v1758, %v1749
    %v1763 = vmul.f32 %v1761, %v1749
    %v1764 = vadd.f32 %v1762, 1e-05
    %v1765 = vadd.f32 %v1763, 1e-05
    %v1766 = vrsqrt.pop %v1764
    %v1767 = vrsqrt.pop %v1765
    %v1768 = vmul.f32 %v1752, %v1766
    %v1769 = vmul.f32 %v1753, %v1767
    %v1771 = vlaneseq
    %v1772 = vshrl.u32 %v1771, 7
    %v1773 = vsub.s32 0, %v1772
    %v1774 = vrot.slane %v513, %v1773
    %v1776 = vmul.f32 %v1768, %v1774
    %v1777 = vmul.f32 %v1769, %v1774
    %v1779 = vlaneseq
    %v1780 = vshrl.u32 %v1779, 7
    %v1781 = vsub.s32 0, %v1780
    %v1782 = vrot.slane %v514, %v1781
    %v1784 = vadd.f32 %v1776, %v1782
    %v1785 = vadd.f32 %v1777, %v1782
    %v1787 = vlaneseq
    %v1788 = vshrl.u32 %v1787, 7
    %v1789 = vsub.s32 0, %v1788
    %v1790 = vrot.slane %v503, %v1789
    %v1793 = vsel %vm523, %v1784, 0
    %v1796 = vsel %vm523, %v1785, 0
    %1798 = vmatprep.subr.mxu0 0.0
    %1799 = vmatpush1.msra.mxu0 %v499
    %1800 = vmatprep.subr.mxu0 0.0
    %1801 = vmatpush1.msra.mxu0 %v500
    %1802 = vmatprep.subr.mxu0 0.0
    %1803 = vmatpush1.msra.mxu0 %v501
    %1804 = vmatprep.subr.mxu0 0.0
    %1805 = vmatpush1.msra.mxu0 %v502
    %1806 = vmatprep.subr.mxu0 0.0
    %1807 = vmatpush1.msra.mxu0 0.0
    %1808 = vmatprep.subr.mxu0 0.0
    %1809 = vmatpush1.msra.mxu0 0.0
    %1810 = vmatprep.subr.mxu0 0.0
    %1811 = vmatpush1.msra.mxu0 0.0
    %1812 = vmatprep.subr.mxu0 0.0
    %1813 = vmatpush1.msra.mxu0 0.0
    %1814 = vmatprep.subr.mxu0 0.0
    %1815 = vmatpush1.msra.mxu0 0.0
    %1816 = vmatprep.subr.mxu0 0.0
    %1817 = vmatpush1.msra.mxu0 0.0
    %1818 = vmatprep.subr.mxu0 0.0
    %1819 = vmatpush1.msra.mxu0 0.0
    %1820 = vmatprep.subr.mxu0 0.0
    %1821 = vmatpush1.msra.mxu0 0.0
    %1822 = vmatprep.subr.mxu0 0.0
    %1823 = vmatpush1.msra.mxu0 0.0
    %1824 = vmatprep.subr.mxu0 0.0
    %1825 = vmatpush1.msra.mxu0 0.0
    %1826 = vmatprep.subr.mxu0 0.0
    %1827 = vmatpush1.msra.mxu0 0.0
    %1828 = vmatprep.subr.mxu0 0.0
    %1829 = vmatpush1.msra.mxu0 0.0
    %1830 = vmatprep.subr.mxu0 0.0
    %1831 = vmatpush1.msra.mxu0 0.0
    %1832 = vmatprep.subr.mxu0 0.0
    %1833 = vmatpush1.msra.mxu0 0.0
    %1834 = vmatprep.subr.mxu0 0.0
    %1835 = vmatpush1.msra.mxu0 0.0
    %1836 = vmatprep.subr.mxu0 0.0
    %1837 = vmatpush1.msra.mxu0 0.0
    %1838 = vmatprep.subr.mxu0 0.0
    %1839 = vmatpush1.msra.mxu0 0.0
    %1840 = vmatprep.subr.mxu0 0.0
    %1841 = vmatpush1.msra.mxu0 0.0
    %1842 = vmatprep.subr.mxu0 0.0
    %1843 = vmatpush1.msra.mxu0 0.0
    %1844 = vmatprep.subr.mxu0 0.0
    %1845 = vmatpush1.msra.mxu0 0.0
    %1846 = vmatprep.subr.mxu0 0.0
    %1847 = vmatpush1.msra.mxu0 0.0
    %1848 = vmatprep.subr.mxu0 0.0
    %1849 = vmatpush1.msra.mxu0 0.0
    %1850 = vmatprep.subr.mxu0 0.0
    %1851 = vmatpush1.msra.mxu0 0.0
    %1852 = vmatprep.subr.mxu0 0.0
    %1853 = vmatpush1.msra.mxu0 0.0
    %1854 = vmatprep.subr.mxu0 0.0
    %1855 = vmatpush1.msra.mxu0 0.0
    %1856 = vmatprep.subr.mxu0 0.0
    %1857 = vmatpush1.msra.mxu0 0.0
    %1858 = vmatprep.subr.mxu0 0.0
    %1859 = vmatpush1.msra.mxu0 0.0
    %1860 = vmatprep.subr.mxu0 0.0
    %1861 = vmatpush1.msra.mxu0 0.0
    %1862 = vmatprep.mubr.f32.mxu0 0.0
    %1863 = vmatmul.mubr.f32.gmra.mrb[0].mxu0 %v1793
    %v1864 = vpop.f32.mrb[0].mxu0
    %v1865 = vadd.f32 %v1790, %v1864
    %v1866 = vpop.f32.mrb[0].mxu0
    %1867 = vmatprep.mubr.f32.mxu0 0.0
    %1868 = vmatmul.mubr.f32.gmra.mrb[0].mxu0 %v1796
    %v1869 = vpop.f32.mrb[0].mxu0
    %v1870 = vadd.f32 %v1790, %v1869
    %v1871 = vpop.f32.mrb[0].mxu0
    %1872 = vdwg.mxu0
    %v1873 = vmax.f32 %v1865, 0.0
    %v1874 = vmax.f32 %v1870, 0.0
    %v1876 = vlaneseq
    %v1877 = vshrl.u32 %v1876, 7
    %v1878 = vsub.s32 0, %v1877
    %v1879 = vrot.slane %v512, %v1878
    %vm1881 = vcmask 523264
    %v1883 = vsel %vm1881, %v1873, 0
    %v1886 = vsel %vm1881, %v1874, 0
    %1888 = vmatprep.subr.mxu0 0.0
    %1889 = vmatpush1.msra.mxu0 %v504
    %1890 = vmatprep.subr.mxu0 0.0
    %1891 = vmatpush1.msra.mxu0 %v505
    %1892 = vmatprep.subr.mxu0 0.0
    %1893 = vmatpush1.msra.mxu0 %v506
    %1894 = vmatprep.subr.mxu0 0.0
    %1895 = vmatpush1.msra.mxu0 %v507
    %1896 = vmatprep.subr.mxu0 0.0
    %1897 = vmatpush1.msra.mxu0 %v508
    %1898 = vmatprep.subr.mxu0 0.0
    %1899 = vmatpush1.msra.mxu0 %v509
    %1900 = vmatprep.subr.mxu0 0.0
    %1901 = vmatpush1.msra.mxu0 %v510
    %1902 = vmatprep.subr.mxu0 0.0
    %1903 = vmatpush1.msra.mxu0 %v511
    %1904 = vmatprep.subr.mxu0 0.0
    %1905 = vmatpush1.msra.mxu0 0.0
    %1906 = vmatprep.subr.mxu0 0.0
    %1907 = vmatpush1.msra.mxu0 0.0
    %1908 = vmatprep.subr.mxu0 0.0
    %1909 = vmatpush1.msra.mxu0 0.0
    %1910 = vmatprep.subr.mxu0 0.0
    %1911 = vmatpush1.msra.mxu0 0.0
    %1912 = vmatprep.subr.mxu0 0.0
    %1913 = vmatpush1.msra.mxu0 0.0
    %1914 = vmatprep.subr.mxu0 0.0
    %1915 = vmatpush1.msra.mxu0 0.0
    %1916 = vmatprep.subr.mxu0 0.0
    %1917 = vmatpush1.msra.mxu0 0.0
    %1918 = vmatprep.subr.mxu0 0.0
    %1919 = vmatpush1.msra.mxu0 0.0
    %1920 = vmatprep.subr.mxu0 0.0
    %1921 = vmatpush1.msra.mxu0 0.0
    %1922 = vmatprep.subr.mxu0 0.0
    %1923 = vmatpush1.msra.mxu0 0.0
    %1924 = vmatprep.subr.mxu0 0.0
    %1925 = vmatpush1.msra.mxu0 0.0
    %1926 = vmatprep.subr.mxu0 0.0
    %1927 = vmatpush1.msra.mxu0 0.0
    %1928 = vmatprep.subr.mxu0 0.0
    %1929 = vmatpush1.msra.mxu0 0.0
    %1930 = vmatprep.subr.mxu0 0.0
    %1931 = vmatpush1.msra.mxu0 0.0
    %1932 = vmatprep.subr.mxu0 0.0
    %1933 = vmatpush1.msra.mxu0 0.0
    %1934 = vmatprep.subr.mxu0 0.0
    %1935 = vmatpush1.msra.mxu0 0.0
    %1936 = vmatprep.subr.mxu0 0.0
    %1937 = vmatpush1.msra.mxu0 0.0
    %1938 = vmatprep.subr.mxu0 0.0
    %1939 = vmatpush1.msra.mxu0 0.0
    %1940 = vmatprep.subr.mxu0 0.0
    %1941 = vmatpush1.msra.mxu0 0.0
    %1942 = vmatprep.subr.mxu0 0.0
    %1943 = vmatpush1.msra.mxu0 0.0
    %1944 = vmatprep.subr.mxu0 0.0
    %1945 = vmatpush1.msra.mxu0 0.0
    %1946 = vmatprep.subr.mxu0 0.0
    %1947 = vmatpush1.msra.mxu0 0.0
    %1948 = vmatprep.subr.mxu0 0.0
    %1949 = vmatpush1.msra.mxu0 0.0
    %1950 = vmatprep.subr.mxu0 0.0
    %1951 = vmatpush1.msra.mxu0 0.0
    %1952 = vmatprep.mubr.f32.mxu0 0.0
    %1953 = vmatmul.mubr.f32.gmra.mrb[0].mxu0 %v1883
    %v1954 = vpop.f32.mrb[0].mxu0
    %v1955 = vadd.f32 %v1879, %v1954
    %v1956 = vpop.f32.mrb[0].mxu0
    %1957 = vmatprep.mubr.f32.mxu0 0.0
    %1958 = vmatmul.mubr.f32.gmra.mrb[0].mxu0 %v1886
    %v1959 = vpop.f32.mrb[0].mxu0
    %v1960 = vadd.f32 %v1879, %v1959
    %v1961 = vpop.f32.mrb[0].mxu0
    %1962 = vdwg.mxu0
    %v1963 = vadd.f32 %v1784, %v1955
    %v1964 = vadd.f32 %v1785, %v1960
    %v1965 = vsel %vm523, %v1963, 0.0
    %1966 = vadd.xlane.f32.xlu0 %v1965
    %v1967 = vpop.xlane.xlu0 %1966
    %v1968 = vsel %vm523, %v1964, 0.0
    %1969 = vadd.xlane.f32.xlu0 %v1968
    %v1970 = vpop.xlane.xlu0 %1969
    %v1971 = vmul.f32 %v1967, %v1749
    %v1972 = vmul.f32 %v1970, %v1749
    %v1973 = vsub.f32 %v1963, %v1971
    %v1974 = vsub.f32 %v1964, %v1972
    %v1975 = vmul.f32 %v1973, %v1973
    %v1976 = vmul.f32 %v1974, %v1974
    %v1977 = vsel %vm523, %v1975, 0.0
    %1978 = vadd.xlane.f32.xlu0 %v1977
    %v1979 = vpop.xlane.xlu0 %1978
    %v1980 = vsel %vm523, %v1976, 0.0
    %1981 = vadd.xlane.f32.xlu0 %v1980
    %v1982 = vpop.xlane.xlu0 %1981
    %v1983 = vmul.f32 %v1979, %v1749
    %v1984 = vmul.f32 %v1982, %v1749
    %v1985 = vadd.f32 %v1983, 1e-05
    %v1986 = vadd.f32 %v1984, 1e-05
    %v1987 = vrsqrt.pop %v1985
    %v1988 = vrsqrt.pop %v1986
    %v1989 = vmul.f32 %v1973, %v1987
    %v1990 = vmul.f32 %v1974, %v1988
    %v1992 = vlaneseq
    %v1993 = vshrl.u32 %v1992, 7
    %v1994 = vsub.s32 0, %v1993
    %v1995 = vrot.slane %v515, %v1994
    %v1997 = vmul.f32 %v1989, %v1995
    %v1998 = vmul.f32 %v1990, %v1995
    %v2000 = vlaneseq
    %v2001 = vshrl.u32 %v2000, 7
    %v2002 = vsub.s32 0, %v2001
    %v2003 = vrot.slane %v516, %v2002
    %v2005 = vadd.f32 %v1997, %v2003
    %v2006 = vadd.f32 %v1998, %v2003
    %v2007 = vld [vmem:[%s53] sm:$0xff]
    %v2008 = vld [vmem:[%s53 + $0x8] sm:$0xff]
    %v2009 = vld [vmem:[%s53 + $0x10] sm:$0xff]
    %v2010 = vld [vmem:[%s53 + $0x18] sm:$0xff]
    %v2011 = vld [vmem:[%s55] sm:$0x1]
    %v2012 = vld [vmem:[%s57] sm:$0xff]
    %v2013 = vld [vmem:[%s57 + $0x8] sm:$0xff]
    %v2014 = vld [vmem:[%s57 + $0x10] sm:$0xff]
    %v2015 = vld [vmem:[%s57 + $0x18] sm:$0xff]
    %v2016 = vld [vmem:[%s59] sm:$0x1]
    %v2017 = vld [vmem:[%s61] sm:$0xff]
    %v2018 = vld [vmem:[%s61 + $0x8] sm:$0xff]
    %v2019 = vld [vmem:[%s61 + $0x10] sm:$0xff]
    %v2020 = vld [vmem:[%s61 + $0x18] sm:$0xff]
    %v2021 = vld [vmem:[%s63] sm:$0x1]
    %v2022 = vld [vmem:[%s65] sm:$0xff]
    %v2023 = vld [vmem:[%s65 + $0x8] sm:$0xff]
    %v2024 = vld [vmem:[%s65 + $0x10] sm:$0xff]
    %v2025 = vld [vmem:[%s65 + $0x18] sm:$0xff]
    %v2026 = vld [vmem:[%s65 + $0x20] sm:$0xff]
    %v2027 = vld [vmem:[%s65 + $0x28] sm:$0xff]
    %v2028 = vld [vmem:[%s65 + $0x30] sm:$0xff]
    %v2029 = vld [vmem:[%s65 + $0x38] sm:$0xff]
    %v2030 = vld [vmem:[%s67] sm:$0x1]
    %v2031 = vld [vmem:[%s69] sm:$0x1]
    %v2032 = vld [vmem:[%s71] sm:$0x1]
    %v2033 = vld [vmem:[%s73] sm:$0x1]
    %v2034 = vld [vmem:[%s75] sm:$0x1]
    %v2036 = vlaneseq
    %v2037 = vshrl.u32 %v2036, 7
    %v2038 = vsub.s32 0, %v2037
    %v2039 = vrot.slane %v2011, %v2038
    %v2042 = vsel %vm523, %v2005, 0
    %v2045 = vsel %vm523, %v2006, 0
    %2047 = vmatprep.subr.mxu0 0.0
    %2048 = vmatpush1.msra.mxu0 %v2007
    %2049 = vmatprep.subr.mxu0 0.0
    %2050 = vmatpush1.msra.mxu0 %v2008
    %2051 = vmatprep.subr.mxu0 0.0
    %2052 = vmatpush1.msra.mxu0 %v2009
    %2053 = vmatprep.subr.mxu0 0.0
    %2054 = vmatpush1.msra.mxu0 %v2010
    %2055 = vmatprep.subr.mxu0 0.0
    %2056 = vmatpush1.msra.mxu0 0.0
    %2057 = vmatprep.subr.mxu0 0.0
    %2058 = vmatpush1.msra.mxu0 0.0
    %2059 = vmatprep.subr.mxu0 0.0
    %2060 = vmatpush1.msra.mxu0 0.0
    %2061 = vmatprep.subr.mxu0 0.0
    %2062 = vmatpush1.msra.mxu0 0.0
    %2063 = vmatprep.subr.mxu0 0.0
    %2064 = vmatpush1.msra.mxu0 0.0
    %2065 = vmatprep.subr.mxu0 0.0
    %2066 = vmatpush1.msra.mxu0 0.0
    %2067 = vmatprep.subr.mxu0 0.0
    %2068 = vmatpush1.msra.mxu0 0.0
    %2069 = vmatprep.subr.mxu0 0.0
    %2070 = vmatpush1.msra.mxu0 0.0
    %2071 = vmatprep.subr.mxu0 0.0
    %2072 = vmatpush1.msra.mxu0 0.0
    %2073 = vmatprep.subr.mxu0 0.0
    %2074 = vmatpush1.msra.mxu0 0.0
    %2075 = vmatprep.subr.mxu0 0.0
    %2076 = vmatpush1.msra.mxu0 0.0
    %2077 = vmatprep.subr.mxu0 0.0
    %2078 = vmatpush1.msra.mxu0 0.0
    %2079 = vmatprep.subr.mxu0 0.0
    %2080 = vmatpush1.msra.mxu0 0.0
    %2081 = vmatprep.subr.mxu0 0.0
    %2082 = vmatpush1.msra.mxu0 0.0
    %2083 = vmatprep.subr.mxu0 0.0
    %2084 = vmatpush1.msra.mxu0 0.0
    %2085 = vmatprep.subr.mxu0 0.0
    %2086 = vmatpush1.msra.mxu0 0.0
    %2087 = vmatprep.subr.mxu0 0.0
    %2088 = vmatpush1.msra.mxu0 0.0
    %2089 = vmatprep.subr.mxu0 0.0
    %2090 = vmatpush1.msra.mxu0 0.0
    %2091 = vmatprep.subr.mxu0 0.0
    %2092 = vmatpush1.msra.mxu0 0.0
    %2093 = vmatprep.subr.mxu0 0.0
    %2094 = vmatpush1.msra.mxu0 0.0
    %2095 = vmatprep.subr.mxu0 0.0
    %2096 = vmatpush1.msra.mxu0 0.0
    %2097 = vmatprep.subr.mxu0 0.0
    %2098 = vmatpush1.msra.mxu0 0.0
    %2099 = vmatprep.subr.mxu0 0.0
    %2100 = vmatpush1.msra.mxu0 0.0
    %2101 = vmatprep.subr.mxu0 0.0
    %2102 = vmatpush1.msra.mxu0 0.0
    %2103 = vmatprep.subr.mxu0 0.0
    %2104 = vmatpush1.msra.mxu0 0.0
    %2105 = vmatprep.subr.mxu0 0.0
    %2106 = vmatpush1.msra.mxu0 0.0
    %2107 = vmatprep.subr.mxu0 0.0
    %2108 = vmatpush1.msra.mxu0 0.0
    %2109 = vmatprep.subr.mxu0 0.0
    %2110 = vmatpush1.msra.mxu0 0.0
    %2111 = vmatprep.mubr.f32.mxu0 0.0
    %2112 = vmatmul.mubr.f32.gmra.mrb[0].mxu0 %v2042
    %v2113 = vpop.f32.mrb[0].mxu0
    %v2114 = vadd.f32 %v2039, %v2113
    %v2115 = vpop.f32.mrb[0].mxu0
    %2116 = vmatprep.mubr.f32.mxu0 0.0
    %2117 = vmatmul.mubr.f32.gmra.mrb[0].mxu0 %v2045
    %v2118 = vpop.f32.mrb[0].mxu0
    %v2119 = vadd.f32 %v2039, %v2118
    %v2120 = vpop.f32.mrb[0].mxu0
    %2121 = vdwg.mxu0
    %2124 = vrot.lane.b32.xlu0 %v2114, 96
    %v2125 = vpop.permute.xlu0 %2124
    %2126 = vrot.lane.b32.xlu0 %v2119, 96
    %v2127 = vpop.permute.xlu0 %2126
    %v2128 = vsel %vm611, %v2114, 0
    %v2130 = vsel %vm611, %v2119, 0
    %v2132 = vsel %vm611, %v2125, 0
    %v2134 = vsel %vm611, %v2127, 0
    %2136 = vmatprep.subr.mxu0 0.0
    %2137 = vmatpush1.xpose.msra.mxu0 %v2132
    %2138 = vmatprep.subr.mxu0 0.0
    %2139 = vmatpush1.xpose.msra.mxu0 %v2134
    %2140 = vmatprep.subr.mxu0 0.0
    %2141 = vmatpush1.xpose.msra.mxu0 0.0
    %2142 = vmatprep.subr.mxu0 0.0
    %2143 = vmatpush1.xpose.msra.mxu0 0.0
    %2144 = vmatprep.subr.mxu0 0.0
    %2145 = vmatpush1.xpose.msra.mxu0 0.0
    %2146 = vmatprep.subr.mxu0 0.0
    %2147 = vmatpush1.xpose.msra.mxu0 0.0
    %2148 = vmatprep.subr.mxu0 0.0
    %2149 = vmatpush1.xpose.msra.mxu0 0.0
    %2150 = vmatprep.subr.mxu0 0.0
    %2151 = vmatpush1.xpose.msra.mxu0 0.0
    %2152 = vmatprep.subr.mxu0 0.0
    %2153 = vmatpush1.xpose.msra.mxu0 0.0
    %2154 = vmatprep.subr.mxu0 0.0
    %2155 = vmatpush1.xpose.msra.mxu0 0.0
    %2156 = vmatprep.subr.mxu0 0.0
    %2157 = vmatpush1.xpose.msra.mxu0 0.0
    %2158 = vmatprep.subr.mxu0 0.0
    %2159 = vmatpush1.xpose.msra.mxu0 0.0
    %2160 = vmatprep.subr.mxu0 0.0
    %2161 = vmatpush1.xpose.msra.mxu0 0.0
    %2162 = vmatprep.subr.mxu0 0.0
    %2163 = vmatpush1.xpose.msra.mxu0 0.0
    %2164 = vmatprep.subr.mxu0 0.0
    %2165 = vmatpush1.xpose.msra.mxu0 0.0
    %2166 = vmatprep.subr.mxu0 0.0
    %2167 = vmatpush1.xpose.msra.mxu0 0.0
    %2168 = vmatprep.subr.mxu0 0.0
    %2169 = vmatpush1.xpose.msra.mxu0 0.0
    %2170 = vmatprep.subr.mxu0 0.0
    %2171 = vmatpush1.xpose.msra.mxu0 0.0
    %2172 = vmatprep.subr.mxu0 0.0
    %2173 = vmatpush1.xpose.msra.mxu0 0.0
    %2174 = vmatprep.subr.mxu0 0.0
    %2175 = vmatpush1.xpose.msra.mxu0 0.0
    %2176 = vmatprep.subr.mxu0 0.0
    %2177 = vmatpush1.xpose.msra.mxu0 0.0
    %2178 = vmatprep.subr.mxu0 0.0
    %2179 = vmatpush1.xpose.msra.mxu0 0.0
    %2180 = vmatprep.subr.mxu0 0.0
    %2181 = vmatpush1.xpose.msra.mxu0 0.0
    %2182 = vmatprep.subr.mxu0 0.0
    %2183 = vmatpush1.xpose.msra.mxu0 0.0
    %2184 = vmatprep.subr.mxu0 0.0
    %2185 = vmatpush1.xpose.msra.mxu0 0.0
    %2186 = vmatprep.subr.mxu0 0.0
    %2187 = vmatpush1.xpose.msra.mxu0 0.0
    %2188 = vmatprep.subr.mxu0 0.0
    %2189 = vmatpush1.xpose.msra.mxu0 0.0
    %2190 = vmatprep.subr.mxu0 0.0
    %2191 = vmatpush1.xpose.msra.mxu0 0.0
    %2192 = vmatprep.subr.mxu0 0.0
    %2193 = vmatpush1.xpose.msra.mxu0 0.0
    %2194 = vmatprep.subr.mxu0 0.0
    %2195 = vmatpush1.xpose.msra.mxu0 0.0
    %2196 = vmatprep.subr.mxu0 0.0
    %2197 = vmatpush1.xpose.msra.mxu0 0.0
    %2198 = vmatprep.subr.mxu0 0.0
    %2199 = vmatpush1.xpose.msra.mxu0 0.0
    %2200 = vmatprep.mubr.f32.mxu0 0.0
    %2201 = vmatmul.mubr.f32.gmra.mrb[0].mxu0 %v2128
    %v2202 = vpop.f32.mrb[0].mxu0
    %v2203 = vadd.f32 %v385, %v2202
    %v2204 = vpop.f32.mrb[0].mxu0
    %2205 = vmatprep.mubr.f32.mxu0 0.0
    %2206 = vmatmul.mubr.f32.gmra.mrb[0].mxu0 %v2130
    %v2207 = vpop.f32.mrb[0].mxu0
    %v2208 = vadd.f32 %v386, %v2207
    %v2209 = vpop.f32.mrb[0].mxu0
    %2210 = vdwg.mxu0
    %v2211 = vsel %vm695, %v2203, -inf
    %2212 = vmax.xlane.f32.xlu0 %v2211
    %v2213 = vpop.xlane.xlu0 %2212
    %v2214 = vsel %vm695, %v2208, -inf
    %2215 = vmax.xlane.f32.xlu0 %v2214
    %v2216 = vpop.xlane.xlu0 %2215
    %v2217 = vsub.f32 %v2203, %v2213
    %v2218 = vsub.f32 %v2208, %v2216
    %v2219 = vmul.f32 %v2217, 1.442695
    %v2220 = vpow.pop %v2219
    %v2221 = vmul.f32 %v2218, 1.442695
    %v2222 = vpow.pop %v2221
    %v2223 = vsel %vm695, %v2220, 0.0
    %2224 = vadd.xlane.f32.xlu0 %v2223
    %v2225 = vpop.xlane.xlu0 %2224
    %v2226 = vsel %vm695, %v2222, 0.0
    %2227 = vadd.xlane.f32.xlu0 %v2226
    %v2228 = vpop.xlane.xlu0 %2227
    %v2229 = vrcp.pop %v2225
    %v2230 = vrcp.pop %v2228
    %v2231 = vmul.f32 %v2220, %v2229
    %v2232 = vmul.f32 %v2222, %v2230
    %2233 = vrot.lane.b32.xlu0 %v2114, 64
    %v2234 = vpop.permute.xlu0 %2233
    %2235 = vrot.lane.b32.xlu0 %v2119, 64
    %v2236 = vpop.permute.xlu0 %2235
    %v2240 = vsel %vm695, %v2231, 0
    %v2243 = vsel %vm695, %v2232, 0
    %2245 = vmatprep.subr.mxu0 0.0
    %2246 = vmatpush1.msra.mxu0 %v2234
    %2247 = vmatprep.subr.mxu0 0.0
    %2248 = vmatpush1.msra.mxu0 %v2236
    %2249 = vmatprep.subr.mxu0 0.0
    %2250 = vmatpush1.msra.mxu0 0.0
    %2251 = vmatprep.subr.mxu0 0.0
    %2252 = vmatpush1.msra.mxu0 0.0
    %2253 = vmatprep.subr.mxu0 0.0
    %2254 = vmatpush1.msra.mxu0 0.0
    %2255 = vmatprep.subr.mxu0 0.0
    %2256 = vmatpush1.msra.mxu0 0.0
    %2257 = vmatprep.subr.mxu0 0.0
    %2258 = vmatpush1.msra.mxu0 0.0
    %2259 = vmatprep.subr.mxu0 0.0
    %2260 = vmatpush1.msra.mxu0 0.0
    %2261 = vmatprep.subr.mxu0 0.0
    %2262 = vmatpush1.msra.mxu0 0.0
    %2263 = vmatprep.subr.mxu0 0.0
    %2264 = vmatpush1.msra.mxu0 0.0
    %2265 = vmatprep.subr.mxu0 0.0
    %2266 = vmatpush1.msra.mxu0 0.0
    %2267 = vmatprep.subr.mxu0 0.0
    %2268 = vmatpush1.msra.mxu0 0.0
    %2269 = vmatprep.subr.mxu0 0.0
    %2270 = vmatpush1.msra.mxu0 0.0
    %2271 = vmatprep.subr.mxu0 0.0
    %2272 = vmatpush1.msra.mxu0 0.0
    %2273 = vmatprep.subr.mxu0 0.0
    %2274 = vmatpush1.msra.mxu0 0.0
    %2275 = vmatprep.subr.mxu0 0.0
    %2276 = vmatpush1.msra.mxu0 0.0
    %2277 = vmatprep.subr.mxu0 0.0
    %2278 = vmatpush1.msra.mxu0 0.0
    %2279 = vmatprep.subr.mxu0 0.0
    %2280 = vmatpush1.msra.mxu0 0.0
    %2281 = vmatprep.subr.mxu0 0.0
    %2282 = vmatpush1.msra.mxu0 0.0
    %2283 = vmatprep.subr.mxu0 0.0
    %2284 = vmatpush1.msra.mxu0 0.0
    %2285 = vmatprep.subr.mxu0 0.0
    %2286 = vmatpush1.msra.mxu0 0.0
    %2287 = vmatprep.subr.mxu0 0.0
    %2288 = vmatpush1.msra.mxu0 0.0
    %2289 = vmatprep.subr.mxu0 0.0
    %2290 = vmatpush1.msra.mxu0 0.0
    %2291 = vmatprep.subr.mxu0 0.0
    %2292 = vmatpush1.msra.mxu0 0.0
    %2293 = vmatprep.subr.mxu0 0.0
    %2294 = vmatpush1.msra.mxu0 0.0
    %2295 = vmatprep.subr.mxu0 0.0
    %2296 = vmatpush1.msra.mxu0 0.0
    %2297 = vmatprep.subr.mxu0 0.0
    %2298 = vmatpush1.msra.mxu0 0.0
    %2299 = vmatprep.subr.mxu0 0.0
    %2300 = vmatpush1.msra.mxu0 0.0
    %2301 = vmatprep.subr.mxu0 0.0
    %2302 = vmatpush1.msra.mxu0 0.0
    %2303 = vmatprep.subr.mxu0 0.0
    %2304 = vmatpush1.msra.mxu0 0.0
    %2305 = vmatprep.subr.mxu0 0.0
    %2306 = vmatpush1.msra.mxu0 0.0
    %2307 = vmatprep.subr.mxu0 0.0
    %2308 = vmatpush1.msra.mxu0 0.0
    %2309 = vmatprep.mubr.f32.mxu0 0.0
    %2310 = vmatmul.mubr.f32.gmra.mrb[0].mxu0 %v2240
    %v2311 = vpop.f32.mrb[0].mxu0
    %v2312 = vadd.f32 0.0, %v2311
    %v2313 = vpop.f32.mrb[0].mxu0
    %2314 = vmatprep.mubr.f32.mxu0 0.0
    %2315 = vmatmul.mubr.f32.gmra.mrb[0].mxu0 %v2243
    %v2316 = vpop.f32.mrb[0].mxu0
    %v2317 = vadd.f32 0.0, %v2316
    %v2318 = vpop.f32.mrb[0].mxu0
    %2319 = vdwg.mxu0
    %2320 = vrot.lane.b32.xlu0 %v2114, 120
    %v2321 = vpop.permute.xlu0 %2320
    %2322 = vrot.lane.b32.xlu0 %v2119, 120
    %v2323 = vpop.permute.xlu0 %2322
    %2324 = vrot.lane.b32.xlu0 %v2114, 88
    %v2325 = vpop.permute.xlu0 %2324
    %2326 = vrot.lane.b32.xlu0 %v2119, 88
    %v2327 = vpop.permute.xlu0 %2326
    %v2328 = vsel %vm611, %v2321, 0
    %v2330 = vsel %vm611, %v2323, 0
    %v2332 = vsel %vm611, %v2325, 0
    %v2334 = vsel %vm611, %v2327, 0
    %2336 = vmatprep.subr.mxu0 0.0
    %2337 = vmatpush1.xpose.msra.mxu0 %v2332
    %2338 = vmatprep.subr.mxu0 0.0
    %2339 = vmatpush1.xpose.msra.mxu0 %v2334
    %2340 = vmatprep.subr.mxu0 0.0
    %2341 = vmatpush1.xpose.msra.mxu0 0.0
    %2342 = vmatprep.subr.mxu0 0.0
    %2343 = vmatpush1.xpose.msra.mxu0 0.0
    %2344 = vmatprep.subr.mxu0 0.0
    %2345 = vmatpush1.xpose.msra.mxu0 0.0
    %2346 = vmatprep.subr.mxu0 0.0
    %2347 = vmatpush1.xpose.msra.mxu0 0.0
    %2348 = vmatprep.subr.mxu0 0.0
    %2349 = vmatpush1.xpose.msra.mxu0 0.0
    %2350 = vmatprep.subr.mxu0 0.0
    %2351 = vmatpush1.xpose.msra.mxu0 0.0
    %2352 = vmatprep.subr.mxu0 0.0
    %2353 = vmatpush1.xpose.msra.mxu0 0.0
    %2354 = vmatprep.subr.mxu0 0.0
    %2355 = vmatpush1.xpose.msra.mxu0 0.0
    %2356 = vmatprep.subr.mxu0 0.0
    %2357 = vmatpush1.xpose.msra.mxu0 0.0
    %2358 = vmatprep.subr.mxu0 0.0
    %2359 = vmatpush1.xpose.msra.mxu0 0.0
    %2360 = vmatprep.subr.mxu0 0.0
    %2361 = vmatpush1.xpose.msra.mxu0 0.0
    %2362 = vmatprep.subr.mxu0 0.0
    %2363 = vmatpush1.xpose.msra.mxu0 0.0
    %2364 = vmatprep.subr.mxu0 0.0
    %2365 = vmatpush1.xpose.msra.mxu0 0.0
    %2366 = vmatprep.subr.mxu0 0.0
    %2367 = vmatpush1.xpose.msra.mxu0 0.0
    %2368 = vmatprep.subr.mxu0 0.0
    %2369 = vmatpush1.xpose.msra.mxu0 0.0
    %2370 = vmatprep.subr.mxu0 0.0
    %2371 = vmatpush1.xpose.msra.mxu0 0.0
    %2372 = vmatprep.subr.mxu0 0.0
    %2373 = vmatpush1.xpose.msra.mxu0 0.0
    %2374 = vmatprep.subr.mxu0 0.0
    %2375 = vmatpush1.xpose.msra.mxu0 0.0
    %2376 = vmatprep.subr.mxu0 0.0
    %2377 = vmatpush1.xpose.msra.mxu0 0.0
    %2378 = vmatprep.subr.mxu0 0.0
    %2379 = vmatpush1.xpose.msra.mxu0 0.0
    %2380 = vmatprep.subr.mxu0 0.0
    %2381 = vmatpush1.xpose.msra.mxu0 0.0
    %2382 = vmatprep.subr.mxu0 0.0
    %2383 = vmatpush1.xpose.msra.mxu0 0.0
    %2384 = vmatprep.subr.mxu0 0.0
    %2385 = vmatpush1.xpose.msra.mxu0 0.0
    %2386 = vmatprep.subr.mxu0 0.0
    %2387 = vmatpush1.xpose.msra.mxu0 0.0
    %2388 = vmatprep.subr.mxu0 0.0
    %2389 = vmatpush1.xpose.msra.mxu0 0.0
    %2390 = vmatprep.subr.mxu0 0.0
    %2391 = vmatpush1.xpose.msra.mxu0 0.0
    %2392 = vmatprep.subr.mxu0 0.0
    %2393 = vmatpush1.xpose.msra.mxu0 0.0
    %2394 = vmatprep.subr.mxu0 0.0
    %2395 = vmatpush1.xpose.msra.mxu0 0.0
    %2396 = vmatprep.subr.mxu0 0.0
    %2397 = vmatpush1.xpose.msra.mxu0 0.0
    %2398 = vmatprep.subr.mxu0 0.0
    %2399 = vmatpush1.xpose.msra.mxu0 0.0
    %2400 = vmatprep.mubr.f32.mxu0 0.0
    %2401 = vmatmul.mubr.f32.gmra.mrb[0].mxu0 %v2328
    %v2402 = vpop.f32.mrb[0].mxu0
    %v2403 = vadd.f32 %v385, %v2402
    %v2404 = vpop.f32.mrb[0].mxu0
    %2405 = vmatprep.mubr.f32.mxu0 0.0
    %2406 = vmatmul.mubr.f32.gmra.mrb[0].mxu0 %v2330
    %v2407 = vpop.f32.mrb[0].mxu0
    %v2408 = vadd.f32 %v386, %v2407
    %v2409 = vpop.f32.mrb[0].mxu0
    %2410 = vdwg.mxu0
    %v2411 = vsel %vm695, %v2403, -inf
    %2412 = vmax.xlane.f32.xlu0 %v2411
    %v2413 = vpop.xlane.xlu0 %2412
    %v2414 = vsel %vm695, %v2408, -inf
    %2415 = vmax.xlane.f32.xlu0 %v2414
    %v2416 = vpop.xlane.xlu0 %2415
    %v2417 = vsub.f32 %v2403, %v2413
    %v2418 = vsub.f32 %v2408, %v2416
    %v2419 = vmul.f32 %v2417, 1.442695
    %v2420 = vpow.pop %v2419
    %v2421 = vmul.f32 %v2418, 1.442695
    %v2422 = vpow.pop %v2421
    %v2423 = vsel %vm695, %v2420, 0.0
    %2424 = vadd.xlane.f32.xlu0 %v2423
    %v2425 = vpop.xlane.xlu0 %2424
    %v2426 = vsel %vm695, %v2422, 0.0
    %2427 = vadd.xlane.f32.xlu0 %v2426
    %v2428 = vpop.xlane.xlu0 %2427
    %v2429 = vrcp.pop %v2425
    %v2430 = vrcp.pop %v2428
    %v2431 = vmul.f32 %v2420, %v2429
    %v2432 = vmul.f32 %v2422, %v2430
    %2433 = vrot.lane.b32.xlu0 %v2114, 56
    %v2434 = vpop.permute.xlu0 %2433
    %2435 = vrot.lane.b32.xlu0 %v2119, 56
    %v2436 = vpop.permute.xlu0 %2435
    %v2440 = vsel %vm695, %v2431, 0
    %v2443 = vsel %vm695, %v2432, 0
    %2445 = vmatprep.subr.mxu0 0.0
    %2446 = vmatpush1.msra.mxu0 %v2434
    %2447 = vmatprep.subr.mxu0 0.0
    %2448 = vmatpush1.msra.mxu0 %v2436
    %2449 = vmatprep.subr.mxu0 0.0
    %2450 = vmatpush1.msra.mxu0 0.0
    %2451 = vmatprep.subr.mxu0 0.0
    %2452 = vmatpush1.msra.mxu0 0.0
    %2453 = vmatprep.subr.mxu0 0.0
    %2454 = vmatpush1.msra.mxu0 0.0
    %2455 = vmatprep.subr.mxu0 0.0
    %2456 = vmatpush1.msra.mxu0 0.0
    %2457 = vmatprep.subr.mxu0 0.0
    %2458 = vmatpush1.msra.mxu0 0.0
    %2459 = vmatprep.subr.mxu0 0.0
    %2460 = vmatpush1.msra.mxu0 0.0
    %2461 = vmatprep.subr.mxu0 0.0
    %2462 = vmatpush1.msra.mxu0 0.0
    %2463 = vmatprep.subr.mxu0 0.0
    %2464 = vmatpush1.msra.mxu0 0.0
    %2465 = vmatprep.subr.mxu0 0.0
    %2466 = vmatpush1.msra.mxu0 0.0
    %2467 = vmatprep.subr.mxu0 0.0
    %2468 = vmatpush1.msra.mxu0 0.0
    %2469 = vmatprep.subr.mxu0 0.0
    %2470 = vmatpush1.msra.mxu0 0.0
    %2471 = vmatprep.subr.mxu0 0.0
    %2472 = vmatpush1.msra.mxu0 0.0
    %2473 = vmatprep.subr.mxu0 0.0
    %2474 = vmatpush1.msra.mxu0 0.0
    %2475 = vmatprep.subr.mxu0 0.0
    %2476 = vmatpush1.msra.mxu0 0.0
    %2477 = vmatprep.subr.mxu0 0.0
    %2478 = vmatpush1.msra.mxu0 0.0
    %2479 = vmatprep.subr.mxu0 0.0
    %2480 = vmatpush1.msra.mxu0 0.0
    %2481 = vmatprep.subr.mxu0 0.0
    %2482 = vmatpush1.msra.mxu0 0.0
    %2483 = vmatprep.subr.mxu0 0.0
    %2484 = vmatpush1.msra.mxu0 0.0
    %2485 = vmatprep.subr.mxu0 0.0
    %2486 = vmatpush1.msra.mxu0 0.0
    %2487 = vmatprep.subr.mxu0 0.0
    %2488 = vmatpush1.msra.mxu0 0.0
    %2489 = vmatprep.subr.mxu0 0.0
    %2490 = vmatpush1.msra.mxu0 0.0
    %2491 = vmatprep.subr.mxu0 0.0
    %2492 = vmatpush1.msra.mxu0 0.0
    %2493 = vmatprep.subr.mxu0 0.0
    %2494 = vmatpush1.msra.mxu0 0.0
    %2495 = vmatprep.subr.mxu0 0.0
    %2496 = vmatpush1.msra.mxu0 0.0
    %2497 = vmatprep.subr.mxu0 0.0
    %2498 = vmatpush1.msra.mxu0 0.0
    %2499 = vmatprep.subr.mxu0 0.0
    %2500 = vmatpush1.msra.mxu0 0.0
    %2501 = vmatprep.subr.mxu0 0.0
    %2502 = vmatpush1.msra.mxu0 0.0
    %2503 = vmatprep.subr.mxu0 0.0
    %2504 = vmatpush1.msra.mxu0 0.0
    %2505 = vmatprep.subr.mxu0 0.0
    %2506 = vmatpush1.msra.mxu0 0.0
    %2507 = vmatprep.subr.mxu0 0.0
    %2508 = vmatpush1.msra.mxu0 0.0
    %2509 = vmatprep.mubr.f32.mxu0 0.0
    %2510 = vmatmul.mubr.f32.gmra.mrb[0].mxu0 %v2440
    %v2511 = vpop.f32.mrb[0].mxu0
    %v2512 = vadd.f32 0.0, %v2511
    %v2513 = vpop.f32.mrb[0].mxu0
    %2514 = vmatprep.mubr.f32.mxu0 0.0
    %2515 = vmatmul.mubr.f32.gmra.mrb[0].mxu0 %v2443
    %v2516 = vpop.f32.mrb[0].mxu0
    %v2517 = vadd.f32 0.0, %v2516
    %v2518 = vpop.f32.mrb[0].mxu0
    %2519 = vdwg.mxu0
    %v2521 = vsel %vm611, %v2512, 0
    %v2524 = vsel %vm611, %v2517, 0
    %2526 = vmatprep.subr.mxu0 0.0
    %2527 = vmatpush1.msra.mxu0 %v2013
    %2528 = vmatprep.subr.mxu0 0.0
    %2529 = vmatpush1.msra.mxu0 0.0
    %2530 = vmatprep.subr.mxu0 0.0
    %2531 = vmatpush1.msra.mxu0 0.0
    %2532 = vmatprep.subr.mxu0 0.0
    %2533 = vmatpush1.msra.mxu0 0.0
    %2534 = vmatprep.subr.mxu0 0.0
    %2535 = vmatpush1.msra.mxu0 0.0
    %2536 = vmatprep.subr.mxu0 0.0
    %2537 = vmatpush1.msra.mxu0 0.0
    %2538 = vmatprep.subr.mxu0 0.0
    %2539 = vmatpush1.msra.mxu0 0.0
    %2540 = vmatprep.subr.mxu0 0.0
    %2541 = vmatpush1.msra.mxu0 0.0
    %2542 = vmatprep.subr.mxu0 0.0
    %2543 = vmatpush1.msra.mxu0 0.0
    %2544 = vmatprep.subr.mxu0 0.0
    %2545 = vmatpush1.msra.mxu0 0.0
    %2546 = vmatprep.subr.mxu0 0.0
    %2547 = vmatpush1.msra.mxu0 0.0
    %2548 = vmatprep.subr.mxu0 0.0
    %2549 = vmatpush1.msra.mxu0 0.0
    %2550 = vmatprep.subr.mxu0 0.0
    %2551 = vmatpush1.msra.mxu0 0.0
    %2552 = vmatprep.subr.mxu0 0.0
    %2553 = vmatpush1.msra.mxu0 0.0
    %2554 = vmatprep.subr.mxu0 0.0
    %2555 = vmatpush1.msra.mxu0 0.0
    %2556 = vmatprep.subr.mxu0 0.0
    %2557 = vmatpush1.msra.mxu0 0.0
    %2558 = vmatprep.subr.mxu0 0.0
    %2559 = vmatpush1.msra.mxu0 0.0
    %2560 = vmatprep.subr.mxu0 0.0
    %2561 = vmatpush1.msra.mxu0 0.0
    %2562 = vmatprep.subr.mxu0 0.0
    %2563 = vmatpush1.msra.mxu0 0.0
    %2564 = vmatprep.subr.mxu0 0.0
    %2565 = vmatpush1.msra.mxu0 0.0
    %2566 = vmatprep.subr.mxu0 0.0
    %2567 = vmatpush1.msra.mxu0 0.0
    %2568 = vmatprep.subr.mxu0 0.0
    %2569 = vmatpush1.msra.mxu0 0.0
    %2570 = vmatprep.subr.mxu0 0.0
    %2571 = vmatpush1.msra.mxu0 0.0
    %2572 = vmatprep.subr.mxu0 0.0
    %2573 = vmatpush1.msra.mxu0 0.0
    %2574 = vmatprep.subr.mxu0 0.0
    %2575 = vmatpush1.msra.mxu0 0.0
    %2576 = vmatprep.subr.mxu0 0.0
    %2577 = vmatpush1.msra.mxu0 0.0
    %2578 = vmatprep.subr.mxu0 0.0
    %2579 = vmatpush1.msra.mxu0 0.0
    %2580 = vmatprep.subr.mxu0 0.0
    %2581 = vmatpush1.msra.mxu0 0.0
    %2582 = vmatprep.subr.mxu0 0.0
    %2583 = vmatpush1.msra.mxu0 0.0
    %2584 = vmatprep.subr.mxu0 0.0
    %2585 = vmatpush1.msra.mxu0 0.0
    %2586 = vmatprep.subr.mxu0 0.0
    %2587 = vmatpush1.msra.mxu0 0.0
    %2588 = vmatprep.subr.mxu0 0.0
    %2589 = vmatpush1.msra.mxu0 0.0
    %2590 = vmatprep.mubr.f32.mxu0 0.0
    %2591 = vmatmul.mubr.f32.gmra.mrb[0].mxu0 %v2521
    %v2592 = vpop.f32.mrb[0].mxu0
    %v2593 = vadd.f32 0.0, %v2592
    %v2594 = vpop.f32.mrb[0].mxu0
    %2595 = vmatprep.mubr.f32.mxu0 0.0
    %2596 = vmatmul.mubr.f32.gmra.mrb[0].mxu0 %v2524
    %v2597 = vpop.f32.mrb[0].mxu0
    %v2598 = vadd.f32 0.0, %v2597
    %v2599 = vpop.f32.mrb[0].mxu0
    %2600 = vdwg.mxu0
    %v2602 = vsel %vm611, %v2312, 0
    %v2605 = vsel %vm611, %v2317, 0
    %2607 = vmatprep.subr.mxu0 0.0
    %2608 = vmatpush1.msra.mxu0 %v2012
    %2609 = vmatprep.subr.mxu0 0.0
    %2610 = vmatpush1.msra.mxu0 0.0
    %2611 = vmatprep.subr.mxu0 0.0
    %2612 = vmatpush1.msra.mxu0 0.0
    %2613 = vmatprep.subr.mxu0 0.0
    %2614 = vmatpush1.msra.mxu0 0.0
    %2615 = vmatprep.subr.mxu0 0.0
    %2616 = vmatpush1.msra.mxu0 0.0
    %2617 = vmatprep.subr.mxu0 0.0
    %2618 = vmatpush1.msra.mxu0 0.0
    %2619 = vmatprep.subr.mxu0 0.0
    %2620 = vmatpush1.msra.mxu0 0.0
    %2621 = vmatprep.subr.mxu0 0.0
    %2622 = vmatpush1.msra.mxu0 0.0
    %2623 = vmatprep.subr.mxu0 0.0
    %2624 = vmatpush1.msra.mxu0 0.0
    %2625 = vmatprep.subr.mxu0 0.0
    %2626 = vmatpush1.msra.mxu0 0.0
    %2627 = vmatprep.subr.mxu0 0.0
    %2628 = vmatpush1.msra.mxu0 0.0
    %2629 = vmatprep.subr.mxu0 0.0
    %2630 = vmatpush1.msra.mxu0 0.0
    %2631 = vmatprep.subr.mxu0 0.0
    %2632 = vmatpush1.msra.mxu0 0.0
    %2633 = vmatprep.subr.mxu0 0.0
    %2634 = vmatpush1.msra.mxu0 0.0
    %2635 = vmatprep.subr.mxu0 0.0
    %2636 = vmatpush1.msra.mxu0 0.0
    %2637 = vmatprep.subr.mxu0 0.0
    %2638 = vmatpush1.msra.mxu0 0.0
    %2639 = vmatprep.subr.mxu0 0.0
    %2640 = vmatpush1.msra.mxu0 0.0
    %2641 = vmatprep.subr.mxu0 0.0
    %2642 = vmatpush1.msra.mxu0 0.0
    %2643 = vmatprep.subr.mxu0 0.0
    %2644 = vmatpush1.msra.mxu0 0.0
    %2645 = vmatprep.subr.mxu0 0.0
    %2646 = vmatpush1.msra.mxu0 0.0
    %2647 = vmatprep.subr.mxu0 0.0
    %2648 = vmatpush1.msra.mxu0 0.0
    %2649 = vmatprep.subr.mxu0 0.0
    %2650 = vmatpush1.msra.mxu0 0.0
    %2651 = vmatprep.subr.mxu0 0.0
    %2652 = vmatpush1.msra.mxu0 0.0
    %2653 = vmatprep.subr.mxu0 0.0
    %2654 = vmatpush1.msra.mxu0 0.0
    %2655 = vmatprep.subr.mxu0 0.0
    %2656 = vmatpush1.msra.mxu0 0.0
    %2657 = vmatprep.subr.mxu0 0.0
    %2658 = vmatpush1.msra.mxu0 0.0
    %2659 = vmatprep.subr.mxu0 0.0
    %2660 = vmatpush1.msra.mxu0 0.0
    %2661 = vmatprep.subr.mxu0 0.0
    %2662 = vmatpush1.msra.mxu0 0.0
    %2663 = vmatprep.subr.mxu0 0.0
    %2664 = vmatpush1.msra.mxu0 0.0
    %2665 = vmatprep.subr.mxu0 0.0
    %2666 = vmatpush1.msra.mxu0 0.0
    %2667 = vmatprep.subr.mxu0 0.0
    %2668 = vmatpush1.msra.mxu0 0.0
    %2669 = vmatprep.subr.mxu0 0.0
    %2670 = vmatpush1.msra.mxu0 0.0
    %2671 = vmatprep.mubr.f32.mxu0 0.0
    %2672 = vmatmul.mubr.f32.gmra.mrb[0].mxu0 %v2602
    %v2673 = vpop.f32.mrb[0].mxu0
    %v2674 = vadd.f32 %v2593, %v2673
    %v2675 = vpop.f32.mrb[0].mxu0
    %2676 = vmatprep.mubr.f32.mxu0 0.0
    %2677 = vmatmul.mubr.f32.gmra.mrb[0].mxu0 %v2605
    %v2678 = vpop.f32.mrb[0].mxu0
    %v2679 = vadd.f32 %v2598, %v2678
    %v2680 = vpop.f32.mrb[0].mxu0
    %2681 = vdwg.mxu0
    %2682 = vrot.lane.b32.xlu0 %v2114, 112
    %v2683 = vpop.permute.xlu0 %2682
    %2684 = vrot.lane.b32.xlu0 %v2119, 112
    %v2685 = vpop.permute.xlu0 %2684
    %2686 = vrot.lane.b32.xlu0 %v2114, 80
    %v2687 = vpop.permute.xlu0 %2686
    %2688 = vrot.lane.b32.xlu0 %v2119, 80
    %v2689 = vpop.permute.xlu0 %2688
    %v2690 = vsel %vm611, %v2683, 0
    %v2692 = vsel %vm611, %v2685, 0
    %v2694 = vsel %vm611, %v2687, 0
    %v2696 = vsel %vm611, %v2689, 0
    %2698 = vmatprep.subr.mxu0 0.0
    %2699 = vmatpush1.xpose.msra.mxu0 %v2694
    %2700 = vmatprep.subr.mxu0 0.0
    %2701 = vmatpush1.xpose.msra.mxu0 %v2696
    %2702 = vmatprep.subr.mxu0 0.0
    %2703 = vmatpush1.xpose.msra.mxu0 0.0
    %2704 = vmatprep.subr.mxu0 0.0
    %2705 = vmatpush1.xpose.msra.mxu0 0.0
    %2706 = vmatprep.subr.mxu0 0.0
    %2707 = vmatpush1.xpose.msra.mxu0 0.0
    %2708 = vmatprep.subr.mxu0 0.0
    %2709 = vmatpush1.xpose.msra.mxu0 0.0
    %2710 = vmatprep.subr.mxu0 0.0
    %2711 = vmatpush1.xpose.msra.mxu0 0.0
    %2712 = vmatprep.subr.mxu0 0.0
    %2713 = vmatpush1.xpose.msra.mxu0 0.0
    %2714 = vmatprep.subr.mxu0 0.0
    %2715 = vmatpush1.xpose.msra.mxu0 0.0
    %2716 = vmatprep.subr.mxu0 0.0
    %2717 = vmatpush1.xpose.msra.mxu0 0.0
    %2718 = vmatprep.subr.mxu0 0.0
    %2719 = vmatpush1.xpose.msra.mxu0 0.0
    %2720 = vmatprep.subr.mxu0 0.0
    %2721 = vmatpush1.xpose.msra.mxu0 0.0
    %2722 = vmatprep.subr.mxu0 0.0
    %2723 = vmatpush1.xpose.msra.mxu0 0.0
    %2724 = vmatprep.subr.mxu0 0.0
    %2725 = vmatpush1.xpose.msra.mxu0 0.0
    %2726 = vmatprep.subr.mxu0 0.0
    %2727 = vmatpush1.xpose.msra.mxu0 0.0
    %2728 = vmatprep.subr.mxu0 0.0
    %2729 = vmatpush1.xpose.msra.mxu0 0.0
    %2730 = vmatprep.subr.mxu0 0.0
    %2731 = vmatpush1.xpose.msra.mxu0 0.0
    %2732 = vmatprep.subr.mxu0 0.0
    %2733 = vmatpush1.xpose.msra.mxu0 0.0
    %2734 = vmatprep.subr.mxu0 0.0
    %2735 = vmatpush1.xpose.msra.mxu0 0.0
    %2736 = vmatprep.subr.mxu0 0.0
    %2737 = vmatpush1.xpose.msra.mxu0 0.0
    %2738 = vmatprep.subr.mxu0 0.0
    %2739 = vmatpush1.xpose.msra.mxu0 0.0
    %2740 = vmatprep.subr.mxu0 0.0
    %2741 = vmatpush1.xpose.msra.mxu0 0.0
    %2742 = vmatprep.subr.mxu0 0.0
    %2743 = vmatpush1.xpose.msra.mxu0 0.0
    %2744 = vmatprep.subr.mxu0 0.0
    %2745 = vmatpush1.xpose.msra.mxu0 0.0
    %2746 = vmatprep.subr.mxu0 0.0
    %2747 = vmatpush1.xpose.msra.mxu0 0.0
    %2748 = vmatprep.subr.mxu0 0.0
    %2749 = vmatpush1.xpose.msra.mxu0 0.0
    %2750 = vmatprep.subr.mxu0 0.0
    %2751 = vmatpush1.xpose.msra.mxu0 0.0
    %2752 = vmatprep.subr.mxu0 0.0
    %2753 = vmatpush1.xpose.msra.mxu0 0.0
    %2754 = vmatprep.subr.mxu0 0.0
    %2755 = vmatpush1.xpose.msra.mxu0 0.0
    %2756 = vmatprep.subr.mxu0 0.0
    %2757 = vmatpush1.xpose.msra.mxu0 0.0
    %2758 = vmatprep.subr.mxu0 0.0
    %2759 = vmatpush1.xpose.msra.mxu0 0.0
    %2760 = vmatprep.subr.mxu0 0.0
    %2761 = vmatpush1.xpose.msra.mxu0 0.0
    %2762 = vmatprep.mubr.f32.mxu0 0.0
    %2763 = vmatmul.mubr.f32.gmra.mrb[0].mxu0 %v2690
    %v2764 = vpop.f32.mrb[0].mxu0
    %v2765 = vadd.f32 %v385, %v2764
    %v2766 = vpop.f32.mrb[0].mxu0
    %2767 = vmatprep.mubr.f32.mxu0 0.0
    %2768 = vmatmul.mubr.f32.gmra.mrb[0].mxu0 %v2692
    %v2769 = vpop.f32.mrb[0].mxu0
    %v2770 = vadd.f32 %v386, %v2769
    %v2771 = vpop.f32.mrb[0].mxu0
    %2772 = vdwg.mxu0
    %v2773 = vsel %vm695, %v2765, -inf
    %2774 = vmax.xlane.f32.xlu0 %v2773
    %v2775 = vpop.xlane.xlu0 %2774
    %v2776 = vsel %vm695, %v2770, -inf
    %2777 = vmax.xlane.f32.xlu0 %v2776
    %v2778 = vpop.xlane.xlu0 %2777
    %v2779 = vsub.f32 %v2765, %v2775
    %v2780 = vsub.f32 %v2770, %v2778
    %v2781 = vmul.f32 %v2779, 1.442695
    %v2782 = vpow.pop %v2781
    %v2783 = vmul.f32 %v2780, 1.442695
    %v2784 = vpow.pop %v2783
    %v2785 = vsel %vm695, %v2782, 0.0
    %2786 = vadd.xlane.f32.xlu0 %v2785
    %v2787 = vpop.xlane.xlu0 %2786
    %v2788 = vsel %vm695, %v2784, 0.0
    %2789 = vadd.xlane.f32.xlu0 %v2788
    %v2790 = vpop.xlane.xlu0 %2789
    %v2791 = vrcp.pop %v2787
    %v2792 = vrcp.pop %v2790
    %v2793 = vmul.f32 %v2782, %v2791
    %v2794 = vmul.f32 %v2784, %v2792
    %2795 = vrot.lane.b32.xlu0 %v2114, 48
    %v2796 = vpop.permute.xlu0 %2795
    %2797 = vrot.lane.b32.xlu0 %v2119, 48
    %v2798 = vpop.permute.xlu0 %2797
    %v2802 = vsel %vm695, %v2793, 0
    %v2805 = vsel %vm695, %v2794, 0
    %2807 = vmatprep.subr.mxu0 0.0
    %2808 = vmatpush1.msra.mxu0 %v2796
    %2809 = vmatprep.subr.mxu0 0.0
    %2810 = vmatpush1.msra.mxu0 %v2798
    %2811 = vmatprep.subr.mxu0 0.0
    %2812 = vmatpush1.msra.mxu0 0.0
    %2813 = vmatprep.subr.mxu0 0.0
    %2814 = vmatpush1.msra.mxu0 0.0
    %2815 = vmatprep.subr.mxu0 0.0
    %2816 = vmatpush1.msra.mxu0 0.0
    %2817 = vmatprep.subr.mxu0 0.0
    %2818 = vmatpush1.msra.mxu0 0.0
    %2819 = vmatprep.subr.mxu0 0.0
    %2820 = vmatpush1.msra.mxu0 0.0
    %2821 = vmatprep.subr.mxu0 0.0
    %2822 = vmatpush1.msra.mxu0 0.0
    %2823 = vmatprep.subr.mxu0 0.0
    %2824 = vmatpush1.msra.mxu0 0.0
    %2825 = vmatprep.subr.mxu0 0.0
    %2826 = vmatpush1.msra.mxu0 0.0
    %2827 = vmatprep.subr.mxu0 0.0
    %2828 = vmatpush1.msra.mxu0 0.0
    %2829 = vmatprep.subr.mxu0 0.0
    %2830 = vmatpush1.msra.mxu0 0.0
    %2831 = vmatprep.subr.mxu0 0.0
    %2832 = vmatpush1.msra.mxu0 0.0
    %2833 = vmatprep.subr.mxu0 0.0
    %2834 = vmatpush1.msra.mxu0 0.0
    %2835 = vmatprep.subr.mxu0 0.0
    %2836 = vmatpush1.msra.mxu0 0.0
    %2837 = vmatprep.subr.mxu0 0.0
    %2838 = vmatpush1.msra.mxu0 0.0
    %2839 = vmatprep.subr.mxu0 0.0
    %2840 = vmatpush1.msra.mxu0 0.0
    %2841 = vmatprep.subr.mxu0 0.0
    %2842 = vmatpush1.msra.mxu0 0.0
    %2843 = vmatprep.subr.mxu0 0.0
    %2844 = vmatpush1.msra.mxu0 0.0
    %2845 = vmatprep.subr.mxu0 0.0
    %2846 = vmatpush1.msra.mxu0 0.0
    %2847 = vmatprep.subr.mxu0 0.0
    %2848 = vmatpush1.msra.mxu0 0.0
    %2849 = vmatprep.subr.mxu0 0.0
    %2850 = vmatpush1.msra.mxu0 0.0
    %2851 = vmatprep.subr.mxu0 0.0
    %2852 = vmatpush1.msra.mxu0 0.0
    %2853 = vmatprep.subr.mxu0 0.0
    %2854 = vmatpush1.msra.mxu0 0.0
    %2855 = vmatprep.subr.mxu0 0.0
    %2856 = vmatpush1.msra.mxu0 0.0
    %2857 = vmatprep.subr.mxu0 0.0
    %2858 = vmatpush1.msra.mxu0 0.0
    %2859 = vmatprep.subr.mxu0 0.0
    %2860 = vmatpush1.msra.mxu0 0.0
    %2861 = vmatprep.subr.mxu0 0.0
    %2862 = vmatpush1.msra.mxu0 0.0
    %2863 = vmatprep.subr.mxu0 0.0
    %2864 = vmatpush1.msra.mxu0 0.0
    %2865 = vmatprep.subr.mxu0 0.0
    %2866 = vmatpush1.msra.mxu0 0.0
    %2867 = vmatprep.subr.mxu0 0.0
    %2868 = vmatpush1.msra.mxu0 0.0
    %2869 = vmatprep.subr.mxu0 0.0
    %2870 = vmatpush1.msra.mxu0 0.0
    %2871 = vmatprep.mubr.f32.mxu0 0.0
    %2872 = vmatmul.mubr.f32.gmra.mrb[0].mxu0 %v2802
    %v2873 = vpop.f32.mrb[0].mxu0
    %v2874 = vadd.f32 0.0, %v2873
    %v2875 = vpop.f32.mrb[0].mxu0
    %2876 = vmatprep.mubr.f32.mxu0 0.0
    %2877 = vmatmul.mubr.f32.gmra.mrb[0].mxu0 %v2805
    %v2878 = vpop.f32.mrb[0].mxu0
    %v2879 = vadd.f32 0.0, %v2878
    %v2880 = vpop.f32.mrb[0].mxu0
    %2881 = vdwg.mxu0
    %v2883 = vsel %vm611, %v2874, 0
    %v2886 = vsel %vm611, %v2879, 0
    %2888 = vmatprep.subr.mxu0 0.0
    %2889 = vmatpush1.msra.mxu0 %v2014
    %2890 = vmatprep.subr.mxu0 0.0
    %2891 = vmatpush1.msra.mxu0 0.0
    %2892 = vmatprep.subr.mxu0 0.0
    %2893 = vmatpush1.msra.mxu0 0.0
    %2894 = vmatprep.subr.mxu0 0.0
    %2895 = vmatpush1.msra.mxu0 0.0
    %2896 = vmatprep.subr.mxu0 0.0
    %2897 = vmatpush1.msra.mxu0 0.0
    %2898 = vmatprep.subr.mxu0 0.0
    %2899 = vmatpush1.msra.mxu0 0.0
    %2900 = vmatprep.subr.mxu0 0.0
    %2901 = vmatpush1.msra.mxu0 0.0
    %2902 = vmatprep.subr.mxu0 0.0
    %2903 = vmatpush1.msra.mxu0 0.0
    %2904 = vmatprep.subr.mxu0 0.0
    %2905 = vmatpush1.msra.mxu0 0.0
    %2906 = vmatprep.subr.mxu0 0.0
    %2907 = vmatpush1.msra.mxu0 0.0
    %2908 = vmatprep.subr.mxu0 0.0
    %2909 = vmatpush1.msra.mxu0 0.0
    %2910 = vmatprep.subr.mxu0 0.0
    %2911 = vmatpush1.msra.mxu0 0.0
    %2912 = vmatprep.subr.mxu0 0.0
    %2913 = vmatpush1.msra.mxu0 0.0
    %2914 = vmatprep.subr.mxu0 0.0
    %2915 = vmatpush1.msra.mxu0 0.0
    %2916 = vmatprep.subr.mxu0 0.0
    %2917 = vmatpush1.msra.mxu0 0.0
    %2918 = vmatprep.subr.mxu0 0.0
    %2919 = vmatpush1.msra.mxu0 0.0
    %2920 = vmatprep.subr.mxu0 0.0
    %2921 = vmatpush1.msra.mxu0 0.0
    %2922 = vmatprep.subr.mxu0 0.0
    %2923 = vmatpush1.msra.mxu0 0.0
    %2924 = vmatprep.subr.mxu0 0.0
    %2925 = vmatpush1.msra.mxu0 0.0
    %2926 = vmatprep.subr.mxu0 0.0
    %2927 = vmatpush1.msra.mxu0 0.0
    %2928 = vmatprep.subr.mxu0 0.0
    %2929 = vmatpush1.msra.mxu0 0.0
    %2930 = vmatprep.subr.mxu0 0.0
    %2931 = vmatpush1.msra.mxu0 0.0
    %2932 = vmatprep.subr.mxu0 0.0
    %2933 = vmatpush1.msra.mxu0 0.0
    %2934 = vmatprep.subr.mxu0 0.0
    %2935 = vmatpush1.msra.mxu0 0.0
    %2936 = vmatprep.subr.mxu0 0.0
    %2937 = vmatpush1.msra.mxu0 0.0
    %2938 = vmatprep.subr.mxu0 0.0
    %2939 = vmatpush1.msra.mxu0 0.0
    %2940 = vmatprep.subr.mxu0 0.0
    %2941 = vmatpush1.msra.mxu0 0.0
    %2942 = vmatprep.subr.mxu0 0.0
    %2943 = vmatpush1.msra.mxu0 0.0
    %2944 = vmatprep.subr.mxu0 0.0
    %2945 = vmatpush1.msra.mxu0 0.0
    %2946 = vmatprep.subr.mxu0 0.0
    %2947 = vmatpush1.msra.mxu0 0.0
    %2948 = vmatprep.subr.mxu0 0.0
    %2949 = vmatpush1.msra.mxu0 0.0
    %2950 = vmatprep.subr.mxu0 0.0
    %2951 = vmatpush1.msra.mxu0 0.0
    %2952 = vmatprep.mubr.f32.mxu0 0.0
    %2953 = vmatmul.mubr.f32.gmra.mrb[0].mxu0 %v2883
    %v2954 = vpop.f32.mrb[0].mxu0
    %v2955 = vadd.f32 0.0, %v2954
    %v2956 = vpop.f32.mrb[0].mxu0
    %2957 = vmatprep.mubr.f32.mxu0 0.0
    %2958 = vmatmul.mubr.f32.gmra.mrb[0].mxu0 %v2886
    %v2959 = vpop.f32.mrb[0].mxu0
    %v2960 = vadd.f32 0.0, %v2959
    %v2961 = vpop.f32.mrb[0].mxu0
    %2962 = vdwg.mxu0
    %v2963 = vadd.f32 %v2674, %v2955
    %v2964 = vadd.f32 %v2679, %v2960
    %2965 = vrot.lane.b32.xlu0 %v2114, 104
    %v2966 = vpop.permute.xlu0 %2965
    %2967 = vrot.lane.b32.xlu0 %v2119, 104
    %v2968 = vpop.permute.xlu0 %2967
    %2969 = vrot.lane.b32.xlu0 %v2114, 72
    %v2970 = vpop.permute.xlu0 %2969
    %2971 = vrot.lane.b32.xlu0 %v2119, 72
    %v2972 = vpop.permute.xlu0 %2971
    %v2973 = vsel %vm611, %v2966, 0
    %v2975 = vsel %vm611, %v2968, 0
    %v2977 = vsel %vm611, %v2970, 0
    %v2979 = vsel %vm611, %v2972, 0
    %2981 = vmatprep.subr.mxu0 0.0
    %2982 = vmatpush1.xpose.msra.mxu0 %v2977
    %2983 = vmatprep.subr.mxu0 0.0
    %2984 = vmatpush1.xpose.msra.mxu0 %v2979
    %2985 = vmatprep.subr.mxu0 0.0
    %2986 = vmatpush1.xpose.msra.mxu0 0.0
    %2987 = vmatprep.subr.mxu0 0.0
    %2988 = vmatpush1.xpose.msra.mxu0 0.0
    %2989 = vmatprep.subr.mxu0 0.0
    %2990 = vmatpush1.xpose.msra.mxu0 0.0
    %2991 = vmatprep.subr.mxu0 0.0
    %2992 = vmatpush1.xpose.msra.mxu0 0.0
    %2993 = vmatprep.subr.mxu0 0.0
    %2994 = vmatpush1.xpose.msra.mxu0 0.0
    %2995 = vmatprep.subr.mxu0 0.0
    %2996 = vmatpush1.xpose.msra.mxu0 0.0
    %2997 = vmatprep.subr.mxu0 0.0
    %2998 = vmatpush1.xpose.msra.mxu0 0.0
    %2999 = vmatprep.subr.mxu0 0.0
    %3000 = vmatpush1.xpose.msra.mxu0 0.0
    %3001 = vmatprep.subr.mxu0 0.0
    %3002 = vmatpush1.xpose.msra.mxu0 0.0
    %3003 = vmatprep.subr.mxu0 0.0
    %3004 = vmatpush1.xpose.msra.mxu0 0.0
    %3005 = vmatprep.subr.mxu0 0.0
    %3006 = vmatpush1.xpose.msra.mxu0 0.0
    %3007 = vmatprep.subr.mxu0 0.0
    %3008 = vmatpush1.xpose.msra.mxu0 0.0
    %3009 = vmatprep.subr.mxu0 0.0
    %3010 = vmatpush1.xpose.msra.mxu0 0.0
    %3011 = vmatprep.subr.mxu0 0.0
    %3012 = vmatpush1.xpose.msra.mxu0 0.0
    %3013 = vmatprep.subr.mxu0 0.0
    %3014 = vmatpush1.xpose.msra.mxu0 0.0
    %3015 = vmatprep.subr.mxu0 0.0
    %3016 = vmatpush1.xpose.msra.mxu0 0.0
    %3017 = vmatprep.subr.mxu0 0.0
    %3018 = vmatpush1.xpose.msra.mxu0 0.0
    %3019 = vmatprep.subr.mxu0 0.0
    %3020 = vmatpush1.xpose.msra.mxu0 0.0
    %3021 = vmatprep.subr.mxu0 0.0
    %3022 = vmatpush1.xpose.msra.mxu0 0.0
    %3023 = vmatprep.subr.mxu0 0.0
    %3024 = vmatpush1.xpose.msra.mxu0 0.0
    %3025 = vmatprep.subr.mxu0 0.0
    %3026 = vmatpush1.xpose.msra.mxu0 0.0
    %3027 = vmatprep.subr.mxu0 0.0
    %3028 = vmatpush1.xpose.msra.mxu0 0.0
    %3029 = vmatprep.subr.mxu0 0.0
    %3030 = vmatpush1.xpose.msra.mxu0 0.0
    %3031 = vmatprep.subr.mxu0 0.0
    %3032 = vmatpush1.xpose.msra.mxu0 0.0
    %3033 = vmatprep.subr.mxu0 0.0
    %3034 = vmatpush1.xpose.msra.mxu0 0.0
    %3035 = vmatprep.subr.mxu0 0.0
    %3036 = vmatpush1.xpose.msra.mxu0 0.0
    %3037 = vmatprep.subr.mxu0 0.0
    %3038 = vmatpush1.xpose.msra.mxu0 0.0
    %3039 = vmatprep.subr.mxu0 0.0
    %3040 = vmatpush1.xpose.msra.mxu0 0.0
    %3041 = vmatprep.subr.mxu0 0.0
    %3042 = vmatpush1.xpose.msra.mxu0 0.0
    %3043 = vmatprep.subr.mxu0 0.0
    %3044 = vmatpush1.xpose.msra.mxu0 0.0
    %3045 = vmatprep.mubr.f32.mxu0 0.0
    %3046 = vmatmul.mubr.f32.gmra.mrb[0].mxu0 %v2973
    %v3047 = vpop.f32.mrb[0].mxu0
    %v3048 = vadd.f32 %v385, %v3047
    %v3049 = vpop.f32.mrb[0].mxu0
    %3050 = vmatprep.mubr.f32.mxu0 0.0
    %3051 = vmatmul.mubr.f32.gmra.mrb[0].mxu0 %v2975
    %v3052 = vpop.f32.mrb[0].mxu0
    %v3053 = vadd.f32 %v386, %v3052
    %v3054 = vpop.f32.mrb[0].mxu0
    %3055 = vdwg.mxu0
    %v3056 = vsel %vm695, %v3048, -inf
    %3057 = vmax.xlane.f32.xlu0 %v3056
    %v3058 = vpop.xlane.xlu0 %3057
    %v3059 = vsel %vm695, %v3053, -inf
    %3060 = vmax.xlane.f32.xlu0 %v3059
    %v3061 = vpop.xlane.xlu0 %3060
    %v3062 = vsub.f32 %v3048, %v3058
    %v3063 = vsub.f32 %v3053, %v3061
    %v3064 = vmul.f32 %v3062, 1.442695
    %v3065 = vpow.pop %v3064
    %v3066 = vmul.f32 %v3063, 1.442695
    %v3067 = vpow.pop %v3066
    %v3068 = vsel %vm695, %v3065, 0.0
    %3069 = vadd.xlane.f32.xlu0 %v3068
    %v3070 = vpop.xlane.xlu0 %3069
    %v3071 = vsel %vm695, %v3067, 0.0
    %3072 = vadd.xlane.f32.xlu0 %v3071
    %v3073 = vpop.xlane.xlu0 %3072
    %v3074 = vrcp.pop %v3070
    %v3075 = vrcp.pop %v3073
    %v3076 = vmul.f32 %v3065, %v3074
    %v3077 = vmul.f32 %v3067, %v3075
    %3078 = vrot.lane.b32.xlu0 %v2114, 40
    %v3079 = vpop.permute.xlu0 %3078
    %3080 = vrot.lane.b32.xlu0 %v2119, 40
    %v3081 = vpop.permute.xlu0 %3080
    %v3085 = vsel %vm695, %v3076, 0
    %v3088 = vsel %vm695, %v3077, 0
    %3090 = vmatprep.subr.mxu0 0.0
    %3091 = vmatpush1.msra.mxu0 %v3079
    %3092 = vmatprep.subr.mxu0 0.0
    %3093 = vmatpush1.msra.mxu0 %v3081
    %3094 = vmatprep.subr.mxu0 0.0
    %3095 = vmatpush1.msra.mxu0 0.0
    %3096 = vmatprep.subr.mxu0 0.0
    %3097 = vmatpush1.msra.mxu0 0.0
    %3098 = vmatprep.subr.mxu0 0.0
    %3099 = vmatpush1.msra.mxu0 0.0
    %3100 = vmatprep.subr.mxu0 0.0
    %3101 = vmatpush1.msra.mxu0 0.0
    %3102 = vmatprep.subr.mxu0 0.0
    %3103 = vmatpush1.msra.mxu0 0.0
    %3104 = vmatprep.subr.mxu0 0.0
    %3105 = vmatpush1.msra.mxu0 0.0
    %3106 = vmatprep.subr.mxu0 0.0
    %3107 = vmatpush1.msra.mxu0 0.0
    %3108 = vmatprep.subr.mxu0 0.0
    %3109 = vmatpush1.msra.mxu0 0.0
    %3110 = vmatprep.subr.mxu0 0.0
    %3111 = vmatpush1.msra.mxu0 0.0
    %3112 = vmatprep.subr.mxu0 0.0
    %3113 = vmatpush1.msra.mxu0 0.0
    %3114 = vmatprep.subr.mxu0 0.0
    %3115 = vmatpush1.msra.mxu0 0.0
    %3116 = vmatprep.subr.mxu0 0.0
    %3117 = vmatpush1.msra.mxu0 0.0
    %3118 = vmatprep.subr.mxu0 0.0
    %3119 = vmatpush1.msra.mxu0 0.0
    %3120 = vmatprep.subr.mxu0 0.0
    %3121 = vmatpush1.msra.mxu0 0.0
    %3122 = vmatprep.subr.mxu0 0.0
    %3123 = vmatpush1.msra.mxu0 0.0
    %3124 = vmatprep.subr.mxu0 0.0
    %3125 = vmatpush1.msra.mxu0 0.0
    %3126 = vmatprep.subr.mxu0 0.0
    %3127 = vmatpush1.msra.mxu0 0.0
    %3128 = vmatprep.subr.mxu0 0.0
    %3129 = vmatpush1.msra.mxu0 0.0
    %3130 = vmatprep.subr.mxu0 0.0
    %3131 = vmatpush1.msra.mxu0 0.0
    %3132 = vmatprep.subr.mxu0 0.0
    %3133 = vmatpush1.msra.mxu0 0.0
    %3134 = vmatprep.subr.mxu0 0.0
    %3135 = vmatpush1.msra.mxu0 0.0
    %3136 = vmatprep.subr.mxu0 0.0
    %3137 = vmatpush1.msra.mxu0 0.0
    %3138 = vmatprep.subr.mxu0 0.0
    %3139 = vmatpush1.msra.mxu0 0.0
    %3140 = vmatprep.subr.mxu0 0.0
    %3141 = vmatpush1.msra.mxu0 0.0
    %3142 = vmatprep.subr.mxu0 0.0
    %3143 = vmatpush1.msra.mxu0 0.0
    %3144 = vmatprep.subr.mxu0 0.0
    %3145 = vmatpush1.msra.mxu0 0.0
    %3146 = vmatprep.subr.mxu0 0.0
    %3147 = vmatpush1.msra.mxu0 0.0
    %3148 = vmatprep.subr.mxu0 0.0
    %3149 = vmatpush1.msra.mxu0 0.0
    %3150 = vmatprep.subr.mxu0 0.0
    %3151 = vmatpush1.msra.mxu0 0.0
    %3152 = vmatprep.subr.mxu0 0.0
    %3153 = vmatpush1.msra.mxu0 0.0
    %3154 = vmatprep.mubr.f32.mxu0 0.0
    %3155 = vmatmul.mubr.f32.gmra.mrb[0].mxu0 %v3085
    %v3156 = vpop.f32.mrb[0].mxu0
    %v3157 = vadd.f32 0.0, %v3156
    %v3158 = vpop.f32.mrb[0].mxu0
    %3159 = vmatprep.mubr.f32.mxu0 0.0
    %3160 = vmatmul.mubr.f32.gmra.mrb[0].mxu0 %v3088
    %v3161 = vpop.f32.mrb[0].mxu0
    %v3162 = vadd.f32 0.0, %v3161
    %v3163 = vpop.f32.mrb[0].mxu0
    %3164 = vdwg.mxu0
    %v3166 = vsel %vm611, %v3157, 0
    %v3169 = vsel %vm611, %v3162, 0
    %3171 = vmatprep.subr.mxu0 0.0
    %3172 = vmatpush1.msra.mxu0 %v2015
    %3173 = vmatprep.subr.mxu0 0.0
    %3174 = vmatpush1.msra.mxu0 0.0
    %3175 = vmatprep.subr.mxu0 0.0
    %3176 = vmatpush1.msra.mxu0 0.0
    %3177 = vmatprep.subr.mxu0 0.0
    %3178 = vmatpush1.msra.mxu0 0.0
    %3179 = vmatprep.subr.mxu0 0.0
    %3180 = vmatpush1.msra.mxu0 0.0
    %3181 = vmatprep.subr.mxu0 0.0
    %3182 = vmatpush1.msra.mxu0 0.0
    %3183 = vmatprep.subr.mxu0 0.0
    %3184 = vmatpush1.msra.mxu0 0.0
    %3185 = vmatprep.subr.mxu0 0.0
    %3186 = vmatpush1.msra.mxu0 0.0
    %3187 = vmatprep.subr.mxu0 0.0
    %3188 = vmatpush1.msra.mxu0 0.0
    %3189 = vmatprep.subr.mxu0 0.0
    %3190 = vmatpush1.msra.mxu0 0.0
    %3191 = vmatprep.subr.mxu0 0.0
    %3192 = vmatpush1.msra.mxu0 0.0
    %3193 = vmatprep.subr.mxu0 0.0
    %3194 = vmatpush1.msra.mxu0 0.0
    %3195 = vmatprep.subr.mxu0 0.0
    %3196 = vmatpush1.msra.mxu0 0.0
    %3197 = vmatprep.subr.mxu0 0.0
    %3198 = vmatpush1.msra.mxu0 0.0
    %3199 = vmatprep.subr.mxu0 0.0
    %3200 = vmatpush1.msra.mxu0 0.0
    %3201 = vmatprep.subr.mxu0 0.0
    %3202 = vmatpush1.msra.mxu0 0.0
    %3203 = vmatprep.subr.mxu0 0.0
    %3204 = vmatpush1.msra.mxu0 0.0
    %3205 = vmatprep.subr.mxu0 0.0
    %3206 = vmatpush1.msra.mxu0 0.0
    %3207 = vmatprep.subr.mxu0 0.0
    %3208 = vmatpush1.msra.mxu0 0.0
    %3209 = vmatprep.subr.mxu0 0.0
    %3210 = vmatpush1.msra.mxu0 0.0
    %3211 = vmatprep.subr.mxu0 0.0
    %3212 = vmatpush1.msra.mxu0 0.0
    %3213 = vmatprep.subr.mxu0 0.0
    %3214 = vmatpush1.msra.mxu0 0.0
    %3215 = vmatprep.subr.mxu0 0.0
    %3216 = vmatpush1.msra.mxu0 0.0
    %3217 = vmatprep.subr.mxu0 0.0
    %3218 = vmatpush1.msra.mxu0 0.0
    %3219 = vmatprep.subr.mxu0 0.0
    %3220 = vmatpush1.msra.mxu0 0.0
    %3221 = vmatprep.subr.mxu0 0.0
    %3222 = vmatpush1.msra.mxu0 0.0
    %3223 = vmatprep.subr.mxu0 0.0
    %3224 = vmatpush1.msra.mxu0 0.0
    %3225 = vmatprep.subr.mxu0 0.0
    %3226 = vmatpush1.msra.mxu0 0.0
    %3227 = vmatprep.subr.mxu0 0.0
    %3228 = vmatpush1.msra.mxu0 0.0
    %3229 = vmatprep.subr.mxu0 0.0
    %3230 = vmatpush1.msra.mxu0 0.0
    %3231 = vmatprep.subr.mxu0 0.0
    %3232 = vmatpush1.msra.mxu0 0.0
    %3233 = vmatprep.subr.mxu0 0.0
    %3234 = vmatpush1.msra.mxu0 0.0
    %3235 = vmatprep.mubr.f32.mxu0 0.0
    %3236 = vmatmul.mubr.f32.gmra.mrb[0].mxu0 %v3166
    %v3237 = vpop.f32.mrb[0].mxu0
    %v3238 = vadd.f32 0.0, %v3237
    %v3239 = vpop.f32.mrb[0].mxu0
    %3240 = vmatprep.mubr.f32.mxu0 0.0
    %3241 = vmatmul.mubr.f32.gmra.mrb[0].mxu0 %v3169
    %v3242 = vpop.f32.mrb[0].mxu0
    %v3243 = vadd.f32 0.0, %v3242
    %v3244 = vpop.f32.mrb[0].mxu0
    %3245 = vdwg.mxu0
    %v3246 = vadd.f32 %v2963, %v3238
    %v3247 = vadd.f32 %v2964, %v3243
    %v3249 = vlaneseq
    %v3250 = vshrl.u32 %v3249, 7
    %v3251 = vsub.s32 0, %v3250
    %v3252 = vrot.slane %v2016, %v3251
    %v3254 = vadd.f32 %v3246, %v3252
    %v3255 = vadd.f32 %v3247, %v3252
    %v3256 = vadd.f32 %v2005, %v3254
    %v3257 = vadd.f32 %v2006, %v3255
    %v3258 = vsel %vm523, %v3256, 0.0
    %3259 = vadd.xlane.f32.xlu0 %v3258
    %v3260 = vpop.xlane.xlu0 %3259
    %v3261 = vsel %vm523, %v3257, 0.0
    %3262 = vadd.xlane.f32.xlu0 %v3261
    %v3263 = vpop.xlane.xlu0 %3262
    %v3264 = vmul.f32 %v3260, %v1749
    %v3265 = vmul.f32 %v3263, %v1749
    %v3266 = vsub.f32 %v3256, %v3264
    %v3267 = vsub.f32 %v3257, %v3265
    %v3268 = vmul.f32 %v3266, %v3266
    %v3269 = vmul.f32 %v3267, %v3267
    %v3270 = vsel %vm523, %v3268, 0.0
    %3271 = vadd.xlane.f32.xlu0 %v3270
    %v3272 = vpop.xlane.xlu0 %3271
    %v3273 = vsel %vm523, %v3269, 0.0
    %3274 = vadd.xlane.f32.xlu0 %v3273
    %v3275 = vpop.xlane.xlu0 %3274
    %v3276 = vmul.f32 %v3272, %v1749
    %v3277 = vmul.f32 %v3275, %v1749
    %v3278 = vadd.f32 %v3276, 1e-05
    %v3279 = vadd.f32 %v3277, 1e-05
    %v3280 = vrsqrt.pop %v3278
    %v3281 = vrsqrt.pop %v3279
    %v3282 = vmul.f32 %v3266, %v3280
    %v3283 = vmul.f32 %v3267, %v3281
    %v3285 = vlaneseq
    %v3286 = vshrl.u32 %v3285, 7
    %v3287 = vsub.s32 0, %v3286
    %v3288 = vrot.slane %v2031, %v3287
    %v3290 = vmul.f32 %v3282, %v3288
    %v3291 = vmul.f32 %v3283, %v3288
    %v3293 = vlaneseq
    %v3294 = vshrl.u32 %v3293, 7
    %v3295 = vsub.s32 0, %v3294
    %v3296 = vrot.slane %v2032, %v3295
    %v3298 = vadd.f32 %v3290, %v3296
    %v3299 = vadd.f32 %v3291, %v3296
    %v3301 = vlaneseq
    %v3302 = vshrl.u32 %v3301, 7
    %v3303 = vsub.s32 0, %v3302
    %v3304 = vrot.slane %v2021, %v3303
    %v3307 = vsel %vm523, %v3298, 0
    %v3310 = vsel %vm523, %v3299, 0
    %3312 = vmatprep.subr.mxu0 0.0
    %3313 = vmatpush1.msra.mxu0 %v2017
    %3314 = vmatprep.subr.mxu0 0.0
    %3315 = vmatpush1.msra.mxu0 %v2018
    %3316 = vmatprep.subr.mxu0 0.0
    %3317 = vmatpush1.msra.mxu0 %v2019
    %3318 = vmatprep.subr.mxu0 0.0
    %3319 = vmatpush1.msra.mxu0 %v2020
    %3320 = vmatprep.subr.mxu0 0.0
    %3321 = vmatpush1.msra.mxu0 0.0
    %3322 = vmatprep.subr.mxu0 0.0
    %3323 = vmatpush1.msra.mxu0 0.0
    %3324 = vmatprep.subr.mxu0 0.0
    %3325 = vmatpush1.msra.mxu0 0.0
    %3326 = vmatprep.subr.mxu0 0.0
    %3327 = vmatpush1.msra.mxu0 0.0
    %3328 = vmatprep.subr.mxu0 0.0
    %3329 = vmatpush1.msra.mxu0 0.0
    %3330 = vmatprep.subr.mxu0 0.0
    %3331 = vmatpush1.msra.mxu0 0.0
    %3332 = vmatprep.subr.mxu0 0.0
    %3333 = vmatpush1.msra.mxu0 0.0
    %3334 = vmatprep.subr.mxu0 0.0
    %3335 = vmatpush1.msra.mxu0 0.0
    %3336 = vmatprep.subr.mxu0 0.0
    %3337 = vmatpush1.msra.mxu0 0.0
    %3338 = vmatprep.subr.mxu0 0.0
    %3339 = vmatpush1.msra.mxu0 0.0
    %3340 = vmatprep.subr.mxu0 0.0
    %3341 = vmatpush1.msra.mxu0 0.0
    %3342 = vmatprep.subr.mxu0 0.0
    %3343 = vmatpush1.msra.mxu0 0.0
    %3344 = vmatprep.subr.mxu0 0.0
    %3345 = vmatpush1.msra.mxu0 0.0
    %3346 = vmatprep.subr.mxu0 0.0
    %3347 = vmatpush1.msra.mxu0 0.0
    %3348 = vmatprep.subr.mxu0 0.0
    %3349 = vmatpush1.msra.mxu0 0.0
    %3350 = vmatprep.subr.mxu0 0.0
    %3351 = vmatpush1.msra.mxu0 0.0
    %3352 = vmatprep.subr.mxu0 0.0
    %3353 = vmatpush1.msra.mxu0 0.0
    %3354 = vmatprep.subr.mxu0 0.0
    %3355 = vmatpush1.msra.mxu0 0.0
    %3356 = vmatprep.subr.mxu0 0.0
    %3357 = vmatpush1.msra.mxu0 0.0
    %3358 = vmatprep.subr.mxu0 0.0
    %3359 = vmatpush1.msra.mxu0 0.0
    %3360 = vmatprep.subr.mxu0 0.0
    %3361 = vmatpush1.msra.mxu0 0.0
    %3362 = vmatprep.subr.mxu0 0.0
    %3363 = vmatpush1.msra.mxu0 0.0
    %3364 = vmatprep.subr.mxu0 0.0
    %3365 = vmatpush1.msra.mxu0 0.0
    %3366 = vmatprep.subr.mxu0 0.0
    %3367 = vmatpush1.msra.mxu0 0.0
    %3368 = vmatprep.subr.mxu0 0.0
    %3369 = vmatpush1.msra.mxu0 0.0
    %3370 = vmatprep.subr.mxu0 0.0
    %3371 = vmatpush1.msra.mxu0 0.0
    %3372 = vmatprep.subr.mxu0 0.0
    %3373 = vmatpush1.msra.mxu0 0.0
    %3374 = vmatprep.subr.mxu0 0.0
    %3375 = vmatpush1.msra.mxu0 0.0
    %3376 = vmatprep.mubr.f32.mxu0 0.0
    %3377 = vmatmul.mubr.f32.gmra.mrb[0].mxu0 %v3307
    %v3378 = vpop.f32.mrb[0].mxu0
    %v3379 = vadd.f32 %v3304, %v3378
    %v3380 = vpop.f32.mrb[0].mxu0
    %3381 = vmatprep.mubr.f32.mxu0 0.0
    %3382 = vmatmul.mubr.f32.gmra.mrb[0].mxu0 %v3310
    %v3383 = vpop.f32.mrb[0].mxu0
    %v3384 = vadd.f32 %v3304, %v3383
    %v3385 = vpop.f32.mrb[0].mxu0
    %3386 = vdwg.mxu0
    %v3387 = vmax.f32 %v3379, 0.0
    %v3388 = vmax.f32 %v3384, 0.0
    %v3390 = vlaneseq
    %v3391 = vshrl.u32 %v3390, 7
    %v3392 = vsub.s32 0, %v3391
    %v3393 = vrot.slane %v2030, %v3392
    %v3396 = vsel %vm1881, %v3387, 0
    %v3399 = vsel %vm1881, %v3388, 0
    %3401 = vmatprep.subr.mxu0 0.0
    %3402 = vmatpush1.msra.mxu0 %v2022
    %3403 = vmatprep.subr.mxu0 0.0
    %3404 = vmatpush1.msra.mxu0 %v2023
    %3405 = vmatprep.subr.mxu0 0.0
    %3406 = vmatpush1.msra.mxu0 %v2024
    %3407 = vmatprep.subr.mxu0 0.0
    %3408 = vmatpush1.msra.mxu0 %v2025
    %3409 = vmatprep.subr.mxu0 0.0
    %3410 = vmatpush1.msra.mxu0 %v2026
    %3411 = vmatprep.subr.mxu0 0.0
    %3412 = vmatpush1.msra.mxu0 %v2027
    %3413 = vmatprep.subr.mxu0 0.0
    %3414 = vmatpush1.msra.mxu0 %v2028
    %3415 = vmatprep.subr.mxu0 0.0
    %3416 = vmatpush1.msra.mxu0 %v2029
    %3417 = vmatprep.subr.mxu0 0.0
    %3418 = vmatpush1.msra.mxu0 0.0
    %3419 = vmatprep.subr.mxu0 0.0
    %3420 = vmatpush1.msra.mxu0 0.0
    %3421 = vmatprep.subr.mxu0 0.0
    %3422 = vmatpush1.msra.mxu0 0.0
    %3423 = vmatprep.subr.mxu0 0.0
    %3424 = vmatpush1.msra.mxu0 0.0
    %3425 = vmatprep.subr.mxu0 0.0
    %3426 = vmatpush1.msra.mxu0 0.0
    %3427 = vmatprep.subr.mxu0 0.0
    %3428 = vmatpush1.msra.mxu0 0.0
    %3429 = vmatprep.subr.mxu0 0.0
    %3430 = vmatpush1.msra.mxu0 0.0
    %3431 = vmatprep.subr.mxu0 0.0
    %3432 = vmatpush1.msra.mxu0 0.0
    %3433 = vmatprep.subr.mxu0 0.0
    %3434 = vmatpush1.msra.mxu0 0.0
    %3435 = vmatprep.subr.mxu0 0.0
    %3436 = vmatpush1.msra.mxu0 0.0
    %3437 = vmatprep.subr.mxu0 0.0
    %3438 = vmatpush1.msra.mxu0 0.0
    %3439 = vmatprep.subr.mxu0 0.0
    %3440 = vmatpush1.msra.mxu0 0.0
    %3441 = vmatprep.subr.mxu0 0.0
    %3442 = vmatpush1.msra.mxu0 0.0
    %3443 = vmatprep.subr.mxu0 0.0
    %3444 = vmatpush1.msra.mxu0 0.0
    %3445 = vmatprep.subr.mxu0 0.0
    %3446 = vmatpush1.msra.mxu0 0.0
    %3447 = vmatprep.subr.mxu0 0.0
    %3448 = vmatpush1.msra.mxu0 0.0
    %3449 = vmatprep.subr.mxu0 0.0
    %3450 = vmatpush1.msra.mxu0 0.0
    %3451 = vmatprep.subr.mxu0 0.0
    %3452 = vmatpush1.msra.mxu0 0.0
    %3453 = vmatprep.subr.mxu0 0.0
    %3454 = vmatpush1.msra.mxu0 0.0
    %3455 = vmatprep.subr.mxu0 0.0
    %3456 = vmatpush1.msra.mxu0 0.0
    %3457 = vmatprep.subr.mxu0 0.0
    %3458 = vmatpush1.msra.mxu0 0.0
    %3459 = vmatprep.subr.mxu0 0.0
    %3460 = vmatpush1.msra.mxu0 0.0
    %3461 = vmatprep.subr.mxu0 0.0
    %3462 = vmatpush1.msra.mxu0 0.0
    %3463 = vmatprep.subr.mxu0 0.0
    %3464 = vmatpush1.msra.mxu0 0.0
    %3465 = vmatprep.mubr.f32.mxu0 0.0
    %3466 = vmatmul.mubr.f32.gmra.mrb[0].mxu0 %v3396
    %v3467 = vpop.f32.mrb[0].mxu0
    %v3468 = vadd.f32 %v3393, %v3467
    %v3469 = vpop.f32.mrb[0].mxu0
    %3470 = vmatprep.mubr.f32.mxu0 0.0
    %3471 = vmatmul.mubr.f32.gmra.mrb[0].mxu0 %v3399
    %v3472 = vpop.f32.mrb[0].mxu0
    %v3473 = vadd.f32 %v3393, %v3472
    %v3474 = vpop.f32.mrb[0].mxu0
    %3475 = vdwg.mxu0
    %v3476 = vadd.f32 %v3298, %v3468
    %v3477 = vadd.f32 %v3299, %v3473
    %v3478 = vsel %vm523, %v3476, 0.0
    %3479 = vadd.xlane.f32.xlu0 %v3478
    %v3480 = vpop.xlane.xlu0 %3479
    %v3481 = vsel %vm523, %v3477, 0.0
    %3482 = vadd.xlane.f32.xlu0 %v3481
    %v3483 = vpop.xlane.xlu0 %3482
    %v3484 = vmul.f32 %v3480, %v1749
    %v3485 = vmul.f32 %v3483, %v1749
    %v3486 = vsub.f32 %v3476, %v3484
    %v3487 = vsub.f32 %v3477, %v3485
    %v3488 = vmul.f32 %v3486, %v3486
    %v3489 = vmul.f32 %v3487, %v3487
    %v3490 = vsel %vm523, %v3488, 0.0
    %3491 = vadd.xlane.f32.xlu0 %v3490
    %v3492 = vpop.xlane.xlu0 %3491
    %v3493 = vsel %vm523, %v3489, 0.0
    %3494 = vadd.xlane.f32.xlu0 %v3493
    %v3495 = vpop.xlane.xlu0 %3494
    %v3496 = vmul.f32 %v3492, %v1749
    %v3497 = vmul.f32 %v3495, %v1749
    %v3498 = vadd.f32 %v3496, 1e-05
    %v3499 = vadd.f32 %v3497, 1e-05
    %v3500 = vrsqrt.pop %v3498
    %v3501 = vrsqrt.pop %v3499
    %v3502 = vmul.f32 %v3486, %v3500
    %v3503 = vmul.f32 %v3487, %v3501
    %v3505 = vlaneseq
    %v3506 = vshrl.u32 %v3505, 7
    %v3507 = vsub.s32 0, %v3506
    %v3508 = vrot.slane %v2033, %v3507
    %v3510 = vmul.f32 %v3502, %v3508
    %v3511 = vmul.f32 %v3503, %v3508
    %v3513 = vlaneseq
    %v3514 = vshrl.u32 %v3513, 7
    %v3515 = vsub.s32 0, %v3514
    %v3516 = vrot.slane %v2034, %v3515
    %v3518 = vadd.f32 %v3510, %v3516
    %v3519 = vadd.f32 %v3511, %v3516
    %v3520 = vsel %vm523, %v3518, 0.0
    %3521 = vadd.xlane.f32.xlu0 %v3520
    %v3522 = vpop.xlane.xlu0 %3521
    %v3523 = vsel %vm523, %v3519, 0.0
    %3524 = vadd.xlane.f32.xlu0 %v3523
    %v3525 = vpop.xlane.xlu0 %3524
    %v3526 = vmul.f32 %v3522, %v1749
    %v3527 = vmul.f32 %v3525, %v1749
    %v3528 = vsub.f32 %v3518, %v3526
    %v3529 = vsub.f32 %v3519, %v3527
    %v3530 = vmul.f32 %v3528, %v3528
    %v3531 = vmul.f32 %v3529, %v3529
    %v3532 = vsel %vm523, %v3530, 0.0
    %3533 = vadd.xlane.f32.xlu0 %v3532
    %v3534 = vpop.xlane.xlu0 %3533
    %v3535 = vsel %vm523, %v3531, 0.0
    %3536 = vadd.xlane.f32.xlu0 %v3535
    %v3537 = vpop.xlane.xlu0 %3536
    %v3538 = vmul.f32 %v3534, %v1749
    %v3539 = vmul.f32 %v3537, %v1749
    %v3540 = vadd.f32 %v3538, 1e-05
    %v3541 = vadd.f32 %v3539, 1e-05
    %v3542 = vrsqrt.pop %v3540
    %v3543 = vrsqrt.pop %v3541
    %v3544 = vmul.f32 %v3528, %v3542
    %v3545 = vmul.f32 %v3529, %v3543
    %v3547 = vlaneseq
    %v3548 = vshrl.u32 %v3547, 7
    %v3549 = vsub.s32 0, %v3548
    %v3550 = vrot.slane %v389, %v3549
    %v3552 = vmul.f32 %v3544, %v3550
    %v3553 = vmul.f32 %v3545, %v3550
    %v3555 = vlaneseq
    %v3556 = vshrl.u32 %v3555, 7
    %v3557 = vsub.s32 0, %v3556
    %v3558 = vrot.slane %v390, %v3557
    %v3560 = vadd.f32 %v3552, %v3558
    %v3561 = vadd.f32 %v3553, %v3558
    %v3562 = vadd.f32 %v382, %v399
    %v3563 = vld [vmem:[%s77] sm:$0xff]
    %v3564 = vld [vmem:[%s77 + $0x8] sm:$0xff]
    %v3565 = vld [vmem:[%s77 + $0x10] sm:$0xff]
    %v3566 = vld [vmem:[%s77 + $0x18] sm:$0xff]
    %v3567 = vld [vmem:[%s79] sm:$0x1]
    %v3568 = vld [vmem:[%s81] sm:$0xff]
    %v3569 = vld [vmem:[%s81 + $0x8] sm:$0xff]
    %v3570 = vld [vmem:[%s81 + $0x10] sm:$0xff]
    %v3571 = vld [vmem:[%s81 + $0x18] sm:$0xff]
    %v3572 = vld [vmem:[%s83] sm:$0x1]
    %v3573 = vld [vmem:[%s85] sm:$0xff]
    %v3574 = vld [vmem:[%s85 + $0x8] sm:$0xff]
    %v3575 = vld [vmem:[%s85 + $0x10] sm:$0xff]
    %v3576 = vld [vmem:[%s85 + $0x18] sm:$0xff]
    %v3577 = vld [vmem:[%s87] sm:$0x1]
    %v3578 = vld [vmem:[%s89] sm:$0xff]
    %v3579 = vld [vmem:[%s89 + $0x8] sm:$0xff]
    %v3580 = vld [vmem:[%s89 + $0x10] sm:$0xff]
    %v3581 = vld [vmem:[%s89 + $0x18] sm:$0xff]
    %v3582 = vld [vmem:[%s91] sm:$0x1]
    %v3583 = vld [vmem:[%s93] sm:$0xff]
    %v3584 = vld [vmem:[%s93 + $0x8] sm:$0xff]
    %v3585 = vld [vmem:[%s93 + $0x10] sm:$0xff]
    %v3586 = vld [vmem:[%s93 + $0x18] sm:$0xff]
    %v3587 = vld [vmem:[%s95] sm:$0x1]
    %v3588 = vld [vmem:[%s97] sm:$0xff]
    %v3589 = vld [vmem:[%s97 + $0x8] sm:$0xff]
    %v3590 = vld [vmem:[%s97 + $0x10] sm:$0xff]
    %v3591 = vld [vmem:[%s97 + $0x18] sm:$0xff]
    %v3592 = vld [vmem:[%s99] sm:$0x1]
    %v3593 = vld [vmem:[%s101] sm:$0xff]
    %v3594 = vld [vmem:[%s101 + $0x8] sm:$0xff]
    %v3595 = vld [vmem:[%s101 + $0x10] sm:$0xff]
    %v3596 = vld [vmem:[%s101 + $0x18] sm:$0xff]
    %v3597 = vld [vmem:[%s101 + $0x20] sm:$0xff]
    %v3598 = vld [vmem:[%s101 + $0x28] sm:$0xff]
    %v3599 = vld [vmem:[%s101 + $0x30] sm:$0xff]
    %v3600 = vld [vmem:[%s101 + $0x38] sm:$0xff]
    %v3601 = vld [vmem:[%s103] sm:$0x1]
    %v3602 = vld [vmem:[%s105] sm:$0x1]
    %v3603 = vld [vmem:[%s107] sm:$0x1]
    %v3604 = vld [vmem:[%s109] sm:$0x1]
    %v3605 = vld [vmem:[%s111] sm:$0x1]
    %v3606 = vld [vmem:[%s113] sm:$0x1]
    %v3607 = vld [vmem:[%s115] sm:$0x1]
    %v3609 = vlaneseq
    %v3610 = vshrl.u32 %v3609, 7
    %v3611 = vsub.s32 0, %v3610
    %v3612 = vrot.slane %v3567, %v3611
    %v3615 = vsel %vm523, %v3562, 0
    %3617 = vmatprep.subr.mxu0 0.0
    %3618 = vmatpush1.msra.mxu0 %v3563
    %3619 = vmatprep.subr.mxu0 0.0
    %3620 = vmatpush1.msra.mxu0 %v3564
    %3621 = vmatprep.subr.mxu0 0.0
    %3622 = vmatpush1.msra.mxu0 %v3565
    %3623 = vmatprep.subr.mxu0 0.0
    %3624 = vmatpush1.msra.mxu0 %v3566
    %3625 = vmatprep.subr.mxu0 0.0
    %3626 = vmatpush1.msra.mxu0 0.0
    %3627 = vmatprep.subr.mxu0 0.0
    %3628 = vmatpush1.msra.mxu0 0.0
    %3629 = vmatprep.subr.mxu0 0.0
    %3630 = vmatpush1.msra.mxu0 0.0
    %3631 = vmatprep.subr.mxu0 0.0
    %3632 = vmatpush1.msra.mxu0 0.0
    %3633 = vmatprep.subr.mxu0 0.0
    %3634 = vmatpush1.msra.mxu0 0.0
    %3635 = vmatprep.subr.mxu0 0.0
    %3636 = vmatpush1.msra.mxu0 0.0
    %3637 = vmatprep.subr.mxu0 0.0
    %3638 = vmatpush1.msra.mxu0 0.0
    %3639 = vmatprep.subr.mxu0 0.0
    %3640 = vmatpush1.msra.mxu0 0.0
    %3641 = vmatprep.subr.mxu0 0.0
    %3642 = vmatpush1.msra.mxu0 0.0
    %3643 = vmatprep.subr.mxu0 0.0
    %3644 = vmatpush1.msra.mxu0 0.0
    %3645 = vmatprep.subr.mxu0 0.0
    %3646 = vmatpush1.msra.mxu0 0.0
    %3647 = vmatprep.subr.mxu0 0.0
    %3648 = vmatpush1.msra.mxu0 0.0
    %3649 = vmatprep.subr.mxu0 0.0
    %3650 = vmatpush1.msra.mxu0 0.0
    %3651 = vmatprep.subr.mxu0 0.0
    %3652 = vmatpush1.msra.mxu0 0.0
    %3653 = vmatprep.subr.mxu0 0.0
    %3654 = vmatpush1.msra.mxu0 0.0
    %3655 = vmatprep.subr.mxu0 0.0
    %3656 = vmatpush1.msra.mxu0 0.0
    %3657 = vmatprep.subr.mxu0 0.0
    %3658 = vmatpush1.msra.mxu0 0.0
    %3659 = vmatprep.subr.mxu0 0.0
    %3660 = vmatpush1.msra.mxu0 0.0
    %3661 = vmatprep.subr.mxu0 0.0
    %3662 = vmatpush1.msra.mxu0 0.0
    %3663 = vmatprep.subr.mxu0 0.0
    %3664 = vmatpush1.msra.mxu0 0.0
    %3665 = vmatprep.subr.mxu0 0.0
    %3666 = vmatpush1.msra.mxu0 0.0
    %3667 = vmatprep.subr.mxu0 0.0
    %3668 = vmatpush1.msra.mxu0 0.0
    %3669 = vmatprep.subr.mxu0 0.0
    %3670 = vmatpush1.msra.mxu0 0.0
    %3671 = vmatprep.subr.mxu0 0.0
    %3672 = vmatpush1.msra.mxu0 0.0
    %3673 = vmatprep.subr.mxu0 0.0
    %3674 = vmatpush1.msra.mxu0 0.0
    %3675 = vmatprep.subr.mxu0 0.0
    %3676 = vmatpush1.msra.mxu0 0.0
    %3677 = vmatprep.subr.mxu0 0.0
    %3678 = vmatpush1.msra.mxu0 0.0
    %3679 = vmatprep.subr.mxu0 0.0
    %3680 = vmatpush1.msra.mxu0 0.0
    %3681 = vmatprep.mubr.f32.mxu0 0.0
    %3682 = vmatmul.mubr.f32.gmra.mrb[0].mxu0 %v3615
    %v3683 = vpop.f32.mrb[0].mxu0
    %v3684 = vadd.f32 %v3612, %v3683
    %v3685 = vpop.f32.mrb[0].mxu0
    %3686 = vdwg.mxu0
    %3688 = vrot.lane.b32.xlu0 %v3684, 96
    %v3689 = vpop.permute.xlu0 %3688
    %v3690 = vsel %vm611, %v3684, 0
    %v3692 = vsel %vm611, %v3689, 0
    %3694 = vmatprep.subr.mxu0 0.0
    %3695 = vmatpush1.xpose.msra.mxu0 %v3692
    %3696 = vmatprep.subr.mxu0 0.0
    %3697 = vmatpush1.xpose.msra.mxu0 0.0
    %3698 = vmatprep.subr.mxu0 0.0
    %3699 = vmatpush1.xpose.msra.mxu0 0.0
    %3700 = vmatprep.subr.mxu0 0.0
    %3701 = vmatpush1.xpose.msra.mxu0 0.0
    %3702 = vmatprep.subr.mxu0 0.0
    %3703 = vmatpush1.xpose.msra.mxu0 0.0
    %3704 = vmatprep.subr.mxu0 0.0
    %3705 = vmatpush1.xpose.msra.mxu0 0.0
    %3706 = vmatprep.subr.mxu0 0.0
    %3707 = vmatpush1.xpose.msra.mxu0 0.0
    %3708 = vmatprep.subr.mxu0 0.0
    %3709 = vmatpush1.xpose.msra.mxu0 0.0
    %3710 = vmatprep.subr.mxu0 0.0
    %3711 = vmatpush1.xpose.msra.mxu0 0.0
    %3712 = vmatprep.subr.mxu0 0.0
    %3713 = vmatpush1.xpose.msra.mxu0 0.0
    %3714 = vmatprep.subr.mxu0 0.0
    %3715 = vmatpush1.xpose.msra.mxu0 0.0
    %3716 = vmatprep.subr.mxu0 0.0
    %3717 = vmatpush1.xpose.msra.mxu0 0.0
    %3718 = vmatprep.subr.mxu0 0.0
    %3719 = vmatpush1.xpose.msra.mxu0 0.0
    %3720 = vmatprep.subr.mxu0 0.0
    %3721 = vmatpush1.xpose.msra.mxu0 0.0
    %3722 = vmatprep.subr.mxu0 0.0
    %3723 = vmatpush1.xpose.msra.mxu0 0.0
    %3724 = vmatprep.subr.mxu0 0.0
    %3725 = vmatpush1.xpose.msra.mxu0 0.0
    %3726 = vmatprep.subr.mxu0 0.0
    %3727 = vmatpush1.xpose.msra.mxu0 0.0
    %3728 = vmatprep.subr.mxu0 0.0
    %3729 = vmatpush1.xpose.msra.mxu0 0.0
    %3730 = vmatprep.subr.mxu0 0.0
    %3731 = vmatpush1.xpose.msra.mxu0 0.0
    %3732 = vmatprep.subr.mxu0 0.0
    %3733 = vmatpush1.xpose.msra.mxu0 0.0
    %3734 = vmatprep.subr.mxu0 0.0
    %3735 = vmatpush1.xpose.msra.mxu0 0.0
    %3736 = vmatprep.subr.mxu0 0.0
    %3737 = vmatpush1.xpose.msra.mxu0 0.0
    %3738 = vmatprep.subr.mxu0 0.0
    %3739 = vmatpush1.xpose.msra.mxu0 0.0
    %3740 = vmatprep.subr.mxu0 0.0
    %3741 = vmatpush1.xpose.msra.mxu0 0.0
    %3742 = vmatprep.subr.mxu0 0.0
    %3743 = vmatpush1.xpose.msra.mxu0 0.0
    %3744 = vmatprep.subr.mxu0 0.0
    %3745 = vmatpush1.xpose.msra.mxu0 0.0
    %3746 = vmatprep.subr.mxu0 0.0
    %3747 = vmatpush1.xpose.msra.mxu0 0.0
    %3748 = vmatprep.subr.mxu0 0.0
    %3749 = vmatpush1.xpose.msra.mxu0 0.0
    %3750 = vmatprep.subr.mxu0 0.0
    %3751 = vmatpush1.xpose.msra.mxu0 0.0
    %3752 = vmatprep.subr.mxu0 0.0
    %3753 = vmatpush1.xpose.msra.mxu0 0.0
    %3754 = vmatprep.subr.mxu0 0.0
    %3755 = vmatpush1.xpose.msra.mxu0 0.0
    %3756 = vmatprep.subr.mxu0 0.0
    %3757 = vmatpush1.xpose.msra.mxu0 0.0
    %3758 = vmatprep.mubr.f32.mxu0 0.0
    %3759 = vmatmul.mubr.f32.gmra.mrb[0].mxu0 %v3690
    %v3760 = vpop.f32.mrb[0].mxu0
    %v3761 = vadd.f32 %v387, %v3760
    %v3762 = vpop.f32.mrb[0].mxu0
    %3763 = vdwg.mxu0
    %v3764 = vsel %vm611, %v3761, -inf
    %3765 = vmax.xlane.f32.xlu0 %v3764
    %v3766 = vpop.xlane.xlu0 %3765
    %v3767 = vsub.f32 %v3761, %v3766
    %v3768 = vmul.f32 %v3767, 1.442695
    %v3769 = vpow.pop %v3768
    %v3770 = vsel %vm611, %v3769, 0.0
    %3771 = vadd.xlane.f32.xlu0 %v3770
    %v3772 = vpop.xlane.xlu0 %3771
    %v3773 = vrcp.pop %v3772
    %v3774 = vmul.f32 %v3769, %v3773
    %3775 = vrot.lane.b32.xlu0 %v3684, 64
    %v3776 = vpop.permute.xlu0 %3775
    %v3779 = vsel %vm611, %v3774, 0
    %3781 = vmatprep.subr.mxu0 0.0
    %3782 = vmatpush1.msra.mxu0 %v3776
    %3783 = vmatprep.subr.mxu0 0.0
    %3784 = vmatpush1.msra.mxu0 0.0
    %3785 = vmatprep.subr.mxu0 0.0
    %3786 = vmatpush1.msra.mxu0 0.0
    %3787 = vmatprep.subr.mxu0 0.0
    %3788 = vmatpush1.msra.mxu0 0.0
    %3789 = vmatprep.subr.mxu0 0.0
    %3790 = vmatpush1.msra.mxu0 0.0
    %3791 = vmatprep.subr.mxu0 0.0
    %3792 = vmatpush1.msra.mxu0 0.0
    %3793 = vmatprep.subr.mxu0 0.0
    %3794 = vmatpush1.msra.mxu0 0.0
    %3795 = vmatprep.subr.mxu0 0.0
    %3796 = vmatpush1.msra.mxu0 0.0
    %3797 = vmatprep.subr.mxu0 0.0
    %3798 = vmatpush1.msra.mxu0 0.0
    %3799 = vmatprep.subr.mxu0 0.0
    %3800 = vmatpush1.msra.mxu0 0.0
    %3801 = vmatprep.subr.mxu0 0.0
    %3802 = vmatpush1.msra.mxu0 0.0
    %3803 = vmatprep.subr.mxu0 0.0
    %3804 = vmatpush1.msra.mxu0 0.0
    %3805 = vmatprep.subr.mxu0 0.0
    %3806 = vmatpush1.msra.mxu0 0.0
    %3807 = vmatprep.subr.mxu0 0.0
    %3808 = vmatpush1.msra.mxu0 0.0
    %3809 = vmatprep.subr.mxu0 0.0
    %3810 = vmatpush1.msra.mxu0 0.0
    %3811 = vmatprep.subr.mxu0 0.0
    %3812 = vmatpush1.msra.mxu0 0.0
    %3813 = vmatprep.subr.mxu0 0.0
    %3814 = vmatpush1.msra.mxu0 0.0
    %3815 = vmatprep.subr.mxu0 0.0
    %3816 = vmatpush1.msra.mxu0 0.0
    %3817 = vmatprep.subr.mxu0 0.0
    %3818 = vmatpush1.msra.mxu0 0.0
    %3819 = vmatprep.subr.mxu0 0.0
    %3820 = vmatpush1.msra.mxu0 0.0
    %3821 = vmatprep.subr.mxu0 0.0
    %3822 = vmatpush1.msra.mxu0 0.0
    %3823 = vmatprep.subr.mxu0 0.0
    %3824 = vmatpush1.msra.mxu0 0.0
    %3825 = vmatprep.subr.mxu0 0.0
    %3826 = vmatpush1.msra.mxu0 0.0
    %3827 = vmatprep.subr.mxu0 0.0
    %3828 = vmatpush1.msra.mxu0 0.0
    %3829 = vmatprep.subr.mxu0 0.0
    %3830 = vmatpush1.msra.mxu0 0.0
    %3831 = vmatprep.subr.mxu0 0.0
    %3832 = vmatpush1.msra.mxu0 0.0
    %3833 = vmatprep.subr.mxu0 0.0
    %3834 = vmatpush1.msra.mxu0 0.0
    %3835 = vmatprep.subr.mxu0 0.0
    %3836 = vmatpush1.msra.mxu0 0.0
    %3837 = vmatprep.subr.mxu0 0.0
    %3838 = vmatpush1.msra.mxu0 0.0
    %3839 = vmatprep.subr.mxu0 0.0
    %3840 = vmatpush1.msra.mxu0 0.0
    %3841 = vmatprep.subr.mxu0 0.0
    %3842 = vmatpush1.msra.mxu0 0.0
    %3843 = vmatprep.subr.mxu0 0.0
    %3844 = vmatpush1.msra.mxu0 0.0
    %3845 = vmatprep.mubr.f32.mxu0 0.0
    %3846 = vmatmul.mubr.f32.gmra.mrb[0].mxu0 %v3779
    %v3847 = vpop.f32.mrb[0].mxu0
    %v3848 = vadd.f32 0.0, %v3847
    %v3849 = vpop.f32.mrb[0].mxu0
    %3850 = vdwg.mxu0
    %3851 = vrot.lane.b32.xlu0 %v3684, 120
    %v3852 = vpop.permute.xlu0 %3851
    %3853 = vrot.lane.b32.xlu0 %v3684, 88
    %v3854 = vpop.permute.xlu0 %3853
    %v3855 = vsel %vm611, %v3852, 0
    %v3857 = vsel %vm611, %v3854, 0
    %3859 = vmatprep.subr.mxu0 0.0
    %3860 = vmatpush1.xpose.msra.mxu0 %v3857
    %3861 = vmatprep.subr.mxu0 0.0
    %3862 = vmatpush1.xpose.msra.mxu0 0.0
    %3863 = vmatprep.subr.mxu0 0.0
    %3864 = vmatpush1.xpose.msra.mxu0 0.0
    %3865 = vmatprep.subr.mxu0 0.0
    %3866 = vmatpush1.xpose.msra.mxu0 0.0
    %3867 = vmatprep.subr.mxu0 0.0
    %3868 = vmatpush1.xpose.msra.mxu0 0.0
    %3869 = vmatprep.subr.mxu0 0.0
    %3870 = vmatpush1.xpose.msra.mxu0 0.0
    %3871 = vmatprep.subr.mxu0 0.0
    %3872 = vmatpush1.xpose.msra.mxu0 0.0
    %3873 = vmatprep.subr.mxu0 0.0
    %3874 = vmatpush1.xpose.msra.mxu0 0.0
    %3875 = vmatprep.subr.mxu0 0.0
    %3876 = vmatpush1.xpose.msra.mxu0 0.0
    %3877 = vmatprep.subr.mxu0 0.0
    %3878 = vmatpush1.xpose.msra.mxu0 0.0
    %3879 = vmatprep.subr.mxu0 0.0
    %3880 = vmatpush1.xpose.msra.mxu0 0.0
    %3881 = vmatprep.subr.mxu0 0.0
    %3882 = vmatpush1.xpose.msra.mxu0 0.0
    %3883 = vmatprep.subr.mxu0 0.0
    %3884 = vmatpush1.xpose.msra.mxu0 0.0
    %3885 = vmatprep.subr.mxu0 0.0
    %3886 = vmatpush1.xpose.msra.mxu0 0.0
    %3887 = vmatprep.subr.mxu0 0.0
    %3888 = vmatpush1.xpose.msra.mxu0 0.0
    %3889 = vmatprep.subr.mxu0 0.0
    %3890 = vmatpush1.xpose.msra.mxu0 0.0
    %3891 = vmatprep.subr.mxu0 0.0
    %3892 = vmatpush1.xpose.msra.mxu0 0.0
    %3893 = vmatprep.subr.mxu0 0.0
    %3894 = vmatpush1.xpose.msra.mxu0 0.0
    %3895 = vmatprep.subr.mxu0 0.0
    %3896 = vmatpush1.xpose.msra.mxu0 0.0
    %3897 = vmatprep.subr.mxu0 0.0
    %3898 = vmatpush1.xpose.msra.mxu0 0.0
    %3899 = vmatprep.subr.mxu0 0.0
    %3900 = vmatpush1.xpose.msra.mxu0 0.0
    %3901 = vmatprep.subr.mxu0 0.0
    %3902 = vmatpush1.xpose.msra.mxu0 0.0
    %3903 = vmatprep.subr.mxu0 0.0
    %3904 = vmatpush1.xpose.msra.mxu0 0.0
    %3905 = vmatprep.subr.mxu0 0.0
    %3906 = vmatpush1.xpose.msra.mxu0 0.0
    %3907 = vmatprep.subr.mxu0 0.0
    %3908 = vmatpush1.xpose.msra.mxu0 0.0
    %3909 = vmatprep.subr.mxu0 0.0
    %3910 = vmatpush1.xpose.msra.mxu0 0.0
    %3911 = vmatprep.subr.mxu0 0.0
    %3912 = vmatpush1.xpose.msra.mxu0 0.0
    %3913 = vmatprep.subr.mxu0 0.0
    %3914 = vmatpush1.xpose.msra.mxu0 0.0
    %3915 = vmatprep.subr.mxu0 0.0
    %3916 = vmatpush1.xpose.msra.mxu0 0.0
    %3917 = vmatprep.subr.mxu0 0.0
    %3918 = vmatpush1.xpose.msra.mxu0 0.0
    %3919 = vmatprep.subr.mxu0 0.0
    %3920 = vmatpush1.xpose.msra.mxu0 0.0
    %3921 = vmatprep.subr.mxu0 0.0
    %3922 = vmatpush1.xpose.msra.mxu0 0.0
    %3923 = vmatprep.mubr.f32.mxu0 0.0
    %3924 = vmatmul.mubr.f32.gmra.mrb[0].mxu0 %v3855
    %v3925 = vpop.f32.mrb[0].mxu0
    %v3926 = vadd.f32 %v387, %v3925
    %v3927 = vpop.f32.mrb[0].mxu0
    %3928 = vdwg.mxu0
    %v3929 = vsel %vm611, %v3926, -inf
    %3930 = vmax.xlane.f32.xlu0 %v3929
    %v3931 = vpop.xlane.xlu0 %3930
    %v3932 = vsub.f32 %v3926, %v3931
    %v3933 = vmul.f32 %v3932, 1.442695
    %v3934 = vpow.pop %v3933
    %v3935 = vsel %vm611, %v3934, 0.0
    %3936 = vadd.xlane.f32.xlu0 %v3935
    %v3937 = vpop.xlane.xlu0 %3936
    %v3938 = vrcp.pop %v3937
    %v3939 = vmul.f32 %v3934, %v3938
    %3940 = vrot.lane.b32.xlu0 %v3684, 56
    %v3941 = vpop.permute.xlu0 %3940
    %v3944 = vsel %vm611, %v3939, 0
    %3946 = vmatprep.subr.mxu0 0.0
    %3947 = vmatpush1.msra.mxu0 %v3941
    %3948 = vmatprep.subr.mxu0 0.0
    %3949 = vmatpush1.msra.mxu0 0.0
    %3950 = vmatprep.subr.mxu0 0.0
    %3951 = vmatpush1.msra.mxu0 0.0
    %3952 = vmatprep.subr.mxu0 0.0
    %3953 = vmatpush1.msra.mxu0 0.0
    %3954 = vmatprep.subr.mxu0 0.0
    %3955 = vmatpush1.msra.mxu0 0.0
    %3956 = vmatprep.subr.mxu0 0.0
    %3957 = vmatpush1.msra.mxu0 0.0
    %3958 = vmatprep.subr.mxu0 0.0
    %3959 = vmatpush1.msra.mxu0 0.0
    %3960 = vmatprep.subr.mxu0 0.0
    %3961 = vmatpush1.msra.mxu0 0.0
    %3962 = vmatprep.subr.mxu0 0.0
    %3963 = vmatpush1.msra.mxu0 0.0
    %3964 = vmatprep.subr.mxu0 0.0
    %3965 = vmatpush1.msra.mxu0 0.0
    %3966 = vmatprep.subr.mxu0 0.0
    %3967 = vmatpush1.msra.mxu0 0.0
    %3968 = vmatprep.subr.mxu0 0.0
    %3969 = vmatpush1.msra.mxu0 0.0
    %3970 = vmatprep.subr.mxu0 0.0
    %3971 = vmatpush1.msra.mxu0 0.0
    %3972 = vmatprep.subr.mxu0 0.0
    %3973 = vmatpush1.msra.mxu0 0.0
    %3974 = vmatprep.subr.mxu0 0.0
    %3975 = vmatpush1.msra.mxu0 0.0
    %3976 = vmatprep.subr.mxu0 0.0
    %3977 = vmatpush1.msra.mxu0 0.0
    %3978 = vmatprep.subr.mxu0 0.0
    %3979 = vmatpush1.msra.mxu0 0.0
    %3980 = vmatprep.subr.mxu0 0.0
    %3981 = vmatpush1.msra.mxu0 0.0
    %3982 = vmatprep.subr.mxu0 0.0
    %3983 = vmatpush1.msra.mxu0 0.0
    %3984 = vmatprep.subr.mxu0 0.0
    %3985 = vmatpush1.msra.mxu0 0.0
    %3986 = vmatprep.subr.mxu0 0.0
    %3987 = vmatpush1.msra.mxu0 0.0
    %3988 = vmatprep.subr.mxu0 0.0
    %3989 = vmatpush1.msra.mxu0 0.0
    %3990 = vmatprep.subr.mxu0 0.0
    %3991 = vmatpush1.msra.mxu0 0.0
    %3992 = vmatprep.subr.mxu0 0.0
    %3993 = vmatpush1.msra.mxu0 0.0
    %3994 = vmatprep.subr.mxu0 0.0
    %3995 = vmatpush1.msra.mxu0 0.0
    %3996 = vmatprep.subr.mxu0 0.0
    %3997 = vmatpush1.msra.mxu0 0.0
    %3998 = vmatprep.subr.mxu0 0.0
    %3999 = vmatpush1.msra.mxu0 0.0
    %4000 = vmatprep.subr.mxu0 0.0
    %4001 = vmatpush1.msra.mxu0 0.0
    %4002 = vmatprep.subr.mxu0 0.0
    %4003 = vmatpush1.msra.mxu0 0.0
    %4004 = vmatprep.subr.mxu0 0.0
    %4005 = vmatpush1.msra.mxu0 0.0
    %4006 = vmatprep.subr.mxu0 0.0
    %4007 = vmatpush1.msra.mxu0 0.0
    %4008 = vmatprep.subr.mxu0 0.0
    %4009 = vmatpush1.msra.mxu0 0.0
    %4010 = vmatprep.mubr.f32.mxu0 0.0
    %4011 = vmatmul.mubr.f32.gmra.mrb[0].mxu0 %v3944
    %v4012 = vpop.f32.mrb[0].mxu0
    %v4013 = vadd.f32 0.0, %v4012
    %v4014 = vpop.f32.mrb[0].mxu0
    %4015 = vdwg.mxu0
    %v4017 = vsel %vm611, %v4013, 0
    %4019 = vmatprep.subr.mxu0 0.0
    %4020 = vmatpush1.msra.mxu0 %v3569
    %4021 = vmatprep.subr.mxu0 0.0
    %4022 = vmatpush1.msra.mxu0 0.0
    %4023 = vmatprep.subr.mxu0 0.0
    %4024 = vmatpush1.msra.mxu0 0.0
    %4025 = vmatprep.subr.mxu0 0.0
    %4026 = vmatpush1.msra.mxu0 0.0
    %4027 = vmatprep.subr.mxu0 0.0
    %4028 = vmatpush1.msra.mxu0 0.0
    %4029 = vmatprep.subr.mxu0 0.0
    %4030 = vmatpush1.msra.mxu0 0.0
    %4031 = vmatprep.subr.mxu0 0.0
    %4032 = vmatpush1.msra.mxu0 0.0
    %4033 = vmatprep.subr.mxu0 0.0
    %4034 = vmatpush1.msra.mxu0 0.0
    %4035 = vmatprep.subr.mxu0 0.0
    %4036 = vmatpush1.msra.mxu0 0.0
    %4037 = vmatprep.subr.mxu0 0.0
    %4038 = vmatpush1.msra.mxu0 0.0
    %4039 = vmatprep.subr.mxu0 0.0
    %4040 = vmatpush1.msra.mxu0 0.0
    %4041 = vmatprep.subr.mxu0 0.0
    %4042 = vmatpush1.msra.mxu0 0.0
    %4043 = vmatprep.subr.mxu0 0.0
    %4044 = vmatpush1.msra.mxu0 0.0
    %4045 = vmatprep.subr.mxu0 0.0
    %4046 = vmatpush1.msra.mxu0 0.0
    %4047 = vmatprep.subr.mxu0 0.0
    %4048 = vmatpush1.msra.mxu0 0.0
    %4049 = vmatprep.subr.mxu0 0.0
    %4050 = vmatpush1.msra.mxu0 0.0
    %4051 = vmatprep.subr.mxu0 0.0
    %4052 = vmatpush1.msra.mxu0 0.0
    %4053 = vmatprep.subr.mxu0 0.0
    %4054 = vmatpush1.msra.mxu0 0.0
    %4055 = vmatprep.subr.mxu0 0.0
    %4056 = vmatpush1.msra.mxu0 0.0
    %4057 = vmatprep.subr.mxu0 0.0
    %4058 = vmatpush1.msra.mxu0 0.0
    %4059 = vmatprep.subr.mxu0 0.0
    %4060 = vmatpush1.msra.mxu0 0.0
    %4061 = vmatprep.subr.mxu0 0.0
    %4062 = vmatpush1.msra.mxu0 0.0
    %4063 = vmatprep.subr.mxu0 0.0
    %4064 = vmatpush1.msra.mxu0 0.0
    %4065 = vmatprep.subr.mxu0 0.0
    %4066 = vmatpush1.msra.mxu0 0.0
    %4067 = vmatprep.subr.mxu0 0.0
    %4068 = vmatpush1.msra.mxu0 0.0
    %4069 = vmatprep.subr.mxu0 0.0
    %4070 = vmatpush1.msra.mxu0 0.0
    %4071 = vmatprep.subr.mxu0 0.0
    %4072 = vmatpush1.msra.mxu0 0.0
    %4073 = vmatprep.subr.mxu0 0.0
    %4074 = vmatpush1.msra.mxu0 0.0
    %4075 = vmatprep.subr.mxu0 0.0
    %4076 = vmatpush1.msra.mxu0 0.0
    %4077 = vmatprep.subr.mxu0 0.0
    %4078 = vmatpush1.msra.mxu0 0.0
    %4079 = vmatprep.subr.mxu0 0.0
    %4080 = vmatpush1.msra.mxu0 0.0
    %4081 = vmatprep.subr.mxu0 0.0
    %4082 = vmatpush1.msra.mxu0 0.0
    %4083 = vmatprep.mubr.f32.mxu0 0.0
    %4084 = vmatmul.mubr.f32.gmra.mrb[0].mxu0 %v4017
    %v4085 = vpop.f32.mrb[0].mxu0
    %v4086 = vadd.f32 0.0, %v4085
    %v4087 = vpop.f32.mrb[0].mxu0
    %4088 = vdwg.mxu0
    %v4090 = vsel %vm611, %v3848, 0
    %4092 = vmatprep.subr.mxu0 0.0
    %4093 = vmatpush1.msra.mxu0 %v3568
    %4094 = vmatprep.subr.mxu0 0.0
    %4095 = vmatpush1.msra.mxu0 0.0
    %4096 = vmatprep.subr.mxu0 0.0
    %4097 = vmatpush1.msra.mxu0 0.0
    %4098 = vmatprep.subr.mxu0 0.0
    %4099 = vmatpush1.msra.mxu0 0.0
    %4100 = vmatprep.subr.mxu0 0.0
    %4101 = vmatpush1.msra.mxu0 0.0
    %4102 = vmatprep.subr.mxu0 0.0
    %4103 = vmatpush1.msra.mxu0 0.0
    %4104 = vmatprep.subr.mxu0 0.0
    %4105 = vmatpush1.msra.mxu0 0.0
    %4106 = vmatprep.subr.mxu0 0.0
    %4107 = vmatpush1.msra.mxu0 0.0
    %4108 = vmatprep.subr.mxu0 0.0
    %4109 = vmatpush1.msra.mxu0 0.0
    %4110 = vmatprep.subr.mxu0 0.0
    %4111 = vmatpush1.msra.mxu0 0.0
    %4112 = vmatprep.subr.mxu0 0.0
    %4113 = vmatpush1.msra.mxu0 0.0
    %4114 = vmatprep.subr.mxu0 0.0
    %4115 = vmatpush1.msra.mxu0 0.0
    %4116 = vmatprep.subr.mxu0 0.0
    %4117 = vmatpush1.msra.mxu0 0.0
    %4118 = vmatprep.subr.mxu0 0.0
    %4119 = vmatpush1.msra.mxu0 0.0
    %4120 = vmatprep.subr.mxu0 0.0
    %4121 = vmatpush1.msra.mxu0 0.0
    %4122 = vmatprep.subr.mxu0 0.0
    %4123 = vmatpush1.msra.mxu0 0.0
    %4124 = vmatprep.subr.mxu0 0.0
    %4125 = vmatpush1.msra.mxu0 0.0
    %4126 = vmatprep.subr.mxu0 0.0
    %4127 = vmatpush1.msra.mxu0 0.0
    %4128 = vmatprep.subr.mxu0 0.0
    %4129 = vmatpush1.msra.mxu0 0.0
    %4130 = vmatprep.subr.mxu0 0.0
    %4131 = vmatpush1.msra.mxu0 0.0
    %4132 = vmatprep.subr.mxu0 0.0
    %4133 = vmatpush1.msra.mxu0 0.0
    %4134 = vmatprep.subr.mxu0 0.0
    %4135 = vmatpush1.msra.mxu0 0.0
    %4136 = vmatprep.subr.mxu0 0.0
    %4137 = vmatpush1.msra.mxu0 0.0
    %4138 = vmatprep.subr.mxu0 0.0
    %4139 = vmatpush1.msra.mxu0 0.0
    %4140 = vmatprep.subr.mxu0 0.0
    %4141 = vmatpush1.msra.mxu0 0.0
    %4142 = vmatprep.subr.mxu0 0.0
    %4143 = vmatpush1.msra.mxu0 0.0
    %4144 = vmatprep.subr.mxu0 0.0
    %4145 = vmatpush1.msra.mxu0 0.0
    %4146 = vmatprep.subr.mxu0 0.0
    %4147 = vmatpush1.msra.mxu0 0.0
    %4148 = vmatprep.subr.mxu0 0.0
    %4149 = vmatpush1.msra.mxu0 0.0
    %4150 = vmatprep.subr.mxu0 0.0
    %4151 = vmatpush1.msra.mxu0 0.0
    %4152 = vmatprep.subr.mxu0 0.0
    %4153 = vmatpush1.msra.mxu0 0.0
    %4154 = vmatprep.subr.mxu0 0.0
    %4155 = vmatpush1.msra.mxu0 0.0
    %4156 = vmatprep.mubr.f32.mxu0 0.0
    %4157 = vmatmul.mubr.f32.gmra.mrb[0].mxu0 %v4090
    %v4158 = vpop.f32.mrb[0].mxu0
    %v4159 = vadd.f32 %v4086, %v4158
    %v4160 = vpop.f32.mrb[0].mxu0
    %4161 = vdwg.mxu0
    %4162 = vrot.lane.b32.xlu0 %v3684, 112
    %v4163 = vpop.permute.xlu0 %4162
    %4164 = vrot.lane.b32.xlu0 %v3684, 80
    %v4165 = vpop.permute.xlu0 %4164
    %v4166 = vsel %vm611, %v4163, 0
    %v4168 = vsel %vm611, %v4165, 0
    %4170 = vmatprep.subr.mxu0 0.0
    %4171 = vmatpush1.xpose.msra.mxu0 %v4168
    %4172 = vmatprep.subr.mxu0 0.0
    %4173 = vmatpush1.xpose.msra.mxu0 0.0
    %4174 = vmatprep.subr.mxu0 0.0
    %4175 = vmatpush1.xpose.msra.mxu0 0.0
    %4176 = vmatprep.subr.mxu0 0.0
    %4177 = vmatpush1.xpose.msra.mxu0 0.0
    %4178 = vmatprep.subr.mxu0 0.0
    %4179 = vmatpush1.xpose.msra.mxu0 0.0
    %4180 = vmatprep.subr.mxu0 0.0
    %4181 = vmatpush1.xpose.msra.mxu0 0.0
    %4182 = vmatprep.subr.mxu0 0.0
    %4183 = vmatpush1.xpose.msra.mxu0 0.0
    %4184 = vmatprep.subr.mxu0 0.0
    %4185 = vmatpush1.xpose.msra.mxu0 0.0
    %4186 = vmatprep.subr.mxu0 0.0
    %4187 = vmatpush1.xpose.msra.mxu0 0.0
    %4188 = vmatprep.subr.mxu0 0.0
    %4189 = vmatpush1.xpose.msra.mxu0 0.0
    %4190 = vmatprep.subr.mxu0 0.0
    %4191 = vmatpush1.xpose.msra.mxu0 0.0
    %4192 = vmatprep.subr.mxu0 0.0
    %4193 = vmatpush1.xpose.msra.mxu0 0.0
    %4194 = vmatprep.subr.mxu0 0.0
    %4195 = vmatpush1.xpose.msra.mxu0 0.0
    %4196 = vmatprep.subr.mxu0 0.0
    %4197 = vmatpush1.xpose.msra.mxu0 0.0
    %4198 = vmatprep.subr.mxu0 0.0
    %4199 = vmatpush1.xpose.msra.mxu0 0.0
    %4200 = vmatprep.subr.mxu0 0.0
    %4201 = vmatpush1.xpose.msra.mxu0 0.0
    %4202 = vmatprep.subr.mxu0 0.0
    %4203 = vmatpush1.xpose.msra.mxu0 0.0
    %4204 = vmatprep.subr.mxu0 0.0
    %4205 = vmatpush1.xpose.msra.mxu0 0.0
    %4206 = vmatprep.subr.mxu0 0.0
    %4207 = vmatpush1.xpose.msra.mxu0 0.0
    %4208 = vmatprep.subr.mxu0 0.0
    %4209 = vmatpush1.xpose.msra.mxu0 0.0
    %4210 = vmatprep.subr.mxu0 0.0
    %4211 = vmatpush1.xpose.msra.mxu0 0.0
    %4212 = vmatprep.subr.mxu0 0.0
    %4213 = vmatpush1.xpose.msra.mxu0 0.0
    %4214 = vmatprep.subr.mxu0 0.0
    %4215 = vmatpush1.xpose.msra.mxu0 0.0
    %4216 = vmatprep.subr.mxu0 0.0
    %4217 = vmatpush1.xpose.msra.mxu0 0.0
    %4218 = vmatprep.subr.mxu0 0.0
    %4219 = vmatpush1.xpose.msra.mxu0 0.0
    %4220 = vmatprep.subr.mxu0 0.0
    %4221 = vmatpush1.xpose.msra.mxu0 0.0
    %4222 = vmatprep.subr.mxu0 0.0
    %4223 = vmatpush1.xpose.msra.mxu0 0.0
    %4224 = vmatprep.subr.mxu0 0.0
    %4225 = vmatpush1.xpose.msra.mxu0 0.0
    %4226 = vmatprep.subr.mxu0 0.0
    %4227 = vmatpush1.xpose.msra.mxu0 0.0
    %4228 = vmatprep.subr.mxu0 0.0
    %4229 = vmatpush1.xpose.msra.mxu0 0.0
    %4230 = vmatprep.subr.mxu0 0.0
    %4231 = vmatpush1.xpose.msra.mxu0 0.0
    %4232 = vmatprep.subr.mxu0 0.0
    %4233 = vmatpush1.xpose.msra.mxu0 0.0
    %4234 = vmatprep.mubr.f32.mxu0 0.0
    %4235 = vmatmul.mubr.f32.gmra.mrb[0].mxu0 %v4166
    %v4236 = vpop.f32.mrb[0].mxu0
    %v4237 = vadd.f32 %v387, %v4236
    %v4238 = vpop.f32.mrb[0].mxu0
    %4239 = vdwg.mxu0
    %v4240 = vsel %vm611, %v4237, -inf
    %4241 = vmax.xlane.f32.xlu0 %v4240
    %v4242 = vpop.xlane.xlu0 %4241
    %v4243 = vsub.f32 %v4237, %v4242
    %v4244 = vmul.f32 %v4243, 1.442695
    %v4245 = vpow.pop %v4244
    %v4246 = vsel %vm611, %v4245, 0.0
    %4247 = vadd.xlane.f32.xlu0 %v4246
    %v4248 = vpop.xlane.xlu0 %4247
    %v4249 = vrcp.pop %v4248
    %v4250 = vmul.f32 %v4245, %v4249
    %4251 = vrot.lane.b32.xlu0 %v3684, 48
    %v4252 = vpop.permute.xlu0 %4251
    %v4255 = vsel %vm611, %v4250, 0
    %4257 = vmatprep.subr.mxu0 0.0
    %4258 = vmatpush1.msra.mxu0 %v4252
    %4259 = vmatprep.subr.mxu0 0.0
    %4260 = vmatpush1.msra.mxu0 0.0
    %4261 = vmatprep.subr.mxu0 0.0
    %4262 = vmatpush1.msra.mxu0 0.0
    %4263 = vmatprep.subr.mxu0 0.0
    %4264 = vmatpush1.msra.mxu0 0.0
    %4265 = vmatprep.subr.mxu0 0.0
    %4266 = vmatpush1.msra.mxu0 0.0
    %4267 = vmatprep.subr.mxu0 0.0
    %4268 = vmatpush1.msra.mxu0 0.0
    %4269 = vmatprep.subr.mxu0 0.0
    %4270 = vmatpush1.msra.mxu0 0.0
    %4271 = vmatprep.subr.mxu0 0.0
    %4272 = vmatpush1.msra.mxu0 0.0
    %4273 = vmatprep.subr.mxu0 0.0
    %4274 = vmatpush1.msra.mxu0 0.0
    %4275 = vmatprep.subr.mxu0 0.0
    %4276 = vmatpush1.msra.mxu0 0.0
    %4277 = vmatprep.subr.mxu0 0.0
    %4278 = vmatpush1.msra.mxu0 0.0
    %4279 = vmatprep.subr.mxu0 0.0
    %4280 = vmatpush1.msra.mxu0 0.0
    %4281 = vmatprep.subr.mxu0 0.0
    %4282 = vmatpush1.msra.mxu0 0.0
    %4283 = vmatprep.subr.mxu0 0.0
    %4284 = vmatpush1.msra.mxu0 0.0
    %4285 = vmatprep.subr.mxu0 0.0
    %4286 = vmatpush1.msra.mxu0 0.0
    %4287 = vmatprep.subr.mxu0 0.0
    %4288 = vmatpush1.msra.mxu0 0.0
    %4289 = vmatprep.subr.mxu0 0.0
    %4290 = vmatpush1.msra.mxu0 0.0
    %4291 = vmatprep.subr.mxu0 0.0
    %4292 = vmatpush1.msra.mxu0 0.0
    %4293 = vmatprep.subr.mxu0 0.0
    %4294 = vmatpush1.msra.mxu0 0.0
    %4295 = vmatprep.subr.mxu0 0.0
    %4296 = vmatpush1.msra.mxu0 0.0
    %4297 = vmatprep.subr.mxu0 0.0
    %4298 = vmatpush1.msra.mxu0 0.0
    %4299 = vmatprep.subr.mxu0 0.0
    %4300 = vmatpush1.msra.mxu0 0.0
    %4301 = vmatprep.subr.mxu0 0.0
    %4302 = vmatpush1.msra.mxu0 0.0
    %4303 = vmatprep.subr.mxu0 0.0
    %4304 = vmatpush1.msra.mxu0 0.0
    %4305 = vmatprep.subr.mxu0 0.0
    %4306 = vmatpush1.msra.mxu0 0.0
    %4307 = vmatprep.subr.mxu0 0.0
    %4308 = vmatpush1.msra.mxu0 0.0
    %4309 = vmatprep.subr.mxu0 0.0
    %4310 = vmatpush1.msra.mxu0 0.0
    %4311 = vmatprep.subr.mxu0 0.0
    %4312 = vmatpush1.msra.mxu0 0.0
    %4313 = vmatprep.subr.mxu0 0.0
    %4314 = vmatpush1.msra.mxu0 0.0
    %4315 = vmatprep.subr.mxu0 0.0
    %4316 = vmatpush1.msra.mxu0 0.0
    %4317 = vmatprep.subr.mxu0 0.0
    %4318 = vmatpush1.msra.mxu0 0.0
    %4319 = vmatprep.subr.mxu0 0.0
    %4320 = vmatpush1.msra.mxu0 0.0
    %4321 = vmatprep.mubr.f32.mxu0 0.0
    %4322 = vmatmul.mubr.f32.gmra.mrb[0].mxu0 %v4255
    %v4323 = vpop.f32.mrb[0].mxu0
    %v4324 = vadd.f32 0.0, %v4323
    %v4325 = vpop.f32.mrb[0].mxu0
    %4326 = vdwg.mxu0
    %v4328 = vsel %vm611, %v4324, 0
    %4330 = vmatprep.subr.mxu0 0.0
    %4331 = vmatpush1.msra.mxu0 %v3570
    %4332 = vmatprep.subr.mxu0 0.0
    %4333 = vmatpush1.msra.mxu0 0.0
    %4334 = vmatprep.subr.mxu0 0.0
    %4335 = vmatpush1.msra.mxu0 0.0
    %4336 = vmatprep.subr.mxu0 0.0
    %4337 = vmatpush1.msra.mxu0 0.0
    %4338 = vmatprep.subr.mxu0 0.0
    %4339 = vmatpush1.msra.mxu0 0.0
    %4340 = vmatprep.subr.mxu0 0.0
    %4341 = vmatpush1.msra.mxu0 0.0
    %4342 = vmatprep.subr.mxu0 0.0
    %4343 = vmatpush1.msra.mxu0 0.0
    %4344 = vmatprep.subr.mxu0 0.0
    %4345 = vmatpush1.msra.mxu0 0.0
    %4346 = vmatprep.subr.mxu0 0.0
    %4347 = vmatpush1.msra.mxu0 0.0
    %4348 = vmatprep.subr.mxu0 0.0
    %4349 = vmatpush1.msra.mxu0 0.0
    %4350 = vmatprep.subr.mxu0 0.0
    %4351 = vmatpush1.msra.mxu0 0.0
    %4352 = vmatprep.subr.mxu0 0.0
    %4353 = vmatpush1.msra.mxu0 0.0
    %4354 = vmatprep.subr.mxu0 0.0
    %4355 = vmatpush1.msra.mxu0 0.0
    %4356 = vmatprep.subr.mxu0 0.0
    %4357 = vmatpush1.msra.mxu0 0.0
    %4358 = vmatprep.subr.mxu0 0.0
    %4359 = vmatpush1.msra.mxu0 0.0
    %4360 = vmatprep.subr.mxu0 0.0
    %4361 = vmatpush1.msra.mxu0 0.0
    %4362 = vmatprep.subr.mxu0 0.0
    %4363 = vmatpush1.msra.mxu0 0.0
    %4364 = vmatprep.subr.mxu0 0.0
    %4365 = vmatpush1.msra.mxu0 0.0
    %4366 = vmatprep.subr.mxu0 0.0
    %4367 = vmatpush1.msra.mxu0 0.0
    %4368 = vmatprep.subr.mxu0 0.0
    %4369 = vmatpush1.msra.mxu0 0.0
    %4370 = vmatprep.subr.mxu0 0.0
    %4371 = vmatpush1.msra.mxu0 0.0
    %4372 = vmatprep.subr.mxu0 0.0
    %4373 = vmatpush1.msra.mxu0 0.0
    %4374 = vmatprep.subr.mxu0 0.0
    %4375 = vmatpush1.msra.mxu0 0.0
    %4376 = vmatprep.subr.mxu0 0.0
    %4377 = vmatpush1.msra.mxu0 0.0
    %4378 = vmatprep.subr.mxu0 0.0
    %4379 = vmatpush1.msra.mxu0 0.0
    %4380 = vmatprep.subr.mxu0 0.0
    %4381 = vmatpush1.msra.mxu0 0.0
    %4382 = vmatprep.subr.mxu0 0.0
    %4383 = vmatpush1.msra.mxu0 0.0
    %4384 = vmatprep.subr.mxu0 0.0
    %4385 = vmatpush1.msra.mxu0 0.0
    %4386 = vmatprep.subr.mxu0 0.0
    %4387 = vmatpush1.msra.mxu0 0.0
    %4388 = vmatprep.subr.mxu0 0.0
    %4389 = vmatpush1.msra.mxu0 0.0
    %4390 = vmatprep.subr.mxu0 0.0
    %4391 = vmatpush1.msra.mxu0 0.0
    %4392 = vmatprep.subr.mxu0 0.0
    %4393 = vmatpush1.msra.mxu0 0.0
    %4394 = vmatprep.mubr.f32.mxu0 0.0
    %4395 = vmatmul.mubr.f32.gmra.mrb[0].mxu0 %v4328
    %v4396 = vpop.f32.mrb[0].mxu0
    %v4397 = vadd.f32 0.0, %v4396
    %v4398 = vpop.f32.mrb[0].mxu0
    %4399 = vdwg.mxu0
    %v4400 = vadd.f32 %v4159, %v4397
    %4401 = vrot.lane.b32.xlu0 %v3684, 104
    %v4402 = vpop.permute.xlu0 %4401
    %4403 = vrot.lane.b32.xlu0 %v3684, 72
    %v4404 = vpop.permute.xlu0 %4403
    %v4405 = vsel %vm611, %v4402, 0
    %v4407 = vsel %vm611, %v4404, 0
    %4409 = vmatprep.subr.mxu0 0.0
    %4410 = vmatpush1.xpose.msra.mxu0 %v4407
    %4411 = vmatprep.subr.mxu0 0.0
    %4412 = vmatpush1.xpose.msra.mxu0 0.0
    %4413 = vmatprep.subr.mxu0 0.0
    %4414 = vmatpush1.xpose.msra.mxu0 0.0
    %4415 = vmatprep.subr.mxu0 0.0
    %4416 = vmatpush1.xpose.msra.mxu0 0.0
    %4417 = vmatprep.subr.mxu0 0.0
    %4418 = vmatpush1.xpose.msra.mxu0 0.0
    %4419 = vmatprep.subr.mxu0 0.0
    %4420 = vmatpush1.xpose.msra.mxu0 0.0
    %4421 = vmatprep.subr.mxu0 0.0
    %4422 = vmatpush1.xpose.msra.mxu0 0.0
    %4423 = vmatprep.subr.mxu0 0.0
    %4424 = vmatpush1.xpose.msra.mxu0 0.0
    %4425 = vmatprep.subr.mxu0 0.0
    %4426 = vmatpush1.xpose.msra.mxu0 0.0
    %4427 = vmatprep.subr.mxu0 0.0
    %4428 = vmatpush1.xpose.msra.mxu0 0.0
    %4429 = vmatprep.subr.mxu0 0.0
    %4430 = vmatpush1.xpose.msra.mxu0 0.0
    %4431 = vmatprep.subr.mxu0 0.0
    %4432 = vmatpush1.xpose.msra.mxu0 0.0
    %4433 = vmatprep.subr.mxu0 0.0
    %4434 = vmatpush1.xpose.msra.mxu0 0.0
    %4435 = vmatprep.subr.mxu0 0.0
    %4436 = vmatpush1.xpose.msra.mxu0 0.0
    %4437 = vmatprep.subr.mxu0 0.0
    %4438 = vmatpush1.xpose.msra.mxu0 0.0
    %4439 = vmatprep.subr.mxu0 0.0
    %4440 = vmatpush1.xpose.msra.mxu0 0.0
    %4441 = vmatprep.subr.mxu0 0.0
    %4442 = vmatpush1.xpose.msra.mxu0 0.0
    %4443 = vmatprep.subr.mxu0 0.0
    %4444 = vmatpush1.xpose.msra.mxu0 0.0
    %4445 = vmatprep.subr.mxu0 0.0
    %4446 = vmatpush1.xpose.msra.mxu0 0.0
    %4447 = vmatprep.subr.mxu0 0.0
    %4448 = vmatpush1.xpose.msra.mxu0 0.0
    %4449 = vmatprep.subr.mxu0 0.0
    %4450 = vmatpush1.xpose.msra.mxu0 0.0
    %4451 = vmatprep.subr.mxu0 0.0
    %4452 = vmatpush1.xpose.msra.mxu0 0.0
    %4453 = vmatprep.subr.mxu0 0.0
    %4454 = vmatpush1.xpose.msra.mxu0 0.0
    %4455 = vmatprep.subr.mxu0 0.0
    %4456 = vmatpush1.xpose.msra.mxu0 0.0
    %4457 = vmatprep.subr.mxu0 0.0
    %4458 = vmatpush1.xpose.msra.mxu0 0.0
    %4459 = vmatprep.subr.mxu0 0.0
    %4460 = vmatpush1.xpose.msra.mxu0 0.0
    %4461 = vmatprep.subr.mxu0 0.0
    %4462 = vmatpush1.xpose.msra.mxu0 0.0
    %4463 = vmatprep.subr.mxu0 0.0
    %4464 = vmatpush1.xpose.msra.mxu0 0.0
    %4465 = vmatprep.subr.mxu0 0.0
    %4466 = vmatpush1.xpose.msra.mxu0 0.0
    %4467 = vmatprep.subr.mxu0 0.0
    %4468 = vmatpush1.xpose.msra.mxu0 0.0
    %4469 = vmatprep.subr.mxu0 0.0
    %4470 = vmatpush1.xpose.msra.mxu0 0.0
    %4471 = vmatprep.subr.mxu0 0.0
    %4472 = vmatpush1.xpose.msra.mxu0 0.0
    %4473 = vmatprep.mubr.f32.mxu0 0.0
    %4474 = vmatmul.mubr.f32.gmra.mrb[0].mxu0 %v4405
    %v4475 = vpop.f32.mrb[0].mxu0
    %v4476 = vadd.f32 %v387, %v4475
    %v4477 = vpop.f32.mrb[0].mxu0
    %4478 = vdwg.mxu0
    %v4479 = vsel %vm611, %v4476, -inf
    %4480 = vmax.xlane.f32.xlu0 %v4479
    %v4481 = vpop.xlane.xlu0 %4480
    %v4482 = vsub.f32 %v4476, %v4481
    %v4483 = vmul.f32 %v4482, 1.442695
    %v4484 = vpow.pop %v4483
    %v4485 = vsel %vm611, %v4484, 0.0
    %4486 = vadd.xlane.f32.xlu0 %v4485
    %v4487 = vpop.xlane.xlu0 %4486
    %v4488 = vrcp.pop %v4487
    %v4489 = vmul.f32 %v4484, %v4488
    %4490 = vrot.lane.b32.xlu0 %v3684, 40
    %v4491 = vpop.permute.xlu0 %4490
    %v4494 = vsel %vm611, %v4489, 0
    %4496 = vmatprep.subr.mxu0 0.0
    %4497 = vmatpush1.msra.mxu0 %v4491
    %4498 = vmatprep.subr.mxu0 0.0
    %4499 = vmatpush1.msra.mxu0 0.0
    %4500 = vmatprep.subr.mxu0 0.0
    %4501 = vmatpush1.msra.mxu0 0.0
    %4502 = vmatprep.subr.mxu0 0.0
    %4503 = vmatpush1.msra.mxu0 0.0
    %4504 = vmatprep.subr.mxu0 0.0
    %4505 = vmatpush1.msra.mxu0 0.0
    %4506 = vmatprep.subr.mxu0 0.0
    %4507 = vmatpush1.msra.mxu0 0.0
    %4508 = vmatprep.subr.mxu0 0.0
    %4509 = vmatpush1.msra.mxu0 0.0
    %4510 = vmatprep.subr.mxu0 0.0
    %4511 = vmatpush1.msra.mxu0 0.0
    %4512 = vmatprep.subr.mxu0 0.0
    %4513 = vmatpush1.msra.mxu0 0.0
    %4514 = vmatprep.subr.mxu0 0.0
    %4515 = vmatpush1.msra.mxu0 0.0
    %4516 = vmatprep.subr.mxu0 0.0
    %4517 = vmatpush1.msra.mxu0 0.0
    %4518 = vmatprep.subr.mxu0 0.0
    %4519 = vmatpush1.msra.mxu0 0.0
    %4520 = vmatprep.subr.mxu0 0.0
    %4521 = vmatpush1.msra.mxu0 0.0
    %4522 = vmatprep.subr.mxu0 0.0
    %4523 = vmatpush1.msra.mxu0 0.0
    %4524 = vmatprep.subr.mxu0 0.0
    %4525 = vmatpush1.msra.mxu0 0.0
    %4526 = vmatprep.subr.mxu0 0.0
    %4527 = vmatpush1.msra.mxu0 0.0
    %4528 = vmatprep.subr.mxu0 0.0
    %4529 = vmatpush1.msra.mxu0 0.0
    %4530 = vmatprep.subr.mxu0 0.0
    %4531 = vmatpush1.msra.mxu0 0.0
    %4532 = vmatprep.subr.mxu0 0.0
    %4533 = vmatpush1.msra.mxu0 0.0
    %4534 = vmatprep.subr.mxu0 0.0
    %4535 = vmatpush1.msra.mxu0 0.0
    %4536 = vmatprep.subr.mxu0 0.0
    %4537 = vmatpush1.msra.mxu0 0.0
    %4538 = vmatprep.subr.mxu0 0.0
    %4539 = vmatpush1.msra.mxu0 0.0
    %4540 = vmatprep.subr.mxu0 0.0
    %4541 = vmatpush1.msra.mxu0 0.0
    %4542 = vmatprep.subr.mxu0 0.0
    %4543 = vmatpush1.msra.mxu0 0.0
    %4544 = vmatprep.subr.mxu0 0.0
    %4545 = vmatpush1.msra.mxu0 0.0
    %4546 = vmatprep.subr.mxu0 0.0
    %4547 = vmatpush1.msra.mxu0 0.0
    %4548 = vmatprep.subr.mxu0 0.0
    %4549 = vmatpush1.msra.mxu0 0.0
    %4550 = vmatprep.subr.mxu0 0.0
    %4551 = vmatpush1.msra.mxu0 0.0
    %4552 = vmatprep.subr.mxu0 0.0
    %4553 = vmatpush1.msra.mxu0 0.0
    %4554 = vmatprep.subr.mxu0 0.0
    %4555 = vmatpush1.msra.mxu0 0.0
    %4556 = vmatprep.subr.mxu0 0.0
    %4557 = vmatpush1.msra.mxu0 0.0
    %4558 = vmatprep.subr.mxu0 0.0
    %4559 = vmatpush1.msra.mxu0 0.0
    %4560 = vmatprep.mubr.f32.mxu0 0.0
    %4561 = vmatmul.mubr.f32.gmra.mrb[0].mxu0 %v4494
    %v4562 = vpop.f32.mrb[0].mxu0
    %v4563 = vadd.f32 0.0, %v4562
    %v4564 = vpop.f32.mrb[0].mxu0
    %4565 = vdwg.mxu0
    %v4567 = vsel %vm611, %v4563, 0
    %4569 = vmatprep.subr.mxu0 0.0
    %4570 = vmatpush1.msra.mxu0 %v3571
    %4571 = vmatprep.subr.mxu0 0.0
    %4572 = vmatpush1.msra.mxu0 0.0
    %4573 = vmatprep.subr.mxu0 0.0
    %4574 = vmatpush1.msra.mxu0 0.0
    %4575 = vmatprep.subr.mxu0 0.0
    %4576 = vmatpush1.msra.mxu0 0.0
    %4577 = vmatprep.subr.mxu0 0.0
    %4578 = vmatpush1.msra.mxu0 0.0
    %4579 = vmatprep.subr.mxu0 0.0
    %4580 = vmatpush1.msra.mxu0 0.0
    %4581 = vmatprep.subr.mxu0 0.0
    %4582 = vmatpush1.msra.mxu0 0.0
    %4583 = vmatprep.subr.mxu0 0.0
    %4584 = vmatpush1.msra.mxu0 0.0
    %4585 = vmatprep.subr.mxu0 0.0
    %4586 = vmatpush1.msra.mxu0 0.0
    %4587 = vmatprep.subr.mxu0 0.0
    %4588 = vmatpush1.msra.mxu0 0.0
    %4589 = vmatprep.subr.mxu0 0.0
    %4590 = vmatpush1.msra.mxu0 0.0
    %4591 = vmatprep.subr.mxu0 0.0
    %4592 = vmatpush1.msra.mxu0 0.0
    %4593 = vmatprep.subr.mxu0 0.0
    %4594 = vmatpush1.msra.mxu0 0.0
    %4595 = vmatprep.subr.mxu0 0.0
    %4596 = vmatpush1.msra.mxu0 0.0
    %4597 = vmatprep.subr.mxu0 0.0
    %4598 = vmatpush1.msra.mxu0 0.0
    %4599 = vmatprep.subr.mxu0 0.0
    %4600 = vmatpush1.msra.mxu0 0.0
    %4601 = vmatprep.subr.mxu0 0.0
    %4602 = vmatpush1.msra.mxu0 0.0
    %4603 = vmatprep.subr.mxu0 0.0
    %4604 = vmatpush1.msra.mxu0 0.0
    %4605 = vmatprep.subr.mxu0 0.0
    %4606 = vmatpush1.msra.mxu0 0.0
    %4607 = vmatprep.subr.mxu0 0.0
    %4608 = vmatpush1.msra.mxu0 0.0
    %4609 = vmatprep.subr.mxu0 0.0
    %4610 = vmatpush1.msra.mxu0 0.0
    %4611 = vmatprep.subr.mxu0 0.0
    %4612 = vmatpush1.msra.mxu0 0.0
    %4613 = vmatprep.subr.mxu0 0.0
    %4614 = vmatpush1.msra.mxu0 0.0
    %4615 = vmatprep.subr.mxu0 0.0
    %4616 = vmatpush1.msra.mxu0 0.0
    %4617 = vmatprep.subr.mxu0 0.0
    %4618 = vmatpush1.msra.mxu0 0.0
    %4619 = vmatprep.subr.mxu0 0.0
    %4620 = vmatpush1.msra.mxu0 0.0
    %4621 = vmatprep.subr.mxu0 0.0
    %4622 = vmatpush1.msra.mxu0 0.0
    %4623 = vmatprep.subr.mxu0 0.0
    %4624 = vmatpush1.msra.mxu0 0.0
    %4625 = vmatprep.subr.mxu0 0.0
    %4626 = vmatpush1.msra.mxu0 0.0
    %4627 = vmatprep.subr.mxu0 0.0
    %4628 = vmatpush1.msra.mxu0 0.0
    %4629 = vmatprep.subr.mxu0 0.0
    %4630 = vmatpush1.msra.mxu0 0.0
    %4631 = vmatprep.subr.mxu0 0.0
    %4632 = vmatpush1.msra.mxu0 0.0
    %4633 = vmatprep.mubr.f32.mxu0 0.0
    %4634 = vmatmul.mubr.f32.gmra.mrb[0].mxu0 %v4567
    %v4635 = vpop.f32.mrb[0].mxu0
    %v4636 = vadd.f32 0.0, %v4635
    %v4637 = vpop.f32.mrb[0].mxu0
    %4638 = vdwg.mxu0
    %v4639 = vadd.f32 %v4400, %v4636
    %v4641 = vlaneseq
    %v4642 = vshrl.u32 %v4641, 7
    %v4643 = vsub.s32 0, %v4642
    %v4644 = vrot.slane %v3572, %v4643
    %v4646 = vadd.f32 %v4639, %v4644
    %v4647 = vadd.f32 %v3562, %v4646
    %v4648 = vsel %vm523, %v4647, 0.0
    %4649 = vadd.xlane.f32.xlu0 %v4648
    %v4650 = vpop.xlane.xlu0 %4649
    %v4651 = vmul.f32 %v4650, %v1749
    %v4652 = vsub.f32 %v4647, %v4651
    %v4653 = vmul.f32 %v4652, %v4652
    %v4654 = vsel %vm523, %v4653, 0.0
    %4655 = vadd.xlane.f32.xlu0 %v4654
    %v4656 = vpop.xlane.xlu0 %4655
    %v4657 = vmul.f32 %v4656, %v1749
    %v4658 = vadd.f32 %v4657, 1e-05
    %v4659 = vrsqrt.pop %v4658
    %v4660 = vmul.f32 %v4652, %v4659
    %v4662 = vlaneseq
    %v4663 = vshrl.u32 %v4662, 7
    %v4664 = vsub.s32 0, %v4663
    %v4665 = vrot.slane %v3602, %v4664
    %v4667 = vmul.f32 %v4660, %v4665
    %v4669 = vlaneseq
    %v4670 = vshrl.u32 %v4669, 7
    %v4671 = vsub.s32 0, %v4670
    %v4672 = vrot.slane %v3603, %v4671
    %v4674 = vadd.f32 %v4667, %v4672
    %v4676 = vlaneseq
    %v4677 = vshrl.u32 %v4676, 7
    %v4678 = vsub.s32 0, %v4677
    %v4679 = vrot.slane %v3577, %v4678
    %v4682 = vsel %vm523, %v4674, 0
    %4684 = vmatprep.subr.mxu0 0.0
    %4685 = vmatpush1.msra.mxu0 %v3573
    %4686 = vmatprep.subr.mxu0 0.0
    %4687 = vmatpush1.msra.mxu0 %v3574
    %4688 = vmatprep.subr.mxu0 0.0
    %4689 = vmatpush1.msra.mxu0 %v3575
    %4690 = vmatprep.subr.mxu0 0.0
    %4691 = vmatpush1.msra.mxu0 %v3576
    %4692 = vmatprep.subr.mxu0 0.0
    %4693 = vmatpush1.msra.mxu0 0.0
    %4694 = vmatprep.subr.mxu0 0.0
    %4695 = vmatpush1.msra.mxu0 0.0
    %4696 = vmatprep.subr.mxu0 0.0
    %4697 = vmatpush1.msra.mxu0 0.0
    %4698 = vmatprep.subr.mxu0 0.0
    %4699 = vmatpush1.msra.mxu0 0.0
    %4700 = vmatprep.subr.mxu0 0.0
    %4701 = vmatpush1.msra.mxu0 0.0
    %4702 = vmatprep.subr.mxu0 0.0
    %4703 = vmatpush1.msra.mxu0 0.0
    %4704 = vmatprep.subr.mxu0 0.0
    %4705 = vmatpush1.msra.mxu0 0.0
    %4706 = vmatprep.subr.mxu0 0.0
    %4707 = vmatpush1.msra.mxu0 0.0
    %4708 = vmatprep.subr.mxu0 0.0
    %4709 = vmatpush1.msra.mxu0 0.0
    %4710 = vmatprep.subr.mxu0 0.0
    %4711 = vmatpush1.msra.mxu0 0.0
    %4712 = vmatprep.subr.mxu0 0.0
    %4713 = vmatpush1.msra.mxu0 0.0
    %4714 = vmatprep.subr.mxu0 0.0
    %4715 = vmatpush1.msra.mxu0 0.0
    %4716 = vmatprep.subr.mxu0 0.0
    %4717 = vmatpush1.msra.mxu0 0.0
    %4718 = vmatprep.subr.mxu0 0.0
    %4719 = vmatpush1.msra.mxu0 0.0
    %4720 = vmatprep.subr.mxu0 0.0
    %4721 = vmatpush1.msra.mxu0 0.0
    %4722 = vmatprep.subr.mxu0 0.0
    %4723 = vmatpush1.msra.mxu0 0.0
    %4724 = vmatprep.subr.mxu0 0.0
    %4725 = vmatpush1.msra.mxu0 0.0
    %4726 = vmatprep.subr.mxu0 0.0
    %4727 = vmatpush1.msra.mxu0 0.0
    %4728 = vmatprep.subr.mxu0 0.0
    %4729 = vmatpush1.msra.mxu0 0.0
    %4730 = vmatprep.subr.mxu0 0.0
    %4731 = vmatpush1.msra.mxu0 0.0
    %4732 = vmatprep.subr.mxu0 0.0
    %4733 = vmatpush1.msra.mxu0 0.0
    %4734 = vmatprep.subr.mxu0 0.0
    %4735 = vmatpush1.msra.mxu0 0.0
    %4736 = vmatprep.subr.mxu0 0.0
    %4737 = vmatpush1.msra.mxu0 0.0
    %4738 = vmatprep.subr.mxu0 0.0
    %4739 = vmatpush1.msra.mxu0 0.0
    %4740 = vmatprep.subr.mxu0 0.0
    %4741 = vmatpush1.msra.mxu0 0.0
    %4742 = vmatprep.subr.mxu0 0.0
    %4743 = vmatpush1.msra.mxu0 0.0
    %4744 = vmatprep.subr.mxu0 0.0
    %4745 = vmatpush1.msra.mxu0 0.0
    %4746 = vmatprep.subr.mxu0 0.0
    %4747 = vmatpush1.msra.mxu0 0.0
    %4748 = vmatprep.mubr.f32.mxu0 0.0
    %4749 = vmatmul.mubr.f32.gmra.mrb[0].mxu0 %v4682
    %v4750 = vpop.f32.mrb[0].mxu0
    %v4751 = vadd.f32 %v4679, %v4750
    %v4752 = vpop.f32.mrb[0].mxu0
    %4753 = vdwg.mxu0
    %v4755 = vlaneseq
    %v4756 = vshrl.u32 %v4755, 7
    %v4757 = vsub.s32 0, %v4756
    %v4758 = vrot.slane %v3582, %v4757
    %v4761 = vsel %vm523, %v3560, 0
    %v4764 = vsel %vm523, %v3561, 0
    %4766 = vmatprep.subr.mxu0 0.0
    %4767 = vmatpush1.msra.mxu0 %v3578
    %4768 = vmatprep.subr.mxu0 0.0
    %4769 = vmatpush1.msra.mxu0 %v3579
    %4770 = vmatprep.subr.mxu0 0.0
    %4771 = vmatpush1.msra.mxu0 %v3580
    %4772 = vmatprep.subr.mxu0 0.0
    %4773 = vmatpush1.msra.mxu0 %v3581
    %4774 = vmatprep.subr.mxu0 0.0
    %4775 = vmatpush1.msra.mxu0 0.0
    %4776 = vmatprep.subr.mxu0 0.0
    %4777 = vmatpush1.msra.mxu0 0.0
    %4778 = vmatprep.subr.mxu0 0.0
    %4779 = vmatpush1.msra.mxu0 0.0
    %4780 = vmatprep.subr.mxu0 0.0
    %4781 = vmatpush1.msra.mxu0 0.0
    %4782 = vmatprep.subr.mxu0 0.0
    %4783 = vmatpush1.msra.mxu0 0.0
    %4784 = vmatprep.subr.mxu0 0.0
    %4785 = vmatpush1.msra.mxu0 0.0
    %4786 = vmatprep.subr.mxu0 0.0
    %4787 = vmatpush1.msra.mxu0 0.0
    %4788 = vmatprep.subr.mxu0 0.0
    %4789 = vmatpush1.msra.mxu0 0.0
    %4790 = vmatprep.subr.mxu0 0.0
    %4791 = vmatpush1.msra.mxu0 0.0
    %4792 = vmatprep.subr.mxu0 0.0
    %4793 = vmatpush1.msra.mxu0 0.0
    %4794 = vmatprep.subr.mxu0 0.0
    %4795 = vmatpush1.msra.mxu0 0.0
    %4796 = vmatprep.subr.mxu0 0.0
    %4797 = vmatpush1.msra.mxu0 0.0
    %4798 = vmatprep.subr.mxu0 0.0
    %4799 = vmatpush1.msra.mxu0 0.0
    %4800 = vmatprep.subr.mxu0 0.0
    %4801 = vmatpush1.msra.mxu0 0.0
    %4802 = vmatprep.subr.mxu0 0.0
    %4803 = vmatpush1.msra.mxu0 0.0
    %4804 = vmatprep.subr.mxu0 0.0
    %4805 = vmatpush1.msra.mxu0 0.0
    %4806 = vmatprep.subr.mxu0 0.0
    %4807 = vmatpush1.msra.mxu0 0.0
    %4808 = vmatprep.subr.mxu0 0.0
    %4809 = vmatpush1.msra.mxu0 0.0
    %4810 = vmatprep.subr.mxu0 0.0
    %4811 = vmatpush1.msra.mxu0 0.0
    %4812 = vmatprep.subr.mxu0 0.0
    %4813 = vmatpush1.msra.mxu0 0.0
    %4814 = vmatprep.subr.mxu0 0.0
    %4815 = vmatpush1.msra.mxu0 0.0
    %4816 = vmatprep.subr.mxu0 0.0
    %4817 = vmatpush1.msra.mxu0 0.0
    %4818 = vmatprep.subr.mxu0 0.0
    %4819 = vmatpush1.msra.mxu0 0.0
    %4820 = vmatprep.subr.mxu0 0.0
    %4821 = vmatpush1.msra.mxu0 0.0
    %4822 = vmatprep.subr.mxu0 0.0
    %4823 = vmatpush1.msra.mxu0 0.0
    %4824 = vmatprep.subr.mxu0 0.0
    %4825 = vmatpush1.msra.mxu0 0.0
    %4826 = vmatprep.subr.mxu0 0.0
    %4827 = vmatpush1.msra.mxu0 0.0
    %4828 = vmatprep.subr.mxu0 0.0
    %4829 = vmatpush1.msra.mxu0 0.0
    %4830 = vmatprep.mubr.f32.mxu0 0.0
    %4831 = vmatmul.mubr.f32.gmra.mrb[0].mxu0 %v4761
    %v4832 = vpop.f32.mrb[0].mxu0
    %v4833 = vadd.f32 %v4758, %v4832
    %v4834 = vpop.f32.mrb[0].mxu0
    %4835 = vmatprep.mubr.f32.mxu0 0.0
    %4836 = vmatmul.mubr.f32.gmra.mrb[0].mxu0 %v4764
    %v4837 = vpop.f32.mrb[0].mxu0
    %v4838 = vadd.f32 %v4758, %v4837
    %v4839 = vpop.f32.mrb[0].mxu0
    %4840 = vdwg.mxu0
    %v4842 = vsel %vm611, %v4751, 0
    %v4845 = vsel %vm611, %v4833, 0
    %v4848 = vsel %vm611, %v4838, 0
    %4850 = vmatprep.subr.mxu0 0.0
    %4851 = vmatpush1.xpose.msra.mxu0 %v4845
    %4852 = vmatprep.subr.mxu0 0.0
    %4853 = vmatpush1.xpose.msra.mxu0 %v4848
    %4854 = vmatprep.subr.mxu0 0.0
    %4855 = vmatpush1.xpose.msra.mxu0 0.0
    %4856 = vmatprep.subr.mxu0 0.0
    %4857 = vmatpush1.xpose.msra.mxu0 0.0
    %4858 = vmatprep.subr.mxu0 0.0
    %4859 = vmatpush1.xpose.msra.mxu0 0.0
    %4860 = vmatprep.subr.mxu0 0.0
    %4861 = vmatpush1.xpose.msra.mxu0 0.0
    %4862 = vmatprep.subr.mxu0 0.0
    %4863 = vmatpush1.xpose.msra.mxu0 0.0
    %4864 = vmatprep.subr.mxu0 0.0
    %4865 = vmatpush1.xpose.msra.mxu0 0.0
    %4866 = vmatprep.subr.mxu0 0.0
    %4867 = vmatpush1.xpose.msra.mxu0 0.0
    %4868 = vmatprep.subr.mxu0 0.0
    %4869 = vmatpush1.xpose.msra.mxu0 0.0
    %4870 = vmatprep.subr.mxu0 0.0
    %4871 = vmatpush1.xpose.msra.mxu0 0.0
    %4872 = vmatprep.subr.mxu0 0.0
    %4873 = vmatpush1.xpose.msra.mxu0 0.0
    %4874 = vmatprep.subr.mxu0 0.0
    %4875 = vmatpush1.xpose.msra.mxu0 0.0
    %4876 = vmatprep.subr.mxu0 0.0
    %4877 = vmatpush1.xpose.msra.mxu0 0.0
    %4878 = vmatprep.subr.mxu0 0.0
    %4879 = vmatpush1.xpose.msra.mxu0 0.0
    %4880 = vmatprep.subr.mxu0 0.0
    %4881 = vmatpush1.xpose.msra.mxu0 0.0
    %4882 = vmatprep.subr.mxu0 0.0
    %4883 = vmatpush1.xpose.msra.mxu0 0.0
    %4884 = vmatprep.subr.mxu0 0.0
    %4885 = vmatpush1.xpose.msra.mxu0 0.0
    %4886 = vmatprep.subr.mxu0 0.0
    %4887 = vmatpush1.xpose.msra.mxu0 0.0
    %4888 = vmatprep.subr.mxu0 0.0
    %4889 = vmatpush1.xpose.msra.mxu0 0.0
    %4890 = vmatprep.subr.mxu0 0.0
    %4891 = vmatpush1.xpose.msra.mxu0 0.0
    %4892 = vmatprep.subr.mxu0 0.0
    %4893 = vmatpush1.xpose.msra.mxu0 0.0
    %4894 = vmatprep.subr.mxu0 0.0
    %4895 = vmatpush1.xpose.msra.mxu0 0.0
    %4896 = vmatprep.subr.mxu0 0.0
    %4897 = vmatpush1.xpose.msra.mxu0 0.0
    %4898 = vmatprep.subr.mxu0 0.0
    %4899 = vmatpush1.xpose.msra.mxu0 0.0
    %4900 = vmatprep.subr.mxu0 0.0
    %4901 = vmatpush1.xpose.msra.mxu0 0.0
    %4902 = vmatprep.subr.mxu0 0.0
    %4903 = vmatpush1.xpose.msra.mxu0 0.0
    %4904 = vmatprep.subr.mxu0 0.0
    %4905 = vmatpush1.xpose.msra.mxu0 0.0
    %4906 = vmatprep.subr.mxu0 0.0
    %4907 = vmatpush1.xpose.msra.mxu0 0.0
    %4908 = vmatprep.subr.mxu0 0.0
    %4909 = vmatpush1.xpose.msra.mxu0 0.0
    %4910 = vmatprep.subr.mxu0 0.0
    %4911 = vmatpush1.xpose.msra.mxu0 0.0
    %4912 = vmatprep.subr.mxu0 0.0
    %4913 = vmatpush1.xpose.msra.mxu0 0.0
    %4914 = vmatprep.mubr.f32.mxu0 0.0
    %4915 = vmatmul.mubr.f32.gmra.mrb[0].mxu0 %v4842
    %v4916 = vpop.f32.mrb[0].mxu0
    %v4917 = vadd.f32 %v388, %v4916
    %v4918 = vpop.f32.mrb[0].mxu0
    %4919 = vdwg.mxu0
    %v4920 = vsel %vm695, %v4917, -inf
    %4921 = vmax.xlane.f32.xlu0 %v4920
    %v4922 = vpop.xlane.xlu0 %4921
    %v4923 = vsub.f32 %v4917, %v4922
    %v4924 = vmul.f32 %v4923, 1.442695
    %v4925 = vpow.pop %v4924
    %v4926 = vsel %vm695, %v4925, 0.0
    %4927 = vadd.xlane.f32.xlu0 %v4926
    %v4928 = vpop.xlane.xlu0 %4927
    %v4929 = vrcp.pop %v4928
    %v4930 = vmul.f32 %v4925, %v4929
    %4931 = vrot.lane.b32.xlu0 %v4833, 96
    %v4932 = vpop.permute.xlu0 %4931
    %4933 = vrot.lane.b32.xlu0 %v4838, 96
    %v4934 = vpop.permute.xlu0 %4933
    %v4938 = vsel %vm695, %v4930, 0
    %4940 = vmatprep.subr.mxu0 0.0
    %4941 = vmatpush1.msra.mxu0 %v4932
    %4942 = vmatprep.subr.mxu0 0.0
    %4943 = vmatpush1.msra.mxu0 %v4934
    %4944 = vmatprep.subr.mxu0 0.0
    %4945 = vmatpush1.msra.mxu0 0.0
    %4946 = vmatprep.subr.mxu0 0.0
    %4947 = vmatpush1.msra.mxu0 0.0
    %4948 = vmatprep.subr.mxu0 0.0
    %4949 = vmatpush1.msra.mxu0 0.0
    %4950 = vmatprep.subr.mxu0 0.0
    %4951 = vmatpush1.msra.mxu0 0.0
    %4952 = vmatprep.subr.mxu0 0.0
    %4953 = vmatpush1.msra.mxu0 0.0
    %4954 = vmatprep.subr.mxu0 0.0
    %4955 = vmatpush1.msra.mxu0 0.0
    %4956 = vmatprep.subr.mxu0 0.0
    %4957 = vmatpush1.msra.mxu0 0.0
    %4958 = vmatprep.subr.mxu0 0.0
    %4959 = vmatpush1.msra.mxu0 0.0
    %4960 = vmatprep.subr.mxu0 0.0
    %4961 = vmatpush1.msra.mxu0 0.0
    %4962 = vmatprep.subr.mxu0 0.0
    %4963 = vmatpush1.msra.mxu0 0.0
    %4964 = vmatprep.subr.mxu0 0.0
    %4965 = vmatpush1.msra.mxu0 0.0
    %4966 = vmatprep.subr.mxu0 0.0
    %4967 = vmatpush1.msra.mxu0 0.0
    %4968 = vmatprep.subr.mxu0 0.0
    %4969 = vmatpush1.msra.mxu0 0.0
    %4970 = vmatprep.subr.mxu0 0.0
    %4971 = vmatpush1.msra.mxu0 0.0
    %4972 = vmatprep.subr.mxu0 0.0
    %4973 = vmatpush1.msra.mxu0 0.0
    %4974 = vmatprep.subr.mxu0 0.0
    %4975 = vmatpush1.msra.mxu0 0.0
    %4976 = vmatprep.subr.mxu0 0.0
    %4977 = vmatpush1.msra.mxu0 0.0
    %4978 = vmatprep.subr.mxu0 0.0
    %4979 = vmatpush1.msra.mxu0 0.0
    %4980 = vmatprep.subr.mxu0 0.0
    %4981 = vmatpush1.msra.mxu0 0.0
    %4982 = vmatprep.subr.mxu0 0.0
    %4983 = vmatpush1.msra.mxu0 0.0
    %4984 = vmatprep.subr.mxu0 0.0
    %4985 = vmatpush1.msra.mxu0 0.0
    %4986 = vmatprep.subr.mxu0 0.0
    %4987 = vmatpush1.msra.mxu0 0.0
    %4988 = vmatprep.subr.mxu0 0.0
    %4989 = vmatpush1.msra.mxu0 0.0
    %4990 = vmatprep.subr.mxu0 0.0
    %4991 = vmatpush1.msra.mxu0 0.0
    %4992 = vmatprep.subr.mxu0 0.0
    %4993 = vmatpush1.msra.mxu0 0.0
    %4994 = vmatprep.subr.mxu0 0.0
    %4995 = vmatpush1.msra.mxu0 0.0
    %4996 = vmatprep.subr.mxu0 0.0
    %4997 = vmatpush1.msra.mxu0 0.0
    %4998 = vmatprep.subr.mxu0 0.0
    %4999 = vmatpush1.msra.mxu0 0.0
    %5000 = vmatprep.subr.mxu0 0.0
    %5001 = vmatpush1.msra.mxu0 0.0
    %5002 = vmatprep.subr.mxu0 0.0
    %5003 = vmatpush1.msra.mxu0 0.0
    %5004 = vmatprep.mubr.f32.mxu0 0.0
    %5005 = vmatmul.mubr.f32.gmra.mrb[0].mxu0 %v4938
    %v5006 = vpop.f32.mrb[0].mxu0
    %v5007 = vadd.f32 0.0, %v5006
    %v5008 = vpop.f32.mrb[0].mxu0
    %5009 = vdwg.mxu0
    %5010 = vrot.lane.b32.xlu0 %v4751, 120
    %v5011 = vpop.permute.xlu0 %5010
    %5012 = vrot.lane.b32.xlu0 %v4833, 120
    %v5013 = vpop.permute.xlu0 %5012
    %5014 = vrot.lane.b32.xlu0 %v4838, 120
    %v5015 = vpop.permute.xlu0 %5014
    %v5016 = vsel %vm611, %v5011, 0
    %v5018 = vsel %vm611, %v5013, 0
    %v5020 = vsel %vm611, %v5015, 0
    %5022 = vmatprep.subr.mxu0 0.0
    %5023 = vmatpush1.xpose.msra.mxu0 %v5018
    %5024 = vmatprep.subr.mxu0 0.0
    %5025 = vmatpush1.xpose.msra.mxu0 %v5020
    %5026 = vmatprep.subr.mxu0 0.0
    %5027 = vmatpush1.xpose.msra.mxu0 0.0
    %5028 = vmatprep.subr.mxu0 0.0
    %5029 = vmatpush1.xpose.msra.mxu0 0.0
    %5030 = vmatprep.subr.mxu0 0.0
    %5031 = vmatpush1.xpose.msra.mxu0 0.0
    %5032 = vmatprep.subr.mxu0 0.0
    %5033 = vmatpush1.xpose.msra.mxu0 0.0
    %5034 = vmatprep.subr.mxu0 0.0
    %5035 = vmatpush1.xpose.msra.mxu0 0.0
    %5036 = vmatprep.subr.mxu0 0.0
    %5037 = vmatpush1.xpose.msra.mxu0 0.0
    %5038 = vmatprep.subr.mxu0 0.0
    %5039 = vmatpush1.xpose.msra.mxu0 0.0
    %5040 = vmatprep.subr.mxu0 0.0
    %5041 = vmatpush1.xpose.msra.mxu0 0.0
    %5042 = vmatprep.subr.mxu0 0.0
    %5043 = vmatpush1.xpose.msra.mxu0 0.0
    %5044 = vmatprep.subr.mxu0 0.0
    %5045 = vmatpush1.xpose.msra.mxu0 0.0
    %5046 = vmatprep.subr.mxu0 0.0
    %5047 = vmatpush1.xpose.msra.mxu0 0.0
    %5048 = vmatprep.subr.mxu0 0.0
    %5049 = vmatpush1.xpose.msra.mxu0 0.0
    %5050 = vmatprep.subr.mxu0 0.0
    %5051 = vmatpush1.xpose.msra.mxu0 0.0
    %5052 = vmatprep.subr.mxu0 0.0
    %5053 = vmatpush1.xpose.msra.mxu0 0.0
    %5054 = vmatprep.subr.mxu0 0.0
    %5055 = vmatpush1.xpose.msra.mxu0 0.0
    %5056 = vmatprep.subr.mxu0 0.0
    %5057 = vmatpush1.xpose.msra.mxu0 0.0
    %5058 = vmatprep.subr.mxu0 0.0
    %5059 = vmatpush1.xpose.msra.mxu0 0.0
    %5060 = vmatprep.subr.mxu0 0.0
    %5061 = vmatpush1.xpose.msra.mxu0 0.0
    %5062 = vmatprep.subr.mxu0 0.0
    %5063 = vmatpush1.xpose.msra.mxu0 0.0
    %5064 = vmatprep.subr.mxu0 0.0
    %5065 = vmatpush1.xpose.msra.mxu0 0.0
    %5066 = vmatprep.subr.mxu0 0.0
    %5067 = vmatpush1.xpose.msra.mxu0 0.0
    %5068 = vmatprep.subr.mxu0 0.0
    %5069 = vmatpush1.xpose.msra.mxu0 0.0
    %5070 = vmatprep.subr.mxu0 0.0
    %5071 = vmatpush1.xpose.msra.mxu0 0.0
    %5072 = vmatprep.subr.mxu0 0.0
    %5073 = vmatpush1.xpose.msra.mxu0 0.0
    %5074 = vmatprep.subr.mxu0 0.0
    %5075 = vmatpush1.xpose.msra.mxu0 0.0
    %5076 = vmatprep.subr.mxu0 0.0
    %5077 = vmatpush1.xpose.msra.mxu0 0.0
    %5078 = vmatprep.subr.mxu0 0.0
    %5079 = vmatpush1.xpose.msra.mxu0 0.0
    %5080 = vmatprep.subr.mxu0 0.0
    %5081 = vmatpush1.xpose.msra.mxu0 0.0
    %5082 = vmatprep.subr.mxu0 0.0
    %5083 = vmatpush1.xpose.msra.mxu0 0.0
    %5084 = vmatprep.subr.mxu0 0.0
    %5085 = vmatpush1.xpose.msra.mxu0 0.0
    %5086 = vmatprep.mubr.f32.mxu0 0.0
    %5087 = vmatmul.mubr.f32.gmra.mrb[0].mxu0 %v5016
    %v5088 = vpop.f32.mrb[0].mxu0
    %v5089 = vadd.f32 %v388, %v5088
    %v5090 = vpop.f32.mrb[0].mxu0
    %5091 = vdwg.mxu0
    %v5092 = vsel %vm695, %v5089, -inf
    %5093 = vmax.xlane.f32.xlu0 %v5092
    %v5094 = vpop.xlane.xlu0 %5093
    %v5095 = vsub.f32 %v5089, %v5094
    %v5096 = vmul.f32 %v5095, 1.442695
    %v5097 = vpow.pop %v5096
    %v5098 = vsel %vm695, %v5097, 0.0
    %5099 = vadd.xlane.f32.xlu0 %v5098
    %v5100 = vpop.xlane.xlu0 %5099
    %v5101 = vrcp.pop %v5100
    %v5102 = vmul.f32 %v5097, %v5101
    %5103 = vrot.lane.b32.xlu0 %v4833, 88
    %v5104 = vpop.permute.xlu0 %5103
    %5105 = vrot.lane.b32.xlu0 %v4838, 88
    %v5106 = vpop.permute.xlu0 %5105
    %v5110 = vsel %vm695, %v5102, 0
    %5112 = vmatprep.subr.mxu0 0.0
    %5113 = vmatpush1.msra.mxu0 %v5104
    %5114 = vmatprep.subr.mxu0 0.0
    %5115 = vmatpush1.msra.mxu0 %v5106
    %5116 = vmatprep.subr.mxu0 0.0
    %5117 = vmatpush1.msra.mxu0 0.0
    %5118 = vmatprep.subr.mxu0 0.0
    %5119 = vmatpush1.msra.mxu0 0.0
    %5120 = vmatprep.subr.mxu0 0.0
    %5121 = vmatpush1.msra.mxu0 0.0
    %5122 = vmatprep.subr.mxu0 0.0
    %5123 = vmatpush1.msra.mxu0 0.0
    %5124 = vmatprep.subr.mxu0 0.0
    %5125 = vmatpush1.msra.mxu0 0.0
    %5126 = vmatprep.subr.mxu0 0.0
    %5127 = vmatpush1.msra.mxu0 0.0
    %5128 = vmatprep.subr.mxu0 0.0
    %5129 = vmatpush1.msra.mxu0 0.0
    %5130 = vmatprep.subr.mxu0 0.0
    %5131 = vmatpush1.msra.mxu0 0.0
    %5132 = vmatprep.subr.mxu0 0.0
    %5133 = vmatpush1.msra.mxu0 0.0
    %5134 = vmatprep.subr.mxu0 0.0
    %5135 = vmatpush1.msra.mxu0 0.0
    %5136 = vmatprep.subr.mxu0 0.0
    %5137 = vmatpush1.msra.mxu0 0.0
    %5138 = vmatprep.subr.mxu0 0.0
    %5139 = vmatpush1.msra.mxu0 0.0
    %5140 = vmatprep.subr.mxu0 0.0
    %5141 = vmatpush1.msra.mxu0 0.0
    %5142 = vmatprep.subr.mxu0 0.0
    %5143 = vmatpush1.msra.mxu0 0.0
    %5144 = vmatprep.subr.mxu0 0.0
    %5145 = vmatpush1.msra.mxu0 0.0
    %5146 = vmatprep.subr.mxu0 0.0
    %5147 = vmatpush1.msra.mxu0 0.0
    %5148 = vmatprep.subr.mxu0 0.0
    %5149 = vmatpush1.msra.mxu0 0.0
    %5150 = vmatprep.subr.mxu0 0.0
    %5151 = vmatpush1.msra.mxu0 0.0
    %5152 = vmatprep.subr.mxu0 0.0
    %5153 = vmatpush1.msra.mxu0 0.0
    %5154 = vmatprep.subr.mxu0 0.0
    %5155 = vmatpush1.msra.mxu0 0.0
    %5156 = vmatprep.subr.mxu0 0.0
    %5157 = vmatpush1.msra.mxu0 0.0
    %5158 = vmatprep.subr.mxu0 0.0
    %5159 = vmatpush1.msra.mxu0 0.0
    %5160 = vmatprep.subr.mxu0 0.0
    %5161 = vmatpush1.msra.mxu0 0.0
    %5162 = vmatprep.subr.mxu0 0.0
    %5163 = vmatpush1.msra.mxu0 0.0
    %5164 = vmatprep.subr.mxu0 0.0
    %5165 = vmatpush1.msra.mxu0 0.0
    %5166 = vmatprep.subr.mxu0 0.0
    %5167 = vmatpush1.msra.mxu0 0.0
    %5168 = vmatprep.subr.mxu0 0.0
    %5169 = vmatpush1.msra.mxu0 0.0
    %5170 = vmatprep.subr.mxu0 0.0
    %5171 = vmatpush1.msra.mxu0 0.0
    %5172 = vmatprep.subr.mxu0 0.0
    %5173 = vmatpush1.msra.mxu0 0.0
    %5174 = vmatprep.subr.mxu0 0.0
    %5175 = vmatpush1.msra.mxu0 0.0
    %5176 = vmatprep.mubr.f32.mxu0 0.0
    %5177 = vmatmul.mubr.f32.gmra.mrb[0].mxu0 %v5110
    %v5178 = vpop.f32.mrb[0].mxu0
    %v5179 = vadd.f32 0.0, %v5178
    %v5180 = vpop.f32.mrb[0].mxu0
    %5181 = vdwg.mxu0
    %v5183 = vsel %vm611, %v5179, 0
    %5185 = vmatprep.subr.mxu0 0.0
    %5186 = vmatpush1.msra.mxu0 %v3584
    %5187 = vmatprep.subr.mxu0 0.0
    %5188 = vmatpush1.msra.mxu0 0.0
    %5189 = vmatprep.subr.mxu0 0.0
    %5190 = vmatpush1.msra.mxu0 0.0
    %5191 = vmatprep.subr.mxu0 0.0
    %5192 = vmatpush1.msra.mxu0 0.0
    %5193 = vmatprep.subr.mxu0 0.0
    %5194 = vmatpush1.msra.mxu0 0.0
    %5195 = vmatprep.subr.mxu0 0.0
    %5196 = vmatpush1.msra.mxu0 0.0
    %5197 = vmatprep.subr.mxu0 0.0
    %5198 = vmatpush1.msra.mxu0 0.0
    %5199 = vmatprep.subr.mxu0 0.0
    %5200 = vmatpush1.msra.mxu0 0.0
    %5201 = vmatprep.subr.mxu0 0.0
    %5202 = vmatpush1.msra.mxu0 0.0
    %5203 = vmatprep.subr.mxu0 0.0
    %5204 = vmatpush1.msra.mxu0 0.0
    %5205 = vmatprep.subr.mxu0 0.0
    %5206 = vmatpush1.msra.mxu0 0.0
    %5207 = vmatprep.subr.mxu0 0.0
    %5208 = vmatpush1.msra.mxu0 0.0
    %5209 = vmatprep.subr.mxu0 0.0
    %5210 = vmatpush1.msra.mxu0 0.0
    %5211 = vmatprep.subr.mxu0 0.0
    %5212 = vmatpush1.msra.mxu0 0.0
    %5213 = vmatprep.subr.mxu0 0.0
    %5214 = vmatpush1.msra.mxu0 0.0
    %5215 = vmatprep.subr.mxu0 0.0
    %5216 = vmatpush1.msra.mxu0 0.0
    %5217 = vmatprep.subr.mxu0 0.0
    %5218 = vmatpush1.msra.mxu0 0.0
    %5219 = vmatprep.subr.mxu0 0.0
    %5220 = vmatpush1.msra.mxu0 0.0
    %5221 = vmatprep.subr.mxu0 0.0
    %5222 = vmatpush1.msra.mxu0 0.0
    %5223 = vmatprep.subr.mxu0 0.0
    %5224 = vmatpush1.msra.mxu0 0.0
    %5225 = vmatprep.subr.mxu0 0.0
    %5226 = vmatpush1.msra.mxu0 0.0
    %5227 = vmatprep.subr.mxu0 0.0
    %5228 = vmatpush1.msra.mxu0 0.0
    %5229 = vmatprep.subr.mxu0 0.0
    %5230 = vmatpush1.msra.mxu0 0.0
    %5231 = vmatprep.subr.mxu0 0.0
    %5232 = vmatpush1.msra.mxu0 0.0
    %5233 = vmatprep.subr.mxu0 0.0
    %5234 = vmatpush1.msra.mxu0 0.0
    %5235 = vmatprep.subr.mxu0 0.0
    %5236 = vmatpush1.msra.mxu0 0.0
    %5237 = vmatprep.subr.mxu0 0.0
    %5238 = vmatpush1.msra.mxu0 0.0
    %5239 = vmatprep.subr.mxu0 0.0
    %5240 = vmatpush1.msra.mxu0 0.0
    %5241 = vmatprep.subr.mxu0 0.0
    %5242 = vmatpush1.msra.mxu0 0.0
    %5243 = vmatprep.subr.mxu0 0.0
    %5244 = vmatpush1.msra.mxu0 0.0
    %5245 = vmatprep.subr.mxu0 0.0
    %5246 = vmatpush1.msra.mxu0 0.0
    %5247 = vmatprep.subr.mxu0 0.0
    %5248 = vmatpush1.msra.mxu0 0.0
    %5249 = vmatprep.mubr.f32.mxu0 0.0
    %5250 = vmatmul.mubr.f32.gmra.mrb[0].mxu0 %v5183
    %v5251 = vpop.f32.mrb[0].mxu0
    %v5252 = vadd.f32 0.0, %v5251
    %v5253 = vpop.f32.mrb[0].mxu0
    %5254 = vdwg.mxu0
    %v5256 = vsel %vm611, %v5007, 0
    %5258 = vmatprep.subr.mxu0 0.0
    %5259 = vmatpush1.msra.mxu0 %v3583
    %5260 = vmatprep.subr.mxu0 0.0
    %5261 = vmatpush1.msra.mxu0 0.0
    %5262 = vmatprep.subr.mxu0 0.0
    %5263 = vmatpush1.msra.mxu0 0.0
    %5264 = vmatprep.subr.mxu0 0.0
    %5265 = vmatpush1.msra.mxu0 0.0
    %5266 = vmatprep.subr.mxu0 0.0
    %5267 = vmatpush1.msra.mxu0 0.0
    %5268 = vmatprep.subr.mxu0 0.0
    %5269 = vmatpush1.msra.mxu0 0.0
    %5270 = vmatprep.subr.mxu0 0.0
    %5271 = vmatpush1.msra.mxu0 0.0
    %5272 = vmatprep.subr.mxu0 0.0
    %5273 = vmatpush1.msra.mxu0 0.0
    %5274 = vmatprep.subr.mxu0 0.0
    %5275 = vmatpush1.msra.mxu0 0.0
    %5276 = vmatprep.subr.mxu0 0.0
    %5277 = vmatpush1.msra.mxu0 0.0
    %5278 = vmatprep.subr.mxu0 0.0
    %5279 = vmatpush1.msra.mxu0 0.0
    %5280 = vmatprep.subr.mxu0 0.0
    %5281 = vmatpush1.msra.mxu0 0.0
    %5282 = vmatprep.subr.mxu0 0.0
    %5283 = vmatpush1.msra.mxu0 0.0
    %5284 = vmatprep.subr.mxu0 0.0
    %5285 = vmatpush1.msra.mxu0 0.0
    %5286 = vmatprep.subr.mxu0 0.0
    %5287 = vmatpush1.msra.mxu0 0.0
    %5288 = vmatprep.subr.mxu0 0.0
    %5289 = vmatpush1.msra.mxu0 0.0
    %5290 = vmatprep.subr.mxu0 0.0
    %5291 = vmatpush1.msra.mxu0 0.0
    %5292 = vmatprep.subr.mxu0 0.0
    %5293 = vmatpush1.msra.mxu0 0.0
    %5294 = vmatprep.subr.mxu0 0.0
    %5295 = vmatpush1.msra.mxu0 0.0
    %5296 = vmatprep.subr.mxu0 0.0
    %5297 = vmatpush1.msra.mxu0 0.0
    %5298 = vmatprep.subr.mxu0 0.0
    %5299 = vmatpush1.msra.mxu0 0.0
    %5300 = vmatprep.subr.mxu0 0.0
    %5301 = vmatpush1.msra.mxu0 0.0
    %5302 = vmatprep.subr.mxu0 0.0
    %5303 = vmatpush1.msra.mxu0 0.0
    %5304 = vmatprep.subr.mxu0 0.0
    %5305 = vmatpush1.msra.mxu0 0.0
    %5306 = vmatprep.subr.mxu0 0.0
    %5307 = vmatpush1.msra.mxu0 0.0
    %5308 = vmatprep.subr.mxu0 0.0
    %5309 = vmatpush1.msra.mxu0 0.0
    %5310 = vmatprep.subr.mxu0 0.0
    %5311 = vmatpush1.msra.mxu0 0.0
    %5312 = vmatprep.subr.mxu0 0.0
    %5313 = vmatpush1.msra.mxu0 0.0
    %5314 = vmatprep.subr.mxu0 0.0
    %5315 = vmatpush1.msra.mxu0 0.0
    %5316 = vmatprep.subr.mxu0 0.0
    %5317 = vmatpush1.msra.mxu0 0.0
    %5318 = vmatprep.subr.mxu0 0.0
    %5319 = vmatpush1.msra.mxu0 0.0
    %5320 = vmatprep.subr.mxu0 0.0
    %5321 = vmatpush1.msra.mxu0 0.0
    %5322 = vmatprep.mubr.f32.mxu0 0.0
    %5323 = vmatmul.mubr.f32.gmra.mrb[0].mxu0 %v5256
    %v5324 = vpop.f32.mrb[0].mxu0
    %v5325 = vadd.f32 %v5252, %v5324
    %v5326 = vpop.f32.mrb[0].mxu0
    %5327 = vdwg.mxu0
    %5328 = vrot.lane.b32.xlu0 %v4751, 112
    %v5329 = vpop.permute.xlu0 %5328
    %5330 = vrot.lane.b32.xlu0 %v4833, 112
    %v5331 = vpop.permute.xlu0 %5330
    %5332 = vrot.lane.b32.xlu0 %v4838, 112
    %v5333 = vpop.permute.xlu0 %5332
    %v5334 = vsel %vm611, %v5329, 0
    %v5336 = vsel %vm611, %v5331, 0
    %v5338 = vsel %vm611, %v5333, 0
    %5340 = vmatprep.subr.mxu0 0.0
    %5341 = vmatpush1.xpose.msra.mxu0 %v5336
    %5342 = vmatprep.subr.mxu0 0.0
    %5343 = vmatpush1.xpose.msra.mxu0 %v5338
    %5344 = vmatprep.subr.mxu0 0.0
    %5345 = vmatpush1.xpose.msra.mxu0 0.0
    %5346 = vmatprep.subr.mxu0 0.0
    %5347 = vmatpush1.xpose.msra.mxu0 0.0
    %5348 = vmatprep.subr.mxu0 0.0
    %5349 = vmatpush1.xpose.msra.mxu0 0.0
    %5350 = vmatprep.subr.mxu0 0.0
    %5351 = vmatpush1.xpose.msra.mxu0 0.0
    %5352 = vmatprep.subr.mxu0 0.0
    %5353 = vmatpush1.xpose.msra.mxu0 0.0
    %5354 = vmatprep.subr.mxu0 0.0
    %5355 = vmatpush1.xpose.msra.mxu0 0.0
    %5356 = vmatprep.subr.mxu0 0.0
    %5357 = vmatpush1.xpose.msra.mxu0 0.0
    %5358 = vmatprep.subr.mxu0 0.0
    %5359 = vmatpush1.xpose.msra.mxu0 0.0
    %5360 = vmatprep.subr.mxu0 0.0
    %5361 = vmatpush1.xpose.msra.mxu0 0.0
    %5362 = vmatprep.subr.mxu0 0.0
    %5363 = vmatpush1.xpose.msra.mxu0 0.0
    %5364 = vmatprep.subr.mxu0 0.0
    %5365 = vmatpush1.xpose.msra.mxu0 0.0
    %5366 = vmatprep.subr.mxu0 0.0
    %5367 = vmatpush1.xpose.msra.mxu0 0.0
    %5368 = vmatprep.subr.mxu0 0.0
    %5369 = vmatpush1.xpose.msra.mxu0 0.0
    %5370 = vmatprep.subr.mxu0 0.0
    %5371 = vmatpush1.xpose.msra.mxu0 0.0
    %5372 = vmatprep.subr.mxu0 0.0
    %5373 = vmatpush1.xpose.msra.mxu0 0.0
    %5374 = vmatprep.subr.mxu0 0.0
    %5375 = vmatpush1.xpose.msra.mxu0 0.0
    %5376 = vmatprep.subr.mxu0 0.0
    %5377 = vmatpush1.xpose.msra.mxu0 0.0
    %5378 = vmatprep.subr.mxu0 0.0
    %5379 = vmatpush1.xpose.msra.mxu0 0.0
    %5380 = vmatprep.subr.mxu0 0.0
    %5381 = vmatpush1.xpose.msra.mxu0 0.0
    %5382 = vmatprep.subr.mxu0 0.0
    %5383 = vmatpush1.xpose.msra.mxu0 0.0
    %5384 = vmatprep.subr.mxu0 0.0
    %5385 = vmatpush1.xpose.msra.mxu0 0.0
    %5386 = vmatprep.subr.mxu0 0.0
    %5387 = vmatpush1.xpose.msra.mxu0 0.0
    %5388 = vmatprep.subr.mxu0 0.0
    %5389 = vmatpush1.xpose.msra.mxu0 0.0
    %5390 = vmatprep.subr.mxu0 0.0
    %5391 = vmatpush1.xpose.msra.mxu0 0.0
    %5392 = vmatprep.subr.mxu0 0.0
    %5393 = vmatpush1.xpose.msra.mxu0 0.0
    %5394 = vmatprep.subr.mxu0 0.0
    %5395 = vmatpush1.xpose.msra.mxu0 0.0
    %5396 = vmatprep.subr.mxu0 0.0
    %5397 = vmatpush1.xpose.msra.mxu0 0.0
    %5398 = vmatprep.subr.mxu0 0.0
    %5399 = vmatpush1.xpose.msra.mxu0 0.0
    %5400 = vmatprep.subr.mxu0 0.0
    %5401 = vmatpush1.xpose.msra.mxu0 0.0
    %5402 = vmatprep.subr.mxu0 0.0
    %5403 = vmatpush1.xpose.msra.mxu0 0.0
    %5404 = vmatprep.mubr.f32.mxu0 0.0
    %5405 = vmatmul.mubr.f32.gmra.mrb[0].mxu0 %v5334
    %v5406 = vpop.f32.mrb[0].mxu0
    %v5407 = vadd.f32 %v388, %v5406
    %v5408 = vpop.f32.mrb[0].mxu0
    %5409 = vdwg.mxu0
    %v5410 = vsel %vm695, %v5407, -inf
    %5411 = vmax.xlane.f32.xlu0 %v5410
    %v5412 = vpop.xlane.xlu0 %5411
    %v5413 = vsub.f32 %v5407, %v5412
    %v5414 = vmul.f32 %v5413, 1.442695
    %v5415 = vpow.pop %v5414
    %v5416 = vsel %vm695, %v5415, 0.0
    %5417 = vadd.xlane.f32.xlu0 %v5416
    %v5418 = vpop.xlane.xlu0 %5417
    %v5419 = vrcp.pop %v5418
    %v5420 = vmul.f32 %v5415, %v5419
    %5421 = vrot.lane.b32.xlu0 %v4833, 80
    %v5422 = vpop.permute.xlu0 %5421
    %5423 = vrot.lane.b32.xlu0 %v4838, 80
    %v5424 = vpop.permute.xlu0 %5423
    %v5428 = vsel %vm695, %v5420, 0
    %5430 = vmatprep.subr.mxu0 0.0
    %5431 = vmatpush1.msra.mxu0 %v5422
    %5432 = vmatprep.subr.mxu0 0.0
    %5433 = vmatpush1.msra.mxu0 %v5424
    %5434 = vmatprep.subr.mxu0 0.0
    %5435 = vmatpush1.msra.mxu0 0.0
    %5436 = vmatprep.subr.mxu0 0.0
    %5437 = vmatpush1.msra.mxu0 0.0
    %5438 = vmatprep.subr.mxu0 0.0
    %5439 = vmatpush1.msra.mxu0 0.0
    %5440 = vmatprep.subr.mxu0 0.0
    %5441 = vmatpush1.msra.mxu0 0.0
    %5442 = vmatprep.subr.mxu0 0.0
    %5443 = vmatpush1.msra.mxu0 0.0
    %5444 = vmatprep.subr.mxu0 0.0
    %5445 = vmatpush1.msra.mxu0 0.0
    %5446 = vmatprep.subr.mxu0 0.0
    %5447 = vmatpush1.msra.mxu0 0.0
    %5448 = vmatprep.subr.mxu0 0.0
    %5449 = vmatpush1.msra.mxu0 0.0
    %5450 = vmatprep.subr.mxu0 0.0
    %5451 = vmatpush1.msra.mxu0 0.0
    %5452 = vmatprep.subr.mxu0 0.0
    %5453 = vmatpush1.msra.mxu0 0.0
    %5454 = vmatprep.subr.mxu0 0.0
    %5455 = vmatpush1.msra.mxu0 0.0
    %5456 = vmatprep.subr.mxu0 0.0
    %5457 = vmatpush1.msra.mxu0 0.0
    %5458 = vmatprep.subr.mxu0 0.0
    %5459 = vmatpush1.msra.mxu0 0.0
    %5460 = vmatprep.subr.mxu0 0.0
    %5461 = vmatpush1.msra.mxu0 0.0
    %5462 = vmatprep.subr.mxu0 0.0
    %5463 = vmatpush1.msra.mxu0 0.0
    %5464 = vmatprep.subr.mxu0 0.0
    %5465 = vmatpush1.msra.mxu0 0.0
    %5466 = vmatprep.subr.mxu0 0.0
    %5467 = vmatpush1.msra.mxu0 0.0
    %5468 = vmatprep.subr.mxu0 0.0
    %5469 = vmatpush1.msra.mxu0 0.0
    %5470 = vmatprep.subr.mxu0 0.0
    %5471 = vmatpush1.msra.mxu0 0.0
    %5472 = vmatprep.subr.mxu0 0.0
    %5473 = vmatpush1.msra.mxu0 0.0
    %5474 = vmatprep.subr.mxu0 0.0
    %5475 = vmatpush1.msra.mxu0 0.0
    %5476 = vmatprep.subr.mxu0 0.0
    %5477 = vmatpush1.msra.mxu0 0.0
    %5478 = vmatprep.subr.mxu0 0.0
    %5479 = vmatpush1.msra.mxu0 0.0
    %5480 = vmatprep.subr.mxu0 0.0
    %5481 = vmatpush1.msra.mxu0 0.0
    %5482 = vmatprep.subr.mxu0 0.0
    %5483 = vmatpush1.msra.mxu0 0.0
    %5484 = vmatprep.subr.mxu0 0.0
    %5485 = vmatpush1.msra.mxu0 0.0
    %5486 = vmatprep.subr.mxu0 0.0
    %5487 = vmatpush1.msra.mxu0 0.0
    %5488 = vmatprep.subr.mxu0 0.0
    %5489 = vmatpush1.msra.mxu0 0.0
    %5490 = vmatprep.subr.mxu0 0.0
    %5491 = vmatpush1.msra.mxu0 0.0
    %5492 = vmatprep.subr.mxu0 0.0
    %5493 = vmatpush1.msra.mxu0 0.0
    %5494 = vmatprep.mubr.f32.mxu0 0.0
    %5495 = vmatmul.mubr.f32.gmra.mrb[0].mxu0 %v5428
    %v5496 = vpop.f32.mrb[0].mxu0
    %v5497 = vadd.f32 0.0, %v5496
    %v5498 = vpop.f32.mrb[0].mxu0
    %5499 = vdwg.mxu0
    %v5501 = vsel %vm611, %v5497, 0
    %5503 = vmatprep.subr.mxu0 0.0
    %5504 = vmatpush1.msra.mxu0 %v3585
    %5505 = vmatprep.subr.mxu0 0.0
    %5506 = vmatpush1.msra.mxu0 0.0
    %5507 = vmatprep.subr.mxu0 0.0
    %5508 = vmatpush1.msra.mxu0 0.0
    %5509 = vmatprep.subr.mxu0 0.0
    %5510 = vmatpush1.msra.mxu0 0.0
    %5511 = vmatprep.subr.mxu0 0.0
    %5512 = vmatpush1.msra.mxu0 0.0
    %5513 = vmatprep.subr.mxu0 0.0
    %5514 = vmatpush1.msra.mxu0 0.0
    %5515 = vmatprep.subr.mxu0 0.0
    %5516 = vmatpush1.msra.mxu0 0.0
    %5517 = vmatprep.subr.mxu0 0.0
    %5518 = vmatpush1.msra.mxu0 0.0
    %5519 = vmatprep.subr.mxu0 0.0
    %5520 = vmatpush1.msra.mxu0 0.0
    %5521 = vmatprep.subr.mxu0 0.0
    %5522 = vmatpush1.msra.mxu0 0.0
    %5523 = vmatprep.subr.mxu0 0.0
    %5524 = vmatpush1.msra.mxu0 0.0
    %5525 = vmatprep.subr.mxu0 0.0
    %5526 = vmatpush1.msra.mxu0 0.0
    %5527 = vmatprep.subr.mxu0 0.0
    %5528 = vmatpush1.msra.mxu0 0.0
    %5529 = vmatprep.subr.mxu0 0.0
    %5530 = vmatpush1.msra.mxu0 0.0
    %5531 = vmatprep.subr.mxu0 0.0
    %5532 = vmatpush1.msra.mxu0 0.0
    %5533 = vmatprep.subr.mxu0 0.0
    %5534 = vmatpush1.msra.mxu0 0.0
    %5535 = vmatprep.subr.mxu0 0.0
    %5536 = vmatpush1.msra.mxu0 0.0
    %5537 = vmatprep.subr.mxu0 0.0
    %5538 = vmatpush1.msra.mxu0 0.0
    %5539 = vmatprep.subr.mxu0 0.0
    %5540 = vmatpush1.msra.mxu0 0.0
    %5541 = vmatprep.subr.mxu0 0.0
    %5542 = vmatpush1.msra.mxu0 0.0
    %5543 = vmatprep.subr.mxu0 0.0
    %5544 = vmatpush1.msra.mxu0 0.0
    %5545 = vmatprep.subr.mxu0 0.0
    %5546 = vmatpush1.msra.mxu0 0.0
    %5547 = vmatprep.subr.mxu0 0.0
    %5548 = vmatpush1.msra.mxu0 0.0
    %5549 = vmatprep.subr.mxu0 0.0
    %5550 = vmatpush1.msra.mxu0 0.0
    %5551 = vmatprep.subr.mxu0 0.0
    %5552 = vmatpush1.msra.mxu0 0.0
    %5553 = vmatprep.subr.mxu0 0.0
    %5554 = vmatpush1.msra.mxu0 0.0
    %5555 = vmatprep.subr.mxu0 0.0
    %5556 = vmatpush1.msra.mxu0 0.0
    %5557 = vmatprep.subr.mxu0 0.0
    %5558 = vmatpush1.msra.mxu0 0.0
    %5559 = vmatprep.subr.mxu0 0.0
    %5560 = vmatpush1.msra.mxu0 0.0
    %5561 = vmatprep.subr.mxu0 0.0
    %5562 = vmatpush1.msra.mxu0 0.0
    %5563 = vmatprep.subr.mxu0 0.0
    %5564 = vmatpush1.msra.mxu0 0.0
    %5565 = vmatprep.subr.mxu0 0.0
    %5566 = vmatpush1.msra.mxu0 0.0
    %5567 = vmatprep.mubr.f32.mxu0 0.0
    %5568 = vmatmul.mubr.f32.gmra.mrb[0].mxu0 %v5501
    %v5569 = vpop.f32.mrb[0].mxu0
    %v5570 = vadd.f32 0.0, %v5569
    %v5571 = vpop.f32.mrb[0].mxu0
    %5572 = vdwg.mxu0
    %v5573 = vadd.f32 %v5325, %v5570
    %5574 = vrot.lane.b32.xlu0 %v4751, 104
    %v5575 = vpop.permute.xlu0 %5574
    %5576 = vrot.lane.b32.xlu0 %v4833, 104
    %v5577 = vpop.permute.xlu0 %5576
    %5578 = vrot.lane.b32.xlu0 %v4838, 104
    %v5579 = vpop.permute.xlu0 %5578
    %v5580 = vsel %vm611, %v5575, 0
    %v5582 = vsel %vm611, %v5577, 0
    %v5584 = vsel %vm611, %v5579, 0
    %5586 = vmatprep.subr.mxu0 0.0
    %5587 = vmatpush1.xpose.msra.mxu0 %v5582
    %5588 = vmatprep.subr.mxu0 0.0
    %5589 = vmatpush1.xpose.msra.mxu0 %v5584
    %5590 = vmatprep.subr.mxu0 0.0
    %5591 = vmatpush1.xpose.msra.mxu0 0.0
    %5592 = vmatprep.subr.mxu0 0.0
    %5593 = vmatpush1.xpose.msra.mxu0 0.0
    %5594 = vmatprep.subr.mxu0 0.0
    %5595 = vmatpush1.xpose.msra.mxu0 0.0
    %5596 = vmatprep.subr.mxu0 0.0
    %5597 = vmatpush1.xpose.msra.mxu0 0.0
    %5598 = vmatprep.subr.mxu0 0.0
    %5599 = vmatpush1.xpose.msra.mxu0 0.0
    %5600 = vmatprep.subr.mxu0 0.0
    %5601 = vmatpush1.xpose.msra.mxu0 0.0
    %5602 = vmatprep.subr.mxu0 0.0
    %5603 = vmatpush1.xpose.msra.mxu0 0.0
    %5604 = vmatprep.subr.mxu0 0.0
    %5605 = vmatpush1.xpose.msra.mxu0 0.0
    %5606 = vmatprep.subr.mxu0 0.0
    %5607 = vmatpush1.xpose.msra.mxu0 0.0
    %5608 = vmatprep.subr.mxu0 0.0
    %5609 = vmatpush1.xpose.msra.mxu0 0.0
    %5610 = vmatprep.subr.mxu0 0.0
    %5611 = vmatpush1.xpose.msra.mxu0 0.0
    %5612 = vmatprep.subr.mxu0 0.0
    %5613 = vmatpush1.xpose.msra.mxu0 0.0
    %5614 = vmatprep.subr.mxu0 0.0
    %5615 = vmatpush1.xpose.msra.mxu0 0.0
    %5616 = vmatprep.subr.mxu0 0.0
    %5617 = vmatpush1.xpose.msra.mxu0 0.0
    %5618 = vmatprep.subr.mxu0 0.0
    %5619 = vmatpush1.xpose.msra.mxu0 0.0
    %5620 = vmatprep.subr.mxu0 0.0
    %5621 = vmatpush1.xpose.msra.mxu0 0.0
    %5622 = vmatprep.subr.mxu0 0.0
    %5623 = vmatpush1.xpose.msra.mxu0 0.0
    %5624 = vmatprep.subr.mxu0 0.0
    %5625 = vmatpush1.xpose.msra.mxu0 0.0
    %5626 = vmatprep.subr.mxu0 0.0
    %5627 = vmatpush1.xpose.msra.mxu0 0.0
    %5628 = vmatprep.subr.mxu0 0.0
    %5629 = vmatpush1.xpose.msra.mxu0 0.0
    %5630 = vmatprep.subr.mxu0 0.0
    %5631 = vmatpush1.xpose.msra.mxu0 0.0
    %5632 = vmatprep.subr.mxu0 0.0
    %5633 = vmatpush1.xpose.msra.mxu0 0.0
    %5634 = vmatprep.subr.mxu0 0.0
    %5635 = vmatpush1.xpose.msra.mxu0 0.0
    %5636 = vmatprep.subr.mxu0 0.0
    %5637 = vmatpush1.xpose.msra.mxu0 0.0
    %5638 = vmatprep.subr.mxu0 0.0
    %5639 = vmatpush1.xpose.msra.mxu0 0.0
    %5640 = vmatprep.subr.mxu0 0.0
    %5641 = vmatpush1.xpose.msra.mxu0 0.0
    %5642 = vmatprep.subr.mxu0 0.0
    %5643 = vmatpush1.xpose.msra.mxu0 0.0
    %5644 = vmatprep.subr.mxu0 0.0
    %5645 = vmatpush1.xpose.msra.mxu0 0.0
    %5646 = vmatprep.subr.mxu0 0.0
    %5647 = vmatpush1.xpose.msra.mxu0 0.0
    %5648 = vmatprep.subr.mxu0 0.0
    %5649 = vmatpush1.xpose.msra.mxu0 0.0
    %5650 = vmatprep.mubr.f32.mxu0 0.0
    %5651 = vmatmul.mubr.f32.gmra.mrb[0].mxu0 %v5580
    %v5652 = vpop.f32.mrb[0].mxu0
    %v5653 = vadd.f32 %v388, %v5652
    %v5654 = vpop.f32.mrb[0].mxu0
    %5655 = vdwg.mxu0
    %v5656 = vsel %vm695, %v5653, -inf
    %5657 = vmax.xlane.f32.xlu0 %v5656
    %v5658 = vpop.xlane.xlu0 %5657
    %v5659 = vsub.f32 %v5653, %v5658
    %v5660 = vmul.f32 %v5659, 1.442695
    %v5661 = vpow.pop %v5660
    %v5662 = vsel %vm695, %v5661, 0.0
    %5663 = vadd.xlane.f32.xlu0 %v5662
    %v5664 = vpop.xlane.xlu0 %5663
    %v5665 = vrcp.pop %v5664
    %v5666 = vmul.f32 %v5661, %v5665
    %5667 = vrot.lane.b32.xlu0 %v4833, 72
    %v5668 = vpop.permute.xlu0 %5667
    %5669 = vrot.lane.b32.xlu0 %v4838, 72
    %v5670 = vpop.permute.xlu0 %5669
    %v5674 = vsel %vm695, %v5666, 0
    %5676 = vmatprep.subr.mxu0 0.0
    %5677 = vmatpush1.msra.mxu0 %v5668
    %5678 = vmatprep.subr.mxu0 0.0
    %5679 = vmatpush1.msra.mxu0 %v5670
    %5680 = vmatprep.subr.mxu0 0.0
    %5681 = vmatpush1.msra.mxu0 0.0
    %5682 = vmatprep.subr.mxu0 0.0
    %5683 = vmatpush1.msra.mxu0 0.0
    %5684 = vmatprep.subr.mxu0 0.0
    %5685 = vmatpush1.msra.mxu0 0.0
    %5686 = vmatprep.subr.mxu0 0.0
    %5687 = vmatpush1.msra.mxu0 0.0
    %5688 = vmatprep.subr.mxu0 0.0
    %5689 = vmatpush1.msra.mxu0 0.0
    %5690 = vmatprep.subr.mxu0 0.0
    %5691 = vmatpush1.msra.mxu0 0.0
    %5692 = vmatprep.subr.mxu0 0.0
    %5693 = vmatpush1.msra.mxu0 0.0
    %5694 = vmatprep.subr.mxu0 0.0
    %5695 = vmatpush1.msra.mxu0 0.0
    %5696 = vmatprep.subr.mxu0 0.0
    %5697 = vmatpush1.msra.mxu0 0.0
    %5698 = vmatprep.subr.mxu0 0.0
    %5699 = vmatpush1.msra.mxu0 0.0
    %5700 = vmatprep.subr.mxu0 0.0
    %5701 = vmatpush1.msra.mxu0 0.0
    %5702 = vmatprep.subr.mxu0 0.0
    %5703 = vmatpush1.msra.mxu0 0.0
    %5704 = vmatprep.subr.mxu0 0.0
    %5705 = vmatpush1.msra.mxu0 0.0
    %5706 = vmatprep.subr.mxu0 0.0
    %5707 = vmatpush1.msra.mxu0 0.0
    %5708 = vmatprep.subr.mxu0 0.0
    %5709 = vmatpush1.msra.mxu0 0.0
    %5710 = vmatprep.subr.mxu0 0.0
    %5711 = vmatpush1.msra.mxu0 0.0
    %5712 = vmatprep.subr.mxu0 0.0
    %5713 = vmatpush1.msra.mxu0 0.0
    %5714 = vmatprep.subr.mxu0 0.0
    %5715 = vmatpush1.msra.mxu0 0.0
    %5716 = vmatprep.subr.mxu0 0.0
    %5717 = vmatpush1.msra.mxu0 0.0
    %5718 = vmatprep.subr.mxu0 0.0
    %5719 = vmatpush1.msra.mxu0 0.0
    %5720 = vmatprep.subr.mxu0 0.0
    %5721 = vmatpush1.msra.mxu0 0.0
    %5722 = vmatprep.subr.mxu0 0.0
    %5723 = vmatpush1.msra.mxu0 0.0
    %5724 = vmatprep.subr.mxu0 0.0
    %5725 = vmatpush1.msra.mxu0 0.0
    %5726 = vmatprep.subr.mxu0 0.0
    %5727 = vmatpush1.msra.mxu0 0.0
    %5728 = vmatprep.subr.mxu0 0.0
    %5729 = vmatpush1.msra.mxu0 0.0
    %5730 = vmatprep.subr.mxu0 0.0
    %5731 = vmatpush1.msra.mxu0 0.0
    %5732 = vmatprep.subr.mxu0 0.0
    %5733 = vmatpush1.msra.mxu0 0.0
    %5734 = vmatprep.subr.mxu0 0.0
    %5735 = vmatpush1.msra.mxu0 0.0
    %5736 = vmatprep.subr.mxu0 0.0
    %5737 = vmatpush1.msra.mxu0 0.0
    %5738 = vmatprep.subr.mxu0 0.0
    %5739 = vmatpush1.msra.mxu0 0.0
    %5740 = vmatprep.mubr.f32.mxu0 0.0
    %5741 = vmatmul.mubr.f32.gmra.mrb[0].mxu0 %v5674
    %v5742 = vpop.f32.mrb[0].mxu0
    %v5743 = vadd.f32 0.0, %v5742
    %v5744 = vpop.f32.mrb[0].mxu0
    %5745 = vdwg.mxu0
    %v5747 = vsel %vm611, %v5743, 0
    %5749 = vmatprep.subr.mxu0 0.0
    %5750 = vmatpush1.msra.mxu0 %v3586
    %5751 = vmatprep.subr.mxu0 0.0
    %5752 = vmatpush1.msra.mxu0 0.0
    %5753 = vmatprep.subr.mxu0 0.0
    %5754 = vmatpush1.msra.mxu0 0.0
    %5755 = vmatprep.subr.mxu0 0.0
    %5756 = vmatpush1.msra.mxu0 0.0
    %5757 = vmatprep.subr.mxu0 0.0
    %5758 = vmatpush1.msra.mxu0 0.0
    %5759 = vmatprep.subr.mxu0 0.0
    %5760 = vmatpush1.msra.mxu0 0.0
    %5761 = vmatprep.subr.mxu0 0.0
    %5762 = vmatpush1.msra.mxu0 0.0
    %5763 = vmatprep.subr.mxu0 0.0
    %5764 = vmatpush1.msra.mxu0 0.0
    %5765 = vmatprep.subr.mxu0 0.0
    %5766 = vmatpush1.msra.mxu0 0.0
    %5767 = vmatprep.subr.mxu0 0.0
    %5768 = vmatpush1.msra.mxu0 0.0
    %5769 = vmatprep.subr.mxu0 0.0
    %5770 = vmatpush1.msra.mxu0 0.0
    %5771 = vmatprep.subr.mxu0 0.0
    %5772 = vmatpush1.msra.mxu0 0.0
    %5773 = vmatprep.subr.mxu0 0.0
    %5774 = vmatpush1.msra.mxu0 0.0
    %5775 = vmatprep.subr.mxu0 0.0
    %5776 = vmatpush1.msra.mxu0 0.0
    %5777 = vmatprep.subr.mxu0 0.0
    %5778 = vmatpush1.msra.mxu0 0.0
    %5779 = vmatprep.subr.mxu0 0.0
    %5780 = vmatpush1.msra.mxu0 0.0
    %5781 = vmatprep.subr.mxu0 0.0
    %5782 = vmatpush1.msra.mxu0 0.0
    %5783 = vmatprep.subr.mxu0 0.0
    %5784 = vmatpush1.msra.mxu0 0.0
    %5785 = vmatprep.subr.mxu0 0.0
    %5786 = vmatpush1.msra.mxu0 0.0
    %5787 = vmatprep.subr.mxu0 0.0
    %5788 = vmatpush1.msra.mxu0 0.0
    %5789 = vmatprep.subr.mxu0 0.0
    %5790 = vmatpush1.msra.mxu0 0.0
    %5791 = vmatprep.subr.mxu0 0.0
    %5792 = vmatpush1.msra.mxu0 0.0
    %5793 = vmatprep.subr.mxu0 0.0
    %5794 = vmatpush1.msra.mxu0 0.0
    %5795 = vmatprep.subr.mxu0 0.0
    %5796 = vmatpush1.msra.mxu0 0.0
    %5797 = vmatprep.subr.mxu0 0.0
    %5798 = vmatpush1.msra.mxu0 0.0
    %5799 = vmatprep.subr.mxu0 0.0
    %5800 = vmatpush1.msra.mxu0 0.0
    %5801 = vmatprep.subr.mxu0 0.0
    %5802 = vmatpush1.msra.mxu0 0.0
    %5803 = vmatprep.subr.mxu0 0.0
    %5804 = vmatpush1.msra.mxu0 0.0
    %5805 = vmatprep.subr.mxu0 0.0
    %5806 = vmatpush1.msra.mxu0 0.0
    %5807 = vmatprep.subr.mxu0 0.0
    %5808 = vmatpush1.msra.mxu0 0.0
    %5809 = vmatprep.subr.mxu0 0.0
    %5810 = vmatpush1.msra.mxu0 0.0
    %5811 = vmatprep.subr.mxu0 0.0
    %5812 = vmatpush1.msra.mxu0 0.0
    %5813 = vmatprep.mubr.f32.mxu0 0.0
    %5814 = vmatmul.mubr.f32.gmra.mrb[0].mxu0 %v5747
    %v5815 = vpop.f32.mrb[0].mxu0
    %v5816 = vadd.f32 0.0, %v5815
    %v5817 = vpop.f32.mrb[0].mxu0
    %5818 = vdwg.mxu0
    %v5819 = vadd.f32 %v5573, %v5816
    %v5821 = vlaneseq
    %v5822 = vshrl.u32 %v5821, 7
    %v5823 = vsub.s32 0, %v5822
    %v5824 = vrot.slane %v3587, %v5823
    %v5826 = vadd.f32 %v5819, %v5824
    %v5827 = vadd.f32 %v4674, %v5826
    %v5828 = vsel %vm523, %v5827, 0.0
    %5829 = vadd.xlane.f32.xlu0 %v5828
    %v5830 = vpop.xlane.xlu0 %5829
    %v5831 = vmul.f32 %v5830, %v1749
    %v5832 = vsub.f32 %v5827, %v5831
    %v5833 = vmul.f32 %v5832, %v5832
    %v5834 = vsel %vm523, %v5833, 0.0
    %5835 = vadd.xlane.f32.xlu0 %v5834
    %v5836 = vpop.xlane.xlu0 %5835
    %v5837 = vmul.f32 %v5836, %v1749
    %v5838 = vadd.f32 %v5837, 1e-05
    %v5839 = vrsqrt.pop %v5838
    %v5840 = vmul.f32 %v5832, %v5839
    %v5842 = vlaneseq
    %v5843 = vshrl.u32 %v5842, 7
    %v5844 = vsub.s32 0, %v5843
    %v5845 = vrot.slane %v3604, %v5844
    %v5847 = vmul.f32 %v5840, %v5845
    %v5849 = vlaneseq
    %v5850 = vshrl.u32 %v5849, 7
    %v5851 = vsub.s32 0, %v5850
    %v5852 = vrot.slane %v3605, %v5851
    %v5854 = vadd.f32 %v5847, %v5852
    %v5856 = vlaneseq
    %v5857 = vshrl.u32 %v5856, 7
    %v5858 = vsub.s32 0, %v5857
    %v5859 = vrot.slane %v3592, %v5858
    %v5862 = vsel %vm523, %v5854, 0
    %5864 = vmatprep.subr.mxu0 0.0
    %5865 = vmatpush1.msra.mxu0 %v3588
    %5866 = vmatprep.subr.mxu0 0.0
    %5867 = vmatpush1.msra.mxu0 %v3589
    %5868 = vmatprep.subr.mxu0 0.0
    %5869 = vmatpush1.msra.mxu0 %v3590
    %5870 = vmatprep.subr.mxu0 0.0
    %5871 = vmatpush1.msra.mxu0 %v3591
    %5872 = vmatprep.subr.mxu0 0.0
    %5873 = vmatpush1.msra.mxu0 0.0
    %5874 = vmatprep.subr.mxu0 0.0
    %5875 = vmatpush1.msra.mxu0 0.0
    %5876 = vmatprep.subr.mxu0 0.0
    %5877 = vmatpush1.msra.mxu0 0.0
    %5878 = vmatprep.subr.mxu0 0.0
    %5879 = vmatpush1.msra.mxu0 0.0
    %5880 = vmatprep.subr.mxu0 0.0
    %5881 = vmatpush1.msra.mxu0 0.0
    %5882 = vmatprep.subr.mxu0 0.0
    %5883 = vmatpush1.msra.mxu0 0.0
    %5884 = vmatprep.subr.mxu0 0.0
    %5885 = vmatpush1.msra.mxu0 0.0
    %5886 = vmatprep.subr.mxu0 0.0
    %5887 = vmatpush1.msra.mxu0 0.0
    %5888 = vmatprep.subr.mxu0 0.0
    %5889 = vmatpush1.msra.mxu0 0.0
    %5890 = vmatprep.subr.mxu0 0.0
    %5891 = vmatpush1.msra.mxu0 0.0
    %5892 = vmatprep.subr.mxu0 0.0
    %5893 = vmatpush1.msra.mxu0 0.0
    %5894 = vmatprep.subr.mxu0 0.0
    %5895 = vmatpush1.msra.mxu0 0.0
    %5896 = vmatprep.subr.mxu0 0.0
    %5897 = vmatpush1.msra.mxu0 0.0
    %5898 = vmatprep.subr.mxu0 0.0
    %5899 = vmatpush1.msra.mxu0 0.0
    %5900 = vmatprep.subr.mxu0 0.0
    %5901 = vmatpush1.msra.mxu0 0.0
    %5902 = vmatprep.subr.mxu0 0.0
    %5903 = vmatpush1.msra.mxu0 0.0
    %5904 = vmatprep.subr.mxu0 0.0
    %5905 = vmatpush1.msra.mxu0 0.0
    %5906 = vmatprep.subr.mxu0 0.0
    %5907 = vmatpush1.msra.mxu0 0.0
    %5908 = vmatprep.subr.mxu0 0.0
    %5909 = vmatpush1.msra.mxu0 0.0
    %5910 = vmatprep.subr.mxu0 0.0
    %5911 = vmatpush1.msra.mxu0 0.0
    %5912 = vmatprep.subr.mxu0 0.0
    %5913 = vmatpush1.msra.mxu0 0.0
    %5914 = vmatprep.subr.mxu0 0.0
    %5915 = vmatpush1.msra.mxu0 0.0
    %5916 = vmatprep.subr.mxu0 0.0
    %5917 = vmatpush1.msra.mxu0 0.0
    %5918 = vmatprep.subr.mxu0 0.0
    %5919 = vmatpush1.msra.mxu0 0.0
    %5920 = vmatprep.subr.mxu0 0.0
    %5921 = vmatpush1.msra.mxu0 0.0
    %5922 = vmatprep.subr.mxu0 0.0
    %5923 = vmatpush1.msra.mxu0 0.0
    %5924 = vmatprep.subr.mxu0 0.0
    %5925 = vmatpush1.msra.mxu0 0.0
    %5926 = vmatprep.subr.mxu0 0.0
    %5927 = vmatpush1.msra.mxu0 0.0
    %5928 = vmatprep.mubr.f32.mxu0 0.0
    %5929 = vmatmul.mubr.f32.gmra.mrb[0].mxu0 %v5862
    %v5930 = vpop.f32.mrb[0].mxu0
    %v5931 = vadd.f32 %v5859, %v5930
    %v5932 = vpop.f32.mrb[0].mxu0
    %5933 = vdwg.mxu0
    %v5934 = vmax.f32 %v5931, 0.0
    %v5936 = vlaneseq
    %v5937 = vshrl.u32 %v5936, 7
    %v5938 = vsub.s32 0, %v5937
    %v5939 = vrot.slane %v3601, %v5938
    %v5942 = vsel %vm1881, %v5934, 0
    %5944 = vmatprep.subr.mxu0 0.0
    %5945 = vmatpush1.msra.mxu0 %v3593
    %5946 = vmatprep.subr.mxu0 0.0
    %5947 = vmatpush1.msra.mxu0 %v3594
    %5948 = vmatprep.subr.mxu0 0.0
    %5949 = vmatpush1.msra.mxu0 %v3595
    %5950 = vmatprep.subr.mxu0 0.0
    %5951 = vmatpush1.msra.mxu0 %v3596
    %5952 = vmatprep.subr.mxu0 0.0
    %5953 = vmatpush1.msra.mxu0 %v3597
    %5954 = vmatprep.subr.mxu0 0.0
    %5955 = vmatpush1.msra.mxu0 %v3598
    %5956 = vmatprep.subr.mxu0 0.0
    %5957 = vmatpush1.msra.mxu0 %v3599
    %5958 = vmatprep.subr.mxu0 0.0
    %5959 = vmatpush1.msra.mxu0 %v3600
    %5960 = vmatprep.subr.mxu0 0.0
    %5961 = vmatpush1.msra.mxu0 0.0
    %5962 = vmatprep.subr.mxu0 0.0
    %5963 = vmatpush1.msra.mxu0 0.0
    %5964 = vmatprep.subr.mxu0 0.0
    %5965 = vmatpush1.msra.mxu0 0.0
    %5966 = vmatprep.subr.mxu0 0.0
    %5967 = vmatpush1.msra.mxu0 0.0
    %5968 = vmatprep.subr.mxu0 0.0
    %5969 = vmatpush1.msra.mxu0 0.0
    %5970 = vmatprep.subr.mxu0 0.0
    %5971 = vmatpush1.msra.mxu0 0.0
    %5972 = vmatprep.subr.mxu0 0.0
    %5973 = vmatpush1.msra.mxu0 0.0
    %5974 = vmatprep.subr.mxu0 0.0
    %5975 = vmatpush1.msra.mxu0 0.0
    %5976 = vmatprep.subr.mxu0 0.0
    %5977 = vmatpush1.msra.mxu0 0.0
    %5978 = vmatprep.subr.mxu0 0.0
    %5979 = vmatpush1.msra.mxu0 0.0
    %5980 = vmatprep.subr.mxu0 0.0
    %5981 = vmatpush1.msra.mxu0 0.0
    %5982 = vmatprep.subr.mxu0 0.0
    %5983 = vmatpush1.msra.mxu0 0.0
    %5984 = vmatprep.subr.mxu0 0.0
    %5985 = vmatpush1.msra.mxu0 0.0
    %5986 = vmatprep.subr.mxu0 0.0
    %5987 = vmatpush1.msra.mxu0 0.0
    %5988 = vmatprep.subr.mxu0 0.0
    %5989 = vmatpush1.msra.mxu0 0.0
    %5990 = vmatprep.subr.mxu0 0.0
    %5991 = vmatpush1.msra.mxu0 0.0
    %5992 = vmatprep.subr.mxu0 0.0
    %5993 = vmatpush1.msra.mxu0 0.0
    %5994 = vmatprep.subr.mxu0 0.0
    %5995 = vmatpush1.msra.mxu0 0.0
    %5996 = vmatprep.subr.mxu0 0.0
    %5997 = vmatpush1.msra.mxu0 0.0
    %5998 = vmatprep.subr.mxu0 0.0
    %5999 = vmatpush1.msra.mxu0 0.0
    %6000 = vmatprep.subr.mxu0 0.0
    %6001 = vmatpush1.msra.mxu0 0.0
    %6002 = vmatprep.subr.mxu0 0.0
    %6003 = vmatpush1.msra.mxu0 0.0
    %6004 = vmatprep.subr.mxu0 0.0
    %6005 = vmatpush1.msra.mxu0 0.0
    %6006 = vmatprep.subr.mxu0 0.0
    %6007 = vmatpush1.msra.mxu0 0.0
    %6008 = vmatprep.mubr.f32.mxu0 0.0
    %6009 = vmatmul.mubr.f32.gmra.mrb[0].mxu0 %v5942
    %v6010 = vpop.f32.mrb[0].mxu0
    %v6011 = vadd.f32 %v5939, %v6010
    %v6012 = vpop.f32.mrb[0].mxu0
    %6013 = vdwg.mxu0
    %v6014 = vadd.f32 %v5854, %v6011
    %v6015 = vsel %vm523, %v6014, 0.0
    %6016 = vadd.xlane.f32.xlu0 %v6015
    %v6017 = vpop.xlane.xlu0 %6016
    %v6018 = vmul.f32 %v6017, %v1749
    %v6019 = vsub.f32 %v6014, %v6018
    %v6020 = vmul.f32 %v6019, %v6019
    %v6021 = vsel %vm523, %v6020, 0.0
    %6022 = vadd.xlane.f32.xlu0 %v6021
    %v6023 = vpop.xlane.xlu0 %6022
    %v6024 = vmul.f32 %v6023, %v1749
    %v6025 = vadd.f32 %v6024, 1e-05
    %v6026 = vrsqrt.pop %v6025
    %v6027 = vmul.f32 %v6019, %v6026
    %v6029 = vlaneseq
    %v6030 = vshrl.u32 %v6029, 7
    %v6031 = vsub.s32 0, %v6030
    %v6032 = vrot.slane %v3606, %v6031
    %v6034 = vmul.f32 %v6027, %v6032
    %v6036 = vlaneseq
    %v6037 = vshrl.u32 %v6036, 7
    %v6038 = vsub.s32 0, %v6037
    %v6039 = vrot.slane %v3607, %v6038
    %v6041 = vadd.f32 %v6034, %v6039
    %v6042 = vld [vmem:[%s117] sm:$0xff]
    %v6043 = vld [vmem:[%s117 + $0x8] sm:$0xff]
    %v6044 = vld [vmem:[%s117 + $0x10] sm:$0xff]
    %v6045 = vld [vmem:[%s117 + $0x18] sm:$0xff]
    %v6046 = vld [vmem:[%s119] sm:$0x1]
    %v6047 = vld [vmem:[%s121] sm:$0xff]
    %v6048 = vld [vmem:[%s121 + $0x8] sm:$0xff]
    %v6049 = vld [vmem:[%s121 + $0x10] sm:$0xff]
    %v6050 = vld [vmem:[%s121 + $0x18] sm:$0xff]
    %v6051 = vld [vmem:[%s123] sm:$0x1]
    %v6052 = vld [vmem:[%s125] sm:$0xff]
    %v6053 = vld [vmem:[%s125 + $0x8] sm:$0xff]
    %v6054 = vld [vmem:[%s125 + $0x10] sm:$0xff]
    %v6055 = vld [vmem:[%s125 + $0x18] sm:$0xff]
    %v6056 = vld [vmem:[%s127] sm:$0x1]
    %v6057 = vld [vmem:[%s129] sm:$0xff]
    %v6058 = vld [vmem:[%s129 + $0x8] sm:$0xff]
    %v6059 = vld [vmem:[%s129 + $0x10] sm:$0xff]
    %v6060 = vld [vmem:[%s129 + $0x18] sm:$0xff]
    %v6061 = vld [vmem:[%s131] sm:$0x1]
    %v6062 = vld [vmem:[%s133] sm:$0xff]
    %v6063 = vld [vmem:[%s133 + $0x8] sm:$0xff]
    %v6064 = vld [vmem:[%s133 + $0x10] sm:$0xff]
    %v6065 = vld [vmem:[%s133 + $0x18] sm:$0xff]
    %v6066 = vld [vmem:[%s135] sm:$0x1]
    %v6067 = vld [vmem:[%s137] sm:$0xff]
    %v6068 = vld [vmem:[%s137 + $0x8] sm:$0xff]
    %v6069 = vld [vmem:[%s137 + $0x10] sm:$0xff]
    %v6070 = vld [vmem:[%s137 + $0x18] sm:$0xff]
    %v6071 = vld [vmem:[%s139] sm:$0x1]
    %v6072 = vld [vmem:[%s141] sm:$0xff]
    %v6073 = vld [vmem:[%s141 + $0x8] sm:$0xff]
    %v6074 = vld [vmem:[%s141 + $0x10] sm:$0xff]
    %v6075 = vld [vmem:[%s141 + $0x18] sm:$0xff]
    %v6076 = vld [vmem:[%s141 + $0x20] sm:$0xff]
    %v6077 = vld [vmem:[%s141 + $0x28] sm:$0xff]
    %v6078 = vld [vmem:[%s141 + $0x30] sm:$0xff]
    %v6079 = vld [vmem:[%s141 + $0x38] sm:$0xff]
    %v6080 = vld [vmem:[%s143] sm:$0x1]
    %v6081 = vld [vmem:[%s145] sm:$0x1]
    %v6082 = vld [vmem:[#allocation3] sm:$0x1]
    %v6083 = vld [vmem:[#allocation5] sm:$0x1]
    %v6084 = vld [vmem:[#allocation7] sm:$0x1]
    %v6085 = vld [vmem:[#allocation8] sm:$0x1]
    %v6086 = vld [vmem:[#allocation10] sm:$0x1]
    %v6088 = vlaneseq
    %v6089 = vshrl.u32 %v6088, 7
    %v6090 = vsub.s32 0, %v6089
    %v6091 = vrot.slane %v6046, %v6090
    %v6094 = vsel %vm523, %v6041, 0
    %6096 = vmatprep.subr.mxu0 0.0
    %6097 = vmatpush1.msra.mxu0 %v6042
    %6098 = vmatprep.subr.mxu0 0.0
    %6099 = vmatpush1.msra.mxu0 %v6043
    %6100 = vmatprep.subr.mxu0 0.0
    %6101 = vmatpush1.msra.mxu0 %v6044
    %6102 = vmatprep.subr.mxu0 0.0
    %6103 = vmatpush1.msra.mxu0 %v6045
    %6104 = vmatprep.subr.mxu0 0.0
    %6105 = vmatpush1.msra.mxu0 0.0
    %6106 = vmatprep.subr.mxu0 0.0
    %6107 = vmatpush1.msra.mxu0 0.0
    %6108 = vmatprep.subr.mxu0 0.0
    %6109 = vmatpush1.msra.mxu0 0.0
    %6110 = vmatprep.subr.mxu0 0.0
    %6111 = vmatpush1.msra.mxu0 0.0
    %6112 = vmatprep.subr.mxu0 0.0
    %6113 = vmatpush1.msra.mxu0 0.0
    %6114 = vmatprep.subr.mxu0 0.0
    %6115 = vmatpush1.msra.mxu0 0.0
    %6116 = vmatprep.subr.mxu0 0.0
    %6117 = vmatpush1.msra.mxu0 0.0
    %6118 = vmatprep.subr.mxu0 0.0
    %6119 = vmatpush1.msra.mxu0 0.0
    %6120 = vmatprep.subr.mxu0 0.0
    %6121 = vmatpush1.msra.mxu0 0.0
    %6122 = vmatprep.subr.mxu0 0.0
    %6123 = vmatpush1.msra.mxu0 0.0
    %6124 = vmatprep.subr.mxu0 0.0
    %6125 = vmatpush1.msra.mxu0 0.0
    %6126 = vmatprep.subr.mxu0 0.0
    %6127 = vmatpush1.msra.mxu0 0.0
    %6128 = vmatprep.subr.mxu0 0.0
    %6129 = vmatpush1.msra.mxu0 0.0
    %6130 = vmatprep.subr.mxu0 0.0
    %6131 = vmatpush1.msra.mxu0 0.0
    %6132 = vmatprep.subr.mxu0 0.0
    %6133 = vmatpush1.msra.mxu0 0.0
    %6134 = vmatprep.subr.mxu0 0.0
    %6135 = vmatpush1.msra.mxu0 0.0
    %6136 = vmatprep.subr.mxu0 0.0
    %6137 = vmatpush1.msra.mxu0 0.0
    %6138 = vmatprep.subr.mxu0 0.0
    %6139 = vmatpush1.msra.mxu0 0.0
    %6140 = vmatprep.subr.mxu0 0.0
    %6141 = vmatpush1.msra.mxu0 0.0
    %6142 = vmatprep.subr.mxu0 0.0
    %6143 = vmatpush1.msra.mxu0 0.0
    %6144 = vmatprep.subr.mxu0 0.0
    %6145 = vmatpush1.msra.mxu0 0.0
    %6146 = vmatprep.subr.mxu0 0.0
    %6147 = vmatpush1.msra.mxu0 0.0
    %6148 = vmatprep.subr.mxu0 0.0
    %6149 = vmatpush1.msra.mxu0 0.0
    %6150 = vmatprep.subr.mxu0 0.0
    %6151 = vmatpush1.msra.mxu0 0.0
    %6152 = vmatprep.subr.mxu0 0.0
    %6153 = vmatpush1.msra.mxu0 0.0
    %6154 = vmatprep.subr.mxu0 0.0
    %6155 = vmatpush1.msra.mxu0 0.0
    %6156 = vmatprep.subr.mxu0 0.0
    %6157 = vmatpush1.msra.mxu0 0.0
    %6158 = vmatprep.subr.mxu0 0.0
    %6159 = vmatpush1.msra.mxu0 0.0
    %6160 = vmatprep.mubr.f32.mxu0 0.0
    %6161 = vmatmul.mubr.f32.gmra.mrb[0].mxu0 %v6094
    %v6162 = vpop.f32.mrb[0].mxu0
    %v6163 = vadd.f32 %v6091, %v6162
    %v6164 = vpop.f32.mrb[0].mxu0
    %6165 = vdwg.mxu0
    %6167 = vrot.lane.b32.xlu0 %v6163, 96
    %v6168 = vpop.permute.xlu0 %6167
    %v6169 = vsel %vm611, %v6163, 0
    %v6171 = vsel %vm611, %v6168, 0
    %6173 = vmatprep.subr.mxu0 0.0
    %6174 = vmatpush1.xpose.msra.mxu0 %v6171
    %6175 = vmatprep.subr.mxu0 0.0
    %6176 = vmatpush1.xpose.msra.mxu0 0.0
    %6177 = vmatprep.subr.mxu0 0.0
    %6178 = vmatpush1.xpose.msra.mxu0 0.0
    %6179 = vmatprep.subr.mxu0 0.0
    %6180 = vmatpush1.xpose.msra.mxu0 0.0
    %6181 = vmatprep.subr.mxu0 0.0
    %6182 = vmatpush1.xpose.msra.mxu0 0.0
    %6183 = vmatprep.subr.mxu0 0.0
    %6184 = vmatpush1.xpose.msra.mxu0 0.0
    %6185 = vmatprep.subr.mxu0 0.0
    %6186 = vmatpush1.xpose.msra.mxu0 0.0
    %6187 = vmatprep.subr.mxu0 0.0
    %6188 = vmatpush1.xpose.msra.mxu0 0.0
    %6189 = vmatprep.subr.mxu0 0.0
    %6190 = vmatpush1.xpose.msra.mxu0 0.0
    %6191 = vmatprep.subr.mxu0 0.0
    %6192 = vmatpush1.xpose.msra.mxu0 0.0
    %6193 = vmatprep.subr.mxu0 0.0
    %6194 = vmatpush1.xpose.msra.mxu0 0.0
    %6195 = vmatprep.subr.mxu0 0.0
    %6196 = vmatpush1.xpose.msra.mxu0 0.0
    %6197 = vmatprep.subr.mxu0 0.0
    %6198 = vmatpush1.xpose.msra.mxu0 0.0
    %6199 = vmatprep.subr.mxu0 0.0
    %6200 = vmatpush1.xpose.msra.mxu0 0.0
    %6201 = vmatprep.subr.mxu0 0.0
    %6202 = vmatpush1.xpose.msra.mxu0 0.0
    %6203 = vmatprep.subr.mxu0 0.0
    %6204 = vmatpush1.xpose.msra.mxu0 0.0
    %6205 = vmatprep.subr.mxu0 0.0
    %6206 = vmatpush1.xpose.msra.mxu0 0.0
    %6207 = vmatprep.subr.mxu0 0.0
    %6208 = vmatpush1.xpose.msra.mxu0 0.0
    %6209 = vmatprep.subr.mxu0 0.0
    %6210 = vmatpush1.xpose.msra.mxu0 0.0
    %6211 = vmatprep.subr.mxu0 0.0
    %6212 = vmatpush1.xpose.msra.mxu0 0.0
    %6213 = vmatprep.subr.mxu0 0.0
    %6214 = vmatpush1.xpose.msra.mxu0 0.0
    %6215 = vmatprep.subr.mxu0 0.0
    %6216 = vmatpush1.xpose.msra.mxu0 0.0
    %6217 = vmatprep.subr.mxu0 0.0
    %6218 = vmatpush1.xpose.msra.mxu0 0.0
    %6219 = vmatprep.subr.mxu0 0.0
    %6220 = vmatpush1.xpose.msra.mxu0 0.0
    %6221 = vmatprep.subr.mxu0 0.0
    %6222 = vmatpush1.xpose.msra.mxu0 0.0
    %6223 = vmatprep.subr.mxu0 0.0
    %6224 = vmatpush1.xpose.msra.mxu0 0.0
    %6225 = vmatprep.subr.mxu0 0.0
    %6226 = vmatpush1.xpose.msra.mxu0 0.0
    %6227 = vmatprep.subr.mxu0 0.0
    %6228 = vmatpush1.xpose.msra.mxu0 0.0
    %6229 = vmatprep.subr.mxu0 0.0
    %6230 = vmatpush1.xpose.msra.mxu0 0.0
    %6231 = vmatprep.subr.mxu0 0.0
    %6232 = vmatpush1.xpose.msra.mxu0 0.0
    %6233 = vmatprep.subr.mxu0 0.0
    %6234 = vmatpush1.xpose.msra.mxu0 0.0
    %6235 = vmatprep.subr.mxu0 0.0
    %6236 = vmatpush1.xpose.msra.mxu0 0.0
    %6237 = vmatprep.mubr.f32.mxu0 0.0
    %6238 = vmatmul.mubr.f32.gmra.mrb[0].mxu0 %v6169
    %v6239 = vpop.f32.mrb[0].mxu0
    %v6240 = vadd.f32 %v387, %v6239
    %v6241 = vpop.f32.mrb[0].mxu0
    %6242 = vdwg.mxu0
    %v6243 = vsel %vm611, %v6240, -inf
    %6244 = vmax.xlane.f32.xlu0 %v6243
    %v6245 = vpop.xlane.xlu0 %6244
    %v6246 = vsub.f32 %v6240, %v6245
    %v6247 = vmul.f32 %v6246, 1.442695
    %v6248 = vpow.pop %v6247
    %v6249 = vsel %vm611, %v6248, 0.0
    %6250 = vadd.xlane.f32.xlu0 %v6249
    %v6251 = vpop.xlane.xlu0 %6250
    %v6252 = vrcp.pop %v6251
    %v6253 = vmul.f32 %v6248, %v6252
    %6254 = vrot.lane.b32.xlu0 %v6163, 64
    %v6255 = vpop.permute.xlu0 %6254
    %v6258 = vsel %vm611, %v6253, 0
    %6260 = vmatprep.subr.mxu0 0.0
    %6261 = vmatpush1.msra.mxu0 %v6255
    %6262 = vmatprep.subr.mxu0 0.0
    %6263 = vmatpush1.msra.mxu0 0.0
    %6264 = vmatprep.subr.mxu0 0.0
    %6265 = vmatpush1.msra.mxu0 0.0
    %6266 = vmatprep.subr.mxu0 0.0
    %6267 = vmatpush1.msra.mxu0 0.0
    %6268 = vmatprep.subr.mxu0 0.0
    %6269 = vmatpush1.msra.mxu0 0.0
    %6270 = vmatprep.subr.mxu0 0.0
    %6271 = vmatpush1.msra.mxu0 0.0
    %6272 = vmatprep.subr.mxu0 0.0
    %6273 = vmatpush1.msra.mxu0 0.0
    %6274 = vmatprep.subr.mxu0 0.0
    %6275 = vmatpush1.msra.mxu0 0.0
    %6276 = vmatprep.subr.mxu0 0.0
    %6277 = vmatpush1.msra.mxu0 0.0
    %6278 = vmatprep.subr.mxu0 0.0
    %6279 = vmatpush1.msra.mxu0 0.0
    %6280 = vmatprep.subr.mxu0 0.0
    %6281 = vmatpush1.msra.mxu0 0.0
    %6282 = vmatprep.subr.mxu0 0.0
    %6283 = vmatpush1.msra.mxu0 0.0
    %6284 = vmatprep.subr.mxu0 0.0
    %6285 = vmatpush1.msra.mxu0 0.0
    %6286 = vmatprep.subr.mxu0 0.0
    %6287 = vmatpush1.msra.mxu0 0.0
    %6288 = vmatprep.subr.mxu0 0.0
    %6289 = vmatpush1.msra.mxu0 0.0
    %6290 = vmatprep.subr.mxu0 0.0
    %6291 = vmatpush1.msra.mxu0 0.0
    %6292 = vmatprep.subr.mxu0 0.0
    %6293 = vmatpush1.msra.mxu0 0.0
    %6294 = vmatprep.subr.mxu0 0.0
    %6295 = vmatpush1.msra.mxu0 0.0
    %6296 = vmatprep.subr.mxu0 0.0
    %6297 = vmatpush1.msra.mxu0 0.0
    %6298 = vmatprep.subr.mxu0 0.0
    %6299 = vmatpush1.msra.mxu0 0.0
    %6300 = vmatprep.subr.mxu0 0.0
    %6301 = vmatpush1.msra.mxu0 0.0
    %6302 = vmatprep.subr.mxu0 0.0
    %6303 = vmatpush1.msra.mxu0 0.0
    %6304 = vmatprep.subr.mxu0 0.0
    %6305 = vmatpush1.msra.mxu0 0.0
    %6306 = vmatprep.subr.mxu0 0.0
    %6307 = vmatpush1.msra.mxu0 0.0
    %6308 = vmatprep.subr.mxu0 0.0
    %6309 = vmatpush1.msra.mxu0 0.0
    %6310 = vmatprep.subr.mxu0 0.0
    %6311 = vmatpush1.msra.mxu0 0.0
    %6312 = vmatprep.subr.mxu0 0.0
    %6313 = vmatpush1.msra.mxu0 0.0
    %6314 = vmatprep.subr.mxu0 0.0
    %6315 = vmatpush1.msra.mxu0 0.0
    %6316 = vmatprep.subr.mxu0 0.0
    %6317 = vmatpush1.msra.mxu0 0.0
    %6318 = vmatprep.subr.mxu0 0.0
    %6319 = vmatpush1.msra.mxu0 0.0
    %6320 = vmatprep.subr.mxu0 0.0
    %6321 = vmatpush1.msra.mxu0 0.0
    %6322 = vmatprep.subr.mxu0 0.0
    %6323 = vmatpush1.msra.mxu0 0.0
    %6324 = vmatprep.mubr.f32.mxu0 0.0
    %6325 = vmatmul.mubr.f32.gmra.mrb[0].mxu0 %v6258
    %v6326 = vpop.f32.mrb[0].mxu0
    %v6327 = vadd.f32 0.0, %v6326
    %v6328 = vpop.f32.mrb[0].mxu0
    %6329 = vdwg.mxu0
    %6330 = vrot.lane.b32.xlu0 %v6163, 120
    %v6331 = vpop.permute.xlu0 %6330
    %6332 = vrot.lane.b32.xlu0 %v6163, 88
    %v6333 = vpop.permute.xlu0 %6332
    %v6334 = vsel %vm611, %v6331, 0
    %v6336 = vsel %vm611, %v6333, 0
    %6338 = vmatprep.subr.mxu0 0.0
    %6339 = vmatpush1.xpose.msra.mxu0 %v6336
    %6340 = vmatprep.subr.mxu0 0.0
    %6341 = vmatpush1.xpose.msra.mxu0 0.0
    %6342 = vmatprep.subr.mxu0 0.0
    %6343 = vmatpush1.xpose.msra.mxu0 0.0
    %6344 = vmatprep.subr.mxu0 0.0
    %6345 = vmatpush1.xpose.msra.mxu0 0.0
    %6346 = vmatprep.subr.mxu0 0.0
    %6347 = vmatpush1.xpose.msra.mxu0 0.0
    %6348 = vmatprep.subr.mxu0 0.0
    %6349 = vmatpush1.xpose.msra.mxu0 0.0
    %6350 = vmatprep.subr.mxu0 0.0
    %6351 = vmatpush1.xpose.msra.mxu0 0.0
    %6352 = vmatprep.subr.mxu0 0.0
    %6353 = vmatpush1.xpose.msra.mxu0 0.0
    %6354 = vmatprep.subr.mxu0 0.0
    %6355 = vmatpush1.xpose.msra.mxu0 0.0
    %6356 = vmatprep.subr.mxu0 0.0
    %6357 = vmatpush1.xpose.msra.mxu0 0.0
    %6358 = vmatprep.subr.mxu0 0.0
    %6359 = vmatpush1.xpose.msra.mxu0 0.0
    %6360 = vmatprep.subr.mxu0 0.0
    %6361 = vmatpush1.xpose.msra.mxu0 0.0
    %6362 = vmatprep.subr.mxu0 0.0
    %6363 = vmatpush1.xpose.msra.mxu0 0.0
    %6364 = vmatprep.subr.mxu0 0.0
    %6365 = vmatpush1.xpose.msra.mxu0 0.0
    %6366 = vmatprep.subr.mxu0 0.0
    %6367 = vmatpush1.xpose.msra.mxu0 0.0
    %6368 = vmatprep.subr.mxu0 0.0
    %6369 = vmatpush1.xpose.msra.mxu0 0.0
    %6370 = vmatprep.subr.mxu0 0.0
    %6371 = vmatpush1.xpose.msra.mxu0 0.0
    %6372 = vmatprep.subr.mxu0 0.0
    %6373 = vmatpush1.xpose.msra.mxu0 0.0
    %6374 = vmatprep.subr.mxu0 0.0
    %6375 = vmatpush1.xpose.msra.mxu0 0.0
    %6376 = vmatprep.subr.mxu0 0.0
    %6377 = vmatpush1.xpose.msra.mxu0 0.0
    %6378 = vmatprep.subr.mxu0 0.0
    %6379 = vmatpush1.xpose.msra.mxu0 0.0
    %6380 = vmatprep.subr.mxu0 0.0
    %6381 = vmatpush1.xpose.msra.mxu0 0.0
    %6382 = vmatprep.subr.mxu0 0.0
    %6383 = vmatpush1.xpose.msra.mxu0 0.0
    %6384 = vmatprep.subr.mxu0 0.0
    %6385 = vmatpush1.xpose.msra.mxu0 0.0
    %6386 = vmatprep.subr.mxu0 0.0
    %6387 = vmatpush1.xpose.msra.mxu0 0.0
    %6388 = vmatprep.subr.mxu0 0.0
    %6389 = vmatpush1.xpose.msra.mxu0 0.0
    %6390 = vmatprep.subr.mxu0 0.0
    %6391 = vmatpush1.xpose.msra.mxu0 0.0
    %6392 = vmatprep.subr.mxu0 0.0
    %6393 = vmatpush1.xpose.msra.mxu0 0.0
    %6394 = vmatprep.subr.mxu0 0.0
    %6395 = vmatpush1.xpose.msra.mxu0 0.0
    %6396 = vmatprep.subr.mxu0 0.0
    %6397 = vmatpush1.xpose.msra.mxu0 0.0
    %6398 = vmatprep.subr.mxu0 0.0
    %6399 = vmatpush1.xpose.msra.mxu0 0.0
    %6400 = vmatprep.subr.mxu0 0.0
    %6401 = vmatpush1.xpose.msra.mxu0 0.0
    %6402 = vmatprep.mubr.f32.mxu0 0.0
    %6403 = vmatmul.mubr.f32.gmra.mrb[0].mxu0 %v6334
    %v6404 = vpop.f32.mrb[0].mxu0
    %v6405 = vadd.f32 %v387, %v6404
    %v6406 = vpop.f32.mrb[0].mxu0
    %6407 = vdwg.mxu0
    %v6408 = vsel %vm611, %v6405, -inf
    %6409 = vmax.xlane.f32.xlu0 %v6408
    %v6410 = vpop.xlane.xlu0 %6409
    %v6411 = vsub.f32 %v6405, %v6410
    %v6412 = vmul.f32 %v6411, 1.442695
    %v6413 = vpow.pop %v6412
    %v6414 = vsel %vm611, %v6413, 0.0
    %6415 = vadd.xlane.f32.xlu0 %v6414
    %v6416 = vpop.xlane.xlu0 %6415
    %v6417 = vrcp.pop %v6416
    %v6418 = vmul.f32 %v6413, %v6417
    %6419 = vrot.lane.b32.xlu0 %v6163, 56
    %v6420 = vpop.permute.xlu0 %6419
    %v6423 = vsel %vm611, %v6418, 0
    %6425 = vmatprep.subr.mxu0 0.0
    %6426 = vmatpush1.msra.mxu0 %v6420
    %6427 = vmatprep.subr.mxu0 0.0
    %6428 = vmatpush1.msra.mxu0 0.0
    %6429 = vmatprep.subr.mxu0 0.0
    %6430 = vmatpush1.msra.mxu0 0.0
    %6431 = vmatprep.subr.mxu0 0.0
    %6432 = vmatpush1.msra.mxu0 0.0
    %6433 = vmatprep.subr.mxu0 0.0
    %6434 = vmatpush1.msra.mxu0 0.0
    %6435 = vmatprep.subr.mxu0 0.0
    %6436 = vmatpush1.msra.mxu0 0.0
    %6437 = vmatprep.subr.mxu0 0.0
    %6438 = vmatpush1.msra.mxu0 0.0
    %6439 = vmatprep.subr.mxu0 0.0
    %6440 = vmatpush1.msra.mxu0 0.0
    %6441 = vmatprep.subr.mxu0 0.0
    %6442 = vmatpush1.msra.mxu0 0.0
    %6443 = vmatprep.subr.mxu0 0.0
    %6444 = vmatpush1.msra.mxu0 0.0
    %6445 = vmatprep.subr.mxu0 0.0
    %6446 = vmatpush1.msra.mxu0 0.0
    %6447 = vmatprep.subr.mxu0 0.0
    %6448 = vmatpush1.msra.mxu0 0.0
    %6449 = vmatprep.subr.mxu0 0.0
    %6450 = vmatpush1.msra.mxu0 0.0
    %6451 = vmatprep.subr.mxu0 0.0
    %6452 = vmatpush1.msra.mxu0 0.0
    %6453 = vmatprep.subr.mxu0 0.0
    %6454 = vmatpush1.msra.mxu0 0.0
    %6455 = vmatprep.subr.mxu0 0.0
    %6456 = vmatpush1.msra.mxu0 0.0
    %6457 = vmatprep.subr.mxu0 0.0
    %6458 = vmatpush1.msra.mxu0 0.0
    %6459 = vmatprep.subr.mxu0 0.0
    %6460 = vmatpush1.msra.mxu0 0.0
    %6461 = vmatprep.subr.mxu0 0.0
    %6462 = vmatpush1.msra.mxu0 0.0
    %6463 = vmatprep.subr.mxu0 0.0
    %6464 = vmatpush1.msra.mxu0 0.0
    %6465 = vmatprep.subr.mxu0 0.0
    %6466 = vmatpush1.msra.mxu0 0.0
    %6467 = vmatprep.subr.mxu0 0.0
    %6468 = vmatpush1.msra.mxu0 0.0
    %6469 = vmatprep.subr.mxu0 0.0
    %6470 = vmatpush1.msra.mxu0 0.0
    %6471 = vmatprep.subr.mxu0 0.0
    %6472 = vmatpush1.msra.mxu0 0.0
    %6473 = vmatprep.subr.mxu0 0.0
    %6474 = vmatpush1.msra.mxu0 0.0
    %6475 = vmatprep.subr.mxu0 0.0
    %6476 = vmatpush1.msra.mxu0 0.0
    %6477 = vmatprep.subr.mxu0 0.0
    %6478 = vmatpush1.msra.mxu0 0.0
    %6479 = vmatprep.subr.mxu0 0.0
    %6480 = vmatpush1.msra.mxu0 0.0
    %6481 = vmatprep.subr.mxu0 0.0
    %6482 = vmatpush1.msra.mxu0 0.0
    %6483 = vmatprep.subr.mxu0 0.0
    %6484 = vmatpush1.msra.mxu0 0.0
    %6485 = vmatprep.subr.mxu0 0.0
    %6486 = vmatpush1.msra.mxu0 0.0
    %6487 = vmatprep.subr.mxu0 0.0
    %6488 = vmatpush1.msra.mxu0 0.0
    %6489 = vmatprep.mubr.f32.mxu0 0.0
    %6490 = vmatmul.mubr.f32.gmra.mrb[0].mxu0 %v6423
    %v6491 = vpop.f32.mrb[0].mxu0
    %v6492 = vadd.f32 0.0, %v6491
    %v6493 = vpop.f32.mrb[0].mxu0
    %6494 = vdwg.mxu0
    %v6496 = vsel %vm611, %v6492, 0
    %6498 = vmatprep.subr.mxu0 0.0
    %6499 = vmatpush1.msra.mxu0 %v6048
    %6500 = vmatprep.subr.mxu0 0.0
    %6501 = vmatpush1.msra.mxu0 0.0
    %6502 = vmatprep.subr.mxu0 0.0
    %6503 = vmatpush1.msra.mxu0 0.0
    %6504 = vmatprep.subr.mxu0 0.0
    %6505 = vmatpush1.msra.mxu0 0.0
    %6506 = vmatprep.subr.mxu0 0.0
    %6507 = vmatpush1.msra.mxu0 0.0
    %6508 = vmatprep.subr.mxu0 0.0
    %6509 = vmatpush1.msra.mxu0 0.0
    %6510 = vmatprep.subr.mxu0 0.0
    %6511 = vmatpush1.msra.mxu0 0.0
    %6512 = vmatprep.subr.mxu0 0.0
    %6513 = vmatpush1.msra.mxu0 0.0
    %6514 = vmatprep.subr.mxu0 0.0
    %6515 = vmatpush1.msra.mxu0 0.0
    %6516 = vmatprep.subr.mxu0 0.0
    %6517 = vmatpush1.msra.mxu0 0.0
    %6518 = vmatprep.subr.mxu0 0.0
    %6519 = vmatpush1.msra.mxu0 0.0
    %6520 = vmatprep.subr.mxu0 0.0
    %6521 = vmatpush1.msra.mxu0 0.0
    %6522 = vmatprep.subr.mxu0 0.0
    %6523 = vmatpush1.msra.mxu0 0.0
    %6524 = vmatprep.subr.mxu0 0.0
    %6525 = vmatpush1.msra.mxu0 0.0
    %6526 = vmatprep.subr.mxu0 0.0
    %6527 = vmatpush1.msra.mxu0 0.0
    %6528 = vmatprep.subr.mxu0 0.0
    %6529 = vmatpush1.msra.mxu0 0.0
    %6530 = vmatprep.subr.mxu0 0.0
    %6531 = vmatpush1.msra.mxu0 0.0
    %6532 = vmatprep.subr.mxu0 0.0
    %6533 = vmatpush1.msra.mxu0 0.0
    %6534 = vmatprep.subr.mxu0 0.0
    %6535 = vmatpush1.msra.mxu0 0.0
    %6536 = vmatprep.subr.mxu0 0.0
    %6537 = vmatpush1.msra.mxu0 0.0
    %6538 = vmatprep.subr.mxu0 0.0
    %6539 = vmatpush1.msra.mxu0 0.0
    %6540 = vmatprep.subr.mxu0 0.0
    %6541 = vmatpush1.msra.mxu0 0.0
    %6542 = vmatprep.subr.mxu0 0.0
    %6543 = vmatpush1.msra.mxu0 0.0
    %6544 = vmatprep.subr.mxu0 0.0
    %6545 = vmatpush1.msra.mxu0 0.0
    %6546 = vmatprep.subr.mxu0 0.0
    %6547 = vmatpush1.msra.mxu0 0.0
    %6548 = vmatprep.subr.mxu0 0.0
    %6549 = vmatpush1.msra.mxu0 0.0
    %6550 = vmatprep.subr.mxu0 0.0
    %6551 = vmatpush1.msra.mxu0 0.0
    %6552 = vmatprep.subr.mxu0 0.0
    %6553 = vmatpush1.msra.mxu0 0.0
    %6554 = vmatprep.subr.mxu0 0.0
    %6555 = vmatpush1.msra.mxu0 0.0
    %6556 = vmatprep.subr.mxu0 0.0
    %6557 = vmatpush1.msra.mxu0 0.0
    %6558 = vmatprep.subr.mxu0 0.0
    %6559 = vmatpush1.msra.mxu0 0.0
    %6560 = vmatprep.subr.mxu0 0.0
    %6561 = vmatpush1.msra.mxu0 0.0
    %6562 = vmatprep.mubr.f32.mxu0 0.0
    %6563 = vmatmul.mubr.f32.gmra.mrb[0].mxu0 %v6496
    %v6564 = vpop.f32.mrb[0].mxu0
    %v6565 = vadd.f32 0.0, %v6564
    %v6566 = vpop.f32.mrb[0].mxu0
    %6567 = vdwg.mxu0
    %v6569 = vsel %vm611, %v6327, 0
    %6571 = vmatprep.subr.mxu0 0.0
    %6572 = vmatpush1.msra.mxu0 %v6047
    %6573 = vmatprep.subr.mxu0 0.0
    %6574 = vmatpush1.msra.mxu0 0.0
    %6575 = vmatprep.subr.mxu0 0.0
    %6576 = vmatpush1.msra.mxu0 0.0
    %6577 = vmatprep.subr.mxu0 0.0
    %6578 = vmatpush1.msra.mxu0 0.0
    %6579 = vmatprep.subr.mxu0 0.0
    %6580 = vmatpush1.msra.mxu0 0.0
    %6581 = vmatprep.subr.mxu0 0.0
    %6582 = vmatpush1.msra.mxu0 0.0
    %6583 = vmatprep.subr.mxu0 0.0
    %6584 = vmatpush1.msra.mxu0 0.0
    %6585 = vmatprep.subr.mxu0 0.0
    %6586 = vmatpush1.msra.mxu0 0.0
    %6587 = vmatprep.subr.mxu0 0.0
    %6588 = vmatpush1.msra.mxu0 0.0
    %6589 = vmatprep.subr.mxu0 0.0
    %6590 = vmatpush1.msra.mxu0 0.0
    %6591 = vmatprep.subr.mxu0 0.0
    %6592 = vmatpush1.msra.mxu0 0.0
    %6593 = vmatprep.subr.mxu0 0.0
    %6594 = vmatpush1.msra.mxu0 0.0
    %6595 = vmatprep.subr.mxu0 0.0
    %6596 = vmatpush1.msra.mxu0 0.0
    %6597 = vmatprep.subr.mxu0 0.0
    %6598 = vmatpush1.msra.mxu0 0.0
    %6599 = vmatprep.subr.mxu0 0.0
    %6600 = vmatpush1.msra.mxu0 0.0
    %6601 = vmatprep.subr.mxu0 0.0
    %6602 = vmatpush1.msra.mxu0 0.0
    %6603 = vmatprep.subr.mxu0 0.0
    %6604 = vmatpush1.msra.mxu0 0.0
    %6605 = vmatprep.subr.mxu0 0.0
    %6606 = vmatpush1.msra.mxu0 0.0
    %6607 = vmatprep.subr.mxu0 0.0
    %6608 = vmatpush1.msra.mxu0 0.0
    %6609 = vmatprep.subr.mxu0 0.0
    %6610 = vmatpush1.msra.mxu0 0.0
    %6611 = vmatprep.subr.mxu0 0.0
    %6612 = vmatpush1.msra.mxu0 0.0
    %6613 = vmatprep.subr.mxu0 0.0
    %6614 = vmatpush1.msra.mxu0 0.0
    %6615 = vmatprep.subr.mxu0 0.0
    %6616 = vmatpush1.msra.mxu0 0.0
    %6617 = vmatprep.subr.mxu0 0.0
    %6618 = vmatpush1.msra.mxu0 0.0
    %6619 = vmatprep.subr.mxu0 0.0
    %6620 = vmatpush1.msra.mxu0 0.0
    %6621 = vmatprep.subr.mxu0 0.0
    %6622 = vmatpush1.msra.mxu0 0.0
    %6623 = vmatprep.subr.mxu0 0.0
    %6624 = vmatpush1.msra.mxu0 0.0
    %6625 = vmatprep.subr.mxu0 0.0
    %6626 = vmatpush1.msra.mxu0 0.0
    %6627 = vmatprep.subr.mxu0 0.0
    %6628 = vmatpush1.msra.mxu0 0.0
    %6629 = vmatprep.subr.mxu0 0.0
    %6630 = vmatpush1.msra.mxu0 0.0
    %6631 = vmatprep.subr.mxu0 0.0
    %6632 = vmatpush1.msra.mxu0 0.0
    %6633 = vmatprep.subr.mxu0 0.0
    %6634 = vmatpush1.msra.mxu0 0.0
    %6635 = vmatprep.mubr.f32.mxu0 0.0
    %6636 = vmatmul.mubr.f32.gmra.mrb[0].mxu0 %v6569
    %v6637 = vpop.f32.mrb[0].mxu0
    %v6638 = vadd.f32 %v6565, %v6637
    %v6639 = vpop.f32.mrb[0].mxu0
    %6640 = vdwg.mxu0
    %6641 = vrot.lane.b32.xlu0 %v6163, 112
    %v6642 = vpop.permute.xlu0 %6641
    %6643 = vrot.lane.b32.xlu0 %v6163, 80
    %v6644 = vpop.permute.xlu0 %6643
    %v6645 = vsel %vm611, %v6642, 0
    %v6647 = vsel %vm611, %v6644, 0
    %6649 = vmatprep.subr.mxu0 0.0
    %6650 = vmatpush1.xpose.msra.mxu0 %v6647
    %6651 = vmatprep.subr.mxu0 0.0
    %6652 = vmatpush1.xpose.msra.mxu0 0.0
    %6653 = vmatprep.subr.mxu0 0.0
    %6654 = vmatpush1.xpose.msra.mxu0 0.0
    %6655 = vmatprep.subr.mxu0 0.0
    %6656 = vmatpush1.xpose.msra.mxu0 0.0
    %6657 = vmatprep.subr.mxu0 0.0
    %6658 = vmatpush1.xpose.msra.mxu0 0.0
    %6659 = vmatprep.subr.mxu0 0.0
    %6660 = vmatpush1.xpose.msra.mxu0 0.0
    %6661 = vmatprep.subr.mxu0 0.0
    %6662 = vmatpush1.xpose.msra.mxu0 0.0
    %6663 = vmatprep.subr.mxu0 0.0
    %6664 = vmatpush1.xpose.msra.mxu0 0.0
    %6665 = vmatprep.subr.mxu0 0.0
    %6666 = vmatpush1.xpose.msra.mxu0 0.0
    %6667 = vmatprep.subr.mxu0 0.0
    %6668 = vmatpush1.xpose.msra.mxu0 0.0
    %6669 = vmatprep.subr.mxu0 0.0
    %6670 = vmatpush1.xpose.msra.mxu0 0.0
    %6671 = vmatprep.subr.mxu0 0.0
    %6672 = vmatpush1.xpose.msra.mxu0 0.0
    %6673 = vmatprep.subr.mxu0 0.0
    %6674 = vmatpush1.xpose.msra.mxu0 0.0
    %6675 = vmatprep.subr.mxu0 0.0
    %6676 = vmatpush1.xpose.msra.mxu0 0.0
    %6677 = vmatprep.subr.mxu0 0.0
    %6678 = vmatpush1.xpose.msra.mxu0 0.0
    %6679 = vmatprep.subr.mxu0 0.0
    %6680 = vmatpush1.xpose.msra.mxu0 0.0
    %6681 = vmatprep.subr.mxu0 0.0
    %6682 = vmatpush1.xpose.msra.mxu0 0.0
    %6683 = vmatprep.subr.mxu0 0.0
    %6684 = vmatpush1.xpose.msra.mxu0 0.0
    %6685 = vmatprep.subr.mxu0 0.0
    %6686 = vmatpush1.xpose.msra.mxu0 0.0
    %6687 = vmatprep.subr.mxu0 0.0
    %6688 = vmatpush1.xpose.msra.mxu0 0.0
    %6689 = vmatprep.subr.mxu0 0.0
    %6690 = vmatpush1.xpose.msra.mxu0 0.0
    %6691 = vmatprep.subr.mxu0 0.0
    %6692 = vmatpush1.xpose.msra.mxu0 0.0
    %6693 = vmatprep.subr.mxu0 0.0
    %6694 = vmatpush1.xpose.msra.mxu0 0.0
    %6695 = vmatprep.subr.mxu0 0.0
    %6696 = vmatpush1.xpose.msra.mxu0 0.0
    %6697 = vmatprep.subr.mxu0 0.0
    %6698 = vmatpush1.xpose.msra.mxu0 0.0
    %6699 = vmatprep.subr.mxu0 0.0
    %6700 = vmatpush1.xpose.msra.mxu0 0.0
    %6701 = vmatprep.subr.mxu0 0.0
    %6702 = vmatpush1.xpose.msra.mxu0 0.0
    %6703 = vmatprep.subr.mxu0 0.0
    %6704 = vmatpush1.xpose.msra.mxu0 0.0
    %6705 = vmatprep.subr.mxu0 0.0
    %6706 = vmatpush1.xpose.msra.mxu0 0.0
    %6707 = vmatprep.subr.mxu0 0.0
    %6708 = vmatpush1.xpose.msra.mxu0 0.0
    %6709 = vmatprep.subr.mxu0 0.0
    %6710 = vmatpush1.xpose.msra.mxu0 0.0
    %6711 = vmatprep.subr.mxu0 0.0
    %6712 = vmatpush1.xpose.msra.mxu0 0.0
    %6713 = vmatprep.mubr.f32.mxu0 0.0
    %6714 = vmatmul.mubr.f32.gmra.mrb[0].mxu0 %v6645
    %v6715 = vpop.f32.mrb[0].mxu0
    %v6716 = vadd.f32 %v387, %v6715
    %v6717 = vpop.f32.mrb[0].mxu0
    %6718 = vdwg.mxu0
    %v6719 = vsel %vm611, %v6716, -inf
    %6720 = vmax.xlane.f32.xlu0 %v6719
    %v6721 = vpop.xlane.xlu0 %6720
    %v6722 = vsub.f32 %v6716, %v6721
    %v6723 = vmul.f32 %v6722, 1.442695
    %v6724 = vpow.pop %v6723
    %v6725 = vsel %vm611, %v6724, 0.0
    %6726 = vadd.xlane.f32.xlu0 %v6725
    %v6727 = vpop.xlane.xlu0 %6726
    %v6728 = vrcp.pop %v6727
    %v6729 = vmul.f32 %v6724, %v6728
    %6730 = vrot.lane.b32.xlu0 %v6163, 48
    %v6731 = vpop.permute.xlu0 %6730
    %v6734 = vsel %vm611, %v6729, 0
    %6736 = vmatprep.subr.mxu0 0.0
    %6737 = vmatpush1.msra.mxu0 %v6731
    %6738 = vmatprep.subr.mxu0 0.0
    %6739 = vmatpush1.msra.mxu0 0.0
    %6740 = vmatprep.subr.mxu0 0.0
    %6741 = vmatpush1.msra.mxu0 0.0
    %6742 = vmatprep.subr.mxu0 0.0
    %6743 = vmatpush1.msra.mxu0 0.0
    %6744 = vmatprep.subr.mxu0 0.0
    %6745 = vmatpush1.msra.mxu0 0.0
    %6746 = vmatprep.subr.mxu0 0.0
    %6747 = vmatpush1.msra.mxu0 0.0
    %6748 = vmatprep.subr.mxu0 0.0
    %6749 = vmatpush1.msra.mxu0 0.0
    %6750 = vmatprep.subr.mxu0 0.0
    %6751 = vmatpush1.msra.mxu0 0.0
    %6752 = vmatprep.subr.mxu0 0.0
    %6753 = vmatpush1.msra.mxu0 0.0
    %6754 = vmatprep.subr.mxu0 0.0
    %6755 = vmatpush1.msra.mxu0 0.0
    %6756 = vmatprep.subr.mxu0 0.0
    %6757 = vmatpush1.msra.mxu0 0.0
    %6758 = vmatprep.subr.mxu0 0.0
    %6759 = vmatpush1.msra.mxu0 0.0
    %6760 = vmatprep.subr.mxu0 0.0
    %6761 = vmatpush1.msra.mxu0 0.0
    %6762 = vmatprep.subr.mxu0 0.0
    %6763 = vmatpush1.msra.mxu0 0.0
    %6764 = vmatprep.subr.mxu0 0.0
    %6765 = vmatpush1.msra.mxu0 0.0
    %6766 = vmatprep.subr.mxu0 0.0
    %6767 = vmatpush1.msra.mxu0 0.0
    %6768 = vmatprep.subr.mxu0 0.0
    %6769 = vmatpush1.msra.mxu0 0.0
    %6770 = vmatprep.subr.mxu0 0.0
    %6771 = vmatpush1.msra.mxu0 0.0
    %6772 = vmatprep.subr.mxu0 0.0
    %6773 = vmatpush1.msra.mxu0 0.0
    %6774 = vmatprep.subr.mxu0 0.0
    %6775 = vmatpush1.msra.mxu0 0.0
    %6776 = vmatprep.subr.mxu0 0.0
    %6777 = vmatpush1.msra.mxu0 0.0
    %6778 = vmatprep.subr.mxu0 0.0
    %6779 = vmatpush1.msra.mxu0 0.0
    %6780 = vmatprep.subr.mxu0 0.0
    %6781 = vmatpush1.msra.mxu0 0.0
    %6782 = vmatprep.subr.mxu0 0.0
    %6783 = vmatpush1.msra.mxu0 0.0
    %6784 = vmatprep.subr.mxu0 0.0
    %6785 = vmatpush1.msra.mxu0 0.0
    %6786 = vmatprep.subr.mxu0 0.0
    %6787 = vmatpush1.msra.mxu0 0.0
    %6788 = vmatprep.subr.mxu0 0.0
    %6789 = vmatpush1.msra.mxu0 0.0
    %6790 = vmatprep.subr.mxu0 0.0
    %6791 = vmatpush1.msra.mxu0 0.0
    %6792 = vmatprep.subr.mxu0 0.0
    %6793 = vmatpush1.msra.mxu0 0.0
    %6794 = vmatprep.subr.mxu0 0.0
    %6795 = vmatpush1.msra.mxu0 0.0
    %6796 = vmatprep.subr.mxu0 0.0
    %6797 = vmatpush1.msra.mxu0 0.0
    %6798 = vmatprep.subr.mxu0 0.0
    %6799 = vmatpush1.msra.mxu0 0.0
    %6800 = vmatprep.mubr.f32.mxu0 0.0
    %6801 = vmatmul.mubr.f32.gmra.mrb[0].mxu0 %v6734
    %v6802 = vpop.f32.mrb[0].mxu0
    %v6803 = vadd.f32 0.0, %v6802
    %v6804 = vpop.f32.mrb[0].mxu0
    %6805 = vdwg.mxu0
    %v6807 = vsel %vm611, %v6803, 0
    %6809 = vmatprep.subr.mxu0 0.0
    %6810 = vmatpush1.msra.mxu0 %v6049
    %6811 = vmatprep.subr.mxu0 0.0
    %6812 = vmatpush1.msra.mxu0 0.0
    %6813 = vmatprep.subr.mxu0 0.0
    %6814 = vmatpush1.msra.mxu0 0.0
    %6815 = vmatprep.subr.mxu0 0.0
    %6816 = vmatpush1.msra.mxu0 0.0
    %6817 = vmatprep.subr.mxu0 0.0
    %6818 = vmatpush1.msra.mxu0 0.0
    %6819 = vmatprep.subr.mxu0 0.0
    %6820 = vmatpush1.msra.mxu0 0.0
    %6821 = vmatprep.subr.mxu0 0.0
    %6822 = vmatpush1.msra.mxu0 0.0
    %6823 = vmatprep.subr.mxu0 0.0
    %6824 = vmatpush1.msra.mxu0 0.0
    %6825 = vmatprep.subr.mxu0 0.0
    %6826 = vmatpush1.msra.mxu0 0.0
    %6827 = vmatprep.subr.mxu0 0.0
    %6828 = vmatpush1.msra.mxu0 0.0
    %6829 = vmatprep.subr.mxu0 0.0
    %6830 = vmatpush1.msra.mxu0 0.0
    %6831 = vmatprep.subr.mxu0 0.0
    %6832 = vmatpush1.msra.mxu0 0.0
    %6833 = vmatprep.subr.mxu0 0.0
    %6834 = vmatpush1.msra.mxu0 0.0
    %6835 = vmatprep.subr.mxu0 0.0
    %6836 = vmatpush1.msra.mxu0 0.0
    %6837 = vmatprep.subr.mxu0 0.0
    %6838 = vmatpush1.msra.mxu0 0.0
    %6839 = vmatprep.subr.mxu0 0.0
    %6840 = vmatpush1.msra.mxu0 0.0
    %6841 = vmatprep.subr.mxu0 0.0
    %6842 = vmatpush1.msra.mxu0 0.0
    %6843 = vmatprep.subr.mxu0 0.0
    %6844 = vmatpush1.msra.mxu0 0.0
    %6845 = vmatprep.subr.mxu0 0.0
    %6846 = vmatpush1.msra.mxu0 0.0
    %6847 = vmatprep.subr.mxu0 0.0
    %6848 = vmatpush1.msra.mxu0 0.0
    %6849 = vmatprep.subr.mxu0 0.0
    %6850 = vmatpush1.msra.mxu0 0.0
    %6851 = vmatprep.subr.mxu0 0.0
    %6852 = vmatpush1.msra.mxu0 0.0
    %6853 = vmatprep.subr.mxu0 0.0
    %6854 = vmatpush1.msra.mxu0 0.0
    %6855 = vmatprep.subr.mxu0 0.0
    %6856 = vmatpush1.msra.mxu0 0.0
    %6857 = vmatprep.subr.mxu0 0.0
    %6858 = vmatpush1.msra.mxu0 0.0
    %6859 = vmatprep.subr.mxu0 0.0
    %6860 = vmatpush1.msra.mxu0 0.0
    %6861 = vmatprep.subr.mxu0 0.0
    %6862 = vmatpush1.msra.mxu0 0.0
    %6863 = vmatprep.subr.mxu0 0.0
    %6864 = vmatpush1.msra.mxu0 0.0
    %6865 = vmatprep.subr.mxu0 0.0
    %6866 = vmatpush1.msra.mxu0 0.0
    %6867 = vmatprep.subr.mxu0 0.0
    %6868 = vmatpush1.msra.mxu0 0.0
    %6869 = vmatprep.subr.mxu0 0.0
    %6870 = vmatpush1.msra.mxu0 0.0
    %6871 = vmatprep.subr.mxu0 0.0
    %6872 = vmatpush1.msra.mxu0 0.0
    %6873 = vmatprep.mubr.f32.mxu0 0.0
    %6874 = vmatmul.mubr.f32.gmra.mrb[0].mxu0 %v6807
    %v6875 = vpop.f32.mrb[0].mxu0
    %v6876 = vadd.f32 0.0, %v6875
    %v6877 = vpop.f32.mrb[0].mxu0
    %6878 = vdwg.mxu0
    %v6879 = vadd.f32 %v6638, %v6876
    %6880 = vrot.lane.b32.xlu0 %v6163, 104
    %v6881 = vpop.permute.xlu0 %6880
    %6882 = vrot.lane.b32.xlu0 %v6163, 72
    %v6883 = vpop.permute.xlu0 %6882
    %v6884 = vsel %vm611, %v6881, 0
    %v6886 = vsel %vm611, %v6883, 0
    %6888 = vmatprep.subr.mxu0 0.0
    %6889 = vmatpush1.xpose.msra.mxu0 %v6886
    %6890 = vmatprep.subr.mxu0 0.0
    %6891 = vmatpush1.xpose.msra.mxu0 0.0
    %6892 = vmatprep.subr.mxu0 0.0
    %6893 = vmatpush1.xpose.msra.mxu0 0.0
    %6894 = vmatprep.subr.mxu0 0.0
    %6895 = vmatpush1.xpose.msra.mxu0 0.0
    %6896 = vmatprep.subr.mxu0 0.0
    %6897 = vmatpush1.xpose.msra.mxu0 0.0
    %6898 = vmatprep.subr.mxu0 0.0
    %6899 = vmatpush1.xpose.msra.mxu0 0.0
    %6900 = vmatprep.subr.mxu0 0.0
    %6901 = vmatpush1.xpose.msra.mxu0 0.0
    %6902 = vmatprep.subr.mxu0 0.0
    %6903 = vmatpush1.xpose.msra.mxu0 0.0
    %6904 = vmatprep.subr.mxu0 0.0
    %6905 = vmatpush1.xpose.msra.mxu0 0.0
    %6906 = vmatprep.subr.mxu0 0.0
    %6907 = vmatpush1.xpose.msra.mxu0 0.0
    %6908 = vmatprep.subr.mxu0 0.0
    %6909 = vmatpush1.xpose.msra.mxu0 0.0
    %6910 = vmatprep.subr.mxu0 0.0
    %6911 = vmatpush1.xpose.msra.mxu0 0.0
    %6912 = vmatprep.subr.mxu0 0.0
    %6913 = vmatpush1.xpose.msra.mxu0 0.0
    %6914 = vmatprep.subr.mxu0 0.0
    %6915 = vmatpush1.xpose.msra.mxu0 0.0
    %6916 = vmatprep.subr.mxu0 0.0
    %6917 = vmatpush1.xpose.msra.mxu0 0.0
    %6918 = vmatprep.subr.mxu0 0.0
    %6919 = vmatpush1.xpose.msra.mxu0 0.0
    %6920 = vmatprep.subr.mxu0 0.0
    %6921 = vmatpush1.xpose.msra.mxu0 0.0
    %6922 = vmatprep.subr.mxu0 0.0
    %6923 = vmatpush1.xpose.msra.mxu0 0.0
    %6924 = vmatprep.subr.mxu0 0.0
    %6925 = vmatpush1.xpose.msra.mxu0 0.0
    %6926 = vmatprep.subr.mxu0 0.0
    %6927 = vmatpush1.xpose.msra.mxu0 0.0
    %6928 = vmatprep.subr.mxu0 0.0
    %6929 = vmatpush1.xpose.msra.mxu0 0.0
    %6930 = vmatprep.subr.mxu0 0.0
    %6931 = vmatpush1.xpose.msra.mxu0 0.0
    %6932 = vmatprep.subr.mxu0 0.0
    %6933 = vmatpush1.xpose.msra.mxu0 0.0
    %6934 = vmatprep.subr.mxu0 0.0
    %6935 = vmatpush1.xpose.msra.mxu0 0.0
    %6936 = vmatprep.subr.mxu0 0.0
    %6937 = vmatpush1.xpose.msra.mxu0 0.0
    %6938 = vmatprep.subr.mxu0 0.0
    %6939 = vmatpush1.xpose.msra.mxu0 0.0
    %6940 = vmatprep.subr.mxu0 0.0
    %6941 = vmatpush1.xpose.msra.mxu0 0.0
    %6942 = vmatprep.subr.mxu0 0.0
    %6943 = vmatpush1.xpose.msra.mxu0 0.0
    %6944 = vmatprep.subr.mxu0 0.0
    %6945 = vmatpush1.xpose.msra.mxu0 0.0
    %6946 = vmatprep.subr.mxu0 0.0
    %6947 = vmatpush1.xpose.msra.mxu0 0.0
    %6948 = vmatprep.subr.mxu0 0.0
    %6949 = vmatpush1.xpose.msra.mxu0 0.0
    %6950 = vmatprep.subr.mxu0 0.0
    %6951 = vmatpush1.xpose.msra.mxu0 0.0
    %6952 = vmatprep.mubr.f32.mxu0 0.0
    %6953 = vmatmul.mubr.f32.gmra.mrb[0].mxu0 %v6884
    %v6954 = vpop.f32.mrb[0].mxu0
    %v6955 = vadd.f32 %v387, %v6954
    %v6956 = vpop.f32.mrb[0].mxu0
    %6957 = vdwg.mxu0
    %v6958 = vsel %vm611, %v6955, -inf
    %6959 = vmax.xlane.f32.xlu0 %v6958
    %v6960 = vpop.xlane.xlu0 %6959
    %v6961 = vsub.f32 %v6955, %v6960
    %v6962 = vmul.f32 %v6961, 1.442695
    %v6963 = vpow.pop %v6962
    %v6964 = vsel %vm611, %v6963, 0.0
    %6965 = vadd.xlane.f32.xlu0 %v6964
    %v6966 = vpop.xlane.xlu0 %6965
    %v6967 = vrcp.pop %v6966
    %v6968 = vmul.f32 %v6963, %v6967
    %6969 = vrot.lane.b32.xlu0 %v6163, 40
    %v6970 = vpop.permute.xlu0 %6969
    %v6973 = vsel %vm611, %v6968, 0
    %6975 = vmatprep.subr.mxu0 0.0
    %6976 = vmatpush1.msra.mxu0 %v6970
    %6977 = vmatprep.subr.mxu0 0.0
    %6978 = vmatpush1.msra.mxu0 0.0
    %6979 = vmatprep.subr.mxu0 0.0
    %6980 = vmatpush1.msra.mxu0 0.0
    %6981 = vmatprep.subr.mxu0 0.0
    %6982 = vmatpush1.msra.mxu0 0.0
    %6983 = vmatprep.subr.mxu0 0.0
    %6984 = vmatpush1.msra.mxu0 0.0
    %6985 = vmatprep.subr.mxu0 0.0
    %6986 = vmatpush1.msra.mxu0 0.0
    %6987 = vmatprep.subr.mxu0 0.0
    %6988 = vmatpush1.msra.mxu0 0.0
    %6989 = vmatprep.subr.mxu0 0.0
    %6990 = vmatpush1.msra.mxu0 0.0
    %6991 = vmatprep.subr.mxu0 0.0
    %6992 = vmatpush1.msra.mxu0 0.0
    %6993 = vmatprep.subr.mxu0 0.0
    %6994 = vmatpush1.msra.mxu0 0.0
    %6995 = vmatprep.subr.mxu0 0.0
    %6996 = vmatpush1.msra.mxu0 0.0
    %6997 = vmatprep.subr.mxu0 0.0
    %6998 = vmatpush1.msra.mxu0 0.0
    %6999 = vmatprep.subr.mxu0 0.0
    %7000 = vmatpush1.msra.mxu0 0.0
    %7001 = vmatprep.subr.mxu0 0.0
    %7002 = vmatpush1.msra.mxu0 0.0
    %7003 = vmatprep.subr.mxu0 0.0
    %7004 = vmatpush1.msra.mxu0 0.0
    %7005 = vmatprep.subr.mxu0 0.0
    %7006 = vmatpush1.msra.mxu0 0.0
    %7007 = vmatprep.subr.mxu0 0.0
    %7008 = vmatpush1.msra.mxu0 0.0
    %7009 = vmatprep.subr.mxu0 0.0
    %7010 = vmatpush1.msra.mxu0 0.0
    %7011 = vmatprep.subr.mxu0 0.0
    %7012 = vmatpush1.msra.mxu0 0.0
    %7013 = vmatprep.subr.mxu0 0.0
    %7014 = vmatpush1.msra.mxu0 0.0
    %7015 = vmatprep.subr.mxu0 0.0
    %7016 = vmatpush1.msra.mxu0 0.0
    %7017 = vmatprep.subr.mxu0 0.0
    %7018 = vmatpush1.msra.mxu0 0.0
    %7019 = vmatprep.subr.mxu0 0.0
    %7020 = vmatpush1.msra.mxu0 0.0
    %7021 = vmatprep.subr.mxu0 0.0
    %7022 = vmatpush1.msra.mxu0 0.0
    %7023 = vmatprep.subr.mxu0 0.0
    %7024 = vmatpush1.msra.mxu0 0.0
    %7025 = vmatprep.subr.mxu0 0.0
    %7026 = vmatpush1.msra.mxu0 0.0
    %7027 = vmatprep.subr.mxu0 0.0
    %7028 = vmatpush1.msra.mxu0 0.0
    %7029 = vmatprep.subr.mxu0 0.0
    %7030 = vmatpush1.msra.mxu0 0.0
    %7031 = vmatprep.subr.mxu0 0.0
    %7032 = vmatpush1.msra.mxu0 0.0
    %7033 = vmatprep.subr.mxu0 0.0
    %7034 = vmatpush1.msra.mxu0 0.0
    %7035 = vmatprep.subr.mxu0 0.0
    %7036 = vmatpush1.msra.mxu0 0.0
    %7037 = vmatprep.subr.mxu0 0.0
    %7038 = vmatpush1.msra.mxu0 0.0
    %7039 = vmatprep.mubr.f32.mxu0 0.0
    %7040 = vmatmul.mubr.f32.gmra.mrb[0].mxu0 %v6973
    %v7041 = vpop.f32.mrb[0].mxu0
    %v7042 = vadd.f32 0.0, %v7041
    %v7043 = vpop.f32.mrb[0].mxu0
    %7044 = vdwg.mxu0
    %v7046 = vsel %vm611, %v7042, 0
    %7048 = vmatprep.subr.mxu0 0.0
    %7049 = vmatpush1.msra.mxu0 %v6050
    %7050 = vmatprep.subr.mxu0 0.0
    %7051 = vmatpush1.msra.mxu0 0.0
    %7052 = vmatprep.subr.mxu0 0.0
    %7053 = vmatpush1.msra.mxu0 0.0
    %7054 = vmatprep.subr.mxu0 0.0
    %7055 = vmatpush1.msra.mxu0 0.0
    %7056 = vmatprep.subr.mxu0 0.0
    %7057 = vmatpush1.msra.mxu0 0.0
    %7058 = vmatprep.subr.mxu0 0.0
    %7059 = vmatpush1.msra.mxu0 0.0
    %7060 = vmatprep.subr.mxu0 0.0
    %7061 = vmatpush1.msra.mxu0 0.0
    %7062 = vmatprep.subr.mxu0 0.0
    %7063 = vmatpush1.msra.mxu0 0.0
    %7064 = vmatprep.subr.mxu0 0.0
    %7065 = vmatpush1.msra.mxu0 0.0
    %7066 = vmatprep.subr.mxu0 0.0
    %7067 = vmatpush1.msra.mxu0 0.0
    %7068 = vmatprep.subr.mxu0 0.0
    %7069 = vmatpush1.msra.mxu0 0.0
    %7070 = vmatprep.subr.mxu0 0.0
    %7071 = vmatpush1.msra.mxu0 0.0
    %7072 = vmatprep.subr.mxu0 0.0
    %7073 = vmatpush1.msra.mxu0 0.0
    %7074 = vmatprep.subr.mxu0 0.0
    %7075 = vmatpush1.msra.mxu0 0.0
    %7076 = vmatprep.subr.mxu0 0.0
    %7077 = vmatpush1.msra.mxu0 0.0
    %7078 = vmatprep.subr.mxu0 0.0
    %7079 = vmatpush1.msra.mxu0 0.0
    %7080 = vmatprep.subr.mxu0 0.0
    %7081 = vmatpush1.msra.mxu0 0.0
    %7082 = vmatprep.subr.mxu0 0.0
    %7083 = vmatpush1.msra.mxu0 0.0
    %7084 = vmatprep.subr.mxu0 0.0
    %7085 = vmatpush1.msra.mxu0 0.0
    %7086 = vmatprep.subr.mxu0 0.0
    %7087 = vmatpush1.msra.mxu0 0.0
    %7088 = vmatprep.subr.mxu0 0.0
    %7089 = vmatpush1.msra.mxu0 0.0
    %7090 = vmatprep.subr.mxu0 0.0
    %7091 = vmatpush1.msra.mxu0 0.0
    %7092 = vmatprep.subr.mxu0 0.0
    %7093 = vmatpush1.msra.mxu0 0.0
    %7094 = vmatprep.subr.mxu0 0.0
    %7095 = vmatpush1.msra.mxu0 0.0
    %7096 = vmatprep.subr.mxu0 0.0
    %7097 = vmatpush1.msra.mxu0 0.0
    %7098 = vmatprep.subr.mxu0 0.0
    %7099 = vmatpush1.msra.mxu0 0.0
    %7100 = vmatprep.subr.mxu0 0.0
    %7101 = vmatpush1.msra.mxu0 0.0
    %7102 = vmatprep.subr.mxu0 0.0
    %7103 = vmatpush1.msra.mxu0 0.0
    %7104 = vmatprep.subr.mxu0 0.0
    %7105 = vmatpush1.msra.mxu0 0.0
    %7106 = vmatprep.subr.mxu0 0.0
    %7107 = vmatpush1.msra.mxu0 0.0
    %7108 = vmatprep.subr.mxu0 0.0
    %7109 = vmatpush1.msra.mxu0 0.0
    %7110 = vmatprep.subr.mxu0 0.0
    %7111 = vmatpush1.msra.mxu0 0.0
    %7112 = vmatprep.mubr.f32.mxu0 0.0
    %7113 = vmatmul.mubr.f32.gmra.mrb[0].mxu0 %v7046
    %v7114 = vpop.f32.mrb[0].mxu0
    %v7115 = vadd.f32 0.0, %v7114
    %v7116 = vpop.f32.mrb[0].mxu0
    %7117 = vdwg.mxu0
    %v7118 = vadd.f32 %v6879, %v7115
    %v7120 = vlaneseq
    %v7121 = vshrl.u32 %v7120, 7
    %v7122 = vsub.s32 0, %v7121
    %v7123 = vrot.slane %v6051, %v7122
    %v7125 = vadd.f32 %v7118, %v7123
    %v7126 = vadd.f32 %v6041, %v7125
    %v7127 = vsel %vm523, %v7126, 0.0
    %7128 = vadd.xlane.f32.xlu0 %v7127
    %v7129 = vpop.xlane.xlu0 %7128
    %v7130 = vmul.f32 %v7129, %v1749
    %v7131 = vsub.f32 %v7126, %v7130
    %v7132 = vmul.f32 %v7131, %v7131
    %v7133 = vsel %vm523, %v7132, 0.0
    %7134 = vadd.xlane.f32.xlu0 %v7133
    %v7135 = vpop.xlane.xlu0 %7134
    %v7136 = vmul.f32 %v7135, %v1749
    %v7137 = vadd.f32 %v7136, 1e-05
    %v7138 = vrsqrt.pop %v7137
    %v7139 = vmul.f32 %v7131, %v7138
    %v7141 = vlaneseq
    %v7142 = vshrl.u32 %v7141, 7
    %v7143 = vsub.s32 0, %v7142
    %v7144 = vrot.slane %v6081, %v7143
    %v7146 = vmul.f32 %v7139, %v7144
    %v7148 = vlaneseq
    %v7149 = vshrl.u32 %v7148, 7
    %v7150 = vsub.s32 0, %v7149
    %v7151 = vrot.slane %v6082, %v7150
    %v7153 = vadd.f32 %v7146, %v7151
    %v7155 = vlaneseq
    %v7156 = vshrl.u32 %v7155, 7
    %v7157 = vsub.s32 0, %v7156
    %v7158 = vrot.slane %v6056, %v7157
    %v7161 = vsel %vm523, %v7153, 0
    %7163 = vmatprep.subr.mxu0 0.0
    %7164 = vmatpush1.msra.mxu0 %v6052
    %7165 = vmatprep.subr.mxu0 0.0
    %7166 = vmatpush1.msra.mxu0 %v6053
    %7167 = vmatprep.subr.mxu0 0.0
    %7168 = vmatpush1.msra.mxu0 %v6054
    %7169 = vmatprep.subr.mxu0 0.0
    %7170 = vmatpush1.msra.mxu0 %v6055
    %7171 = vmatprep.subr.mxu0 0.0
    %7172 = vmatpush1.msra.mxu0 0.0
    %7173 = vmatprep.subr.mxu0 0.0
    %7174 = vmatpush1.msra.mxu0 0.0
    %7175 = vmatprep.subr.mxu0 0.0
    %7176 = vmatpush1.msra.mxu0 0.0
    %7177 = vmatprep.subr.mxu0 0.0
    %7178 = vmatpush1.msra.mxu0 0.0
    %7179 = vmatprep.subr.mxu0 0.0
    %7180 = vmatpush1.msra.mxu0 0.0
    %7181 = vmatprep.subr.mxu0 0.0
    %7182 = vmatpush1.msra.mxu0 0.0
    %7183 = vmatprep.subr.mxu0 0.0
    %7184 = vmatpush1.msra.mxu0 0.0
    %7185 = vmatprep.subr.mxu0 0.0
    %7186 = vmatpush1.msra.mxu0 0.0
    %7187 = vmatprep.subr.mxu0 0.0
    %7188 = vmatpush1.msra.mxu0 0.0
    %7189 = vmatprep.subr.mxu0 0.0
    %7190 = vmatpush1.msra.mxu0 0.0
    %7191 = vmatprep.subr.mxu0 0.0
    %7192 = vmatpush1.msra.mxu0 0.0
    %7193 = vmatprep.subr.mxu0 0.0
    %7194 = vmatpush1.msra.mxu0 0.0
    %7195 = vmatprep.subr.mxu0 0.0
    %7196 = vmatpush1.msra.mxu0 0.0
    %7197 = vmatprep.subr.mxu0 0.0
    %7198 = vmatpush1.msra.mxu0 0.0
    %7199 = vmatprep.subr.mxu0 0.0
    %7200 = vmatpush1.msra.mxu0 0.0
    %7201 = vmatprep.subr.mxu0 0.0
    %7202 = vmatpush1.msra.mxu0 0.0
    %7203 = vmatprep.subr.mxu0 0.0
    %7204 = vmatpush1.msra.mxu0 0.0
    %7205 = vmatprep.subr.mxu0 0.0
    %7206 = vmatpush1.msra.mxu0 0.0
    %7207 = vmatprep.subr.mxu0 0.0
    %7208 = vmatpush1.msra.mxu0 0.0
    %7209 = vmatprep.subr.mxu0 0.0
    %7210 = vmatpush1.msra.mxu0 0.0
    %7211 = vmatprep.subr.mxu0 0.0
    %7212 = vmatpush1.msra.mxu0 0.0
    %7213 = vmatprep.subr.mxu0 0.0
    %7214 = vmatpush1.msra.mxu0 0.0
    %7215 = vmatprep.subr.mxu0 0.0
    %7216 = vmatpush1.msra.mxu0 0.0
    %7217 = vmatprep.subr.mxu0 0.0
    %7218 = vmatpush1.msra.mxu0 0.0
    %7219 = vmatprep.subr.mxu0 0.0
    %7220 = vmatpush1.msra.mxu0 0.0
    %7221 = vmatprep.subr.mxu0 0.0
    %7222 = vmatpush1.msra.mxu0 0.0
    %7223 = vmatprep.subr.mxu0 0.0
    %7224 = vmatpush1.msra.mxu0 0.0
    %7225 = vmatprep.subr.mxu0 0.0
    %7226 = vmatpush1.msra.mxu0 0.0
    %7227 = vmatprep.mubr.f32.mxu0 0.0
    %7228 = vmatmul.mubr.f32.gmra.mrb[0].mxu0 %v7161
    %v7229 = vpop.f32.mrb[0].mxu0
    %v7230 = vadd.f32 %v7158, %v7229
    %v7231 = vpop.f32.mrb[0].mxu0
    %7232 = vdwg.mxu0
    %v7234 = vlaneseq
    %v7235 = vshrl.u32 %v7234, 7
    %v7236 = vsub.s32 0, %v7235
    %v7237 = vrot.slane %v6061, %v7236
    %7239 = vmatprep.subr.mxu0 0.0
    %7240 = vmatpush1.msra.mxu0 %v6057
    %7241 = vmatprep.subr.mxu0 0.0
    %7242 = vmatpush1.msra.mxu0 %v6058
    %7243 = vmatprep.subr.mxu0 0.0
    %7244 = vmatpush1.msra.mxu0 %v6059
    %7245 = vmatprep.subr.mxu0 0.0
    %7246 = vmatpush1.msra.mxu0 %v6060
    %7247 = vmatprep.subr.mxu0 0.0
    %7248 = vmatpush1.msra.mxu0 0.0
    %7249 = vmatprep.subr.mxu0 0.0
    %7250 = vmatpush1.msra.mxu0 0.0
    %7251 = vmatprep.subr.mxu0 0.0
    %7252 = vmatpush1.msra.mxu0 0.0
    %7253 = vmatprep.subr.mxu0 0.0
    %7254 = vmatpush1.msra.mxu0 0.0
    %7255 = vmatprep.subr.mxu0 0.0
    %7256 = vmatpush1.msra.mxu0 0.0
    %7257 = vmatprep.subr.mxu0 0.0
    %7258 = vmatpush1.msra.mxu0 0.0
    %7259 = vmatprep.subr.mxu0 0.0
    %7260 = vmatpush1.msra.mxu0 0.0
    %7261 = vmatprep.subr.mxu0 0.0
    %7262 = vmatpush1.msra.mxu0 0.0
    %7263 = vmatprep.subr.mxu0 0.0
    %7264 = vmatpush1.msra.mxu0 0.0
    %7265 = vmatprep.subr.mxu0 0.0
    %7266 = vmatpush1.msra.mxu0 0.0
    %7267 = vmatprep.subr.mxu0 0.0
    %7268 = vmatpush1.msra.mxu0 0.0
    %7269 = vmatprep.subr.mxu0 0.0
    %7270 = vmatpush1.msra.mxu0 0.0
    %7271 = vmatprep.subr.mxu0 0.0
    %7272 = vmatpush1.msra.mxu0 0.0
    %7273 = vmatprep.subr.mxu0 0.0
    %7274 = vmatpush1.msra.mxu0 0.0
    %7275 = vmatprep.subr.mxu0 0.0
    %7276 = vmatpush1.msra.mxu0 0.0
    %7277 = vmatprep.subr.mxu0 0.0
    %7278 = vmatpush1.msra.mxu0 0.0
    %7279 = vmatprep.subr.mxu0 0.0
    %7280 = vmatpush1.msra.mxu0 0.0
    %7281 = vmatprep.subr.mxu0 0.0
    %7282 = vmatpush1.msra.mxu0 0.0
    %7283 = vmatprep.subr.mxu0 0.0
    %7284 = vmatpush1.msra.mxu0 0.0
    %7285 = vmatprep.subr.mxu0 0.0
    %7286 = vmatpush1.msra.mxu0 0.0
    %7287 = vmatprep.subr.mxu0 0.0
    %7288 = vmatpush1.msra.mxu0 0.0
    %7289 = vmatprep.subr.mxu0 0.0
    %7290 = vmatpush1.msra.mxu0 0.0
    %7291 = vmatprep.subr.mxu0 0.0
    %7292 = vmatpush1.msra.mxu0 0.0
    %7293 = vmatprep.subr.mxu0 0.0
    %7294 = vmatpush1.msra.mxu0 0.0
    %7295 = vmatprep.subr.mxu0 0.0
    %7296 = vmatpush1.msra.mxu0 0.0
    %7297 = vmatprep.subr.mxu0 0.0
    %7298 = vmatpush1.msra.mxu0 0.0
    %7299 = vmatprep.subr.mxu0 0.0
    %7300 = vmatpush1.msra.mxu0 0.0
    %7301 = vmatprep.subr.mxu0 0.0
    %7302 = vmatpush1.msra.mxu0 0.0
    %7303 = vmatprep.mubr.f32.mxu0 0.0
    %7304 = vmatmul.mubr.f32.gmra.mrb[0].mxu0 %v4761
    %v7305 = vpop.f32.mrb[0].mxu0
    %v7306 = vadd.f32 %v7237, %v7305
    %v7307 = vpop.f32.mrb[0].mxu0
    %7308 = vmatprep.mubr.f32.mxu0 0.0
    %7309 = vmatmul.mubr.f32.gmra.mrb[0].mxu0 %v4764
    %v7310 = vpop.f32.mrb[0].mxu0
    %v7311 = vadd.f32 %v7237, %v7310
    %v7312 = vpop.f32.mrb[0].mxu0
    %7313 = vdwg.mxu0
    %v7315 = vsel %vm611, %v7230, 0
    %v7318 = vsel %vm611, %v7306, 0
    %v7321 = vsel %vm611, %v7311, 0
    %7323 = vmatprep.subr.mxu0 0.0
    %7324 = vmatpush1.xpose.msra.mxu0 %v7318
    %7325 = vmatprep.subr.mxu0 0.0
    %7326 = vmatpush1.xpose.msra.mxu0 %v7321
    %7327 = vmatprep.subr.mxu0 0.0
    %7328 = vmatpush1.xpose.msra.mxu0 0.0
    %7329 = vmatprep.subr.mxu0 0.0
    %7330 = vmatpush1.xpose.msra.mxu0 0.0
    %7331 = vmatprep.subr.mxu0 0.0
    %7332 = vmatpush1.xpose.msra.mxu0 0.0
    %7333 = vmatprep.subr.mxu0 0.0
    %7334 = vmatpush1.xpose.msra.mxu0 0.0
    %7335 = vmatprep.subr.mxu0 0.0
    %7336 = vmatpush1.xpose.msra.mxu0 0.0
    %7337 = vmatprep.subr.mxu0 0.0
    %7338 = vmatpush1.xpose.msra.mxu0 0.0
    %7339 = vmatprep.subr.mxu0 0.0
    %7340 = vmatpush1.xpose.msra.mxu0 0.0
    %7341 = vmatprep.subr.mxu0 0.0
    %7342 = vmatpush1.xpose.msra.mxu0 0.0
    %7343 = vmatprep.subr.mxu0 0.0
    %7344 = vmatpush1.xpose.msra.mxu0 0.0
    %7345 = vmatprep.subr.mxu0 0.0
    %7346 = vmatpush1.xpose.msra.mxu0 0.0
    %7347 = vmatprep.subr.mxu0 0.0
    %7348 = vmatpush1.xpose.msra.mxu0 0.0
    %7349 = vmatprep.subr.mxu0 0.0
    %7350 = vmatpush1.xpose.msra.mxu0 0.0
    %7351 = vmatprep.subr.mxu0 0.0
    %7352 = vmatpush1.xpose.msra.mxu0 0.0
    %7353 = vmatprep.subr.mxu0 0.0
    %7354 = vmatpush1.xpose.msra.mxu0 0.0
    %7355 = vmatprep.subr.mxu0 0.0
    %7356 = vmatpush1.xpose.msra.mxu0 0.0
    %7357 = vmatprep.subr.mxu0 0.0
    %7358 = vmatpush1.xpose.msra.mxu0 0.0
    %7359 = vmatprep.subr.mxu0 0.0
    %7360 = vmatpush1.xpose.msra.mxu0 0.0
    %7361 = vmatprep.subr.mxu0 0.0
    %7362 = vmatpush1.xpose.msra.mxu0 0.0
    %7363 = vmatprep.subr.mxu0 0.0
    %7364 = vmatpush1.xpose.msra.mxu0 0.0
    %7365 = vmatprep.subr.mxu0 0.0
    %7366 = vmatpush1.xpose.msra.mxu0 0.0
    %7367 = vmatprep.subr.mxu0 0.0
    %7368 = vmatpush1.xpose.msra.mxu0 0.0
    %7369 = vmatprep.subr.mxu0 0.0
    %7370 = vmatpush1.xpose.msra.mxu0 0.0
    %7371 = vmatprep.subr.mxu0 0.0
    %7372 = vmatpush1.xpose.msra.mxu0 0.0
    %7373 = vmatprep.subr.mxu0 0.0
    %7374 = vmatpush1.xpose.msra.mxu0 0.0
    %7375 = vmatprep.subr.mxu0 0.0
    %7376 = vmatpush1.xpose.msra.mxu0 0.0
    %7377 = vmatprep.subr.mxu0 0.0
    %7378 = vmatpush1.xpose.msra.mxu0 0.0
    %7379 = vmatprep.subr.mxu0 0.0
    %7380 = vmatpush1.xpose.msra.mxu0 0.0
    %7381 = vmatprep.subr.mxu0 0.0
    %7382 = vmatpush1.xpose.msra.mxu0 0.0
    %7383 = vmatprep.subr.mxu0 0.0
    %7384 = vmatpush1.xpose.msra.mxu0 0.0
    %7385 = vmatprep.subr.mxu0 0.0
    %7386 = vmatpush1.xpose.msra.mxu0 0.0
    %7387 = vmatprep.mubr.f32.mxu0 0.0
    %7388 = vmatmul.mubr.f32.gmra.mrb[0].mxu0 %v7315
    %v7389 = vpop.f32.mrb[0].mxu0
    %v7390 = vadd.f32 %v388, %v7389
    %v7391 = vpop.f32.mrb[0].mxu0
    %7392 = vdwg.mxu0
    %v7393 = vsel %vm695, %v7390, -inf
    %7394 = vmax.xlane.f32.xlu0 %v7393
    %v7395 = vpop.xlane.xlu0 %7394
    %v7396 = vsub.f32 %v7390, %v7395
    %v7397 = vmul.f32 %v7396, 1.442695
    %v7398 = vpow.pop %v7397
    %v7399 = vsel %vm695, %v7398, 0.0
    %7400 = vadd.xlane.f32.xlu0 %v7399
    %v7401 = vpop.xlane.xlu0 %7400
    %v7402 = vrcp.pop %v7401
    %v7403 = vmul.f32 %v7398, %v7402
    %7404 = vrot.lane.b32.xlu0 %v7306, 96
    %v7405 = vpop.permute.xlu0 %7404
    %7406 = vrot.lane.b32.xlu0 %v7311, 96
    %v7407 = vpop.permute.xlu0 %7406
    %v7411 = vsel %vm695, %v7403, 0
    %7413 = vmatprep.subr.mxu0 0.0
    %7414 = vmatpush1.msra.mxu0 %v7405
    %7415 = vmatprep.subr.mxu0 0.0
    %7416 = vmatpush1.msra.mxu0 %v7407
    %7417 = vmatprep.subr.mxu0 0.0
    %7418 = vmatpush1.msra.mxu0 0.0
    %7419 = vmatprep.subr.mxu0 0.0
    %7420 = vmatpush1.msra.mxu0 0.0
    %7421 = vmatprep.subr.mxu0 0.0
    %7422 = vmatpush1.msra.mxu0 0.0
    %7423 = vmatprep.subr.mxu0 0.0
    %7424 = vmatpush1.msra.mxu0 0.0
    %7425 = vmatprep.subr.mxu0 0.0
    %7426 = vmatpush1.msra.mxu0 0.0
    %7427 = vmatprep.subr.mxu0 0.0
    %7428 = vmatpush1.msra.mxu0 0.0
    %7429 = vmatprep.subr.mxu0 0.0
    %7430 = vmatpush1.msra.mxu0 0.0
    %7431 = vmatprep.subr.mxu0 0.0
    %7432 = vmatpush1.msra.mxu0 0.0
    %7433 = vmatprep.subr.mxu0 0.0
    %7434 = vmatpush1.msra.mxu0 0.0
    %7435 = vmatprep.subr.mxu0 0.0
    %7436 = vmatpush1.msra.mxu0 0.0
    %7437 = vmatprep.subr.mxu0 0.0
    %7438 = vmatpush1.msra.mxu0 0.0
    %7439 = vmatprep.subr.mxu0 0.0
    %7440 = vmatpush1.msra.mxu0 0.0
    %7441 = vmatprep.subr.mxu0 0.0
    %7442 = vmatpush1.msra.mxu0 0.0
    %7443 = vmatprep.subr.mxu0 0.0
    %7444 = vmatpush1.msra.mxu0 0.0
    %7445 = vmatprep.subr.mxu0 0.0
    %7446 = vmatpush1.msra.mxu0 0.0
    %7447 = vmatprep.subr.mxu0 0.0
    %7448 = vmatpush1.msra.mxu0 0.0
    %7449 = vmatprep.subr.mxu0 0.0
    %7450 = vmatpush1.msra.mxu0 0.0
    %7451 = vmatprep.subr.mxu0 0.0
    %7452 = vmatpush1.msra.mxu0 0.0
    %7453 = vmatprep.subr.mxu0 0.0
    %7454 = vmatpush1.msra.mxu0 0.0
    %7455 = vmatprep.subr.mxu0 0.0
    %7456 = vmatpush1.msra.mxu0 0.0
    %7457 = vmatprep.subr.mxu0 0.0
    %7458 = vmatpush1.msra.mxu0 0.0
    %7459 = vmatprep.subr.mxu0 0.0
    %7460 = vmatpush1.msra.mxu0 0.0
    %7461 = vmatprep.subr.mxu0 0.0
    %7462 = vmatpush1.msra.mxu0 0.0
    %7463 = vmatprep.subr.mxu0 0.0
    %7464 = vmatpush1.msra.mxu0 0.0
    %7465 = vmatprep.subr.mxu0 0.0
    %7466 = vmatpush1.msra.mxu0 0.0
    %7467 = vmatprep.subr.mxu0 0.0
    %7468 = vmatpush1.msra.mxu0 0.0
    %7469 = vmatprep.subr.mxu0 0.0
    %7470 = vmatpush1.msra.mxu0 0.0
    %7471 = vmatprep.subr.mxu0 0.0
    %7472 = vmatpush1.msra.mxu0 0.0
    %7473 = vmatprep.subr.mxu0 0.0
    %7474 = vmatpush1.msra.mxu0 0.0
    %7475 = vmatprep.subr.mxu0 0.0
    %7476 = vmatpush1.msra.mxu0 0.0
    %7477 = vmatprep.mubr.f32.mxu0 0.0
    %7478 = vmatmul.mubr.f32.gmra.mrb[0].mxu0 %v7411
    %v7479 = vpop.f32.mrb[0].mxu0
    %v7480 = vadd.f32 0.0, %v7479
    %v7481 = vpop.f32.mrb[0].mxu0
    %7482 = vdwg.mxu0
    %7483 = vrot.lane.b32.xlu0 %v7230, 120
    %v7484 = vpop.permute.xlu0 %7483
    %7485 = vrot.lane.b32.xlu0 %v7306, 120
    %v7486 = vpop.permute.xlu0 %7485
    %7487 = vrot.lane.b32.xlu0 %v7311, 120
    %v7488 = vpop.permute.xlu0 %7487
    %v7489 = vsel %vm611, %v7484, 0
    %v7491 = vsel %vm611, %v7486, 0
    %v7493 = vsel %vm611, %v7488, 0
    %7495 = vmatprep.subr.mxu0 0.0
    %7496 = vmatpush1.xpose.msra.mxu0 %v7491
    %7497 = vmatprep.subr.mxu0 0.0
    %7498 = vmatpush1.xpose.msra.mxu0 %v7493
    %7499 = vmatprep.subr.mxu0 0.0
    %7500 = vmatpush1.xpose.msra.mxu0 0.0
    %7501 = vmatprep.subr.mxu0 0.0
    %7502 = vmatpush1.xpose.msra.mxu0 0.0
    %7503 = vmatprep.subr.mxu0 0.0
    %7504 = vmatpush1.xpose.msra.mxu0 0.0
    %7505 = vmatprep.subr.mxu0 0.0
    %7506 = vmatpush1.xpose.msra.mxu0 0.0
    %7507 = vmatprep.subr.mxu0 0.0
    %7508 = vmatpush1.xpose.msra.mxu0 0.0
    %7509 = vmatprep.subr.mxu0 0.0
    %7510 = vmatpush1.xpose.msra.mxu0 0.0
    %7511 = vmatprep.subr.mxu0 0.0
    %7512 = vmatpush1.xpose.msra.mxu0 0.0
    %7513 = vmatprep.subr.mxu0 0.0
    %7514 = vmatpush1.xpose.msra.mxu0 0.0
    %7515 = vmatprep.subr.mxu0 0.0
    %7516 = vmatpush1.xpose.msra.mxu0 0.0
    %7517 = vmatprep.subr.mxu0 0.0
    %7518 = vmatpush1.xpose.msra.mxu0 0.0
    %7519 = vmatprep.subr.mxu0 0.0
    %7520 = vmatpush1.xpose.msra.mxu0 0.0
    %7521 = vmatprep.subr.mxu0 0.0
    %7522 = vmatpush1.xpose.msra.mxu0 0.0
    %7523 = vmatprep.subr.mxu0 0.0
    %7524 = vmatpush1.xpose.msra.mxu0 0.0
    %7525 = vmatprep.subr.mxu0 0.0
    %7526 = vmatpush1.xpose.msra.mxu0 0.0
    %7527 = vmatprep.subr.mxu0 0.0
    %7528 = vmatpush1.xpose.msra.mxu0 0.0
    %7529 = vmatprep.subr.mxu0 0.0
    %7530 = vmatpush1.xpose.msra.mxu0 0.0
    %7531 = vmatprep.subr.mxu0 0.0
    %7532 = vmatpush1.xpose.msra.mxu0 0.0
    %7533 = vmatprep.subr.mxu0 0.0
    %7534 = vmatpush1.xpose.msra.mxu0 0.0
    %7535 = vmatprep.subr.mxu0 0.0
    %7536 = vmatpush1.xpose.msra.mxu0 0.0
    %7537 = vmatprep.subr.mxu0 0.0
    %7538 = vmatpush1.xpose.msra.mxu0 0.0
    %7539 = vmatprep.subr.mxu0 0.0
    %7540 = vmatpush1.xpose.msra.mxu0 0.0
    %7541 = vmatprep.subr.mxu0 0.0
    %7542 = vmatpush1.xpose.msra.mxu0 0.0
    %7543 = vmatprep.subr.mxu0 0.0
    %7544 = vmatpush1.xpose.msra.mxu0 0.0
    %7545 = vmatprep.subr.mxu0 0.0
    %7546 = vmatpush1.xpose.msra.mxu0 0.0
    %7547 = vmatprep.subr.mxu0 0.0
    %7548 = vmatpush1.xpose.msra.mxu0 0.0
    %7549 = vmatprep.subr.mxu0 0.0
    %7550 = vmatpush1.xpose.msra.mxu0 0.0
    %7551 = vmatprep.subr.mxu0 0.0
    %7552 = vmatpush1.xpose.msra.mxu0 0.0
    %7553 = vmatprep.subr.mxu0 0.0
    %7554 = vmatpush1.xpose.msra.mxu0 0.0
    %7555 = vmatprep.subr.mxu0 0.0
    %7556 = vmatpush1.xpose.msra.mxu0 0.0
    %7557 = vmatprep.subr.mxu0 0.0
    %7558 = vmatpush1.xpose.msra.mxu0 0.0
    %7559 = vmatprep.mubr.f32.mxu0 0.0
    %7560 = vmatmul.mubr.f32.gmra.mrb[0].mxu0 %v7489
    %v7561 = vpop.f32.mrb[0].mxu0
    %v7562 = vadd.f32 %v388, %v7561
    %v7563 = vpop.f32.mrb[0].mxu0
    %7564 = vdwg.mxu0
    %v7565 = vsel %vm695, %v7562, -inf
    %7566 = vmax.xlane.f32.xlu0 %v7565
    %v7567 = vpop.xlane.xlu0 %7566
    %v7568 = vsub.f32 %v7562, %v7567
    %v7569 = vmul.f32 %v7568, 1.442695
    %v7570 = vpow.pop %v7569
    %v7571 = vsel %vm695, %v7570, 0.0
    %7572 = vadd.xlane.f32.xlu0 %v7571
    %v7573 = vpop.xlane.xlu0 %7572
    %v7574 = vrcp.pop %v7573
    %v7575 = vmul.f32 %v7570, %v7574
    %7576 = vrot.lane.b32.xlu0 %v7306, 88
    %v7577 = vpop.permute.xlu0 %7576
    %7578 = vrot.lane.b32.xlu0 %v7311, 88
    %v7579 = vpop.permute.xlu0 %7578
    %v7583 = vsel %vm695, %v7575, 0
    %7585 = vmatprep.subr.mxu0 0.0
    %7586 = vmatpush1.msra.mxu0 %v7577
    %7587 = vmatprep.subr.mxu0 0.0
    %7588 = vmatpush1.msra.mxu0 %v7579
    %7589 = vmatprep.subr.mxu0 0.0
    %7590 = vmatpush1.msra.mxu0 0.0
    %7591 = vmatprep.subr.mxu0 0.0
    %7592 = vmatpush1.msra.mxu0 0.0
    %7593 = vmatprep.subr.mxu0 0.0
    %7594 = vmatpush1.msra.mxu0 0.0
    %7595 = vmatprep.subr.mxu0 0.0
    %7596 = vmatpush1.msra.mxu0 0.0
    %7597 = vmatprep.subr.mxu0 0.0
    %7598 = vmatpush1.msra.mxu0 0.0
    %7599 = vmatprep.subr.mxu0 0.0
    %7600 = vmatpush1.msra.mxu0 0.0
    %7601 = vmatprep.subr.mxu0 0.0
    %7602 = vmatpush1.msra.mxu0 0.0
    %7603 = vmatprep.subr.mxu0 0.0
    %7604 = vmatpush1.msra.mxu0 0.0
    %7605 = vmatprep.subr.mxu0 0.0
    %7606 = vmatpush1.msra.mxu0 0.0
    %7607 = vmatprep.subr.mxu0 0.0
    %7608 = vmatpush1.msra.mxu0 0.0
    %7609 = vmatprep.subr.mxu0 0.0
    %7610 = vmatpush1.msra.mxu0 0.0
    %7611 = vmatprep.subr.mxu0 0.0
    %7612 = vmatpush1.msra.mxu0 0.0
    %7613 = vmatprep.subr.mxu0 0.0
    %7614 = vmatpush1.msra.mxu0 0.0
    %7615 = vmatprep.subr.mxu0 0.0
    %7616 = vmatpush1.msra.mxu0 0.0
    %7617 = vmatprep.subr.mxu0 0.0
    %7618 = vmatpush1.msra.mxu0 0.0
    %7619 = vmatprep.subr.mxu0 0.0
    %7620 = vmatpush1.msra.mxu0 0.0
    %7621 = vmatprep.subr.mxu0 0.0
    %7622 = vmatpush1.msra.mxu0 0.0
    %7623 = vmatprep.subr.mxu0 0.0
    %7624 = vmatpush1.msra.mxu0 0.0
    %7625 = vmatprep.subr.mxu0 0.0
    %7626 = vmatpush1.msra.mxu0 0.0
    %7627 = vmatprep.subr.mxu0 0.0
    %7628 = vmatpush1.msra.mxu0 0.0
    %7629 = vmatprep.subr.mxu0 0.0
    %7630 = vmatpush1.msra.mxu0 0.0
    %7631 = vmatprep.subr.mxu0 0.0
    %7632 = vmatpush1.msra.mxu0 0.0
    %7633 = vmatprep.subr.mxu0 0.0
    %7634 = vmatpush1.msra.mxu0 0.0
    %7635 = vmatprep.subr.mxu0 0.0
    %7636 = vmatpush1.msra.mxu0 0.0
    %7637 = vmatprep.subr.mxu0 0.0
    %7638 = vmatpush1.msra.mxu0 0.0
    %7639 = vmatprep.subr.mxu0 0.0
    %7640 = vmatpush1.msra.mxu0 0.0
    %7641 = vmatprep.subr.mxu0 0.0
    %7642 = vmatpush1.msra.mxu0 0.0
    %7643 = vmatprep.subr.mxu0 0.0
    %7644 = vmatpush1.msra.mxu0 0.0
    %7645 = vmatprep.subr.mxu0 0.0
    %7646 = vmatpush1.msra.mxu0 0.0
    %7647 = vmatprep.subr.mxu0 0.0
    %7648 = vmatpush1.msra.mxu0 0.0
    %7649 = vmatprep.mubr.f32.mxu0 0.0
    %7650 = vmatmul.mubr.f32.gmra.mrb[0].mxu0 %v7583
    %v7651 = vpop.f32.mrb[0].mxu0
    %v7652 = vadd.f32 0.0, %v7651
    %v7653 = vpop.f32.mrb[0].mxu0
    %7654 = vdwg.mxu0
    %v7656 = vsel %vm611, %v7652, 0
    %7658 = vmatprep.subr.mxu0 0.0
    %7659 = vmatpush1.msra.mxu0 %v6063
    %7660 = vmatprep.subr.mxu0 0.0
    %7661 = vmatpush1.msra.mxu0 0.0
    %7662 = vmatprep.subr.mxu0 0.0
    %7663 = vmatpush1.msra.mxu0 0.0
    %7664 = vmatprep.subr.mxu0 0.0
    %7665 = vmatpush1.msra.mxu0 0.0
    %7666 = vmatprep.subr.mxu0 0.0
    %7667 = vmatpush1.msra.mxu0 0.0
    %7668 = vmatprep.subr.mxu0 0.0
    %7669 = vmatpush1.msra.mxu0 0.0
    %7670 = vmatprep.subr.mxu0 0.0
    %7671 = vmatpush1.msra.mxu0 0.0
    %7672 = vmatprep.subr.mxu0 0.0
    %7673 = vmatpush1.msra.mxu0 0.0
    %7674 = vmatprep.subr.mxu0 0.0
    %7675 = vmatpush1.msra.mxu0 0.0
    %7676 = vmatprep.subr.mxu0 0.0
    %7677 = vmatpush1.msra.mxu0 0.0
    %7678 = vmatprep.subr.mxu0 0.0
    %7679 = vmatpush1.msra.mxu0 0.0
    %7680 = vmatprep.subr.mxu0 0.0
    %7681 = vmatpush1.msra.mxu0 0.0
    %7682 = vmatprep.subr.mxu0 0.0
    %7683 = vmatpush1.msra.mxu0 0.0
    %7684 = vmatprep.subr.mxu0 0.0
    %7685 = vmatpush1.msra.mxu0 0.0
    %7686 = vmatprep.subr.mxu0 0.0
    %7687 = vmatpush1.msra.mxu0 0.0
    %7688 = vmatprep.subr.mxu0 0.0
    %7689 = vmatpush1.msra.mxu0 0.0
    %7690 = vmatprep.subr.mxu0 0.0
    %7691 = vmatpush1.msra.mxu0 0.0
    %7692 = vmatprep.subr.mxu0 0.0
    %7693 = vmatpush1.msra.mxu0 0.0
    %7694 = vmatprep.subr.mxu0 0.0
    %7695 = vmatpush1.msra.mxu0 0.0
    %7696 = vmatprep.subr.mxu0 0.0
    %7697 = vmatpush1.msra.mxu0 0.0
    %7698 = vmatprep.subr.mxu0 0.0
    %7699 = vmatpush1.msra.mxu0 0.0
    %7700 = vmatprep.subr.mxu0 0.0
    %7701 = vmatpush1.msra.mxu0 0.0
    %7702 = vmatprep.subr.mxu0 0.0
    %7703 = vmatpush1.msra.mxu0 0.0
    %7704 = vmatprep.subr.mxu0 0.0
    %7705 = vmatpush1.msra.mxu0 0.0
    %7706 = vmatprep.subr.mxu0 0.0
    %7707 = vmatpush1.msra.mxu0 0.0
    %7708 = vmatprep.subr.mxu0 0.0
    %7709 = vmatpush1.msra.mxu0 0.0
    %7710 = vmatprep.subr.mxu0 0.0
    %7711 = vmatpush1.msra.mxu0 0.0
    %7712 = vmatprep.subr.mxu0 0.0
    %7713 = vmatpush1.msra.mxu0 0.0
    %7714 = vmatprep.subr.mxu0 0.0
    %7715 = vmatpush1.msra.mxu0 0.0
    %7716 = vmatprep.subr.mxu0 0.0
    %7717 = vmatpush1.msra.mxu0 0.0
    %7718 = vmatprep.subr.mxu0 0.0
    %7719 = vmatpush1.msra.mxu0 0.0
    %7720 = vmatprep.subr.mxu0 0.0
    %7721 = vmatpush1.msra.mxu0 0.0
    %7722 = vmatprep.mubr.f32.mxu0 0.0
    %7723 = vmatmul.mubr.f32.gmra.mrb[0].mxu0 %v7656
    %v7724 = vpop.f32.mrb[0].mxu0
    %v7725 = vadd.f32 0.0, %v7724
    %v7726 = vpop.f32.mrb[0].mxu0
    %7727 = vdwg.mxu0
    %v7729 = vsel %vm611, %v7480, 0
    %7731 = vmatprep.subr.mxu0 0.0
    %7732 = vmatpush1.msra.mxu0 %v6062
    %7733 = vmatprep.subr.mxu0 0.0
    %7734 = vmatpush1.msra.mxu0 0.0
    %7735 = vmatprep.subr.mxu0 0.0
    %7736 = vmatpush1.msra.mxu0 0.0
    %7737 = vmatprep.subr.mxu0 0.0
    %7738 = vmatpush1.msra.mxu0 0.0
    %7739 = vmatprep.subr.mxu0 0.0
    %7740 = vmatpush1.msra.mxu0 0.0
    %7741 = vmatprep.subr.mxu0 0.0
    %7742 = vmatpush1.msra.mxu0 0.0
    %7743 = vmatprep.subr.mxu0 0.0
    %7744 = vmatpush1.msra.mxu0 0.0
    %7745 = vmatprep.subr.mxu0 0.0
    %7746 = vmatpush1.msra.mxu0 0.0
    %7747 = vmatprep.subr.mxu0 0.0
    %7748 = vmatpush1.msra.mxu0 0.0
    %7749 = vmatprep.subr.mxu0 0.0
    %7750 = vmatpush1.msra.mxu0 0.0
    %7751 = vmatprep.subr.mxu0 0.0
    %7752 = vmatpush1.msra.mxu0 0.0
    %7753 = vmatprep.subr.mxu0 0.0
    %7754 = vmatpush1.msra.mxu0 0.0
    %7755 = vmatprep.subr.mxu0 0.0
    %7756 = vmatpush1.msra.mxu0 0.0
    %7757 = vmatprep.subr.mxu0 0.0
    %7758 = vmatpush1.msra.mxu0 0.0
    %7759 = vmatprep.subr.mxu0 0.0
    %7760 = vmatpush1.msra.mxu0 0.0
    %7761 = vmatprep.subr.mxu0 0.0
    %7762 = vmatpush1.msra.mxu0 0.0
    %7763 = vmatprep.subr.mxu0 0.0
    %7764 = vmatpush1.msra.mxu0 0.0
    %7765 = vmatprep.subr.mxu0 0.0
    %7766 = vmatpush1.msra.mxu0 0.0
    %7767 = vmatprep.subr.mxu0 0.0
    %7768 = vmatpush1.msra.mxu0 0.0
    %7769 = vmatprep.subr.mxu0 0.0
    %7770 = vmatpush1.msra.mxu0 0.0
    %7771 = vmatprep.subr.mxu0 0.0
    %7772 = vmatpush1.msra.mxu0 0.0
    %7773 = vmatprep.subr.mxu0 0.0
    %7774 = vmatpush1.msra.mxu0 0.0
    %7775 = vmatprep.subr.mxu0 0.0
    %7776 = vmatpush1.msra.mxu0 0.0
    %7777 = vmatprep.subr.mxu0 0.0
    %7778 = vmatpush1.msra.mxu0 0.0
    %7779 = vmatprep.subr.mxu0 0.0
    %7780 = vmatpush1.msra.mxu0 0.0
    %7781 = vmatprep.subr.mxu0 0.0
    %7782 = vmatpush1.msra.mxu0 0.0
    %7783 = vmatprep.subr.mxu0 0.0
    %7784 = vmatpush1.msra.mxu0 0.0
    %7785 = vmatprep.subr.mxu0 0.0
    %7786 = vmatpush1.msra.mxu0 0.0
    %7787 = vmatprep.subr.mxu0 0.0
    %7788 = vmatpush1.msra.mxu0 0.0
    %7789 = vmatprep.subr.mxu0 0.0
    %7790 = vmatpush1.msra.mxu0 0.0
    %7791 = vmatprep.subr.mxu0 0.0
    %7792 = vmatpush1.msra.mxu0 0.0
    %7793 = vmatprep.subr.mxu0 0.0
    %7794 = vmatpush1.msra.mxu0 0.0
    %7795 = vmatprep.mubr.f32.mxu0 0.0
    %7796 = vmatmul.mubr.f32.gmra.mrb[0].mxu0 %v7729
    %v7797 = vpop.f32.mrb[0].mxu0
    %v7798 = vadd.f32 %v7725, %v7797
    %v7799 = vpop.f32.mrb[0].mxu0
    %7800 = vdwg.mxu0
    %7801 = vrot.lane.b32.xlu0 %v7230, 112
    %v7802 = vpop.permute.xlu0 %7801
    %7803 = vrot.lane.b32.xlu0 %v7306, 112
    %v7804 = vpop.permute.xlu0 %7803
    %7805 = vrot.lane.b32.xlu0 %v7311, 112
    %v7806 = vpop.permute.xlu0 %7805
    %v7807 = vsel %vm611, %v7802, 0
    %v7809 = vsel %vm611, %v7804, 0
    %v7811 = vsel %vm611, %v7806, 0
    %7813 = vmatprep.subr.mxu0 0.0
    %7814 = vmatpush1.xpose.msra.mxu0 %v7809
    %7815 = vmatprep.subr.mxu0 0.0
    %7816 = vmatpush1.xpose.msra.mxu0 %v7811
    %7817 = vmatprep.subr.mxu0 0.0
    %7818 = vmatpush1.xpose.msra.mxu0 0.0
    %7819 = vmatprep.subr.mxu0 0.0
    %7820 = vmatpush1.xpose.msra.mxu0 0.0
    %7821 = vmatprep.subr.mxu0 0.0
    %7822 = vmatpush1.xpose.msra.mxu0 0.0
    %7823 = vmatprep.subr.mxu0 0.0
    %7824 = vmatpush1.xpose.msra.mxu0 0.0
    %7825 = vmatprep.subr.mxu0 0.0
    %7826 = vmatpush1.xpose.msra.mxu0 0.0
    %7827 = vmatprep.subr.mxu0 0.0
    %7828 = vmatpush1.xpose.msra.mxu0 0.0
    %7829 = vmatprep.subr.mxu0 0.0
    %7830 = vmatpush1.xpose.msra.mxu0 0.0
    %7831 = vmatprep.subr.mxu0 0.0
    %7832 = vmatpush1.xpose.msra.mxu0 0.0
    %7833 = vmatprep.subr.mxu0 0.0
    %7834 = vmatpush1.xpose.msra.mxu0 0.0
    %7835 = vmatprep.subr.mxu0 0.0
    %7836 = vmatpush1.xpose.msra.mxu0 0.0
    %7837 = vmatprep.subr.mxu0 0.0
    %7838 = vmatpush1.xpose.msra.mxu0 0.0
    %7839 = vmatprep.subr.mxu0 0.0
    %7840 = vmatpush1.xpose.msra.mxu0 0.0
    %7841 = vmatprep.subr.mxu0 0.0
    %7842 = vmatpush1.xpose.msra.mxu0 0.0
    %7843 = vmatprep.subr.mxu0 0.0
    %7844 = vmatpush1.xpose.msra.mxu0 0.0
    %7845 = vmatprep.subr.mxu0 0.0
    %7846 = vmatpush1.xpose.msra.mxu0 0.0
    %7847 = vmatprep.subr.mxu0 0.0
    %7848 = vmatpush1.xpose.msra.mxu0 0.0
    %7849 = vmatprep.subr.mxu0 0.0
    %7850 = vmatpush1.xpose.msra.mxu0 0.0
    %7851 = vmatprep.subr.mxu0 0.0
    %7852 = vmatpush1.xpose.msra.mxu0 0.0
    %7853 = vmatprep.subr.mxu0 0.0
    %7854 = vmatpush1.xpose.msra.mxu0 0.0
    %7855 = vmatprep.subr.mxu0 0.0
    %7856 = vmatpush1.xpose.msra.mxu0 0.0
    %7857 = vmatprep.subr.mxu0 0.0
    %7858 = vmatpush1.xpose.msra.mxu0 0.0
    %7859 = vmatprep.subr.mxu0 0.0
    %7860 = vmatpush1.xpose.msra.mxu0 0.0
    %7861 = vmatprep.subr.mxu0 0.0
    %7862 = vmatpush1.xpose.msra.mxu0 0.0
    %7863 = vmatprep.subr.mxu0 0.0
    %7864 = vmatpush1.xpose.msra.mxu0 0.0
    %7865 = vmatprep.subr.mxu0 0.0
    %7866 = vmatpush1.xpose.msra.mxu0 0.0
    %7867 = vmatprep.subr.mxu0 0.0
    %7868 = vmatpush1.xpose.msra.mxu0 0.0
    %7869 = vmatprep.subr.mxu0 0.0
    %7870 = vmatpush1.xpose.msra.mxu0 0.0
    %7871 = vmatprep.subr.mxu0 0.0
    %7872 = vmatpush1.xpose.msra.mxu0 0.0
    %7873 = vmatprep.subr.mxu0 0.0
    %7874 = vmatpush1.xpose.msra.mxu0 0.0
    %7875 = vmatprep.subr.mxu0 0.0
    %7876 = vmatpush1.xpose.msra.mxu0 0.0
    %7877 = vmatprep.mubr.f32.mxu0 0.0
    %7878 = vmatmul.mubr.f32.gmra.mrb[0].mxu0 %v7807
    %v7879 = vpop.f32.mrb[0].mxu0
    %v7880 = vadd.f32 %v388, %v7879
    %v7881 = vpop.f32.mrb[0].mxu0
    %7882 = vdwg.mxu0
    %v7883 = vsel %vm695, %v7880, -inf
    %7884 = vmax.xlane.f32.xlu0 %v7883
    %v7885 = vpop.xlane.xlu0 %7884
    %v7886 = vsub.f32 %v7880, %v7885
    %v7887 = vmul.f32 %v7886, 1.442695
    %v7888 = vpow.pop %v7887
    %v7889 = vsel %vm695, %v7888, 0.0
    %7890 = vadd.xlane.f32.xlu0 %v7889
    %v7891 = vpop.xlane.xlu0 %7890
    %v7892 = vrcp.pop %v7891
    %v7893 = vmul.f32 %v7888, %v7892
    %7894 = vrot.lane.b32.xlu0 %v7306, 80
    %v7895 = vpop.permute.xlu0 %7894
    %7896 = vrot.lane.b32.xlu0 %v7311, 80
    %v7897 = vpop.permute.xlu0 %7896
    %v7901 = vsel %vm695, %v7893, 0
    %7903 = vmatprep.subr.mxu0 0.0
    %7904 = vmatpush1.msra.mxu0 %v7895
    %7905 = vmatprep.subr.mxu0 0.0
    %7906 = vmatpush1.msra.mxu0 %v7897
    %7907 = vmatprep.subr.mxu0 0.0
    %7908 = vmatpush1.msra.mxu0 0.0
    %7909 = vmatprep.subr.mxu0 0.0
    %7910 = vmatpush1.msra.mxu0 0.0
    %7911 = vmatprep.subr.mxu0 0.0
    %7912 = vmatpush1.msra.mxu0 0.0
    %7913 = vmatprep.subr.mxu0 0.0
    %7914 = vmatpush1.msra.mxu0 0.0
    %7915 = vmatprep.subr.mxu0 0.0
    %7916 = vmatpush1.msra.mxu0 0.0
    %7917 = vmatprep.subr.mxu0 0.0
    %7918 = vmatpush1.msra.mxu0 0.0
    %7919 = vmatprep.subr.mxu0 0.0
    %7920 = vmatpush1.msra.mxu0 0.0
    %7921 = vmatprep.subr.mxu0 0.0
    %7922 = vmatpush1.msra.mxu0 0.0
    %7923 = vmatprep.subr.mxu0 0.0
    %7924 = vmatpush1.msra.mxu0 0.0
    %7925 = vmatprep.subr.mxu0 0.0
    %7926 = vmatpush1.msra.mxu0 0.0
    %7927 = vmatprep.subr.mxu0 0.0
    %7928 = vmatpush1.msra.mxu0 0.0
    %7929 = vmatprep.subr.mxu0 0.0
    %7930 = vmatpush1.msra.mxu0 0.0
    %7931 = vmatprep.subr.mxu0 0.0
    %7932 = vmatpush1.msra.mxu0 0.0
    %7933 = vmatprep.subr.mxu0 0.0
    %7934 = vmatpush1.msra.mxu0 0.0
    %7935 = vmatprep.subr.mxu0 0.0
    %7936 = vmatpush1.msra.mxu0 0.0
    %7937 = vmatprep.subr.mxu0 0.0
    %7938 = vmatpush1.msra.mxu0 0.0
    %7939 = vmatprep.subr.mxu0 0.0
    %7940 = vmatpush1.msra.mxu0 0.0
    %7941 = vmatprep.subr.mxu0 0.0
    %7942 = vmatpush1.msra.mxu0 0.0
    %7943 = vmatprep.subr.mxu0 0.0
    %7944 = vmatpush1.msra.mxu0 0.0
    %7945 = vmatprep.subr.mxu0 0.0
    %7946 = vmatpush1.msra.mxu0 0.0
    %7947 = vmatprep.subr.mxu0 0.0
    %7948 = vmatpush1.msra.mxu0 0.0
    %7949 = vmatprep.subr.mxu0 0.0
    %7950 = vmatpush1.msra.mxu0 0.0
    %7951 = vmatprep.subr.mxu0 0.0
    %7952 = vmatpush1.msra.mxu0 0.0
    %7953 = vmatprep.subr.mxu0 0.0
    %7954 = vmatpush1.msra.mxu0 0.0
    %7955 = vmatprep.subr.mxu0 0.0
    %7956 = vmatpush1.msra.mxu0 0.0
    %7957 = vmatprep.subr.mxu0 0.0
    %7958 = vmatpush1.msra.mxu0 0.0
    %7959 = vmatprep.subr.mxu0 0.0
    %7960 = vmatpush1.msra.mxu0 0.0
    %7961 = vmatprep.subr.mxu0 0.0
    %7962 = vmatpush1.msra.mxu0 0.0
    %7963 = vmatprep.subr.mxu0 0.0
    %7964 = vmatpush1.msra.mxu0 0.0
    %7965 = vmatprep.subr.mxu0 0.0
    %7966 = vmatpush1.msra.mxu0 0.0
    %7967 = vmatprep.mubr.f32.mxu0 0.0
    %7968 = vmatmul.mubr.f32.gmra.mrb[0].mxu0 %v7901
    %v7969 = vpop.f32.mrb[0].mxu0
    %v7970 = vadd.f32 0.0, %v7969
    %v7971 = vpop.f32.mrb[0].mxu0
    %7972 = vdwg.mxu0
    %v7974 = vsel %vm611, %v7970, 0
    %7976 = vmatprep.subr.mxu0 0.0
    %7977 = vmatpush1.msra.mxu0 %v6064
    %7978 = vmatprep.subr.mxu0 0.0
    %7979 = vmatpush1.msra.mxu0 0.0
    %7980 = vmatprep.subr.mxu0 0.0
    %7981 = vmatpush1.msra.mxu0 0.0
    %7982 = vmatprep.subr.mxu0 0.0
    %7983 = vmatpush1.msra.mxu0 0.0
    %7984 = vmatprep.subr.mxu0 0.0
    %7985 = vmatpush1.msra.mxu0 0.0
    %7986 = vmatprep.subr.mxu0 0.0
    %7987 = vmatpush1.msra.mxu0 0.0
    %7988 = vmatprep.subr.mxu0 0.0
    %7989 = vmatpush1.msra.mxu0 0.0
    %7990 = vmatprep.subr.mxu0 0.0
    %7991 = vmatpush1.msra.mxu0 0.0
    %7992 = vmatprep.subr.mxu0 0.0
    %7993 = vmatpush1.msra.mxu0 0.0
    %7994 = vmatprep.subr.mxu0 0.0
    %7995 = vmatpush1.msra.mxu0 0.0
    %7996 = vmatprep.subr.mxu0 0.0
    %7997 = vmatpush1.msra.mxu0 0.0
    %7998 = vmatprep.subr.mxu0 0.0
    %7999 = vmatpush1.msra.mxu0 0.0
    %8000 = vmatprep.subr.mxu0 0.0
    %8001 = vmatpush1.msra.mxu0 0.0
    %8002 = vmatprep.subr.mxu0 0.0
    %8003 = vmatpush1.msra.mxu0 0.0
    %8004 = vmatprep.subr.mxu0 0.0
    %8005 = vmatpush1.msra.mxu0 0.0
    %8006 = vmatprep.subr.mxu0 0.0
    %8007 = vmatpush1.msra.mxu0 0.0
    %8008 = vmatprep.subr.mxu0 0.0
    %8009 = vmatpush1.msra.mxu0 0.0
    %8010 = vmatprep.subr.mxu0 0.0
    %8011 = vmatpush1.msra.mxu0 0.0
    %8012 = vmatprep.subr.mxu0 0.0
    %8013 = vmatpush1.msra.mxu0 0.0
    %8014 = vmatprep.subr.mxu0 0.0
    %8015 = vmatpush1.msra.mxu0 0.0
    %8016 = vmatprep.subr.mxu0 0.0
    %8017 = vmatpush1.msra.mxu0 0.0
    %8018 = vmatprep.subr.mxu0 0.0
    %8019 = vmatpush1.msra.mxu0 0.0
    %8020 = vmatprep.subr.mxu0 0.0
    %8021 = vmatpush1.msra.mxu0 0.0
    %8022 = vmatprep.subr.mxu0 0.0
    %8023 = vmatpush1.msra.mxu0 0.0
    %8024 = vmatprep.subr.mxu0 0.0
    %8025 = vmatpush1.msra.mxu0 0.0
    %8026 = vmatprep.subr.mxu0 0.0
    %8027 = vmatpush1.msra.mxu0 0.0
    %8028 = vmatprep.subr.mxu0 0.0
    %8029 = vmatpush1.msra.mxu0 0.0
    %8030 = vmatprep.subr.mxu0 0.0
    %8031 = vmatpush1.msra.mxu0 0.0
    %8032 = vmatprep.subr.mxu0 0.0
    %8033 = vmatpush1.msra.mxu0 0.0
    %8034 = vmatprep.subr.mxu0 0.0
    %8035 = vmatpush1.msra.mxu0 0.0
    %8036 = vmatprep.subr.mxu0 0.0
    %8037 = vmatpush1.msra.mxu0 0.0
    %8038 = vmatprep.subr.mxu0 0.0
    %8039 = vmatpush1.msra.mxu0 0.0
    %8040 = vmatprep.mubr.f32.mxu0 0.0
    %8041 = vmatmul.mubr.f32.gmra.mrb[0].mxu0 %v7974
    %v8042 = vpop.f32.mrb[0].mxu0
    %v8043 = vadd.f32 0.0, %v8042
    %v8044 = vpop.f32.mrb[0].mxu0
    %8045 = vdwg.mxu0
    %v8046 = vadd.f32 %v7798, %v8043
    %8047 = vrot.lane.b32.xlu0 %v7230, 104
    %v8048 = vpop.permute.xlu0 %8047
    %8049 = vrot.lane.b32.xlu0 %v7306, 104
    %v8050 = vpop.permute.xlu0 %8049
    %8051 = vrot.lane.b32.xlu0 %v7311, 104
    %v8052 = vpop.permute.xlu0 %8051
    %v8053 = vsel %vm611, %v8048, 0
    %v8055 = vsel %vm611, %v8050, 0
    %v8057 = vsel %vm611, %v8052, 0
    %8059 = vmatprep.subr.mxu0 0.0
    %8060 = vmatpush1.xpose.msra.mxu0 %v8055
    %8061 = vmatprep.subr.mxu0 0.0
    %8062 = vmatpush1.xpose.msra.mxu0 %v8057
    %8063 = vmatprep.subr.mxu0 0.0
    %8064 = vmatpush1.xpose.msra.mxu0 0.0
    %8065 = vmatprep.subr.mxu0 0.0
    %8066 = vmatpush1.xpose.msra.mxu0 0.0
    %8067 = vmatprep.subr.mxu0 0.0
    %8068 = vmatpush1.xpose.msra.mxu0 0.0
    %8069 = vmatprep.subr.mxu0 0.0
    %8070 = vmatpush1.xpose.msra.mxu0 0.0
    %8071 = vmatprep.subr.mxu0 0.0
    %8072 = vmatpush1.xpose.msra.mxu0 0.0
    %8073 = vmatprep.subr.mxu0 0.0
    %8074 = vmatpush1.xpose.msra.mxu0 0.0
    %8075 = vmatprep.subr.mxu0 0.0
    %8076 = vmatpush1.xpose.msra.mxu0 0.0
    %8077 = vmatprep.subr.mxu0 0.0
    %8078 = vmatpush1.xpose.msra.mxu0 0.0
    %8079 = vmatprep.subr.mxu0 0.0
    %8080 = vmatpush1.xpose.msra.mxu0 0.0
    %8081 = vmatprep.subr.mxu0 0.0
    %8082 = vmatpush1.xpose.msra.mxu0 0.0
    %8083 = vmatprep.subr.mxu0 0.0
    %8084 = vmatpush1.xpose.msra.mxu0 0.0
    %8085 = vmatprep.subr.mxu0 0.0
    %8086 = vmatpush1.xpose.msra.mxu0 0.0
    %8087 = vmatprep.subr.mxu0 0.0
    %8088 = vmatpush1.xpose.msra.mxu0 0.0
    %8089 = vmatprep.subr.mxu0 0.0
    %8090 = vmatpush1.xpose.msra.mxu0 0.0
    %8091 = vmatprep.subr.mxu0 0.0
    %8092 = vmatpush1.xpose.msra.mxu0 0.0
    %8093 = vmatprep.subr.mxu0 0.0
    %8094 = vmatpush1.xpose.msra.mxu0 0.0
    %8095 = vmatprep.subr.mxu0 0.0
    %8096 = vmatpush1.xpose.msra.mxu0 0.0
    %8097 = vmatprep.subr.mxu0 0.0
    %8098 = vmatpush1.xpose.msra.mxu0 0.0
    %8099 = vmatprep.subr.mxu0 0.0
    %8100 = vmatpush1.xpose.msra.mxu0 0.0
    %8101 = vmatprep.subr.mxu0 0.0
    %8102 = vmatpush1.xpose.msra.mxu0 0.0
    %8103 = vmatprep.subr.mxu0 0.0
    %8104 = vmatpush1.xpose.msra.mxu0 0.0
    %8105 = vmatprep.subr.mxu0 0.0
    %8106 = vmatpush1.xpose.msra.mxu0 0.0
    %8107 = vmatprep.subr.mxu0 0.0
    %8108 = vmatpush1.xpose.msra.mxu0 0.0
    %8109 = vmatprep.subr.mxu0 0.0
    %8110 = vmatpush1.xpose.msra.mxu0 0.0
    %8111 = vmatprep.subr.mxu0 0.0
    %8112 = vmatpush1.xpose.msra.mxu0 0.0
    %8113 = vmatprep.subr.mxu0 0.0
    %8114 = vmatpush1.xpose.msra.mxu0 0.0
    %8115 = vmatprep.subr.mxu0 0.0
    %8116 = vmatpush1.xpose.msra.mxu0 0.0
    %8117 = vmatprep.subr.mxu0 0.0
    %8118 = vmatpush1.xpose.msra.mxu0 0.0
    %8119 = vmatprep.subr.mxu0 0.0
    %8120 = vmatpush1.xpose.msra.mxu0 0.0
    %8121 = vmatprep.subr.mxu0 0.0
    %8122 = vmatpush1.xpose.msra.mxu0 0.0
    %8123 = vmatprep.mubr.f32.mxu0 0.0
    %8124 = vmatmul.mubr.f32.gmra.mrb[0].mxu0 %v8053
    %v8125 = vpop.f32.mrb[0].mxu0
    %v8126 = vadd.f32 %v388, %v8125
    %v8127 = vpop.f32.mrb[0].mxu0
    %8128 = vdwg.mxu0
    %v8129 = vsel %vm695, %v8126, -inf
    %8130 = vmax.xlane.f32.xlu0 %v8129
    %v8131 = vpop.xlane.xlu0 %8130
    %v8132 = vsub.f32 %v8126, %v8131
    %v8133 = vmul.f32 %v8132, 1.442695
    %v8134 = vpow.pop %v8133
    %v8135 = vsel %vm695, %v8134, 0.0
    %8136 = vadd.xlane.f32.xlu0 %v8135
    %v8137 = vpop.xlane.xlu0 %8136
    %v8138 = vrcp.pop %v8137
    %v8139 = vmul.f32 %v8134, %v8138
    %8140 = vrot.lane.b32.xlu0 %v7306, 72
    %v8141 = vpop.permute.xlu0 %8140
    %8142 = vrot.lane.b32.xlu0 %v7311, 72
    %v8143 = vpop.permute.xlu0 %8142
    %v8147 = vsel %vm695, %v8139, 0
    %8149 = vmatprep.subr.mxu0 0.0
    %8150 = vmatpush1.msra.mxu0 %v8141
    %8151 = vmatprep.subr.mxu0 0.0
    %8152 = vmatpush1.msra.mxu0 %v8143
    %8153 = vmatprep.subr.mxu0 0.0
    %8154 = vmatpush1.msra.mxu0 0.0
    %8155 = vmatprep.subr.mxu0 0.0
    %8156 = vmatpush1.msra.mxu0 0.0
    %8157 = vmatprep.subr.mxu0 0.0
    %8158 = vmatpush1.msra.mxu0 0.0
    %8159 = vmatprep.subr.mxu0 0.0
    %8160 = vmatpush1.msra.mxu0 0.0
    %8161 = vmatprep.subr.mxu0 0.0
    %8162 = vmatpush1.msra.mxu0 0.0
    %8163 = vmatprep.subr.mxu0 0.0
    %8164 = vmatpush1.msra.mxu0 0.0
    %8165 = vmatprep.subr.mxu0 0.0
    %8166 = vmatpush1.msra.mxu0 0.0
    %8167 = vmatprep.subr.mxu0 0.0
    %8168 = vmatpush1.msra.mxu0 0.0
    %8169 = vmatprep.subr.mxu0 0.0
    %8170 = vmatpush1.msra.mxu0 0.0
    %8171 = vmatprep.subr.mxu0 0.0
    %8172 = vmatpush1.msra.mxu0 0.0
    %8173 = vmatprep.subr.mxu0 0.0
    %8174 = vmatpush1.msra.mxu0 0.0
    %8175 = vmatprep.subr.mxu0 0.0
    %8176 = vmatpush1.msra.mxu0 0.0
    %8177 = vmatprep.subr.mxu0 0.0
    %8178 = vmatpush1.msra.mxu0 0.0
    %8179 = vmatprep.subr.mxu0 0.0
    %8180 = vmatpush1.msra.mxu0 0.0
    %8181 = vmatprep.subr.mxu0 0.0
    %8182 = vmatpush1.msra.mxu0 0.0
    %8183 = vmatprep.subr.mxu0 0.0
    %8184 = vmatpush1.msra.mxu0 0.0
    %8185 = vmatprep.subr.mxu0 0.0
    %8186 = vmatpush1.msra.mxu0 0.0
    %8187 = vmatprep.subr.mxu0 0.0
    %8188 = vmatpush1.msra.mxu0 0.0
    %8189 = vmatprep.subr.mxu0 0.0
    %8190 = vmatpush1.msra.mxu0 0.0
    %8191 = vmatprep.subr.mxu0 0.0
    %8192 = vmatpush1.msra.mxu0 0.0
    %8193 = vmatprep.subr.mxu0 0.0
    %8194 = vmatpush1.msra.mxu0 0.0
    %8195 = vmatprep.subr.mxu0 0.0
    %8196 = vmatpush1.msra.mxu0 0.0
    %8197 = vmatprep.subr.mxu0 0.0
    %8198 = vmatpush1.msra.mxu0 0.0
    %8199 = vmatprep.subr.mxu0 0.0
    %8200 = vmatpush1.msra.mxu0 0.0
    %8201 = vmatprep.subr.mxu0 0.0
    %8202 = vmatpush1.msra.mxu0 0.0
    %8203 = vmatprep.subr.mxu0 0.0
    %8204 = vmatpush1.msra.mxu0 0.0
    %8205 = vmatprep.subr.mxu0 0.0
    %8206 = vmatpush1.msra.mxu0 0.0
    %8207 = vmatprep.subr.mxu0 0.0
    %8208 = vmatpush1.msra.mxu0 0.0
    %8209 = vmatprep.subr.mxu0 0.0
    %8210 = vmatpush1.msra.mxu0 0.0
    %8211 = vmatprep.subr.mxu0 0.0
    %8212 = vmatpush1.msra.mxu0 0.0
    %8213 = vmatprep.mubr.f32.mxu0 0.0
    %8214 = vmatmul.mubr.f32.gmra.mrb[0].mxu0 %v8147
    %v8215 = vpop.f32.mrb[0].mxu0
    %v8216 = vadd.f32 0.0, %v8215
    %v8217 = vpop.f32.mrb[0].mxu0
    %8218 = vdwg.mxu0
    %v8220 = vsel %vm611, %v8216, 0
    %8222 = vmatprep.subr.mxu0 0.0
    %8223 = vmatpush1.msra.mxu0 %v6065
    %8224 = vmatprep.subr.mxu0 0.0
    %8225 = vmatpush1.msra.mxu0 0.0
    %8226 = vmatprep.subr.mxu0 0.0
    %8227 = vmatpush1.msra.mxu0 0.0
    %8228 = vmatprep.subr.mxu0 0.0
    %8229 = vmatpush1.msra.mxu0 0.0
    %8230 = vmatprep.subr.mxu0 0.0
    %8231 = vmatpush1.msra.mxu0 0.0
    %8232 = vmatprep.subr.mxu0 0.0
    %8233 = vmatpush1.msra.mxu0 0.0
    %8234 = vmatprep.subr.mxu0 0.0
    %8235 = vmatpush1.msra.mxu0 0.0
    %8236 = vmatprep.subr.mxu0 0.0
    %8237 = vmatpush1.msra.mxu0 0.0
    %8238 = vmatprep.subr.mxu0 0.0
    %8239 = vmatpush1.msra.mxu0 0.0
    %8240 = vmatprep.subr.mxu0 0.0
    %8241 = vmatpush1.msra.mxu0 0.0
    %8242 = vmatprep.subr.mxu0 0.0
    %8243 = vmatpush1.msra.mxu0 0.0
    %8244 = vmatprep.subr.mxu0 0.0
    %8245 = vmatpush1.msra.mxu0 0.0
    %8246 = vmatprep.subr.mxu0 0.0
    %8247 = vmatpush1.msra.mxu0 0.0
    %8248 = vmatprep.subr.mxu0 0.0
    %8249 = vmatpush1.msra.mxu0 0.0
    %8250 = vmatprep.subr.mxu0 0.0
    %8251 = vmatpush1.msra.mxu0 0.0
    %8252 = vmatprep.subr.mxu0 0.0
    %8253 = vmatpush1.msra.mxu0 0.0
    %8254 = vmatprep.subr.mxu0 0.0
    %8255 = vmatpush1.msra.mxu0 0.0
    %8256 = vmatprep.subr.mxu0 0.0
    %8257 = vmatpush1.msra.mxu0 0.0
    %8258 = vmatprep.subr.mxu0 0.0
    %8259 = vmatpush1.msra.mxu0 0.0
    %8260 = vmatprep.subr.mxu0 0.0
    %8261 = vmatpush1.msra.mxu0 0.0
    %8262 = vmatprep.subr.mxu0 0.0
    %8263 = vmatpush1.msra.mxu0 0.0
    %8264 = vmatprep.subr.mxu0 0.0
    %8265 = vmatpush1.msra.mxu0 0.0
    %8266 = vmatprep.subr.mxu0 0.0
    %8267 = vmatpush1.msra.mxu0 0.0
    %8268 = vmatprep.subr.mxu0 0.0
    %8269 = vmatpush1.msra.mxu0 0.0
    %8270 = vmatprep.subr.mxu0 0.0
    %8271 = vmatpush1.msra.mxu0 0.0
    %8272 = vmatprep.subr.mxu0 0.0
    %8273 = vmatpush1.msra.mxu0 0.0
    %8274 = vmatprep.subr.mxu0 0.0
    %8275 = vmatpush1.msra.mxu0 0.0
    %8276 = vmatprep.subr.mxu0 0.0
    %8277 = vmatpush1.msra.mxu0 0.0
    %8278 = vmatprep.subr.mxu0 0.0
    %8279 = vmatpush1.msra.mxu0 0.0
    %8280 = vmatprep.subr.mxu0 0.0
    %8281 = vmatpush1.msra.mxu0 0.0
    %8282 = vmatprep.subr.mxu0 0.0
    %8283 = vmatpush1.msra.mxu0 0.0
    %8284 = vmatprep.subr.mxu0 0.0
    %8285 = vmatpush1.msra.mxu0 0.0
    %8286 = vmatprep.mubr.f32.mxu0 0.0
    %8287 = vmatmul.mubr.f32.gmra.mrb[0].mxu0 %v8220
    %v8288 = vpop.f32.mrb[0].mxu0
    %v8289 = vadd.f32 0.0, %v8288
    %v8290 = vpop.f32.mrb[0].mxu0
    %8291 = vdwg.mxu0
    %v8292 = vadd.f32 %v8046, %v8289
    %v8294 = vlaneseq
    %v8295 = vshrl.u32 %v8294, 7
    %v8296 = vsub.s32 0, %v8295
    %v8297 = vrot.slane %v6066, %v8296
    %v8299 = vadd.f32 %v8292, %v8297
    %v8300 = vadd.f32 %v7153, %v8299
    %v8301 = vsel %vm523, %v8300, 0.0
    %8302 = vadd.xlane.f32.xlu0 %v8301
    %v8303 = vpop.xlane.xlu0 %8302
    %v8304 = vmul.f32 %v8303, %v1749
    %v8305 = vsub.f32 %v8300, %v8304
    %v8306 = vmul.f32 %v8305, %v8305
    %v8307 = vsel %vm523, %v8306, 0.0
    %8308 = vadd.xlane.f32.xlu0 %v8307
    %v8309 = vpop.xlane.xlu0 %8308
    %v8310 = vmul.f32 %v8309, %v1749
    %v8311 = vadd.f32 %v8310, 1e-05
    %v8312 = vrsqrt.pop %v8311
    %v8313 = vmul.f32 %v8305, %v8312
    %v8315 = vlaneseq
    %v8316 = vshrl.u32 %v8315, 7
    %v8317 = vsub.s32 0, %v8316
    %v8318 = vrot.slane %v6083, %v8317
    %v8320 = vmul.f32 %v8313, %v8318
    %v8322 = vlaneseq
    %v8323 = vshrl.u32 %v8322, 7
    %v8324 = vsub.s32 0, %v8323
    %v8325 = vrot.slane %v6084, %v8324
    %v8327 = vadd.f32 %v8320, %v8325
    %v8329 = vlaneseq
    %v8330 = vshrl.u32 %v8329, 7
    %v8331 = vsub.s32 0, %v8330
    %v8332 = vrot.slane %v6071, %v8331
    %v8335 = vsel %vm523, %v8327, 0
    %8337 = vmatprep.subr.mxu0 0.0
    %8338 = vmatpush1.msra.mxu0 %v6067
    %8339 = vmatprep.subr.mxu0 0.0
    %8340 = vmatpush1.msra.mxu0 %v6068
    %8341 = vmatprep.subr.mxu0 0.0
    %8342 = vmatpush1.msra.mxu0 %v6069
    %8343 = vmatprep.subr.mxu0 0.0
    %8344 = vmatpush1.msra.mxu0 %v6070
    %8345 = vmatprep.subr.mxu0 0.0
    %8346 = vmatpush1.msra.mxu0 0.0
    %8347 = vmatprep.subr.mxu0 0.0
    %8348 = vmatpush1.msra.mxu0 0.0
    %8349 = vmatprep.subr.mxu0 0.0
    %8350 = vmatpush1.msra.mxu0 0.0
    %8351 = vmatprep.subr.mxu0 0.0
    %8352 = vmatpush1.msra.mxu0 0.0
    %8353 = vmatprep.subr.mxu0 0.0
    %8354 = vmatpush1.msra.mxu0 0.0
    %8355 = vmatprep.subr.mxu0 0.0
    %8356 = vmatpush1.msra.mxu0 0.0
    %8357 = vmatprep.subr.mxu0 0.0
    %8358 = vmatpush1.msra.mxu0 0.0
    %8359 = vmatprep.subr.mxu0 0.0
    %8360 = vmatpush1.msra.mxu0 0.0
    %8361 = vmatprep.subr.mxu0 0.0
    %8362 = vmatpush1.msra.mxu0 0.0
    %8363 = vmatprep.subr.mxu0 0.0
    %8364 = vmatpush1.msra.mxu0 0.0
    %8365 = vmatprep.subr.mxu0 0.0
    %8366 = vmatpush1.msra.mxu0 0.0
    %8367 = vmatprep.subr.mxu0 0.0
    %8368 = vmatpush1.msra.mxu0 0.0
    %8369 = vmatprep.subr.mxu0 0.0
    %8370 = vmatpush1.msra.mxu0 0.0
    %8371 = vmatprep.subr.mxu0 0.0
    %8372 = vmatpush1.msra.mxu0 0.0
    %8373 = vmatprep.subr.mxu0 0.0
    %8374 = vmatpush1.msra.mxu0 0.0
    %8375 = vmatprep.subr.mxu0 0.0
    %8376 = vmatpush1.msra.mxu0 0.0
    %8377 = vmatprep.subr.mxu0 0.0
    %8378 = vmatpush1.msra.mxu0 0.0
    %8379 = vmatprep.subr.mxu0 0.0
    %8380 = vmatpush1.msra.mxu0 0.0
    %8381 = vmatprep.subr.mxu0 0.0
    %8382 = vmatpush1.msra.mxu0 0.0
    %8383 = vmatprep.subr.mxu0 0.0
    %8384 = vmatpush1.msra.mxu0 0.0
    %8385 = vmatprep.subr.mxu0 0.0
    %8386 = vmatpush1.msra.mxu0 0.0
    %8387 = vmatprep.subr.mxu0 0.0
    %8388 = vmatpush1.msra.mxu0 0.0
    %8389 = vmatprep.subr.mxu0 0.0
    %8390 = vmatpush1.msra.mxu0 0.0
    %8391 = vmatprep.subr.mxu0 0.0
    %8392 = vmatpush1.msra.mxu0 0.0
    %8393 = vmatprep.subr.mxu0 0.0
    %8394 = vmatpush1.msra.mxu0 0.0
    %8395 = vmatprep.subr.mxu0 0.0
    %8396 = vmatpush1.msra.mxu0 0.0
    %8397 = vmatprep.subr.mxu0 0.0
    %8398 = vmatpush1.msra.mxu0 0.0
    %8399 = vmatprep.subr.mxu0 0.0
    %8400 = vmatpush1.msra.mxu0 0.0
    %8401 = vmatprep.mubr.f32.mxu0 0.0
    %8402 = vmatmul.mubr.f32.gmra.mrb[0].mxu0 %v8335
    %v8403 = vpop.f32.mrb[0].mxu0
    %v8404 = vadd.f32 %v8332, %v8403
    %v8405 = vpop.f32.mrb[0].mxu0
    %8406 = vdwg.mxu0
    %v8407 = vmax.f32 %v8404, 0.0
    %v8409 = vlaneseq
    %v8410 = vshrl.u32 %v8409, 7
    %v8411 = vsub.s32 0, %v8410
    %v8412 = vrot.slane %v6080, %v8411
    %v8415 = vsel %vm1881, %v8407, 0
    %8417 = vmatprep.subr.mxu0 0.0
    %8418 = vmatpush1.msra.mxu0 %v6072
    %8419 = vmatprep.subr.mxu0 0.0
    %8420 = vmatpush1.msra.mxu0 %v6073
    %8421 = vmatprep.subr.mxu0 0.0
    %8422 = vmatpush1.msra.mxu0 %v6074
    %8423 = vmatprep.subr.mxu0 0.0
    %8424 = vmatpush1.msra.mxu0 %v6075
    %8425 = vmatprep.subr.mxu0 0.0
    %8426 = vmatpush1.msra.mxu0 %v6076
    %8427 = vmatprep.subr.mxu0 0.0
    %8428 = vmatpush1.msra.mxu0 %v6077
    %8429 = vmatprep.subr.mxu0 0.0
    %8430 = vmatpush1.msra.mxu0 %v6078
    %8431 = vmatprep.subr.mxu0 0.0
    %8432 = vmatpush1.msra.mxu0 %v6079
    %8433 = vmatprep.subr.mxu0 0.0
    %8434 = vmatpush1.msra.mxu0 0.0
    %8435 = vmatprep.subr.mxu0 0.0
    %8436 = vmatpush1.msra.mxu0 0.0
    %8437 = vmatprep.subr.mxu0 0.0
    %8438 = vmatpush1.msra.mxu0 0.0
    %8439 = vmatprep.subr.mxu0 0.0
    %8440 = vmatpush1.msra.mxu0 0.0
    %8441 = vmatprep.subr.mxu0 0.0
    %8442 = vmatpush1.msra.mxu0 0.0
    %8443 = vmatprep.subr.mxu0 0.0
    %8444 = vmatpush1.msra.mxu0 0.0
    %8445 = vmatprep.subr.mxu0 0.0
    %8446 = vmatpush1.msra.mxu0 0.0
    %8447 = vmatprep.subr.mxu0 0.0
    %8448 = vmatpush1.msra.mxu0 0.0
    %8449 = vmatprep.subr.mxu0 0.0
    %8450 = vmatpush1.msra.mxu0 0.0
    %8451 = vmatprep.subr.mxu0 0.0
    %8452 = vmatpush1.msra.mxu0 0.0
    %8453 = vmatprep.subr.mxu0 0.0
    %8454 = vmatpush1.msra.mxu0 0.0
    %8455 = vmatprep.subr.mxu0 0.0
    %8456 = vmatpush1.msra.mxu0 0.0
    %8457 = vmatprep.subr.mxu0 0.0
    %8458 = vmatpush1.msra.mxu0 0.0
    %8459 = vmatprep.subr.mxu0 0.0
    %8460 = vmatpush1.msra.mxu0 0.0
    %8461 = vmatprep.subr.mxu0 0.0
    %8462 = vmatpush1.msra.mxu0 0.0
    %8463 = vmatprep.subr.mxu0 0.0
    %8464 = vmatpush1.msra.mxu0 0.0
    %8465 = vmatprep.subr.mxu0 0.0
    %8466 = vmatpush1.msra.mxu0 0.0
    %8467 = vmatprep.subr.mxu0 0.0
    %8468 = vmatpush1.msra.mxu0 0.0
    %8469 = vmatprep.subr.mxu0 0.0
    %8470 = vmatpush1.msra.mxu0 0.0
    %8471 = vmatprep.subr.mxu0 0.0
    %8472 = vmatpush1.msra.mxu0 0.0
    %8473 = vmatprep.subr.mxu0 0.0
    %8474 = vmatpush1.msra.mxu0 0.0
    %8475 = vmatprep.subr.mxu0 0.0
    %8476 = vmatpush1.msra.mxu0 0.0
    %8477 = vmatprep.subr.mxu0 0.0
    %8478 = vmatpush1.msra.mxu0 0.0
    %8479 = vmatprep.subr.mxu0 0.0
    %8480 = vmatpush1.msra.mxu0 0.0
    %8481 = vmatprep.mubr.f32.mxu0 0.0
    %8482 = vmatmul.mubr.f32.gmra.mrb[0].mxu0 %v8415
    %v8483 = vpop.f32.mrb[0].mxu0
    %v8484 = vadd.f32 %v8412, %v8483
    %v8485 = vpop.f32.mrb[0].mxu0
    %8486 = vdwg.mxu0
    %v8487 = vadd.f32 %v8327, %v8484
    %v8488 = vsel %vm523, %v8487, 0.0
    %8489 = vadd.xlane.f32.xlu0 %v8488
    %v8490 = vpop.xlane.xlu0 %8489
    %v8491 = vmul.f32 %v8490, %v1749
    %v8492 = vsub.f32 %v8487, %v8491
    %v8493 = vmul.f32 %v8492, %v8492
    %v8494 = vsel %vm523, %v8493, 0.0
    %8495 = vadd.xlane.f32.xlu0 %v8494
    %v8496 = vpop.xlane.xlu0 %8495
    %v8497 = vmul.f32 %v8496, %v1749
    %v8498 = vadd.f32 %v8497, 1e-05
    %v8499 = vrsqrt.pop %v8498
    %v8500 = vmul.f32 %v8492, %v8499
    %v8502 = vlaneseq
    %v8503 = vshrl.u32 %v8502, 7
    %v8504 = vsub.s32 0, %v8503
    %v8505 = vrot.slane %v6085, %v8504
    %v8507 = vmul.f32 %v8500, %v8505
    %v8509 = vlaneseq
    %v8510 = vshrl.u32 %v8509, 7
    %v8511 = vsub.s32 0, %v8510
    %v8512 = vrot.slane %v6086, %v8511
    %v8514 = vadd.f32 %v8507, %v8512
    %v8515 = vsel %vm523, %v8514, 0.0
    %8516 = vadd.xlane.f32.xlu0 %v8515
    %v8517 = vpop.xlane.xlu0 %8516
    %v8518 = vmul.f32 %v8517, %v1749
    %v8519 = vsub.f32 %v8514, %v8518
    %v8520 = vmul.f32 %v8519, %v8519
    %v8521 = vsel %vm523, %v8520, 0.0
    %8522 = vadd.xlane.f32.xlu0 %v8521
    %v8523 = vpop.xlane.xlu0 %8522
    %v8524 = vmul.f32 %v8523, %v1749
    %v8525 = vadd.f32 %v8524, 1e-05
    %v8526 = vrsqrt.pop %v8525
    %v8527 = vmul.f32 %v8519, %v8526
    %v8529 = vlaneseq
    %v8530 = vshrl.u32 %v8529, 7
    %v8531 = vsub.s32 0, %v8530
    %v8532 = vrot.slane %v391, %v8531
    %v8534 = vmul.f32 %v8527, %v8532
    %v8536 = vlaneseq
    %v8537 = vshrl.u32 %v8536, 7
    %v8538 = vsub.s32 0, %v8537
    %v8539 = vrot.slane %v392, %v8538
    %v8541 = vadd.f32 %v8534, %v8539
    %v8543 = vlaneseq
    %v8544 = vshrl.u32 %v8543, 7
    %v8545 = vsub.s32 0, %v8544
    %v8546 = vrot.slane %v393, %v8545
    %v8548 = vmul.f32 %v8541, %v8546
    %v8549 = vsel %vm523, %v8548, 0.0
    %8550 = vadd.xlane.f32.xlu0 %v8549
    %v8551 = vpop.xlane.xlu0 %8550
    %v8553 = vlaneseq
    %v8554 = vshrl.u32 %v8553, 7
    %v8555 = vsub.s32 0, %v8554
    %v8556 = vrot.slane %v394, %v8555
    %v8558 = vadd.f32 %v8551, %v8556
    %vm8559 = vcmask 7168
    %8560 = vst.msk [vmem:[%s157] sm:$0xff] %vm8559, %v8558
    // Predicated region
    $region334: #{forecast_net_transformer.1} parent=1 // pred_check
      _
    $region335: #{forecast_net_transformer.1} parent=1 // pred_check_branch
      %8562 = sbr.rel (0) target = $region337
    $region336: #{forecast_net_transformer.1} parent=1 // pred_region
      _
    $region337: #{forecast_net_transformer.1} parent=1 // pred_fallthru
      _
    // Predicated region
    $region338: #{forecast_net_transformer.1} parent=1 // pred_check
      _
    $region339: #{forecast_net_transformer.1} parent=1 // pred_check_branch
      %8564 = sbr.rel (0) target = $region341
    $region340: #{forecast_net_transformer.1} parent=1 // pred_region
      _
    $region341: #{forecast_net_transformer.1} parent=1 // pred_fallthru
      _
    %8565 = vsyncpa [#allocation4], 1
    %8566 = vsyncpa [#allocation6], 1
    %8567 = vsyncpa [#allocation9], 1

</llo_original>
